<compile_context>
chip_gen: v5e
topology: v5e:2x2
jax: 0.10.0
libtpu: 0.0.40
codegen_flags: <defaults>
</compile_context>

<pallas_src>
import jax
import jax.numpy as jnp
from jax.experimental import pallas as pl
from jax.experimental.pallas import tpu as pltpu

# small, deterministic synthetic sizes consistent with the module
MNUM = 64      # args.mesh_node_num
MEMB = 32      # args.mesh_node_embed_dim
EEMB = 32      # args.edge_embed_dim
E    = 128     # number of mesh edges
H1, H2 = 512, 256
LN_EPS = 1e-5


def _mesh_node_update_kernel(col_ref, mx_ref, me_x_ref,
                             w1_ref, w2_ref, w3_ref,
                             bias_ref, ln_ref, out_ref):
    g = mx_ref.shape[0]                                  # graphs in this block (static)
    mx = mx_ref[...]                                     # [g, MNUM, MEMB] f32

    # scatter(me_x, col, dim=-2, 'sum')  ==  one_hot(col) @ me_x, per graph (MXU).
    node_ids = jax.lax.broadcasted_iota(jnp.int32, (g, MNUM, E), 1)
    onehot = (node_ids == col_ref[...]).astype(jnp.bfloat16)            # [g, MNUM, E]
    me_x_bf = me_x_ref[...].astype(jnp.bfloat16)                        # [g, E, EEMB]
    edge_agg = jnp.einsum('gme,gec->gmc', onehot, me_x_bf,
                          preferred_element_type=jnp.float32)           # [g, MNUM, EEMB] f32

    # Concat on the lane axis (32 + 32 lanes -> single lane tile) and flatten the
    # graph axis into rows so the big matmuls fill the MXU M dimension.
    x = jnp.concatenate([mx.astype(jnp.bfloat16),
                         edge_agg.astype(jnp.bfloat16)], axis=-1)       # [g, MNUM, 64]
    x2 = x.reshape(g * MNUM, MEMB + EEMB)                               # [g*MNUM, 64]

    b1 = bias_ref[:, 0:H1]                                              # [1, 512]
    b2 = bias_ref[:, H1:H1 + H2]                                        # [1, 256]
    b3 = bias_ref[:, H1 + H2:H1 + H2 + MEMB]                            # [1, 32]

    h = jnp.dot(x2, w1_ref[...], preferred_element_type=jnp.float32) + b1
    h = h * jax.nn.sigmoid(h)                                           # SiLU in f32
    h = jnp.dot(h.astype(jnp.bfloat16), w2_ref[...],
                preferred_element_type=jnp.float32) + b2
    h = h * jax.nn.sigmoid(h)
    h = jnp.dot(h.astype(jnp.bfloat16), w3_ref[...],
                preferred_element_type=jnp.float32) + b3                # [g*MNUM, MEMB]

    h3 = h.reshape(g, MNUM, MEMB)

    # LayerNorm([MNUM, MEMB]) per graph: two-pass mean/var for numerical stability.
    inv_n = 1.0 / float(MNUM * MEMB)
    mean = jnp.sum(jnp.sum(h3, axis=2, keepdims=True),
                   axis=1, keepdims=True) * inv_n                       # [g, 1, 1]
    centered = h3 - mean
    var = jnp.sum(jnp.sum(centered * centered, axis=2, keepdims=True),
                  axis=1, keepdims=True) * inv_n                        # [g, 1, 1]
    hn = centered * jax.lax.rsqrt(var + LN_EPS)
    hn = hn * ln_ref[0][None, :, :] + ln_ref[1][None, :, :]

    # residual
    out_ref[...] = mx + hn


def mesh_node_aggregate_pallas(col, mx, me_x, kparams, graphs_per_block=None):
    """col: [B,1,E] int32, mx: [B,MNUM,MEMB] f32, me_x: [B,E,EEMB] f32."""
    w1, w2, w3, biases, ln = kparams
    B = mx.shape[0]
    if graphs_per_block is None:
        graphs_per_block = next(g for g in (4, 2, 1) if B % g == 0)
    gpb = graphs_per_block
    grid = (B // gpb,)

    def per_graph(shape):
        return pl.BlockSpec((gpb,) + shape, lambda b: (b, 0, 0))

    def resident(shape):
        # constant block index -> DMA'd once, stays VMEM-resident across grid steps
        return pl.BlockSpec(shape, lambda b, n=len(shape): (0,) * n)

    cost = pl.CostEstimate(flops=22_600_000 * B,
                           transcendentals=49_152 * B,
                           bytes_accessed=344_064 + 33_280 * B)

    return pl.pallas_call(
        _mesh_node_update_kernel,
        out_shape=jax.ShapeDtypeStruct((B, MNUM, MEMB), jnp.float32),
        grid=grid,
        in_specs=[per_graph((1, E)),                      # col
                  per_graph((MNUM, MEMB)),                # mx
                  per_graph((E, EEMB)),                   # me_x
                  resident((MEMB + EEMB, H1)),            # w1 (merged, bf16)
                  resident((H1, H2)),                     # w2 (bf16)
                  resident((H2, MEMB)),                   # w3 (bf16)
                  resident((1, H1 + H2 + MEMB)),          # packed biases (f32)
                  resident((2, MNUM, MEMB))],             # packed lnw/lnb (f32)
        out_specs=per_graph((MNUM, MEMB)),
        input_output_aliases={1: 0},                      # mx aliases the output
        compiler_params=pltpu.CompilerParams(
            dimension_semantics=("parallel",)),           # 2 TCs on v7x
        cost_estimate=cost,
    )(col, mx, me_x, w1, w2, w3, biases, ln)


def pack_kernel_params(params):
    """One-time prep: bf16 matmul weights (merged w1), packed biases, packed LN params."""
    w1, b1, w2, b2, w3, b3, lnw, lnb = params
    biases = jnp.concatenate([b1.reshape(1, H1),
                              b2.reshape(1, H2),
                              b3.reshape(1, MEMB)], axis=-1)    # [1, 800] f32
    ln = jnp.stack([lnw, lnb], axis=0)                          # [2, MNUM, MEMB] f32
    return (w1.astype(jnp.bfloat16),
            w2.astype(jnp.bfloat16),
            w3.astype(jnp.bfloat16),
            biases, ln)


def mesh_node_update(gx, mx, me_i, me_x, g2me_i, g2me_x, m2ge_i, m2ge_x, kparams):
    """Single-graph MeshNodeUpdate.forward: only mx is updated, the rest passes through."""
    col = me_i[1].reshape(1, 1, E).astype(jnp.int32)
    mx_new = mesh_node_aggregate_pallas(col, mx[None], me_x[None], kparams)[0]
    return (gx, mx_new, me_i, me_x, g2me_i, g2me_x, m2ge_i, m2ge_x)


def _reference(col, mx, me_x, params):
    """Pure-JAX f32 reference (single graph) for correctness checking."""
    w1, b1, w2, b2, w3, b3, lnw, lnb = params
    edge_agg = jnp.zeros((MNUM, EEMB), jnp.float32).at[col].add(me_x)
    x = jnp.concatenate([mx, edge_agg], -1)
    h = jax.nn.silu(x @ w1 + b1)
    h = jax.nn.silu(h @ w2 + b2)
    h = h @ w3 + b3
    mean = jnp.mean(h)
    var = jnp.mean(jnp.square(h - mean))
    hn = (h - mean) / jnp.sqrt(var + LN_EPS) * lnw + lnb
    return mx + hn


def init_params(key):
    ks = jax.random.split(key, 6)
    d_in = MEMB + EEMB
    w1 = jax.random.normal(ks[0], (d_in, H1), jnp.float32) * (1.0 / jnp.sqrt(d_in))
    b1 = jax.random.normal(ks[1], (1, H1), jnp.float32) * 0.01
    w2 = jax.random.normal(ks[2], (H1, H2), jnp.float32) * (1.0 / jnp.sqrt(H1))
    b2 = jax.random.normal(ks[3], (1, H2), jnp.float32) * 0.01
    w3 = jax.random.normal(ks[4], (H2, MEMB), jnp.float32) * (1.0 / jnp.sqrt(H2))
    b3 = jax.random.normal(ks[5], (1, MEMB), jnp.float32) * 0.01
    lnw = jnp.ones((MNUM, MEMB), jnp.float32)     # LayerNorm([mnum, memb]) weight
    lnb = jnp.zeros((MNUM, MEMB), jnp.float32)    # LayerNorm([mnum, memb]) bias
    return (w1, b1, w2, b2, w3, b3, lnw, lnb)


if __name__ == "__main__":
    key = jax.random.PRNGKey(0)
    keys = jax.random.split(key, 8)

    B = 8            # independent graphs / message-passing instances
    GNUM = 96        # grid nodes (pass-through only)

    gx = jax.random.normal(keys[0], (GNUM, MEMB), jnp.float32)
    mx_b = jax.random.normal(keys[1], (B, MNUM, MEMB), jnp.float32)
    me_x_b = jax.random.normal(keys[2], (B, E, EEMB), jnp.float32)
    row_b = jax.random.randint(keys[3], (B, E), 0, MNUM, jnp.int32)
    col_b = jax.random.randint(keys[4], (B, E), 0, MNUM, jnp.int32)

    params = init_params(keys[5])
    kparams = pack_kernel_params(params)

    # f32 reference computed BEFORE the kernel calls (mx buffers are aliased by the kernel).
    ref = jax.vmap(lambda c, m, e: _reference(c, m, e, params))(col_b, mx_b, me_x_b)
    ref = jax.block_until_ready(ref)

    # Batched call: grid over graphs, weights VMEM-resident, 4 graphs per block.
    out_b = mesh_node_aggregate_pallas(col_b.reshape(B, 1, E), mx_b, me_x_b, kparams)
    out_b = jax.block_until_ready(out_b)
    assert jnp.allclose(out_b, ref, atol=1e-1, rtol=1e-1), "batched mismatch vs reference"

    # Single-graph module forward (original MeshNodeUpdate.forward semantics).
    me_i = jnp.stack([row_b[0], col_b[0]])
    g2me_i = jnp.zeros((2, E), jnp.int32)
    g2me_x = jax.random.normal(keys[6], (E, EEMB), jnp.float32)
    m2ge_i = jnp.zeros((2, E), jnp.int32)
    m2ge_x = jax.random.normal(keys[7], (E, EEMB), jnp.float32)
    out_tuple = mesh_node_update(gx, mx_b[0], me_i, me_x_b[0],
                                 g2me_i, g2me_x, m2ge_i, m2ge_x, kparams)
    mx_new = jax.block_until_ready(out_tuple[1])
    assert jnp.allclose(mx_new, ref[0], atol=1e-1, rtol=1e-1), "single-graph mismatch"

    print("KERNEL_OK")
</pallas_src>

<mosaic_0001>
module attributes {stable_mosaic.version = 11 : i64} {
  func.func @_mesh_node_update_kernel(%arg0: i32, %arg1: memref<4x1x128xi32, #tpu.memory_space<vmem>>, %arg2: memref<4x64x32xf32, #tpu.memory_space<vmem>>, %arg3: memref<4x128x32xf32, #tpu.memory_space<vmem>>, %arg4: memref<64x512xbf16, #tpu.memory_space<vmem>>, %arg5: memref<512x256xbf16, #tpu.memory_space<vmem>>, %arg6: memref<256x32xbf16, #tpu.memory_space<vmem>>, %arg7: memref<1x800xf32, #tpu.memory_space<vmem>>, %arg8: memref<2x64x32xf32, #tpu.memory_space<vmem>>, %arg9: memref<4x64x32xf32, #tpu.memory_space<vmem>>) attributes {dimension_semantics = [#tpu.dimension_semantics<parallel>], iteration_bounds = array<i64: 2>, scalar_prefetch = 0 : i64, scratch_operands = 0 : i64, tpu.core_type = #tpu.core_type<tc>, window_params = [{transform_indices = @transform_0, window_bounds = array<i64: 4, 1, 128>}, {transform_indices = @transform_1, window_bounds = array<i64: 4, 64, 32>}, {transform_indices = @transform_2, window_bounds = array<i64: 4, 128, 32>}, {pipeline_mode = #tpu.pipeline_mode<synchronous>, transform_indices = @transform_3, window_bounds = array<i64: 64, 512>}, {pipeline_mode = #tpu.pipeline_mode<synchronous>, transform_indices = @transform_4, window_bounds = array<i64: 512, 256>}, {pipeline_mode = #tpu.pipeline_mode<synchronous>, transform_indices = @transform_5, window_bounds = array<i64: 256, 32>}, {pipeline_mode = #tpu.pipeline_mode<synchronous>, transform_indices = @transform_6, window_bounds = array<i64: 1, 800>}, {pipeline_mode = #tpu.pipeline_mode<synchronous>, transform_indices = @transform_7, window_bounds = array<i64: 2, 64, 32>}, {transform_indices = @transform_8, window_bounds = array<i64: 4, 64, 32>}]} {
    %c0 = arith.constant 0 : index
    %c0_0 = arith.constant 0 : index
    %c0_1 = arith.constant 0 : index
    %0 = vector.load %arg2[%c0, %c0_0, %c0_1] : memref<4x64x32xf32, #tpu.memory_space<vmem>>, vector<4x64x32xf32>
    %1 = tpu.iota {dimensions = array<i32: 1>} : vector<4x64x128xi32>
    %c0_2 = arith.constant 0 : index
    %c0_3 = arith.constant 0 : index
    %c0_4 = arith.constant 0 : index
    %2 = vector.load %arg1[%c0_2, %c0_3, %c0_4] : memref<4x1x128xi32, #tpu.memory_space<vmem>>, vector<4x1x128xi32>
    %3 = vector.broadcast %2 : vector<4x1x128xi32> to vector<4x64x128xi32>
    %4 = arith.cmpi eq, %1, %3 : vector<4x64x128xi32>
    %5 = arith.extui %4 : vector<4x64x128xi1> to vector<4x64x128xi32>
    %6 = arith.sitofp %5 : vector<4x64x128xi32> to vector<4x64x128xf32>
    %7 = arith.truncf %6 : vector<4x64x128xf32> to vector<4x64x128xbf16>
    %c0_5 = arith.constant 0 : index
    %c0_6 = arith.constant 0 : index
    %c0_7 = arith.constant 0 : index
    %8 = vector.load %arg3[%c0_5, %c0_6, %c0_7] : memref<4x128x32xf32, #tpu.memory_space<vmem>>, vector<4x128x32xf32>
    %9 = arith.truncf %8 : vector<4x128x32xf32> to vector<4x128x32xbf16>
    "tpu.trace_start"() <{level = 10 : i32, message = "gme,gec->gmc"}> : () -> ()
    %cst = arith.constant dense<0.000000e+00> : vector<4x64x32xf32>
    %10 = tpu.matmul %7, %9, %cst {dimension_numbers = #tpu.dot_dimension_numbers<[2], [1], [1], [2], [0, 0, 0, 1, 1, 2], [0], [0]>} : vector<4x64x128xbf16>, vector<4x128x32xbf16>, vector<4x64x32xf32> -> vector<4x64x32xf32>
    "tpu.trace_stop"() : () -> ()
    %11 = arith.truncf %0 : vector<4x64x32xf32> to vector<4x64x32xbf16>
    %12 = arith.truncf %10 : vector<4x64x32xf32> to vector<4x64x32xbf16>
    %13 = tpu.concatenate %11, %12 in 2 : vector<4x64x32xbf16>, vector<4x64x32xbf16> -> vector<4x64x64xbf16>
    %14 = vector.shape_cast %13 : vector<4x64x64xbf16> to vector<256x64xbf16>
    %c0_8 = arith.constant 0 : index
    %c0_9 = arith.constant 0 : index
    %15 = vector.load %arg7[%c0_8, %c0_9] : memref<1x800xf32, #tpu.memory_space<vmem>>, vector<1x512xf32>
    %c0_10 = arith.constant 0 : index
    %c512 = arith.constant 512 : index
    %16 = vector.load %arg7[%c0_10, %c512] : memref<1x800xf32, #tpu.memory_space<vmem>>, vector<1x256xf32>
    %c0_11 = arith.constant 0 : index
    %c768 = arith.constant 768 : index
    %17 = vector.load %arg7[%c0_11, %c768] : memref<1x800xf32, #tpu.memory_space<vmem>>, vector<1x32xf32>
    %c0_12 = arith.constant 0 : index
    %c0_13 = arith.constant 0 : index
    %18 = vector.load %arg4[%c0_12, %c0_13] : memref<64x512xbf16, #tpu.memory_space<vmem>>, vector<64x512xbf16>
    %cst_14 = arith.constant dense<0.000000e+00> : vector<256x512xf32>
    %19 = tpu.matmul %14, %18, %cst_14 {dimension_numbers = #tpu.dot_dimension_numbers<[1], [0], [0], [1], [0, 0, 1, 1], [], []>} : vector<256x64xbf16>, vector<64x512xbf16>, vector<256x512xf32> -> vector<256x512xf32>
    %20 = vector.broadcast %15 : vector<1x512xf32> to vector<256x512xf32>
    %21 = arith.addf %19, %20 : vector<256x512xf32>
    %22 = arith.negf %21 : vector<256x512xf32>
    %23 = math.exp %22 : vector<256x512xf32>
    %cst_15 = arith.constant 1.000000e+00 : f32
    %24 = vector.broadcast %cst_15 : f32 to vector<256x512xf32>
    %25 = arith.addf %24, %23 : vector<256x512xf32>
    %26 = arith.divf %24, %25 : vector<256x512xf32>
    %27 = arith.mulf %21, %26 : vector<256x512xf32>
    %28 = arith.truncf %27 : vector<256x512xf32> to vector<256x512xbf16>
    %c0_16 = arith.constant 0 : index
    %c0_17 = arith.constant 0 : index
    %29 = vector.load %arg5[%c0_16, %c0_17] : memref<512x256xbf16, #tpu.memory_space<vmem>>, vector<512x256xbf16>
    %cst_18 = arith.constant dense<0.000000e+00> : vector<256x256xf32>
    %30 = tpu.matmul %28, %29, %cst_18 {dimension_numbers = #tpu.dot_dimension_numbers<[1], [0], [0], [1], [0, 0, 1, 1], [], []>} : vector<256x512xbf16>, vector<512x256xbf16>, vector<256x256xf32> -> vector<256x256xf32>
    %31 = vector.broadcast %16 : vector<1x256xf32> to vector<256x256xf32>
    %32 = arith.addf %30, %31 : vector<256x256xf32>
    %33 = arith.negf %32 : vector<256x256xf32>
    %34 = math.exp %33 : vector<256x256xf32>
    %cst_19 = arith.constant 1.000000e+00 : f32
    %35 = vector.broadcast %cst_19 : f32 to vector<256x256xf32>
    %36 = arith.addf %35, %34 : vector<256x256xf32>
    %37 = arith.divf %35, %36 : vector<256x256xf32>
    %38 = arith.mulf %32, %37 : vector<256x256xf32>
    %39 = arith.truncf %38 : vector<256x256xf32> to vector<256x256xbf16>
    %c0_20 = arith.constant 0 : index
    %c0_21 = arith.constant 0 : index
    %40 = vector.load %arg6[%c0_20, %c0_21] : memref<256x32xbf16, #tpu.memory_space<vmem>>, vector<256x32xbf16>
    %cst_22 = arith.constant dense<0.000000e+00> : vector<256x32xf32>
    %41 = tpu.matmul %39, %40, %cst_22 {dimension_numbers = #tpu.dot_dimension_numbers<[1], [0], [0], [1], [0, 0, 1, 1], [], []>} : vector<256x256xbf16>, vector<256x32xbf16>, vector<256x32xf32> -> vector<256x32xf32>
    %42 = vector.broadcast %17 : vector<1x32xf32> to vector<256x32xf32>
    %43 = arith.addf %41, %42 : vector<256x32xf32>
    %44 = vector.shape_cast %43 : vector<256x32xf32> to vector<4x64x32xf32>
    %cst_23 = arith.constant dense<0.000000e+00> : vector<4x64xf32>
    %45 = vector.multi_reduction <add>, %44, %cst_23 [2] : vector<4x64x32xf32> to vector<4x64xf32>
    %46 = vector.shape_cast %45 : vector<4x64xf32> to vector<4x64x1xf32>
    %cst_24 = arith.constant dense<0.000000e+00> : vector<4x1xf32>
    %47 = vector.multi_reduction <add>, %46, %cst_24 [1] : vector<4x64x1xf32> to vector<4x1xf32>
    %48 = vector.shape_cast %47 : vector<4x1xf32> to vector<4x1x1xf32>
    %cst_25 = arith.constant 4.8828125E-4 : f32
    %49 = vector.broadcast %cst_25 : f32 to vector<4x1x1xf32>
    %50 = arith.mulf %48, %49 : vector<4x1x1xf32>
    %51 = vector.broadcast %50 : vector<4x1x1xf32> to vector<4x64x32xf32>
    %52 = arith.subf %44, %51 : vector<4x64x32xf32>
    %53 = arith.mulf %52, %52 : vector<4x64x32xf32>
    %cst_26 = arith.constant dense<0.000000e+00> : vector<4x64xf32>
    %54 = vector.multi_reduction <add>, %53, %cst_26 [2] : vector<4x64x32xf32> to vector<4x64xf32>
    %55 = vector.shape_cast %54 : vector<4x64xf32> to vector<4x64x1xf32>
    %cst_27 = arith.constant dense<0.000000e+00> : vector<4x1xf32>
    %56 = vector.multi_reduction <add>, %55, %cst_27 [1] : vector<4x64x1xf32> to vector<4x1xf32>
    %57 = vector.shape_cast %56 : vector<4x1xf32> to vector<4x1x1xf32>
    %cst_28 = arith.constant 4.8828125E-4 : f32
    %58 = vector.broadcast %cst_28 : f32 to vector<4x1x1xf32>
    %59 = arith.mulf %57, %58 : vector<4x1x1xf32>
    %cst_29 = arith.constant 9.99999974E-6 : f32
    %60 = vector.broadcast %cst_29 : f32 to vector<4x1x1xf32>
    %61 = arith.addf %59, %60 : vector<4x1x1xf32>
    %62 = math.rsqrt %61 : vector<4x1x1xf32>
    %63 = vector.broadcast %62 : vector<4x1x1xf32> to vector<4x64x32xf32>
    %64 = arith.mulf %52, %63 : vector<4x64x32xf32>
    %c0_30 = arith.constant 0 : index
    %c0_31 = arith.constant 0 : index
    %c0_32 = arith.constant 0 : index
    %65 = vector.load %arg8[%c0_30, %c0_31, %c0_32] : memref<2x64x32xf32, #tpu.memory_space<vmem>>, vector<1x64x32xf32>
    %66 = vector.shape_cast %65 : vector<1x64x32xf32> to vector<64x32xf32>
    %67 = vector.shape_cast %66 : vector<64x32xf32> to vector<1x64x32xf32>
    %68 = vector.broadcast %67 : vector<1x64x32xf32> to vector<4x64x32xf32>
    %69 = arith.mulf %64, %68 : vector<4x64x32xf32>
    %c1 = arith.constant 1 : index
    %c0_33 = arith.constant 0 : index
    %c0_34 = arith.constant 0 : index
    %70 = vector.load %arg8[%c1, %c0_33, %c0_34] : memref<2x64x32xf32, #tpu.memory_space<vmem>>, vector<1x64x32xf32>
    %71 = vector.shape_cast %70 : vector<1x64x32xf32> to vector<64x32xf32>
    %72 = vector.shape_cast %71 : vector<64x32xf32> to vector<1x64x32xf32>
    %73 = vector.broadcast %72 : vector<1x64x32xf32> to vector<4x64x32xf32>
    %74 = arith.addf %69, %73 : vector<4x64x32xf32>
    %75 = arith.addf %0, %74 : vector<4x64x32xf32>
    %c0_35 = arith.constant 0 : index
    %c0_36 = arith.constant 0 : index
    %c0_37 = arith.constant 0 : index
    %76 = vector.load %arg9[%c0_35, %c0_36, %c0_37] : memref<4x64x32xf32, #tpu.memory_space<vmem>>, vector<4x64x32xf32>
    tpu.vector_store %arg9[%c0_35, %c0_36, %c0_37], %75 {strides = array<i32>} : memref<4x64x32xf32, #tpu.memory_space<vmem>>, vector<4x64x32xf32>,
    return
  }
  func.func @transform_0(%arg0: i32) -> (i32, i32, i32) {
    %c0_i32 = arith.constant 0 : i32
    %c0_i32_0 = arith.constant 0 : i32
    %c0_i32_1 = arith.constant 0 : i32
    return %arg0, %c0_i32, %c0_i32_0 : i32, i32, i32
  }
  func.func @transform_1(%arg0: i32) -> (i32, i32, i32) {
    %c0_i32 = arith.constant 0 : i32
    %c0_i32_0 = arith.constant 0 : i32
    %c0_i32_1 = arith.constant 0 : i32
    return %arg0, %c0_i32, %c0_i32_0 : i32, i32, i32
  }
  func.func @transform_2(%arg0: i32) -> (i32, i32, i32) {
    %c0_i32 = arith.constant 0 : i32
    %c0_i32_0 = arith.constant 0 : i32
    %c0_i32_1 = arith.constant 0 : i32
    return %arg0, %c0_i32, %c0_i32_0 : i32, i32, i32
  }
  func.func @transform_3(%arg0: i32) -> (i32, i32) {
    %c0_i32 = arith.constant 0 : i32
    %c0_i32_0 = arith.constant 0 : i32
    %c0_i32_1 = arith.constant 0 : i32
    return %c0_i32, %c0_i32_0 : i32, i32
  }
  func.func @transform_4(%arg0: i32) -> (i32, i32) {
    %c0_i32 = arith.constant 0 : i32
    %c0_i32_0 = arith.constant 0 : i32
    %c0_i32_1 = arith.constant 0 : i32
    return %c0_i32, %c0_i32_0 : i32, i32
  }
  func.func @transform_5(%arg0: i32) -> (i32, i32) {
    %c0_i32 = arith.constant 0 : i32
    %c0_i32_0 = arith.constant 0 : i32
    %c0_i32_1 = arith.constant 0 : i32
    return %c0_i32, %c0_i32_0 : i32, i32
  }
  func.func @transform_6(%arg0: i32) -> (i32, i32) {
    %c0_i32 = arith.constant 0 : i32
    %c0_i32_0 = arith.constant 0 : i32
    %c0_i32_1 = arith.constant 0 : i32
    return %c0_i32, %c0_i32_0 : i32, i32
  }
  func.func @transform_7(%arg0: i32) -> (i32, i32, i32) {
    %c0_i32 = arith.constant 0 : i32
    %c0_i32_0 = arith.constant 0 : i32
    %c0_i32_1 = arith.constant 0 : i32
    %c0_i32_2 = arith.constant 0 : i32
    return %c0_i32, %c0_i32_0, %c0_i32_1 : i32, i32, i32
  }
  func.func @transform_8(%arg0: i32) -> (i32, i32, i32) {
    %c0_i32 = arith.constant 0 : i32
    %c0_i32_0 = arith.constant 0 : i32
    %c0_i32_1 = arith.constant 0 : i32
    return %arg0, %c0_i32, %c0_i32_0 : i32, i32, i32
  }
}

</mosaic_0001>

<llo_original>
// kernel: tpu_custom_call.1
$region0: #{tpu_custom_call.1}
  #allocation0 [shape = 'u32[]', space=smem, size = 0x4, offset = 0x4, fixed_abs, tag = 'smem constant byte address 0x4 - core index']
  #allocation1 [shape = 'u32[72,128]{1,0:T(1,128)}', space=vmem, size = 0x9000, scoped, tag = 'internal scratch']
  %s0 = inlined_call_operand.vmem [shape: s32[8,1,128], index: 0, kind: input, shape index: {}]
  %s1 = inlined_call_operand.vmem [shape: f32[8,64,32], index: 1, kind: input, shape index: {}, may-alias: {1,8}]
  %s2 = inlined_call_operand.vmem [shape: f32[8,128,32], index: 2, kind: input, shape index: {}]
  %s3 = inlined_call_operand.vmem [shape: bf16[64,512], index: 3, kind: input, shape index: {}]
  %s4 = inlined_call_operand.vmem [shape: bf16[512,256], index: 4, kind: input, shape index: {}]
  %s5 = inlined_call_operand.vmem [shape: bf16[256,32], index: 5, kind: input, shape index: {}]
  %s6 = inlined_call_operand.vmem [shape: f32[1,800], index: 6, kind: input, shape index: {}]
  %s7 = inlined_call_operand.vmem [shape: f32[2,64,32], index: 7, kind: input, shape index: {}]
  %s8 = inlined_call_operand.vmem [shape: f32[8,64,32], index: 8, kind: output, shape index: {}, may-alias: {1,8}]
  %s9 = sld [smem:[#allocation0]]
  $region65: #{tpu_custom_call.1} parent=0
    _
  %s11 = ssub.s32 1, %s9
  %s12 = scalar_select 0, %s11, %s9
  loop: start=0, step=1, limit=4
  $region2: #{tpu_custom_call.1} parent=0 // loop_pre_header
    _
  $region3: #{tpu_custom_call.1} parent=0 // loop_header
    %s14 = sphi 0, %s18
    %p15 = scmp.ge.s32.totalorder %s14, 4
    %s24 = sphi 0, %s26
    %s27 = sphi 0, %s24
    %s28 = sphi 0, %s27
    %s44 = sphi 0, %s28
    %s50 = sphi 0, %s52
    %s53 = sphi 0, %s50
    %s54 = sphi 0, %s53
    %s70 = sphi 0, %s54
    %s76 = sphi 0, %s78
    %s79 = sphi 0, %s76
    %s80 = sphi 0, %s79
    %s96 = sphi 0, %s80
    %s100 = sphi 0, %s100
    %s102 = sphi 0, %s100
    %s103 = sphi 0, %s102
    %s117 = sphi 0, %s103
    %s121 = sphi 0, %s121
    %s123 = sphi 0, %s121
    %s124 = sphi 0, %s123
    %s138 = sphi 0, %s124
    %s142 = sphi 0, %s142
    %s144 = sphi 0, %s142
    %s145 = sphi 0, %s144
    %s159 = sphi 0, %s145
    %s163 = sphi 0, %s163
    %s165 = sphi 0, %s163
    %s166 = sphi 0, %s165
    %s180 = sphi 0, %s166
    %s184 = sphi 0, %s184
    %s186 = sphi 0, %s184
    %s187 = sphi 0, %s186
    %s201 = sphi 0, %s187
    %s207 = sphi 0, %s209
    %s210 = sphi 0, %s207
    %s211 = sphi 0, %s210
    %s227 = sphi 0, %s211
  $region4: #{tpu_custom_call.1} parent=0 // loop_header_branch
    %17 = sbr.rel (%p15) target = $region8
  $region5: #{tpu_custom_call.1} parent=0 // loop_body
    %s19 = ssub.s32 %s14, 1
    %s20 = ssub.s32 %s14, 2
    %s21 = sadd.s32 %s14, 1
    %s22 = ssub.s32 %s14, %s21
    %p23 = scmp.eq.s32.totalorder %s22, 0
    %s25 = sadd.s32 %s24, 1
    %s26 = scalar_select %p23, %s24, %s25
    %p29 = pneg %p23
    %p30 = scmp.eq.s32.totalorder %s14, 1
    %p31 = por %p29, %p30
    %p32 = scmp.ne.s32.totalorder %s24, %s27
    %p33 = scmp.eq.s32.totalorder %s14, 0
    %p34 = por %p32, %p33
    %p35 = scmp.ne.s32.totalorder %s24, %s27
    %p36 = scmp.eq.s32.totalorder %s19, 1
    %p37 = por %p35, %p36
    %p38 = scmp.ne.s32.totalorder %s27, %s28
    %p39 = scmp.eq.s32.totalorder %s19, 0
    %p40 = por %p38, %p39
    %p41 = scmp.ne.s32.totalorder %s27, %s28
    %p42 = scmp.eq.s32.totalorder %s20, 1
    %p43 = por %p41, %p42
    %p45 = scmp.ne.s32.totalorder %s28, %s44
    %p46 = scmp.eq.s32.totalorder %s20, 0
    %p47 = por %p45, %p46
    %s48 = ssub.s32 %s14, %s21
    %p49 = scmp.eq.s32.totalorder %s48, 0
    %s51 = sadd.s32 %s50, 1
    %s52 = scalar_select %p49, %s50, %s51
    %p55 = pneg %p49
    %p56 = scmp.eq.s32.totalorder %s14, 1
    %p57 = por %p55, %p56
    %p58 = scmp.ne.s32.totalorder %s50, %s53
    %p59 = scmp.eq.s32.totalorder %s14, 0
    %p60 = por %p58, %p59
    %p61 = scmp.ne.s32.totalorder %s50, %s53
    %p62 = scmp.eq.s32.totalorder %s19, 1
    %p63 = por %p61, %p62
    %p64 = scmp.ne.s32.totalorder %s53, %s54
    %p65 = scmp.eq.s32.totalorder %s19, 0
    %p66 = por %p64, %p65
    %p67 = scmp.ne.s32.totalorder %s53, %s54
    %p68 = scmp.eq.s32.totalorder %s20, 1
    %p69 = por %p67, %p68
    %p71 = scmp.ne.s32.totalorder %s54, %s70
    %p72 = scmp.eq.s32.totalorder %s20, 0
    %p73 = por %p71, %p72
    %s74 = ssub.s32 %s14, %s21
    %p75 = scmp.eq.s32.totalorder %s74, 0
    %s77 = sadd.s32 %s76, 1
    %s78 = scalar_select %p75, %s76, %s77
    %p81 = pneg %p75
    %p82 = scmp.eq.s32.totalorder %s14, 1
    %p83 = por %p81, %p82
    %p84 = scmp.ne.s32.totalorder %s76, %s79
    %p85 = scmp.eq.s32.totalorder %s14, 0
    %p86 = por %p84, %p85
    %p87 = scmp.ne.s32.totalorder %s76, %s79
    %p88 = scmp.eq.s32.totalorder %s19, 1
    %p89 = por %p87, %p88
    %p90 = scmp.ne.s32.totalorder %s79, %s80
    %p91 = scmp.eq.s32.totalorder %s19, 0
    %p92 = por %p90, %p91
    %p93 = scmp.ne.s32.totalorder %s79, %s80
    %p94 = scmp.eq.s32.totalorder %s20, 1
    %p95 = por %p93, %p94
    %p97 = scmp.ne.s32.totalorder %s80, %s96
    %p98 = scmp.eq.s32.totalorder %s20, 0
    %p99 = por %p97, %p98
    %s101 = sadd.s32 %s100, 1
    %p104 = scmp.eq.s32.totalorder %s14, 1
    %p105 = scmp.ne.s32.totalorder %s100, %s102
    %p106 = scmp.eq.s32.totalorder %s14, 0
    %p107 = por %p105, %p106
    %p108 = scmp.ne.s32.totalorder %s100, %s102
    %p109 = scmp.eq.s32.totalorder %s19, 1
    %p110 = por %p108, %p109
    %p111 = scmp.ne.s32.totalorder %s102, %s103
    %p112 = scmp.eq.s32.totalorder %s19, 0
    %p113 = por %p111, %p112
    %p114 = scmp.ne.s32.totalorder %s102, %s103
    %p115 = scmp.eq.s32.totalorder %s20, 1
    %p116 = por %p114, %p115
    %p118 = scmp.ne.s32.totalorder %s103, %s117
    %p119 = scmp.eq.s32.totalorder %s20, 0
    %p120 = por %p118, %p119
    %s122 = sadd.s32 %s121, 1
    %p125 = scmp.eq.s32.totalorder %s14, 1
    %p126 = scmp.ne.s32.totalorder %s121, %s123
    %p127 = scmp.eq.s32.totalorder %s14, 0
    %p128 = por %p126, %p127
    %p129 = scmp.ne.s32.totalorder %s121, %s123
    %p130 = scmp.eq.s32.totalorder %s19, 1
    %p131 = por %p129, %p130
    %p132 = scmp.ne.s32.totalorder %s123, %s124
    %p133 = scmp.eq.s32.totalorder %s19, 0
    %p134 = por %p132, %p133
    %p135 = scmp.ne.s32.totalorder %s123, %s124
    %p136 = scmp.eq.s32.totalorder %s20, 1
    %p137 = por %p135, %p136
    %p139 = scmp.ne.s32.totalorder %s124, %s138
    %p140 = scmp.eq.s32.totalorder %s20, 0
    %p141 = por %p139, %p140
    %s143 = sadd.s32 %s142, 1
    %p146 = scmp.eq.s32.totalorder %s14, 1
    %p147 = scmp.ne.s32.totalorder %s142, %s144
    %p148 = scmp.eq.s32.totalorder %s14, 0
    %p149 = por %p147, %p148
    %p150 = scmp.ne.s32.totalorder %s142, %s144
    %p151 = scmp.eq.s32.totalorder %s19, 1
    %p152 = por %p150, %p151
    %p153 = scmp.ne.s32.totalorder %s144, %s145
    %p154 = scmp.eq.s32.totalorder %s19, 0
    %p155 = por %p153, %p154
    %p156 = scmp.ne.s32.totalorder %s144, %s145
    %p157 = scmp.eq.s32.totalorder %s20, 1
    %p158 = por %p156, %p157
    %p160 = scmp.ne.s32.totalorder %s145, %s159
    %p161 = scmp.eq.s32.totalorder %s20, 0
    %p162 = por %p160, %p161
    %s164 = sadd.s32 %s163, 1
    %p167 = scmp.eq.s32.totalorder %s14, 1
    %p168 = scmp.ne.s32.totalorder %s163, %s165
    %p169 = scmp.eq.s32.totalorder %s14, 0
    %p170 = por %p168, %p169
    %p171 = scmp.ne.s32.totalorder %s163, %s165
    %p172 = scmp.eq.s32.totalorder %s19, 1
    %p173 = por %p171, %p172
    %p174 = scmp.ne.s32.totalorder %s165, %s166
    %p175 = scmp.eq.s32.totalorder %s19, 0
    %p176 = por %p174, %p175
    %p177 = scmp.ne.s32.totalorder %s165, %s166
    %p178 = scmp.eq.s32.totalorder %s20, 1
    %p179 = por %p177, %p178
    %p181 = scmp.ne.s32.totalorder %s166, %s180
    %p182 = scmp.eq.s32.totalorder %s20, 0
    %p183 = por %p181, %p182
    %s185 = sadd.s32 %s184, 1
    %p188 = scmp.eq.s32.totalorder %s14, 1
    %p189 = scmp.ne.s32.totalorder %s184, %s186
    %p190 = scmp.eq.s32.totalorder %s14, 0
    %p191 = por %p189, %p190
    %p192 = scmp.ne.s32.totalorder %s184, %s186
    %p193 = scmp.eq.s32.totalorder %s19, 1
    %p194 = por %p192, %p193
    %p195 = scmp.ne.s32.totalorder %s186, %s187
    %p196 = scmp.eq.s32.totalorder %s19, 0
    %p197 = por %p195, %p196
    %p198 = scmp.ne.s32.totalorder %s186, %s187
    %p199 = scmp.eq.s32.totalorder %s20, 1
    %p200 = por %p198, %p199
    %p202 = scmp.ne.s32.totalorder %s187, %s201
    %p203 = scmp.eq.s32.totalorder %s20, 0
    %p204 = por %p202, %p203
    %s205 = ssub.s32 %s14, %s21
    %p206 = scmp.eq.s32.totalorder %s205, 0
    %s208 = sadd.s32 %s207, 1
    %s209 = scalar_select %p206, %s207, %s208
    %p212 = pneg %p206
    %p213 = scmp.eq.s32.totalorder %s14, 1
    %p214 = por %p212, %p213
    %p215 = scmp.ne.s32.totalorder %s207, %s210
    %p216 = scmp.eq.s32.totalorder %s14, 0
    %p217 = por %p215, %p216
    %p218 = scmp.ne.s32.totalorder %s207, %s210
    %p219 = scmp.eq.s32.totalorder %s19, 1
    %p220 = por %p218, %p219
    %p221 = scmp.ne.s32.totalorder %s210, %s211
    %p222 = scmp.eq.s32.totalorder %s19, 0
    %p223 = por %p221, %p222
    %p224 = scmp.ne.s32.totalorder %s210, %s211
    %p225 = scmp.eq.s32.totalorder %s20, 1
    %p226 = por %p224, %p225
    %p228 = scmp.ne.s32.totalorder %s211, %s227
    %p229 = scmp.eq.s32.totalorder %s20, 0
    %p230 = por %p228, %p229
    %p231 = scmp.le.s32.totalorder 1, %s14
    %p232 = scmp.lt.s32.totalorder %s14, 3
    %p233 = pnand %p231, %p232
    %p234 = pneg %p233
    // Predicated region
    $region9: #{tpu_custom_call.1} parent=5 // pred_check
      _
    $region10: #{tpu_custom_call.1} parent=5 // pred_check_branch
      %236 = sbr.rel (%p233) target = $region12
    $region11: #{tpu_custom_call.1} parent=5 // pred_region
      %s237 = ssub.s32 %s14, 1
      // Predicated region
      $region13: #{tpu_custom_call.1} parent=11 // pred_check
        %p238 = pneg %p113
      $region14: #{tpu_custom_call.1} parent=11 // pred_check_branch
        %240 = sbr.rel (%p238) target = $region16
      $region15: #{tpu_custom_call.1} parent=11 // pred_region
        _
      $region16: #{tpu_custom_call.1} parent=11 // pred_fallthru
        _
      // Predicated region
      $region17: #{tpu_custom_call.1} parent=11 // pred_check
        %p241 = pneg %p134
      $region18: #{tpu_custom_call.1} parent=11 // pred_check_branch
        %243 = sbr.rel (%p241) target = $region20
      $region19: #{tpu_custom_call.1} parent=11 // pred_region
        _
      $region20: #{tpu_custom_call.1} parent=11 // pred_fallthru
        _
      // Predicated region
      $region21: #{tpu_custom_call.1} parent=11 // pred_check
        %p244 = pneg %p155
      $region22: #{tpu_custom_call.1} parent=11 // pred_check_branch
        %246 = sbr.rel (%p244) target = $region24
      $region23: #{tpu_custom_call.1} parent=11 // pred_region
        _
      $region24: #{tpu_custom_call.1} parent=11 // pred_fallthru
        _
      // Predicated region
      $region25: #{tpu_custom_call.1} parent=11 // pred_check
        %p247 = pneg %p176
      $region26: #{tpu_custom_call.1} parent=11 // pred_check_branch
        %249 = sbr.rel (%p247) target = $region28
      $region27: #{tpu_custom_call.1} parent=11 // pred_region
        _
      $region28: #{tpu_custom_call.1} parent=11 // pred_fallthru
        _
      // Predicated region
      $region29: #{tpu_custom_call.1} parent=11 // pred_check
        %p250 = pneg %p197
      $region30: #{tpu_custom_call.1} parent=11 // pred_check_branch
        %252 = sbr.rel (%p250) target = $region32
      $region31: #{tpu_custom_call.1} parent=11 // pred_region
        _
      $region32: #{tpu_custom_call.1} parent=11 // pred_fallthru
        _
    $region12: #{tpu_custom_call.1} parent=5 // pred_fallthru
      _
    %p253 = scmp.lt.s32.totalorder %s14, 2
    // Predicated region
    $region33: #{tpu_custom_call.1} parent=5 // pred_check
      %p254 = pneg %p253
    $region34: #{tpu_custom_call.1} parent=5 // pred_check_branch
      %256 = sbr.rel (%p254) target = $region36
    $region35: #{tpu_custom_call.1} parent=5 // pred_region
      // Predicated region
      $region37: #{tpu_custom_call.1} parent=35 // pred_check
        %p257 = pneg %p34
      $region38: #{tpu_custom_call.1} parent=35 // pred_check_branch
        %259 = sbr.rel (%p257) target = $region40
      $region39: #{tpu_custom_call.1} parent=35 // pred_region
        %s260 = smul.u32 4, %s14
        %p261 = scmp.lt.s32.totalorder %s260, 7
        %s262 = scalar_select %p261, %s260, 7
        %s263 = scalar_lea.vmem %s0, %s262
        %s264 = smul.u32 4, %s14
      $region40: #{tpu_custom_call.1} parent=35 // pred_fallthru
        _
      // Predicated region
      $region41: #{tpu_custom_call.1} parent=35 // pred_check
        %p265 = pneg %p60
      $region42: #{tpu_custom_call.1} parent=35 // pred_check_branch
        %267 = sbr.rel (%p265) target = $region44
      $region43: #{tpu_custom_call.1} parent=35 // pred_region
        %s268 = smul.u32 4, %s14
        %p269 = scmp.lt.s32.totalorder %s268, 7
        %s270 = scalar_select %p269, %s268, 7
        %s271 = smul.addr %s270, 8
        %s272 = smul.addr %s271, 8
        %s273 = scalar_lea.vmem %s1, %s272
        %s274 = smul.u32 4, %s14
      $region44: #{tpu_custom_call.1} parent=35 // pred_fallthru
        _
      // Predicated region
      $region45: #{tpu_custom_call.1} parent=35 // pred_check
        %p275 = pneg %p86
      $region46: #{tpu_custom_call.1} parent=35 // pred_check_branch
        %277 = sbr.rel (%p275) target = $region48
      $region47: #{tpu_custom_call.1} parent=35 // pred_region
        %s278 = smul.u32 4, %s14
        %p279 = scmp.lt.s32.totalorder %s278, 7
        %s280 = scalar_select %p279, %s278, 7
        %s281 = smul.addr %s280, 16
        %s282 = smul.addr %s281, 8
        %s283 = scalar_lea.vmem %s2, %s282
        %s284 = smul.u32 4, %s14
      $region48: #{tpu_custom_call.1} parent=35 // pred_fallthru
        _
    $region36: #{tpu_custom_call.1} parent=5 // pred_fallthru
      _
    %p285 = scmp.le.s32.totalorder 1, %s14
    %p286 = scmp.lt.s32.totalorder %s14, 3
    %p287 = pnand %p285, %p286
    %p288 = pneg %p287
    // Predicated region
    $region49: #{tpu_custom_call.1} parent=5 // pred_check
      _
    $region50: #{tpu_custom_call.1} parent=5 // pred_check_branch
      %290 = sbr.rel (%p287) target = $region52
    $region51: #{tpu_custom_call.1} parent=5 // pred_region
      %s291 = ssub.s32 %s14, 1
      %s292 = smul.u32 4, %s19
      %p293 = scmp.lt.s32.totalorder %s292, 7
      %s294 = scalar_select %p293, %s292, 7
      %s295 = scalar_lea.vmem %s0, %s294
      %p296 = pneg %p40
      %p297 = pneg %p37
      %s298 = smul.u32 4, %s19
      %p299 = scmp.lt.s32.totalorder %s298, 7
      %s300 = scalar_select %p299, %s298, 7
      %s301 = smul.addr %s300, 8
      %s302 = smul.addr %s301, 8
      %s303 = scalar_lea.vmem %s1, %s302
      %p304 = pneg %p66
      %p305 = pneg %p63
      %s306 = smul.u32 4, %s19
      %p307 = scmp.lt.s32.totalorder %s306, 7
      %s308 = scalar_select %p307, %s306, 7
      %s309 = smul.addr %s308, 16
      %s310 = smul.addr %s309, 8
      %s311 = scalar_lea.vmem %s2, %s310
      %p312 = pneg %p92
      %p313 = pneg %p89
      %p314 = pneg %p113
      %p315 = pneg %p110
      %p316 = pneg %p134
      %p317 = pneg %p131
      %p318 = pneg %p155
      %p319 = pneg %p152
      %p320 = pneg %p176
      %p321 = pneg %p173
      %p322 = pneg %p197
      %p323 = pneg %p194
      %p324 = pneg %p223
      %p325 = pneg %p220
      %s326 = smul.u32 4, %s19
      %p327 = scmp.lt.s32.totalorder %s326, 7
      %s328 = scalar_select %p327, %s326, 7
      %s329 = smul.addr %s328, 8
      %s330 = smul.addr %s329, 8
      %s331 = scalar_lea.vmem %s8, %s330
      %s332 = smul.u32 4, %s19
      %p333 = scmp.lt.s32.totalorder %s332, 7
      %s334 = scalar_select %p333, %s332, 7
      %s335 = scalar_lea.vmem %s0, %s334
      %s336 = smul.u32 4, %s19
      %s337 = smul.u32 4, %s19
      %p338 = scmp.lt.s32.totalorder %s337, 7
      %s339 = scalar_select %p338, %s337, 7
      %s340 = smul.addr %s339, 8
      %s341 = smul.addr %s340, 8
      %s342 = scalar_lea.vmem %s1, %s341
      %s343 = smul.u32 4, %s19
      %s344 = smul.u32 4, %s19
      %p345 = scmp.lt.s32.totalorder %s344, 7
      %s346 = scalar_select %p345, %s344, 7
      %s347 = smul.addr %s346, 16
      %s348 = smul.addr %s347, 8
      %s349 = scalar_lea.vmem %s2, %s348
      %s350 = smul.u32 4, %s19
      %s351 = smul.u32 4, %s19
      %p352 = scmp.lt.s32.totalorder %s351, 7
      %s353 = scalar_select %p352, %s351, 7
      %s354 = smul.addr %s353, 8
      %s355 = smul.addr %s354, 8
      %s356 = scalar_lea.vmem %s8, %s355
      %s357 = smul.u32 4, %s19
      %v359 = vld [vmem:[%s342] sm:$0xff]
      %v360 = vld [vmem:[%s342 + $0x8] sm:$0xff]
      %v361 = vld [vmem:[%s342 + $0x10] sm:$0xff]
      %v362 = vld [vmem:[%s342 + $0x18] sm:$0xff]
      %v363 = vld [vmem:[%s342 + $0x20] sm:$0xff]
      %v364 = vld [vmem:[%s342 + $0x28] sm:$0xff]
      %v365 = vld [vmem:[%s342 + $0x30] sm:$0xff]
      %v366 = vld [vmem:[%s342 + $0x38] sm:$0xff]
      %v367 = vld [vmem:[%s342 + $0x40] sm:$0xff]
      %v368 = vld [vmem:[%s342 + $0x48] sm:$0xff]
      %v369 = vld [vmem:[%s342 + $0x50] sm:$0xff]
      %v370 = vld [vmem:[%s342 + $0x58] sm:$0xff]
      %v371 = vld [vmem:[%s342 + $0x60] sm:$0xff]
      %v372 = vld [vmem:[%s342 + $0x68] sm:$0xff]
      %v373 = vld [vmem:[%s342 + $0x70] sm:$0xff]
      %v374 = vld [vmem:[%s342 + $0x78] sm:$0xff]
      %v375 = vld [vmem:[%s342 + $0x80] sm:$0xff]
      %v376 = vld [vmem:[%s342 + $0x88] sm:$0xff]
      %v377 = vld [vmem:[%s342 + $0x90] sm:$0xff]
      %v378 = vld [vmem:[%s342 + $0x98] sm:$0xff]
      %v379 = vld [vmem:[%s342 + $0xa0] sm:$0xff]
      %v380 = vld [vmem:[%s342 + $0xa8] sm:$0xff]
      %v381 = vld [vmem:[%s342 + $0xb0] sm:$0xff]
      %v382 = vld [vmem:[%s342 + $0xb8] sm:$0xff]
      %v383 = vld [vmem:[%s342 + $0xc0] sm:$0xff]
      %v384 = vld [vmem:[%s342 + $0xc8] sm:$0xff]
      %v385 = vld [vmem:[%s342 + $0xd0] sm:$0xff]
      %v386 = vld [vmem:[%s342 + $0xd8] sm:$0xff]
      %v387 = vld [vmem:[%s342 + $0xe0] sm:$0xff]
      %v388 = vld [vmem:[%s342 + $0xe8] sm:$0xff]
      %v389 = vld [vmem:[%s342 + $0xf0] sm:$0xff]
      %v390 = vld [vmem:[%s342 + $0xf8] sm:$0xff]
      %v391 = vlaneseq
      %v392 = vshrl.u32 %v391, 7
      %v393 = vadd.s32 %v392, 8
      %v394 = vadd.s32 %v392, 16
      %v395 = vadd.s32 %v392, 24
      %v396 = vadd.s32 %v392, 32
      %v397 = vadd.s32 %v392, 40
      %v398 = vadd.s32 %v392, 48
      %v399 = vadd.s32 %v392, 56
      %v400 = vld [vmem:[%s335] sm:$0x1]
      %v401 = vld [vmem:[%s335 + $0x1] sm:$0x1]
      %v402 = vld [vmem:[%s335 + $0x2] sm:$0x1]
      %v403 = vld [vmem:[%s335 + $0x3] sm:$0x1]
      %v404 = vperm.slane %v400, 0
      %v405 = vperm.slane %v401, 0
      %v406 = vperm.slane %v402, 0
      %v407 = vperm.slane %v403, 0
      %vm408 = vcmp.eq.s32.totalorder %v392, %v404
      %vm409 = vcmp.eq.s32.totalorder %v393, %v404
      %vm410 = vcmp.eq.s32.totalorder %v394, %v404
      %vm411 = vcmp.eq.s32.totalorder %v395, %v404
      %vm412 = vcmp.eq.s32.totalorder %v396, %v404
      %vm413 = vcmp.eq.s32.totalorder %v397, %v404
      %vm414 = vcmp.eq.s32.totalorder %v398, %v404
      %vm415 = vcmp.eq.s32.totalorder %v399, %v404
      %vm416 = vcmp.eq.s32.totalorder %v392, %v405
      %vm417 = vcmp.eq.s32.totalorder %v393, %v405
      %vm418 = vcmp.eq.s32.totalorder %v394, %v405
      %vm419 = vcmp.eq.s32.totalorder %v395, %v405
      %vm420 = vcmp.eq.s32.totalorder %v396, %v405
      %vm421 = vcmp.eq.s32.totalorder %v397, %v405
      %vm422 = vcmp.eq.s32.totalorder %v398, %v405
      %vm423 = vcmp.eq.s32.totalorder %v399, %v405
      %vm424 = vcmp.eq.s32.totalorder %v392, %v406
      %vm425 = vcmp.eq.s32.totalorder %v393, %v406
      %vm426 = vcmp.eq.s32.totalorder %v394, %v406
      %vm427 = vcmp.eq.s32.totalorder %v395, %v406
      %vm428 = vcmp.eq.s32.totalorder %v396, %v406
      %vm429 = vcmp.eq.s32.totalorder %v397, %v406
      %vm430 = vcmp.eq.s32.totalorder %v398, %v406
      %vm431 = vcmp.eq.s32.totalorder %v399, %v406
      %vm432 = vcmp.eq.s32.totalorder %v392, %v407
      %vm433 = vcmp.eq.s32.totalorder %v393, %v407
      %vm434 = vcmp.eq.s32.totalorder %v394, %v407
      %vm435 = vcmp.eq.s32.totalorder %v395, %v407
      %vm436 = vcmp.eq.s32.totalorder %v396, %v407
      %vm437 = vcmp.eq.s32.totalorder %v397, %v407
      %vm438 = vcmp.eq.s32.totalorder %v398, %v407
      %vm439 = vcmp.eq.s32.totalorder %v399, %v407
      %v440 = vsel %vm408, 1, 0
      %v441 = vsel %vm409, 1, 0
      %v442 = vsel %vm410, 1, 0
      %v443 = vsel %vm411, 1, 0
      %v444 = vsel %vm412, 1, 0
      %v445 = vsel %vm413, 1, 0
      %v446 = vsel %vm414, 1, 0
      %v447 = vsel %vm415, 1, 0
      %v448 = vsel %vm416, 1, 0
      %v449 = vsel %vm417, 1, 0
      %v450 = vsel %vm418, 1, 0
      %v451 = vsel %vm419, 1, 0
      %v452 = vsel %vm420, 1, 0
      %v453 = vsel %vm421, 1, 0
      %v454 = vsel %vm422, 1, 0
      %v455 = vsel %vm423, 1, 0
      %v456 = vsel %vm424, 1, 0
      %v457 = vsel %vm425, 1, 0
      %v458 = vsel %vm426, 1, 0
      %v459 = vsel %vm427, 1, 0
      %v460 = vsel %vm428, 1, 0
      %v461 = vsel %vm429, 1, 0
      %v462 = vsel %vm430, 1, 0
      %v463 = vsel %vm431, 1, 0
      %v464 = vsel %vm432, 1, 0
      %v465 = vsel %vm433, 1, 0
      %v466 = vsel %vm434, 1, 0
      %v467 = vsel %vm435, 1, 0
      %v468 = vsel %vm436, 1, 0
      %v469 = vsel %vm437, 1, 0
      %v470 = vsel %vm438, 1, 0
      %v471 = vsel %vm439, 1, 0
      %v472 = vcvt.s32.f32 %v440
      %v473 = vcvt.s32.f32 %v441
      %v474 = vcvt.s32.f32 %v442
      %v475 = vcvt.s32.f32 %v443
      %v476 = vcvt.s32.f32 %v444
      %v477 = vcvt.s32.f32 %v445
      %v478 = vcvt.s32.f32 %v446
      %v479 = vcvt.s32.f32 %v447
      %v480 = vcvt.s32.f32 %v448
      %v481 = vcvt.s32.f32 %v449
      %v482 = vcvt.s32.f32 %v450
      %v483 = vcvt.s32.f32 %v451
      %v484 = vcvt.s32.f32 %v452
      %v485 = vcvt.s32.f32 %v453
      %v486 = vcvt.s32.f32 %v454
      %v487 = vcvt.s32.f32 %v455
      %v488 = vcvt.s32.f32 %v456
      %v489 = vcvt.s32.f32 %v457
      %v490 = vcvt.s32.f32 %v458
      %v491 = vcvt.s32.f32 %v459
      %v492 = vcvt.s32.f32 %v460
      %v493 = vcvt.s32.f32 %v461
      %v494 = vcvt.s32.f32 %v462
      %v495 = vcvt.s32.f32 %v463
      %v496 = vcvt.s32.f32 %v464
      %v497 = vcvt.s32.f32 %v465
      %v498 = vcvt.s32.f32 %v466
      %v499 = vcvt.s32.f32 %v467
      %v500 = vcvt.s32.f32 %v468
      %v501 = vcvt.s32.f32 %v469
      %v502 = vcvt.s32.f32 %v470
      %v503 = vcvt.s32.f32 %v471
      %v504 = vpack.c.bf16 %v472, %v472
      %v505 = vpack.c.bf16 %v473, %v473
      %v506 = vpack.c.bf16 %v474, %v474
      %v507 = vpack.c.bf16 %v475, %v475
      %v508 = vpack.c.bf16 %v476, %v476
      %v509 = vpack.c.bf16 %v477, %v477
      %v510 = vpack.c.bf16 %v478, %v478
      %v511 = vpack.c.bf16 %v479, %v479
      %v512 = vpack.c.bf16 %v480, %v480
      %v513 = vpack.c.bf16 %v481, %v481
      %v514 = vpack.c.bf16 %v482, %v482
      %v515 = vpack.c.bf16 %v483, %v483
      %v516 = vpack.c.bf16 %v484, %v484
      %v517 = vpack.c.bf16 %v485, %v485
      %v518 = vpack.c.bf16 %v486, %v486
      %v519 = vpack.c.bf16 %v487, %v487
      %v520 = vpack.c.bf16 %v488, %v488
      %v521 = vpack.c.bf16 %v489, %v489
      %v522 = vpack.c.bf16 %v490, %v490
      %v523 = vpack.c.bf16 %v491, %v491
      %v524 = vpack.c.bf16 %v492, %v492
      %v525 = vpack.c.bf16 %v493, %v493
      %v526 = vpack.c.bf16 %v494, %v494
      %v527 = vpack.c.bf16 %v495, %v495
      %v528 = vpack.c.bf16 %v496, %v496
      %v529 = vpack.c.bf16 %v497, %v497
      %v530 = vpack.c.bf16 %v498, %v498
      %v531 = vpack.c.bf16 %v499, %v499
      %v532 = vpack.c.bf16 %v500, %v500
      %v533 = vpack.c.bf16 %v501, %v501
      %v534 = vpack.c.bf16 %v502, %v502
      %v535 = vpack.c.bf16 %v503, %v503
      %v536 = vld [vmem:[%s349] sm:$0xff]
      %v537 = vld [vmem:[%s349 + $0x8] sm:$0xff]
      %v538 = vld [vmem:[%s349 + $0x10] sm:$0xff]
      %v539 = vld [vmem:[%s349 + $0x18] sm:$0xff]
      %v540 = vld [vmem:[%s349 + $0x20] sm:$0xff]
      %v541 = vld [vmem:[%s349 + $0x28] sm:$0xff]
      %v542 = vld [vmem:[%s349 + $0x30] sm:$0xff]
      %v543 = vld [vmem:[%s349 + $0x38] sm:$0xff]
      %v544 = vld [vmem:[%s349 + $0x40] sm:$0xff]
      %v545 = vld [vmem:[%s349 + $0x48] sm:$0xff]
      %v546 = vld [vmem:[%s349 + $0x50] sm:$0xff]
      %v547 = vld [vmem:[%s349 + $0x58] sm:$0xff]
      %v548 = vld [vmem:[%s349 + $0x60] sm:$0xff]
      %v549 = vld [vmem:[%s349 + $0x68] sm:$0xff]
      %v550 = vld [vmem:[%s349 + $0x70] sm:$0xff]
      %v551 = vld [vmem:[%s349 + $0x78] sm:$0xff]
      %v552 = vld [vmem:[%s349 + $0x80] sm:$0xff]
      %v553 = vld [vmem:[%s349 + $0x88] sm:$0xff]
      %v554 = vld [vmem:[%s349 + $0x90] sm:$0xff]
      %v555 = vld [vmem:[%s349 + $0x98] sm:$0xff]
      %v556 = vld [vmem:[%s349 + $0xa0] sm:$0xff]
      %v557 = vld [vmem:[%s349 + $0xa8] sm:$0xff]
      %v558 = vld [vmem:[%s349 + $0xb0] sm:$0xff]
      %v559 = vld [vmem:[%s349 + $0xb8] sm:$0xff]
      %v560 = vld [vmem:[%s349 + $0xc0] sm:$0xff]
      %v561 = vld [vmem:[%s349 + $0xc8] sm:$0xff]
      %v562 = vld [vmem:[%s349 + $0xd0] sm:$0xff]
      %v563 = vld [vmem:[%s349 + $0xd8] sm:$0xff]
      %v564 = vld [vmem:[%s349 + $0xe0] sm:$0xff]
      %v565 = vld [vmem:[%s349 + $0xe8] sm:$0xff]
      %v566 = vld [vmem:[%s349 + $0xf0] sm:$0xff]
      %v567 = vld [vmem:[%s349 + $0xf8] sm:$0xff]
      %v568 = vld [vmem:[%s349 + $0x100] sm:$0xff]
      %v569 = vld [vmem:[%s349 + $0x108] sm:$0xff]
      %v570 = vld [vmem:[%s349 + $0x110] sm:$0xff]
      %v571 = vld [vmem:[%s349 + $0x118] sm:$0xff]
      %v572 = vld [vmem:[%s349 + $0x120] sm:$0xff]
      %v573 = vld [vmem:[%s349 + $0x128] sm:$0xff]
      %v574 = vld [vmem:[%s349 + $0x130] sm:$0xff]
      %v575 = vld [vmem:[%s349 + $0x138] sm:$0xff]
      %v576 = vld [vmem:[%s349 + $0x140] sm:$0xff]
      %v577 = vld [vmem:[%s349 + $0x148] sm:$0xff]
      %v578 = vld [vmem:[%s349 + $0x150] sm:$0xff]
      %v579 = vld [vmem:[%s349 + $0x158] sm:$0xff]
      %v580 = vld [vmem:[%s349 + $0x160] sm:$0xff]
      %v581 = vld [vmem:[%s349 + $0x168] sm:$0xff]
      %v582 = vld [vmem:[%s349 + $0x170] sm:$0xff]
      %v583 = vld [vmem:[%s349 + $0x178] sm:$0xff]
      %v584 = vld [vmem:[%s349 + $0x180] sm:$0xff]
      %v585 = vld [vmem:[%s349 + $0x188] sm:$0xff]
      %v586 = vld [vmem:[%s349 + $0x190] sm:$0xff]
      %v587 = vld [vmem:[%s349 + $0x198] sm:$0xff]
      %v588 = vld [vmem:[%s349 + $0x1a0] sm:$0xff]
      %v589 = vld [vmem:[%s349 + $0x1a8] sm:$0xff]
      %v590 = vld [vmem:[%s349 + $0x1b0] sm:$0xff]
      %v591 = vld [vmem:[%s349 + $0x1b8] sm:$0xff]
      %v592 = vld [vmem:[%s349 + $0x1c0] sm:$0xff]
      %v593 = vld [vmem:[%s349 + $0x1c8] sm:$0xff]
      %v594 = vld [vmem:[%s349 + $0x1d0] sm:$0xff]
      %v595 = vld [vmem:[%s349 + $0x1d8] sm:$0xff]
      %v596 = vld [vmem:[%s349 + $0x1e0] sm:$0xff]
      %v597 = vld [vmem:[%s349 + $0x1e8] sm:$0xff]
      %v598 = vld [vmem:[%s349 + $0x1f0] sm:$0xff]
      %v599 = vld [vmem:[%s349 + $0x1f8] sm:$0xff]
      %v600 = vpack.c.bf16 %v536, %v536
      %v601 = vpack.c.bf16 %v537, %v537
      %v602 = vpack.c.bf16 %v538, %v538
      %v603 = vpack.c.bf16 %v539, %v539
      %v604 = vpack.c.bf16 %v540, %v540
      %v605 = vpack.c.bf16 %v541, %v541
      %v606 = vpack.c.bf16 %v542, %v542
      %v607 = vpack.c.bf16 %v543, %v543
      %v608 = vpack.c.bf16 %v544, %v544
      %v609 = vpack.c.bf16 %v545, %v545
      %v610 = vpack.c.bf16 %v546, %v546
      %v611 = vpack.c.bf16 %v547, %v547
      %v612 = vpack.c.bf16 %v548, %v548
      %v613 = vpack.c.bf16 %v549, %v549
      %v614 = vpack.c.bf16 %v550, %v550
      %v615 = vpack.c.bf16 %v551, %v551
      %v616 = vpack.c.bf16 %v552, %v552
      %v617 = vpack.c.bf16 %v553, %v553
      %v618 = vpack.c.bf16 %v554, %v554
      %v619 = vpack.c.bf16 %v555, %v555
      %v620 = vpack.c.bf16 %v556, %v556
      %v621 = vpack.c.bf16 %v557, %v557
      %v622 = vpack.c.bf16 %v558, %v558
      %v623 = vpack.c.bf16 %v559, %v559
      %v624 = vpack.c.bf16 %v560, %v560
      %v625 = vpack.c.bf16 %v561, %v561
      %v626 = vpack.c.bf16 %v562, %v562
      %v627 = vpack.c.bf16 %v563, %v563
      %v628 = vpack.c.bf16 %v564, %v564
      %v629 = vpack.c.bf16 %v565, %v565
      %v630 = vpack.c.bf16 %v566, %v566
      %v631 = vpack.c.bf16 %v567, %v567
      %v632 = vpack.c.bf16 %v568, %v568
      %v633 = vpack.c.bf16 %v569, %v569
      %v634 = vpack.c.bf16 %v570, %v570
      %v635 = vpack.c.bf16 %v571, %v571
      %v636 = vpack.c.bf16 %v572, %v572
      %v637 = vpack.c.bf16 %v573, %v573
      %v638 = vpack.c.bf16 %v574, %v574
      %v639 = vpack.c.bf16 %v575, %v575
      %v640 = vpack.c.bf16 %v576, %v576
      %v641 = vpack.c.bf16 %v577, %v577
      %v642 = vpack.c.bf16 %v578, %v578
      %v643 = vpack.c.bf16 %v579, %v579
      %v644 = vpack.c.bf16 %v580, %v580
      %v645 = vpack.c.bf16 %v581, %v581
      %v646 = vpack.c.bf16 %v582, %v582
      %v647 = vpack.c.bf16 %v583, %v583
      %v648 = vpack.c.bf16 %v584, %v584
      %v649 = vpack.c.bf16 %v585, %v585
      %v650 = vpack.c.bf16 %v586, %v586
      %v651 = vpack.c.bf16 %v587, %v587
      %v652 = vpack.c.bf16 %v588, %v588
      %v653 = vpack.c.bf16 %v589, %v589
      %v654 = vpack.c.bf16 %v590, %v590
      %v655 = vpack.c.bf16 %v591, %v591
      %v656 = vpack.c.bf16 %v592, %v592
      %v657 = vpack.c.bf16 %v593, %v593
      %v658 = vpack.c.bf16 %v594, %v594
      %v659 = vpack.c.bf16 %v595, %v595
      %v660 = vpack.c.bf16 %v596, %v596
      %v661 = vpack.c.bf16 %v597, %v597
      %v662 = vpack.c.bf16 %v598, %v598
      %v663 = vpack.c.bf16 %v599, %v599
      %v672 = vunpack.c.l.b16 %v504
      %v673 = vunpack.c.l.b16 %v505
      %v674 = vunpack.c.l.b16 %v506
      %v675 = vunpack.c.l.b16 %v507
      %v676 = vunpack.c.l.b16 %v508
      %v677 = vunpack.c.l.b16 %v509
      %v678 = vunpack.c.l.b16 %v510
      %v679 = vunpack.c.l.b16 %v511
      %v680 = vpack.c.b16 %v673, %v672
      %v681 = vpack.c.b16 %v675, %v674
      %v682 = vpack.c.b16 %v677, %v676
      %v683 = vpack.c.b16 %v679, %v678
      %v704 = vunpack.c.l.b16 %v600
      %v705 = vunpack.c.l.b16 %v601
      %v706 = vunpack.c.l.b16 %v602
      %v707 = vunpack.c.l.b16 %v603
      %v708 = vunpack.c.l.b16 %v604
      %v709 = vunpack.c.l.b16 %v605
      %v710 = vunpack.c.l.b16 %v606
      %v711 = vunpack.c.l.b16 %v607
      %v712 = vunpack.c.l.b16 %v608
      %v713 = vunpack.c.l.b16 %v609
      %v714 = vunpack.c.l.b16 %v610
      %v715 = vunpack.c.l.b16 %v611
      %v716 = vunpack.c.l.b16 %v612
      %v717 = vunpack.c.l.b16 %v613
      %v718 = vunpack.c.l.b16 %v614
      %v719 = vunpack.c.l.b16 %v615
      %v720 = vpack.c.b16 %v705, %v704
      %v721 = vpack.c.b16 %v707, %v706
      %v722 = vpack.c.b16 %v709, %v708
      %v723 = vpack.c.b16 %v711, %v710
      %v724 = vpack.c.b16 %v713, %v712
      %v725 = vpack.c.b16 %v715, %v714
      %v726 = vpack.c.b16 %v717, %v716
      %v727 = vpack.c.b16 %v719, %v718
      %736 = vmatpush.bf16.msra.mxu0 %v727
      %737 = vmatpush.bf16.msra.mxu0 %v726
      %738 = vmatpush.bf16.msra.mxu0 %v725
      %739 = vmatpush.bf16.msra.mxu0 %v724
      %740 = vmatpush.bf16.msra.mxu0 %v723
      %741 = vmatpush.bf16.msra.mxu0 %v722
      %742 = vmatpush.bf16.msra.mxu0 %v721
      %743 = vmatpush.bf16.msra.mxu0 %v720
      %744 = vmatmul.bf16.gmra.mxu0 %v680
      %v745 = vpop.f32.mrf.mxu0
      %v746 = vadd.f32 0.0, %v745
      %v747 = vpop.f32.mrf.mxu0
      %v748 = vadd.f32 0.0, %v747
      %749 = vmatmul.bf16.gmra.mxu0 %v681
      %v750 = vpop.f32.mrf.mxu0
      %v751 = vadd.f32 0.0, %v750
      %v752 = vpop.f32.mrf.mxu0
      %v753 = vadd.f32 0.0, %v752
      %754 = vmatmul.bf16.gmra.mxu0 %v682
      %v755 = vpop.f32.mrf.mxu0
      %v756 = vadd.f32 0.0, %v755
      %v757 = vpop.f32.mrf.mxu0
      %v758 = vadd.f32 0.0, %v757
      %759 = vmatmul.bf16.gmra.mxu0 %v683
      %v760 = vpop.f32.mrf.mxu0
      %v761 = vadd.f32 0.0, %v760
      %v762 = vpop.f32.mrf.mxu0
      %v763 = vadd.f32 0.0, %v762
      %764 = vdwg.mxu0
      %v773 = vunpack.c.l.b16 %v512
      %v774 = vunpack.c.l.b16 %v513
      %v775 = vunpack.c.l.b16 %v514
      %v776 = vunpack.c.l.b16 %v515
      %v777 = vunpack.c.l.b16 %v516
      %v778 = vunpack.c.l.b16 %v517
      %v779 = vunpack.c.l.b16 %v518
      %v780 = vunpack.c.l.b16 %v519
      %v781 = vpack.c.b16 %v774, %v773
      %v782 = vpack.c.b16 %v776, %v775
      %v783 = vpack.c.b16 %v778, %v777
      %v784 = vpack.c.b16 %v780, %v779
      %v805 = vunpack.c.l.b16 %v616
      %v806 = vunpack.c.l.b16 %v617
      %v807 = vunpack.c.l.b16 %v618
      %v808 = vunpack.c.l.b16 %v619
      %v809 = vunpack.c.l.b16 %v620
      %v810 = vunpack.c.l.b16 %v621
      %v811 = vunpack.c.l.b16 %v622
      %v812 = vunpack.c.l.b16 %v623
      %v813 = vunpack.c.l.b16 %v624
      %v814 = vunpack.c.l.b16 %v625
      %v815 = vunpack.c.l.b16 %v626
      %v816 = vunpack.c.l.b16 %v627
      %v817 = vunpack.c.l.b16 %v628
      %v818 = vunpack.c.l.b16 %v629
      %v819 = vunpack.c.l.b16 %v630
      %v820 = vunpack.c.l.b16 %v631
      %v821 = vpack.c.b16 %v806, %v805
      %v822 = vpack.c.b16 %v808, %v807
      %v823 = vpack.c.b16 %v810, %v809
      %v824 = vpack.c.b16 %v812, %v811
      %v825 = vpack.c.b16 %v814, %v813
      %v826 = vpack.c.b16 %v816, %v815
      %v827 = vpack.c.b16 %v818, %v817
      %v828 = vpack.c.b16 %v820, %v819
      %837 = vmatpush.bf16.msra.mxu0 %v828
      %838 = vmatpush.bf16.msra.mxu0 %v827
      %839 = vmatpush.bf16.msra.mxu0 %v826
      %840 = vmatpush.bf16.msra.mxu0 %v825
      %841 = vmatpush.bf16.msra.mxu0 %v824
      %842 = vmatpush.bf16.msra.mxu0 %v823
      %843 = vmatpush.bf16.msra.mxu0 %v822
      %844 = vmatpush.bf16.msra.mxu0 %v821
      %845 = vmatmul.bf16.gmra.mxu0 %v781
      %v846 = vpop.f32.mrf.mxu0
      %v847 = vadd.f32 0.0, %v846
      %v848 = vpop.f32.mrf.mxu0
      %v849 = vadd.f32 0.0, %v848
      %850 = vmatmul.bf16.gmra.mxu0 %v782
      %v851 = vpop.f32.mrf.mxu0
      %v852 = vadd.f32 0.0, %v851
      %v853 = vpop.f32.mrf.mxu0
      %v854 = vadd.f32 0.0, %v853
      %855 = vmatmul.bf16.gmra.mxu0 %v783
      %v856 = vpop.f32.mrf.mxu0
      %v857 = vadd.f32 0.0, %v856
      %v858 = vpop.f32.mrf.mxu0
      %v859 = vadd.f32 0.0, %v858
      %860 = vmatmul.bf16.gmra.mxu0 %v784
      %v861 = vpop.f32.mrf.mxu0
      %v862 = vadd.f32 0.0, %v861
      %v863 = vpop.f32.mrf.mxu0
      %v864 = vadd.f32 0.0, %v863
      %865 = vdwg.mxu0
      %v874 = vunpack.c.l.b16 %v520
      %v875 = vunpack.c.l.b16 %v521
      %v876 = vunpack.c.l.b16 %v522
      %v877 = vunpack.c.l.b16 %v523
      %v878 = vunpack.c.l.b16 %v524
      %v879 = vunpack.c.l.b16 %v525
      %v880 = vunpack.c.l.b16 %v526
      %v881 = vunpack.c.l.b16 %v527
      %v882 = vpack.c.b16 %v875, %v874
      %v883 = vpack.c.b16 %v877, %v876
      %v884 = vpack.c.b16 %v879, %v878
      %v885 = vpack.c.b16 %v881, %v880
      %v906 = vunpack.c.l.b16 %v632
      %v907 = vunpack.c.l.b16 %v633
      %v908 = vunpack.c.l.b16 %v634
      %v909 = vunpack.c.l.b16 %v635
      %v910 = vunpack.c.l.b16 %v636
      %v911 = vunpack.c.l.b16 %v637
      %v912 = vunpack.c.l.b16 %v638
      %v913 = vunpack.c.l.b16 %v639
      %v914 = vunpack.c.l.b16 %v640
      %v915 = vunpack.c.l.b16 %v641
      %v916 = vunpack.c.l.b16 %v642
      %v917 = vunpack.c.l.b16 %v643
      %v918 = vunpack.c.l.b16 %v644
      %v919 = vunpack.c.l.b16 %v645
      %v920 = vunpack.c.l.b16 %v646
      %v921 = vunpack.c.l.b16 %v647
      %v922 = vpack.c.b16 %v907, %v906
      %v923 = vpack.c.b16 %v909, %v908
      %v924 = vpack.c.b16 %v911, %v910
      %v925 = vpack.c.b16 %v913, %v912
      %v926 = vpack.c.b16 %v915, %v914
      %v927 = vpack.c.b16 %v917, %v916
      %v928 = vpack.c.b16 %v919, %v918
      %v929 = vpack.c.b16 %v921, %v920
      %938 = vmatpush.bf16.msra.mxu0 %v929
      %939 = vmatpush.bf16.msra.mxu0 %v928
      %940 = vmatpush.bf16.msra.mxu0 %v927
      %941 = vmatpush.bf16.msra.mxu0 %v926
      %942 = vmatpush.bf16.msra.mxu0 %v925
      %943 = vmatpush.bf16.msra.mxu0 %v924
      %944 = vmatpush.bf16.msra.mxu0 %v923
      %945 = vmatpush.bf16.msra.mxu0 %v922
      %946 = vmatmul.bf16.gmra.mxu0 %v882
      %v947 = vpop.f32.mrf.mxu0
      %v948 = vadd.f32 0.0, %v947
      %v949 = vpop.f32.mrf.mxu0
      %v950 = vadd.f32 0.0, %v949
      %951 = vmatmul.bf16.gmra.mxu0 %v883
      %v952 = vpop.f32.mrf.mxu0
      %v953 = vadd.f32 0.0, %v952
      %v954 = vpop.f32.mrf.mxu0
      %v955 = vadd.f32 0.0, %v954
      %956 = vmatmul.bf16.gmra.mxu0 %v884
      %v957 = vpop.f32.mrf.mxu0
      %v958 = vadd.f32 0.0, %v957
      %v959 = vpop.f32.mrf.mxu0
      %v960 = vadd.f32 0.0, %v959
      %961 = vmatmul.bf16.gmra.mxu0 %v885
      %v962 = vpop.f32.mrf.mxu0
      %v963 = vadd.f32 0.0, %v962
      %v964 = vpop.f32.mrf.mxu0
      %v965 = vadd.f32 0.0, %v964
      %966 = vdwg.mxu0
      %v975 = vunpack.c.l.b16 %v528
      %v976 = vunpack.c.l.b16 %v529
      %v977 = vunpack.c.l.b16 %v530
      %v978 = vunpack.c.l.b16 %v531
      %v979 = vunpack.c.l.b16 %v532
      %v980 = vunpack.c.l.b16 %v533
      %v981 = vunpack.c.l.b16 %v534
      %v982 = vunpack.c.l.b16 %v535
      %v983 = vpack.c.b16 %v976, %v975
      %v984 = vpack.c.b16 %v978, %v977
      %v985 = vpack.c.b16 %v980, %v979
      %v986 = vpack.c.b16 %v982, %v981
      %v1007 = vunpack.c.l.b16 %v648
      %v1008 = vunpack.c.l.b16 %v649
      %v1009 = vunpack.c.l.b16 %v650
      %v1010 = vunpack.c.l.b16 %v651
      %v1011 = vunpack.c.l.b16 %v652
      %v1012 = vunpack.c.l.b16 %v653
      %v1013 = vunpack.c.l.b16 %v654
      %v1014 = vunpack.c.l.b16 %v655
      %v1015 = vunpack.c.l.b16 %v656
      %v1016 = vunpack.c.l.b16 %v657
      %v1017 = vunpack.c.l.b16 %v658
      %v1018 = vunpack.c.l.b16 %v659
      %v1019 = vunpack.c.l.b16 %v660
      %v1020 = vunpack.c.l.b16 %v661
      %v1021 = vunpack.c.l.b16 %v662
      %v1022 = vunpack.c.l.b16 %v663
      %v1023 = vpack.c.b16 %v1008, %v1007
      %v1024 = vpack.c.b16 %v1010, %v1009
      %v1025 = vpack.c.b16 %v1012, %v1011
      %v1026 = vpack.c.b16 %v1014, %v1013
      %v1027 = vpack.c.b16 %v1016, %v1015
      %v1028 = vpack.c.b16 %v1018, %v1017
      %v1029 = vpack.c.b16 %v1020, %v1019
      %v1030 = vpack.c.b16 %v1022, %v1021
      %1039 = vmatpush.bf16.msra.mxu0 %v1030
      %1040 = vmatpush.bf16.msra.mxu0 %v1029
      %1041 = vmatpush.bf16.msra.mxu0 %v1028
      %1042 = vmatpush.bf16.msra.mxu0 %v1027
      %1043 = vmatpush.bf16.msra.mxu0 %v1026
      %1044 = vmatpush.bf16.msra.mxu0 %v1025
      %1045 = vmatpush.bf16.msra.mxu0 %v1024
      %1046 = vmatpush.bf16.msra.mxu0 %v1023
      %1047 = vmatmul.bf16.gmra.mxu0 %v983
      %v1048 = vpop.f32.mrf.mxu0
      %v1049 = vadd.f32 0.0, %v1048
      %v1050 = vpop.f32.mrf.mxu0
      %v1051 = vadd.f32 0.0, %v1050
      %1052 = vmatmul.bf16.gmra.mxu0 %v984
      %v1053 = vpop.f32.mrf.mxu0
      %v1054 = vadd.f32 0.0, %v1053
      %v1055 = vpop.f32.mrf.mxu0
      %v1056 = vadd.f32 0.0, %v1055
      %1057 = vmatmul.bf16.gmra.mxu0 %v985
      %v1058 = vpop.f32.mrf.mxu0
      %v1059 = vadd.f32 0.0, %v1058
      %v1060 = vpop.f32.mrf.mxu0
      %v1061 = vadd.f32 0.0, %v1060
      %1062 = vmatmul.bf16.gmra.mxu0 %v986
      %v1063 = vpop.f32.mrf.mxu0
      %v1064 = vadd.f32 0.0, %v1063
      %v1065 = vpop.f32.mrf.mxu0
      %v1066 = vadd.f32 0.0, %v1065
      %1067 = vdwg.mxu0
      %v1068 = vpack.c.bf16 %v359, %v359
      %v1069 = vpack.c.bf16 %v360, %v360
      %v1070 = vpack.c.bf16 %v361, %v361
      %v1071 = vpack.c.bf16 %v362, %v362
      %v1072 = vpack.c.bf16 %v363, %v363
      %v1073 = vpack.c.bf16 %v364, %v364
      %v1074 = vpack.c.bf16 %v365, %v365
      %v1075 = vpack.c.bf16 %v366, %v366
      %v1076 = vpack.c.bf16 %v367, %v367
      %v1077 = vpack.c.bf16 %v368, %v368
      %v1078 = vpack.c.bf16 %v369, %v369
      %v1079 = vpack.c.bf16 %v370, %v370
      %v1080 = vpack.c.bf16 %v371, %v371
      %v1081 = vpack.c.bf16 %v372, %v372
      %v1082 = vpack.c.bf16 %v373, %v373
      %v1083 = vpack.c.bf16 %v374, %v374
      %v1084 = vpack.c.bf16 %v375, %v375
      %v1085 = vpack.c.bf16 %v376, %v376
      %v1086 = vpack.c.bf16 %v377, %v377
      %v1087 = vpack.c.bf16 %v378, %v378
      %v1088 = vpack.c.bf16 %v379, %v379
      %v1089 = vpack.c.bf16 %v380, %v380
      %v1090 = vpack.c.bf16 %v381, %v381
      %v1091 = vpack.c.bf16 %v382, %v382
      %v1092 = vpack.c.bf16 %v383, %v383
      %v1093 = vpack.c.bf16 %v384, %v384
      %v1094 = vpack.c.bf16 %v385, %v385
      %v1095 = vpack.c.bf16 %v386, %v386
      %v1096 = vpack.c.bf16 %v387, %v387
      %v1097 = vpack.c.bf16 %v388, %v388
      %v1098 = vpack.c.bf16 %v389, %v389
      %v1099 = vpack.c.bf16 %v390, %v390
      %v1100 = vpack.c.bf16 %v746, %v746
      %v1101 = vpack.c.bf16 %v748, %v748
      %v1102 = vpack.c.bf16 %v751, %v751
      %v1103 = vpack.c.bf16 %v753, %v753
      %v1104 = vpack.c.bf16 %v756, %v756
      %v1105 = vpack.c.bf16 %v758, %v758
      %v1106 = vpack.c.bf16 %v761, %v761
      %v1107 = vpack.c.bf16 %v763, %v763
      %v1108 = vpack.c.bf16 %v847, %v847
      %v1109 = vpack.c.bf16 %v849, %v849
      %v1110 = vpack.c.bf16 %v852, %v852
      %v1111 = vpack.c.bf16 %v854, %v854
      %v1112 = vpack.c.bf16 %v857, %v857
      %v1113 = vpack.c.bf16 %v859, %v859
      %v1114 = vpack.c.bf16 %v862, %v862
      %v1115 = vpack.c.bf16 %v864, %v864
      %v1116 = vpack.c.bf16 %v948, %v948
      %v1117 = vpack.c.bf16 %v950, %v950
      %v1118 = vpack.c.bf16 %v953, %v953
      %v1119 = vpack.c.bf16 %v955, %v955
      %v1120 = vpack.c.bf16 %v958, %v958
      %v1121 = vpack.c.bf16 %v960, %v960
      %v1122 = vpack.c.bf16 %v963, %v963
      %v1123 = vpack.c.bf16 %v965, %v965
      %v1124 = vpack.c.bf16 %v1049, %v1049
      %v1125 = vpack.c.bf16 %v1051, %v1051
      %v1126 = vpack.c.bf16 %v1054, %v1054
      %v1127 = vpack.c.bf16 %v1056, %v1056
      %v1128 = vpack.c.bf16 %v1059, %v1059
      %v1129 = vpack.c.bf16 %v1061, %v1061
      %v1130 = vpack.c.bf16 %v1064, %v1064
      %v1131 = vpack.c.bf16 %v1066, %v1066
      %v1164 = vunpack.c.l.b16 %v1068
      %v1165 = vunpack.c.l.b16 %v1069
      %v1166 = vunpack.c.l.b16 %v1070
      %v1167 = vunpack.c.l.b16 %v1071
      %v1168 = vunpack.c.l.b16 %v1072
      %v1169 = vunpack.c.l.b16 %v1073
      %v1170 = vunpack.c.l.b16 %v1074
      %v1171 = vunpack.c.l.b16 %v1075
      %v1172 = vunpack.c.l.b16 %v1076
      %v1173 = vunpack.c.l.b16 %v1077
      %v1174 = vunpack.c.l.b16 %v1078
      %v1175 = vunpack.c.l.b16 %v1079
      %v1176 = vunpack.c.l.b16 %v1080
      %v1177 = vunpack.c.l.b16 %v1081
      %v1178 = vunpack.c.l.b16 %v1082
      %v1179 = vunpack.c.l.b16 %v1083
      %v1180 = vunpack.c.l.b16 %v1084
      %v1181 = vunpack.c.l.b16 %v1085
      %v1182 = vunpack.c.l.b16 %v1086
      %v1183 = vunpack.c.l.b16 %v1087
      %v1184 = vunpack.c.l.b16 %v1088
      %v1185 = vunpack.c.l.b16 %v1089
      %v1186 = vunpack.c.l.b16 %v1090
      %v1187 = vunpack.c.l.b16 %v1091
      %v1188 = vunpack.c.l.b16 %v1092
      %v1189 = vunpack.c.l.b16 %v1093
      %v1190 = vunpack.c.l.b16 %v1094
      %v1191 = vunpack.c.l.b16 %v1095
      %v1192 = vunpack.c.l.b16 %v1096
      %v1193 = vunpack.c.l.b16 %v1097
      %v1194 = vunpack.c.l.b16 %v1098
      %v1195 = vunpack.c.l.b16 %v1099
      %v1196 = vpack.c.b16 %v1165, %v1164
      %v1197 = vpack.c.b16 %v1167, %v1166
      %v1198 = vpack.c.b16 %v1169, %v1168
      %v1199 = vpack.c.b16 %v1171, %v1170
      %v1200 = vpack.c.b16 %v1173, %v1172
      %v1201 = vpack.c.b16 %v1175, %v1174
      %v1202 = vpack.c.b16 %v1177, %v1176
      %v1203 = vpack.c.b16 %v1179, %v1178
      %v1204 = vpack.c.b16 %v1181, %v1180
      %v1205 = vpack.c.b16 %v1183, %v1182
      %v1206 = vpack.c.b16 %v1185, %v1184
      %v1207 = vpack.c.b16 %v1187, %v1186
      %v1208 = vpack.c.b16 %v1189, %v1188
      %v1209 = vpack.c.b16 %v1191, %v1190
      %v1210 = vpack.c.b16 %v1193, %v1192
      %v1211 = vpack.c.b16 %v1195, %v1194
      %v1244 = vunpack.c.l.b16 %v1100
      %v1245 = vunpack.c.l.b16 %v1101
      %v1246 = vunpack.c.l.b16 %v1102
      %v1247 = vunpack.c.l.b16 %v1103
      %v1248 = vunpack.c.l.b16 %v1104
      %v1249 = vunpack.c.l.b16 %v1105
      %v1250 = vunpack.c.l.b16 %v1106
      %v1251 = vunpack.c.l.b16 %v1107
      %v1252 = vunpack.c.l.b16 %v1108
      %v1253 = vunpack.c.l.b16 %v1109
      %v1254 = vunpack.c.l.b16 %v1110
      %v1255 = vunpack.c.l.b16 %v1111
      %v1256 = vunpack.c.l.b16 %v1112
      %v1257 = vunpack.c.l.b16 %v1113
      %v1258 = vunpack.c.l.b16 %v1114
      %v1259 = vunpack.c.l.b16 %v1115
      %v1260 = vunpack.c.l.b16 %v1116
      %v1261 = vunpack.c.l.b16 %v1117
      %v1262 = vunpack.c.l.b16 %v1118
      %v1263 = vunpack.c.l.b16 %v1119
      %v1264 = vunpack.c.l.b16 %v1120
      %v1265 = vunpack.c.l.b16 %v1121
      %v1266 = vunpack.c.l.b16 %v1122
      %v1267 = vunpack.c.l.b16 %v1123
      %v1268 = vunpack.c.l.b16 %v1124
      %v1269 = vunpack.c.l.b16 %v1125
      %v1270 = vunpack.c.l.b16 %v1126
      %v1271 = vunpack.c.l.b16 %v1127
      %v1272 = vunpack.c.l.b16 %v1128
      %v1273 = vunpack.c.l.b16 %v1129
      %v1274 = vunpack.c.l.b16 %v1130
      %v1275 = vunpack.c.l.b16 %v1131
      %v1276 = vpack.c.b16 %v1245, %v1244
      %v1277 = vpack.c.b16 %v1247, %v1246
      %v1278 = vpack.c.b16 %v1249, %v1248
      %v1279 = vpack.c.b16 %v1251, %v1250
      %v1280 = vpack.c.b16 %v1253, %v1252
      %v1281 = vpack.c.b16 %v1255, %v1254
      %v1282 = vpack.c.b16 %v1257, %v1256
      %v1283 = vpack.c.b16 %v1259, %v1258
      %v1284 = vpack.c.b16 %v1261, %v1260
      %v1285 = vpack.c.b16 %v1263, %v1262
      %v1286 = vpack.c.b16 %v1265, %v1264
      %v1287 = vpack.c.b16 %v1267, %v1266
      %v1288 = vpack.c.b16 %v1269, %v1268
      %v1289 = vpack.c.b16 %v1271, %v1270
      %v1290 = vpack.c.b16 %v1273, %v1272
      %v1291 = vpack.c.b16 %v1275, %v1274
      %1292 = vrot.lane.b32.xlu0 %v1276, 32
      %v1293 = vpop.permute.xlu0 %1292
      %1294 = vrot.lane.b32.xlu0 %v1277, 32
      %v1295 = vpop.permute.xlu0 %1294
      %1296 = vrot.lane.b32.xlu0 %v1278, 32
      %v1297 = vpop.permute.xlu0 %1296
      %1298 = vrot.lane.b32.xlu0 %v1279, 32
      %v1299 = vpop.permute.xlu0 %1298
      %1300 = vrot.lane.b32.xlu0 %v1280, 32
      %v1301 = vpop.permute.xlu0 %1300
      %1302 = vrot.lane.b32.xlu0 %v1281, 32
      %v1303 = vpop.permute.xlu0 %1302
      %1304 = vrot.lane.b32.xlu0 %v1282, 32
      %v1305 = vpop.permute.xlu0 %1304
      %1306 = vrot.lane.b32.xlu0 %v1283, 32
      %v1307 = vpop.permute.xlu0 %1306
      %1308 = vrot.lane.b32.xlu0 %v1284, 32
      %v1309 = vpop.permute.xlu0 %1308
      %1310 = vrot.lane.b32.xlu0 %v1285, 32
      %v1311 = vpop.permute.xlu0 %1310
      %1312 = vrot.lane.b32.xlu0 %v1286, 32
      %v1313 = vpop.permute.xlu0 %1312
      %1314 = vrot.lane.b32.xlu0 %v1287, 32
      %v1315 = vpop.permute.xlu0 %1314
      %1316 = vrot.lane.b32.xlu0 %v1288, 32
      %v1317 = vpop.permute.xlu0 %1316
      %1318 = vrot.lane.b32.xlu0 %v1289, 32
      %v1319 = vpop.permute.xlu0 %1318
      %1320 = vrot.lane.b32.xlu0 %v1290, 32
      %v1321 = vpop.permute.xlu0 %1320
      %1322 = vrot.lane.b32.xlu0 %v1291, 32
      %v1323 = vpop.permute.xlu0 %1322
      %vm1324 = vcmask 261120
      %v1327 = vsel %vm1324, %v1196, %v1293
      %v1330 = vsel %vm1324, %v1197, %v1295
      %v1333 = vsel %vm1324, %v1198, %v1297
      %v1336 = vsel %vm1324, %v1199, %v1299
      %v1339 = vsel %vm1324, %v1200, %v1301
      %v1342 = vsel %vm1324, %v1201, %v1303
      %v1345 = vsel %vm1324, %v1202, %v1305
      %v1348 = vsel %vm1324, %v1203, %v1307
      %v1351 = vsel %vm1324, %v1204, %v1309
      %v1354 = vsel %vm1324, %v1205, %v1311
      %v1357 = vsel %vm1324, %v1206, %v1313
      %v1360 = vsel %vm1324, %v1207, %v1315
      %v1363 = vsel %vm1324, %v1208, %v1317
      %v1366 = vsel %vm1324, %v1209, %v1319
      %v1369 = vsel %vm1324, %v1210, %v1321
      %v1372 = vsel %vm1324, %v1211, %v1323
      %v1373 = vld [vmem:[%s6] sm:$0xf]
      %v1374 = vld [vmem:[%s6 + $0x4] sm:$0x3]
      %v1375 = vld [vmem:[%s6 + $0x6] sm:$0x1]
      %v1376 = vld [vmem:[%s3] sm:$0xff]
      %v1377 = vld [vmem:[%s3 + $0x8] sm:$0xff]
      %v1378 = vld [vmem:[%s3 + $0x10] sm:$0xff]
      %v1379 = vld [vmem:[%s3 + $0x18] sm:$0xff]
      %v1380 = vld [vmem:[%s3 + $0x20] sm:$0xff]
      %v1381 = vld [vmem:[%s3 + $0x28] sm:$0xff]
      %v1382 = vld [vmem:[%s3 + $0x30] sm:$0xff]
      %v1383 = vld [vmem:[%s3 + $0x38] sm:$0xff]
      %v1384 = vld [vmem:[%s3 + $0x40] sm:$0xff]
      %v1385 = vld [vmem:[%s3 + $0x48] sm:$0xff]
      %v1386 = vld [vmem:[%s3 + $0x50] sm:$0xff]
      %v1387 = vld [vmem:[%s3 + $0x58] sm:$0xff]
      %v1388 = vld [vmem:[%s3 + $0x60] sm:$0xff]
      %v1389 = vld [vmem:[%s3 + $0x68] sm:$0xff]
      %v1390 = vld [vmem:[%s3 + $0x70] sm:$0xff]
      %v1391 = vld [vmem:[%s3 + $0x78] sm:$0xff]
      %v1393 = vperm.slane %v1373, 0
      %v1394 = vperm.slane %v1373, 1
      %v1395 = vperm.slane %v1373, 2
      %v1396 = vperm.slane %v1373, 3
      %v1417 = vunpack.c.l.b16 %v1376
      %v1418 = vunpack.c.h.b16 %v1376
      %v1419 = vunpack.c.l.b16 %v1377
      %v1420 = vunpack.c.h.b16 %v1377
      %v1421 = vunpack.c.l.b16 %v1378
      %v1422 = vunpack.c.h.b16 %v1378
      %v1423 = vunpack.c.l.b16 %v1379
      %v1424 = vunpack.c.h.b16 %v1379
      %v1425 = vunpack.c.l.b16 %v1380
      %v1426 = vunpack.c.h.b16 %v1380
      %v1427 = vunpack.c.l.b16 %v1381
      %v1428 = vunpack.c.h.b16 %v1381
      %v1429 = vunpack.c.l.b16 %v1382
      %v1430 = vunpack.c.h.b16 %v1382
      %v1431 = vunpack.c.l.b16 %v1383
      %v1432 = vunpack.c.h.b16 %v1383
      %v1433 = vunpack.c.l.b16 %v1384
      %v1434 = vunpack.c.h.b16 %v1384
      %v1435 = vunpack.c.l.b16 %v1385
      %v1436 = vunpack.c.h.b16 %v1385
      %v1437 = vunpack.c.l.b16 %v1386
      %v1438 = vunpack.c.h.b16 %v1386
      %v1439 = vunpack.c.l.b16 %v1387
      %v1440 = vunpack.c.h.b16 %v1387
      %v1441 = vunpack.c.l.b16 %v1388
      %v1442 = vunpack.c.h.b16 %v1388
      %v1443 = vunpack.c.l.b16 %v1389
      %v1444 = vunpack.c.h.b16 %v1389
      %v1445 = vunpack.c.l.b16 %v1390
      %v1446 = vunpack.c.h.b16 %v1390
      %v1447 = vunpack.c.l.b16 %v1391
      %v1448 = vunpack.c.h.b16 %v1391
      %v1449 = vpack.c.b16 %v1421, %v1417
      %v1450 = vpack.c.b16 %v1422, %v1418
      %v1451 = vpack.c.b16 %v1423, %v1419
      %v1452 = vpack.c.b16 %v1424, %v1420
      %v1453 = vpack.c.b16 %v1429, %v1425
      %v1454 = vpack.c.b16 %v1430, %v1426
      %v1455 = vpack.c.b16 %v1431, %v1427
      %v1456 = vpack.c.b16 %v1432, %v1428
      %v1457 = vpack.c.b16 %v1437, %v1433
      %v1458 = vpack.c.b16 %v1438, %v1434
      %v1459 = vpack.c.b16 %v1439, %v1435
      %v1460 = vpack.c.b16 %v1440, %v1436
      %v1461 = vpack.c.b16 %v1445, %v1441
      %v1462 = vpack.c.b16 %v1446, %v1442
      %v1463 = vpack.c.b16 %v1447, %v1443
      %v1464 = vpack.c.b16 %v1448, %v1444
      %vm1481 = vcmask 523264
      %v1482 = vsel %vm1481, %v1327, 0
      %v1484 = vsel %vm1481, %v1330, 0
      %v1486 = vsel %vm1481, %v1333, 0
      %v1488 = vsel %vm1481, %v1336, 0
      %v1490 = vsel %vm1481, %v1339, 0
      %v1492 = vsel %vm1481, %v1342, 0
      %v1494 = vsel %vm1481, %v1345, 0
      %v1496 = vsel %vm1481, %v1348, 0
      %v1498 = vsel %vm1481, %v1351, 0
      %v1500 = vsel %vm1481, %v1354, 0
      %v1502 = vsel %vm1481, %v1357, 0
      %v1504 = vsel %vm1481, %v1360, 0
      %v1506 = vsel %vm1481, %v1363, 0
      %v1508 = vsel %vm1481, %v1366, 0
      %v1510 = vsel %vm1481, %v1369, 0
      %v1512 = vsel %vm1481, %v1372, 0
      %1514 = vmatpush.bf16.msra.mxu0 0
      %1515 = vmatpush.bf16.msra.mxu0 0
      %1516 = vmatpush.bf16.msra.mxu0 0
      %1517 = vmatpush.bf16.msra.mxu0 0
      %1518 = vmatpush.bf16.msra.mxu0 %v1461
      %1519 = vmatpush.bf16.msra.mxu0 %v1457
      %1520 = vmatpush.bf16.msra.mxu0 %v1453
      %1521 = vmatpush.bf16.msra.mxu0 %v1449
      %1522 = vmatmul.bf16.gmra.mxu0 %v1482
      %v1523 = vpop.f32.mrf.mxu0
      %v1524 = vadd.f32 %v1393, %v1523
      %v1525 = vpop.f32.mrf.mxu0
      %v1526 = vadd.f32 %v1393, %v1525
      %1527 = vmatmul.bf16.gmra.mxu0 %v1484
      %v1528 = vpop.f32.mrf.mxu0
      %v1529 = vadd.f32 %v1393, %v1528
      %v1530 = vpop.f32.mrf.mxu0
      %v1531 = vadd.f32 %v1393, %v1530
      %1532 = vmatmul.bf16.gmra.mxu0 %v1486
      %v1533 = vpop.f32.mrf.mxu0
      %v1534 = vadd.f32 %v1393, %v1533
      %v1535 = vpop.f32.mrf.mxu0
      %v1536 = vadd.f32 %v1393, %v1535
      %1537 = vmatmul.bf16.gmra.mxu0 %v1488
      %v1538 = vpop.f32.mrf.mxu0
      %v1539 = vadd.f32 %v1393, %v1538
      %v1540 = vpop.f32.mrf.mxu0
      %v1541 = vadd.f32 %v1393, %v1540
      %1542 = vmatmul.bf16.gmra.mxu0 %v1490
      %v1543 = vpop.f32.mrf.mxu0
      %v1544 = vadd.f32 %v1393, %v1543
      %v1545 = vpop.f32.mrf.mxu0
      %v1546 = vadd.f32 %v1393, %v1545
      %1547 = vmatmul.bf16.gmra.mxu0 %v1492
      %v1548 = vpop.f32.mrf.mxu0
      %v1549 = vadd.f32 %v1393, %v1548
      %v1550 = vpop.f32.mrf.mxu0
      %v1551 = vadd.f32 %v1393, %v1550
      %1552 = vmatmul.bf16.gmra.mxu0 %v1494
      %v1553 = vpop.f32.mrf.mxu0
      %v1554 = vadd.f32 %v1393, %v1553
      %v1555 = vpop.f32.mrf.mxu0
      %v1556 = vadd.f32 %v1393, %v1555
      %1557 = vmatmul.bf16.gmra.mxu0 %v1496
      %v1558 = vpop.f32.mrf.mxu0
      %v1559 = vadd.f32 %v1393, %v1558
      %v1560 = vpop.f32.mrf.mxu0
      %v1561 = vadd.f32 %v1393, %v1560
      %1562 = vmatmul.bf16.gmra.mxu0 %v1498
      %v1563 = vpop.f32.mrf.mxu0
      %v1564 = vadd.f32 %v1393, %v1563
      %v1565 = vpop.f32.mrf.mxu0
      %v1566 = vadd.f32 %v1393, %v1565
      %1567 = vmatmul.bf16.gmra.mxu0 %v1500
      %v1568 = vpop.f32.mrf.mxu0
      %v1569 = vadd.f32 %v1393, %v1568
      %v1570 = vpop.f32.mrf.mxu0
      %v1571 = vadd.f32 %v1393, %v1570
      %1572 = vmatmul.bf16.gmra.mxu0 %v1502
      %v1573 = vpop.f32.mrf.mxu0
      %v1574 = vadd.f32 %v1393, %v1573
      %v1575 = vpop.f32.mrf.mxu0
      %v1576 = vadd.f32 %v1393, %v1575
      %1577 = vmatmul.bf16.gmra.mxu0 %v1504
      %v1578 = vpop.f32.mrf.mxu0
      %v1579 = vadd.f32 %v1393, %v1578
      %v1580 = vpop.f32.mrf.mxu0
      %v1581 = vadd.f32 %v1393, %v1580
      %1582 = vmatmul.bf16.gmra.mxu0 %v1506
      %v1583 = vpop.f32.mrf.mxu0
      %v1584 = vadd.f32 %v1393, %v1583
      %v1585 = vpop.f32.mrf.mxu0
      %v1586 = vadd.f32 %v1393, %v1585
      %1587 = vmatmul.bf16.gmra.mxu0 %v1508
      %v1588 = vpop.f32.mrf.mxu0
      %v1589 = vadd.f32 %v1393, %v1588
      %v1590 = vpop.f32.mrf.mxu0
      %v1591 = vadd.f32 %v1393, %v1590
      %1592 = vmatmul.bf16.gmra.mxu0 %v1510
      %v1593 = vpop.f32.mrf.mxu0
      %v1594 = vadd.f32 %v1393, %v1593
      %v1595 = vpop.f32.mrf.mxu0
      %v1596 = vadd.f32 %v1393, %v1595
      %1597 = vmatmul.bf16.gmra.mxu0 %v1512
      %v1598 = vpop.f32.mrf.mxu0
      %v1599 = vadd.f32 %v1393, %v1598
      %v1600 = vpop.f32.mrf.mxu0
      %v1601 = vadd.f32 %v1393, %v1600
      %1602 = vdwg.mxu0
      %1603 = vmatpush.bf16.msra.mxu0 0
      %1604 = vmatpush.bf16.msra.mxu0 0
      %1605 = vmatpush.bf16.msra.mxu0 0
      %1606 = vmatpush.bf16.msra.mxu0 0
      %1607 = vmatpush.bf16.msra.mxu0 %v1462
      %1608 = vmatpush.bf16.msra.mxu0 %v1458
      %1609 = vmatpush.bf16.msra.mxu0 %v1454
      %1610 = vmatpush.bf16.msra.mxu0 %v1450
      %1611 = vmatmul.bf16.gmra.mxu0 %v1482
      %v1612 = vpop.f32.mrf.mxu0
      %v1613 = vadd.f32 %v1394, %v1612
      %v1614 = vpop.f32.mrf.mxu0
      %v1615 = vadd.f32 %v1394, %v1614
      %1616 = vmatmul.bf16.gmra.mxu0 %v1484
      %v1617 = vpop.f32.mrf.mxu0
      %v1618 = vadd.f32 %v1394, %v1617
      %v1619 = vpop.f32.mrf.mxu0
      %v1620 = vadd.f32 %v1394, %v1619
      %1621 = vmatmul.bf16.gmra.mxu0 %v1486
      %v1622 = vpop.f32.mrf.mxu0
      %v1623 = vadd.f32 %v1394, %v1622
      %v1624 = vpop.f32.mrf.mxu0
      %v1625 = vadd.f32 %v1394, %v1624
      %1626 = vmatmul.bf16.gmra.mxu0 %v1488
      %v1627 = vpop.f32.mrf.mxu0
      %v1628 = vadd.f32 %v1394, %v1627
      %v1629 = vpop.f32.mrf.mxu0
      %v1630 = vadd.f32 %v1394, %v1629
      %1631 = vmatmul.bf16.gmra.mxu0 %v1490
      %v1632 = vpop.f32.mrf.mxu0
      %v1633 = vadd.f32 %v1394, %v1632
      %v1634 = vpop.f32.mrf.mxu0
      %v1635 = vadd.f32 %v1394, %v1634
      %1636 = vmatmul.bf16.gmra.mxu0 %v1492
      %v1637 = vpop.f32.mrf.mxu0
      %v1638 = vadd.f32 %v1394, %v1637
      %v1639 = vpop.f32.mrf.mxu0
      %v1640 = vadd.f32 %v1394, %v1639
      %1641 = vmatmul.bf16.gmra.mxu0 %v1494
      %v1642 = vpop.f32.mrf.mxu0
      %v1643 = vadd.f32 %v1394, %v1642
      %v1644 = vpop.f32.mrf.mxu0
      %v1645 = vadd.f32 %v1394, %v1644
      %1646 = vmatmul.bf16.gmra.mxu0 %v1496
      %v1647 = vpop.f32.mrf.mxu0
      %v1648 = vadd.f32 %v1394, %v1647
      %v1649 = vpop.f32.mrf.mxu0
      %v1650 = vadd.f32 %v1394, %v1649
      %1651 = vmatmul.bf16.gmra.mxu0 %v1498
      %v1652 = vpop.f32.mrf.mxu0
      %v1653 = vadd.f32 %v1394, %v1652
      %v1654 = vpop.f32.mrf.mxu0
      %v1655 = vadd.f32 %v1394, %v1654
      %1656 = vmatmul.bf16.gmra.mxu0 %v1500
      %v1657 = vpop.f32.mrf.mxu0
      %v1658 = vadd.f32 %v1394, %v1657
      %v1659 = vpop.f32.mrf.mxu0
      %v1660 = vadd.f32 %v1394, %v1659
      %1661 = vmatmul.bf16.gmra.mxu0 %v1502
      %v1662 = vpop.f32.mrf.mxu0
      %v1663 = vadd.f32 %v1394, %v1662
      %v1664 = vpop.f32.mrf.mxu0
      %v1665 = vadd.f32 %v1394, %v1664
      %1666 = vmatmul.bf16.gmra.mxu0 %v1504
      %v1667 = vpop.f32.mrf.mxu0
      %v1668 = vadd.f32 %v1394, %v1667
      %v1669 = vpop.f32.mrf.mxu0
      %v1670 = vadd.f32 %v1394, %v1669
      %1671 = vmatmul.bf16.gmra.mxu0 %v1506
      %v1672 = vpop.f32.mrf.mxu0
      %v1673 = vadd.f32 %v1394, %v1672
      %v1674 = vpop.f32.mrf.mxu0
      %v1675 = vadd.f32 %v1394, %v1674
      %1676 = vmatmul.bf16.gmra.mxu0 %v1508
      %v1677 = vpop.f32.mrf.mxu0
      %v1678 = vadd.f32 %v1394, %v1677
      %v1679 = vpop.f32.mrf.mxu0
      %v1680 = vadd.f32 %v1394, %v1679
      %1681 = vmatmul.bf16.gmra.mxu0 %v1510
      %v1682 = vpop.f32.mrf.mxu0
      %v1683 = vadd.f32 %v1394, %v1682
      %v1684 = vpop.f32.mrf.mxu0
      %v1685 = vadd.f32 %v1394, %v1684
      %1686 = vmatmul.bf16.gmra.mxu0 %v1512
      %v1687 = vpop.f32.mrf.mxu0
      %v1688 = vadd.f32 %v1394, %v1687
      %v1689 = vpop.f32.mrf.mxu0
      %v1690 = vadd.f32 %v1394, %v1689
      %1691 = vdwg.mxu0
      %1692 = vmatpush.bf16.msra.mxu0 0
      %1693 = vmatpush.bf16.msra.mxu0 0
      %1694 = vmatpush.bf16.msra.mxu0 0
      %1695 = vmatpush.bf16.msra.mxu0 0
      %1696 = vmatpush.bf16.msra.mxu0 %v1463
      %1697 = vmatpush.bf16.msra.mxu0 %v1459
      %1698 = vmatpush.bf16.msra.mxu0 %v1455
      %1699 = vmatpush.bf16.msra.mxu0 %v1451
      %1700 = vmatmul.bf16.gmra.mxu0 %v1482
      %v1701 = vpop.f32.mrf.mxu0
      %v1702 = vadd.f32 %v1395, %v1701
      %v1703 = vpop.f32.mrf.mxu0
      %v1704 = vadd.f32 %v1395, %v1703
      %1705 = vmatmul.bf16.gmra.mxu0 %v1484
      %v1706 = vpop.f32.mrf.mxu0
      %v1707 = vadd.f32 %v1395, %v1706
      %v1708 = vpop.f32.mrf.mxu0
      %v1709 = vadd.f32 %v1395, %v1708
      %1710 = vmatmul.bf16.gmra.mxu0 %v1486
      %v1711 = vpop.f32.mrf.mxu0
      %v1712 = vadd.f32 %v1395, %v1711
      %v1713 = vpop.f32.mrf.mxu0
      %v1714 = vadd.f32 %v1395, %v1713
      %1715 = vmatmul.bf16.gmra.mxu0 %v1488
      %v1716 = vpop.f32.mrf.mxu0
      %v1717 = vadd.f32 %v1395, %v1716
      %v1718 = vpop.f32.mrf.mxu0
      %v1719 = vadd.f32 %v1395, %v1718
      %1720 = vmatmul.bf16.gmra.mxu0 %v1490
      %v1721 = vpop.f32.mrf.mxu0
      %v1722 = vadd.f32 %v1395, %v1721
      %v1723 = vpop.f32.mrf.mxu0
      %v1724 = vadd.f32 %v1395, %v1723
      %1725 = vmatmul.bf16.gmra.mxu0 %v1492
      %v1726 = vpop.f32.mrf.mxu0
      %v1727 = vadd.f32 %v1395, %v1726
      %v1728 = vpop.f32.mrf.mxu0
      %v1729 = vadd.f32 %v1395, %v1728
      %1730 = vmatmul.bf16.gmra.mxu0 %v1494
      %v1731 = vpop.f32.mrf.mxu0
      %v1732 = vadd.f32 %v1395, %v1731
      %v1733 = vpop.f32.mrf.mxu0
      %v1734 = vadd.f32 %v1395, %v1733
      %1735 = vmatmul.bf16.gmra.mxu0 %v1496
      %v1736 = vpop.f32.mrf.mxu0
      %v1737 = vadd.f32 %v1395, %v1736
      %v1738 = vpop.f32.mrf.mxu0
      %v1739 = vadd.f32 %v1395, %v1738
      %1740 = vmatmul.bf16.gmra.mxu0 %v1498
      %v1741 = vpop.f32.mrf.mxu0
      %v1742 = vadd.f32 %v1395, %v1741
      %v1743 = vpop.f32.mrf.mxu0
      %v1744 = vadd.f32 %v1395, %v1743
      %1745 = vmatmul.bf16.gmra.mxu0 %v1500
      %v1746 = vpop.f32.mrf.mxu0
      %v1747 = vadd.f32 %v1395, %v1746
      %v1748 = vpop.f32.mrf.mxu0
      %v1749 = vadd.f32 %v1395, %v1748
      %1750 = vmatmul.bf16.gmra.mxu0 %v1502
      %v1751 = vpop.f32.mrf.mxu0
      %v1752 = vadd.f32 %v1395, %v1751
      %v1753 = vpop.f32.mrf.mxu0
      %v1754 = vadd.f32 %v1395, %v1753
      %1755 = vmatmul.bf16.gmra.mxu0 %v1504
      %v1756 = vpop.f32.mrf.mxu0
      %v1757 = vadd.f32 %v1395, %v1756
      %v1758 = vpop.f32.mrf.mxu0
      %v1759 = vadd.f32 %v1395, %v1758
      %1760 = vmatmul.bf16.gmra.mxu0 %v1506
      %v1761 = vpop.f32.mrf.mxu0
      %v1762 = vadd.f32 %v1395, %v1761
      %v1763 = vpop.f32.mrf.mxu0
      %v1764 = vadd.f32 %v1395, %v1763
      %1765 = vmatmul.bf16.gmra.mxu0 %v1508
      %v1766 = vpop.f32.mrf.mxu0
      %v1767 = vadd.f32 %v1395, %v1766
      %v1768 = vpop.f32.mrf.mxu0
      %v1769 = vadd.f32 %v1395, %v1768
      %1770 = vmatmul.bf16.gmra.mxu0 %v1510
      %v1771 = vpop.f32.mrf.mxu0
      %v1772 = vadd.f32 %v1395, %v1771
      %v1773 = vpop.f32.mrf.mxu0
      %v1774 = vadd.f32 %v1395, %v1773
      %1775 = vmatmul.bf16.gmra.mxu0 %v1512
      %v1776 = vpop.f32.mrf.mxu0
      %v1777 = vadd.f32 %v1395, %v1776
      %v1778 = vpop.f32.mrf.mxu0
      %v1779 = vadd.f32 %v1395, %v1778
      %1780 = vdwg.mxu0
      %1781 = vmatpush.bf16.msra.mxu0 0
      %1782 = vmatpush.bf16.msra.mxu0 0
      %1783 = vmatpush.bf16.msra.mxu0 0
      %1784 = vmatpush.bf16.msra.mxu0 0
      %1785 = vmatpush.bf16.msra.mxu0 %v1464
      %1786 = vmatpush.bf16.msra.mxu0 %v1460
      %1787 = vmatpush.bf16.msra.mxu0 %v1456
      %1788 = vmatpush.bf16.msra.mxu0 %v1452
      %1789 = vmatmul.bf16.gmra.mxu0 %v1482
      %v1790 = vpop.f32.mrf.mxu0
      %v1791 = vadd.f32 %v1396, %v1790
      %v1792 = vpop.f32.mrf.mxu0
      %v1793 = vadd.f32 %v1396, %v1792
      %1794 = vmatmul.bf16.gmra.mxu0 %v1484
      %v1795 = vpop.f32.mrf.mxu0
      %v1796 = vadd.f32 %v1396, %v1795
      %v1797 = vpop.f32.mrf.mxu0
      %v1798 = vadd.f32 %v1396, %v1797
      %1799 = vmatmul.bf16.gmra.mxu0 %v1486
      %v1800 = vpop.f32.mrf.mxu0
      %v1801 = vadd.f32 %v1396, %v1800
      %v1802 = vpop.f32.mrf.mxu0
      %v1803 = vadd.f32 %v1396, %v1802
      %1804 = vmatmul.bf16.gmra.mxu0 %v1488
      %v1805 = vpop.f32.mrf.mxu0
      %v1806 = vadd.f32 %v1396, %v1805
      %v1807 = vpop.f32.mrf.mxu0
      %v1808 = vadd.f32 %v1396, %v1807
      %1809 = vmatmul.bf16.gmra.mxu0 %v1490
      %v1810 = vpop.f32.mrf.mxu0
      %v1811 = vadd.f32 %v1396, %v1810
      %v1812 = vpop.f32.mrf.mxu0
      %v1813 = vadd.f32 %v1396, %v1812
      %1814 = vmatmul.bf16.gmra.mxu0 %v1492
      %v1815 = vpop.f32.mrf.mxu0
      %v1816 = vadd.f32 %v1396, %v1815
      %v1817 = vpop.f32.mrf.mxu0
      %v1818 = vadd.f32 %v1396, %v1817
      %1819 = vmatmul.bf16.gmra.mxu0 %v1494
      %v1820 = vpop.f32.mrf.mxu0
      %v1821 = vadd.f32 %v1396, %v1820
      %v1822 = vpop.f32.mrf.mxu0
      %v1823 = vadd.f32 %v1396, %v1822
      %1824 = vmatmul.bf16.gmra.mxu0 %v1496
      %v1825 = vpop.f32.mrf.mxu0
      %v1826 = vadd.f32 %v1396, %v1825
      %v1827 = vpop.f32.mrf.mxu0
      %v1828 = vadd.f32 %v1396, %v1827
      %1829 = vmatmul.bf16.gmra.mxu0 %v1498
      %v1830 = vpop.f32.mrf.mxu0
      %v1831 = vadd.f32 %v1396, %v1830
      %v1832 = vpop.f32.mrf.mxu0
      %v1833 = vadd.f32 %v1396, %v1832
      %1834 = vmatmul.bf16.gmra.mxu0 %v1500
      %v1835 = vpop.f32.mrf.mxu0
      %v1836 = vadd.f32 %v1396, %v1835
      %v1837 = vpop.f32.mrf.mxu0
      %v1838 = vadd.f32 %v1396, %v1837
      %1839 = vmatmul.bf16.gmra.mxu0 %v1502
      %v1840 = vpop.f32.mrf.mxu0
      %v1841 = vadd.f32 %v1396, %v1840
      %v1842 = vpop.f32.mrf.mxu0
      %v1843 = vadd.f32 %v1396, %v1842
      %1844 = vmatmul.bf16.gmra.mxu0 %v1504
      %v1845 = vpop.f32.mrf.mxu0
      %v1846 = vadd.f32 %v1396, %v1845
      %v1847 = vpop.f32.mrf.mxu0
      %v1848 = vadd.f32 %v1396, %v1847
      %1849 = vmatmul.bf16.gmra.mxu0 %v1506
      %v1850 = vpop.f32.mrf.mxu0
      %v1851 = vadd.f32 %v1396, %v1850
      %v1852 = vpop.f32.mrf.mxu0
      %v1853 = vadd.f32 %v1396, %v1852
      %1854 = vmatmul.bf16.gmra.mxu0 %v1508
      %v1855 = vpop.f32.mrf.mxu0
      %v1856 = vadd.f32 %v1396, %v1855
      %v1857 = vpop.f32.mrf.mxu0
      %v1858 = vadd.f32 %v1396, %v1857
      %1859 = vmatmul.bf16.gmra.mxu0 %v1510
      %v1860 = vpop.f32.mrf.mxu0
      %v1861 = vadd.f32 %v1396, %v1860
      %v1862 = vpop.f32.mrf.mxu0
      %v1863 = vadd.f32 %v1396, %v1862
      %1864 = vmatmul.bf16.gmra.mxu0 %v1512
      %v1865 = vpop.f32.mrf.mxu0
      %v1866 = vadd.f32 %v1396, %v1865
      %v1867 = vpop.f32.mrf.mxu0
      %v1868 = vadd.f32 %v1396, %v1867
      %1869 = vdwg.mxu0
      %v1870 = vxor.u32 %v1524, 2147483648
      %v1871 = vxor.u32 %v1613, 2147483648
      %v1872 = vxor.u32 %v1702, 2147483648
      %v1873 = vxor.u32 %v1791, 2147483648
      %v1874 = vxor.u32 %v1526, 2147483648
      %v1875 = vxor.u32 %v1615, 2147483648
      %v1876 = vxor.u32 %v1704, 2147483648
      %v1877 = vxor.u32 %v1793, 2147483648
      %v1878 = vxor.u32 %v1529, 2147483648
      %v1879 = vxor.u32 %v1618, 2147483648
      %v1880 = vxor.u32 %v1707, 2147483648
      %v1881 = vxor.u32 %v1796, 2147483648
      %v1882 = vxor.u32 %v1531, 2147483648
      %v1883 = vxor.u32 %v1620, 2147483648
      %v1884 = vxor.u32 %v1709, 2147483648
      %v1885 = vxor.u32 %v1798, 2147483648
      %v1886 = vxor.u32 %v1534, 2147483648
      %v1887 = vxor.u32 %v1623, 2147483648
      %v1888 = vxor.u32 %v1712, 2147483648
      %v1889 = vxor.u32 %v1801, 2147483648
      %v1890 = vxor.u32 %v1536, 2147483648
      %v1891 = vxor.u32 %v1625, 2147483648
      %v1892 = vxor.u32 %v1714, 2147483648
      %v1893 = vxor.u32 %v1803, 2147483648
      %v1894 = vxor.u32 %v1539, 2147483648
      %v1895 = vxor.u32 %v1628, 2147483648
      %v1896 = vxor.u32 %v1717, 2147483648
      %v1897 = vxor.u32 %v1806, 2147483648
      %v1898 = vxor.u32 %v1541, 2147483648
      %v1899 = vxor.u32 %v1630, 2147483648
      %v1900 = vxor.u32 %v1719, 2147483648
      %v1901 = vxor.u32 %v1808, 2147483648
      %v1902 = vxor.u32 %v1544, 2147483648
      %v1903 = vxor.u32 %v1633, 2147483648
      %v1904 = vxor.u32 %v1722, 2147483648
      %v1905 = vxor.u32 %v1811, 2147483648
      %v1906 = vxor.u32 %v1546, 2147483648
      %v1907 = vxor.u32 %v1635, 2147483648
      %v1908 = vxor.u32 %v1724, 2147483648
      %v1909 = vxor.u32 %v1813, 2147483648
      %v1910 = vxor.u32 %v1549, 2147483648
      %v1911 = vxor.u32 %v1638, 2147483648
      %v1912 = vxor.u32 %v1727, 2147483648
      %v1913 = vxor.u32 %v1816, 2147483648
      %v1914 = vxor.u32 %v1551, 2147483648
      %v1915 = vxor.u32 %v1640, 2147483648
      %v1916 = vxor.u32 %v1729, 2147483648
      %v1917 = vxor.u32 %v1818, 2147483648
      %v1918 = vxor.u32 %v1554, 2147483648
      %v1919 = vxor.u32 %v1643, 2147483648
      %v1920 = vxor.u32 %v1732, 2147483648
      %v1921 = vxor.u32 %v1821, 2147483648
      %v1922 = vxor.u32 %v1556, 2147483648
      %v1923 = vxor.u32 %v1645, 2147483648
      %v1924 = vxor.u32 %v1734, 2147483648
      %v1925 = vxor.u32 %v1823, 2147483648
      %v1926 = vxor.u32 %v1559, 2147483648
      %v1927 = vxor.u32 %v1648, 2147483648
      %v1928 = vxor.u32 %v1737, 2147483648
      %v1929 = vxor.u32 %v1826, 2147483648
      %v1930 = vxor.u32 %v1561, 2147483648
      %v1931 = vxor.u32 %v1650, 2147483648
      %v1932 = vxor.u32 %v1739, 2147483648
      %v1933 = vxor.u32 %v1828, 2147483648
      %v1934 = vxor.u32 %v1564, 2147483648
      %v1935 = vxor.u32 %v1653, 2147483648
      %v1936 = vxor.u32 %v1742, 2147483648
      %v1937 = vxor.u32 %v1831, 2147483648
      %v1938 = vxor.u32 %v1566, 2147483648
      %v1939 = vxor.u32 %v1655, 2147483648
      %v1940 = vxor.u32 %v1744, 2147483648
      %v1941 = vxor.u32 %v1833, 2147483648
      %v1942 = vxor.u32 %v1569, 2147483648
      %v1943 = vxor.u32 %v1658, 2147483648
      %v1944 = vxor.u32 %v1747, 2147483648
      %v1945 = vxor.u32 %v1836, 2147483648
      %v1946 = vxor.u32 %v1571, 2147483648
      %v1947 = vxor.u32 %v1660, 2147483648
      %v1948 = vxor.u32 %v1749, 2147483648
      %v1949 = vxor.u32 %v1838, 2147483648
      %v1950 = vxor.u32 %v1574, 2147483648
      %v1951 = vxor.u32 %v1663, 2147483648
      %v1952 = vxor.u32 %v1752, 2147483648
      %v1953 = vxor.u32 %v1841, 2147483648
      %v1954 = vxor.u32 %v1576, 2147483648
      %v1955 = vxor.u32 %v1665, 2147483648
      %v1956 = vxor.u32 %v1754, 2147483648
      %v1957 = vxor.u32 %v1843, 2147483648
      %v1958 = vxor.u32 %v1579, 2147483648
      %v1959 = vxor.u32 %v1668, 2147483648
      %v1960 = vxor.u32 %v1757, 2147483648
      %v1961 = vxor.u32 %v1846, 2147483648
      %v1962 = vxor.u32 %v1581, 2147483648
      %v1963 = vxor.u32 %v1670, 2147483648
      %v1964 = vxor.u32 %v1759, 2147483648
      %v1965 = vxor.u32 %v1848, 2147483648
      %v1966 = vxor.u32 %v1584, 2147483648
      %v1967 = vxor.u32 %v1673, 2147483648
      %v1968 = vxor.u32 %v1762, 2147483648
      %v1969 = vxor.u32 %v1851, 2147483648
      %v1970 = vxor.u32 %v1586, 2147483648
      %v1971 = vxor.u32 %v1675, 2147483648
      %v1972 = vxor.u32 %v1764, 2147483648
      %v1973 = vxor.u32 %v1853, 2147483648
      %v1974 = vxor.u32 %v1589, 2147483648
      %v1975 = vxor.u32 %v1678, 2147483648
      %v1976 = vxor.u32 %v1767, 2147483648
      %v1977 = vxor.u32 %v1856, 2147483648
      %v1978 = vxor.u32 %v1591, 2147483648
      %v1979 = vxor.u32 %v1680, 2147483648
      %v1980 = vxor.u32 %v1769, 2147483648
      %v1981 = vxor.u32 %v1858, 2147483648
      %v1982 = vxor.u32 %v1594, 2147483648
      %v1983 = vxor.u32 %v1683, 2147483648
      %v1984 = vxor.u32 %v1772, 2147483648
      %v1985 = vxor.u32 %v1861, 2147483648
      %v1986 = vxor.u32 %v1596, 2147483648
      %v1987 = vxor.u32 %v1685, 2147483648
      %v1988 = vxor.u32 %v1774, 2147483648
      %v1989 = vxor.u32 %v1863, 2147483648
      %v1990 = vxor.u32 %v1599, 2147483648
      %v1991 = vxor.u32 %v1688, 2147483648
      %v1992 = vxor.u32 %v1777, 2147483648
      %v1993 = vxor.u32 %v1866, 2147483648
      %v1994 = vxor.u32 %v1601, 2147483648
      %v1995 = vxor.u32 %v1690, 2147483648
      %v1996 = vxor.u32 %v1779, 2147483648
      %v1997 = vxor.u32 %v1868, 2147483648
      %v1998 = vmul.f32 %v1870, 1.442695
      %v1999 = vpow.pop %v1998
      %v2000 = vmul.f32 %v1871, 1.442695
      %v2001 = vpow.pop %v2000
      %v2002 = vmul.f32 %v1872, 1.442695
      %v2003 = vpow.pop %v2002
      %v2004 = vmul.f32 %v1873, 1.442695
      %v2005 = vpow.pop %v2004
      %v2006 = vmul.f32 %v1874, 1.442695
      %v2007 = vpow.pop %v2006
      %v2008 = vmul.f32 %v1875, 1.442695
      %v2009 = vpow.pop %v2008
      %v2010 = vmul.f32 %v1876, 1.442695
      %v2011 = vpow.pop %v2010
      %v2012 = vmul.f32 %v1877, 1.442695
      %v2013 = vpow.pop %v2012
      %v2014 = vmul.f32 %v1878, 1.442695
      %v2015 = vpow.pop %v2014
      %v2016 = vmul.f32 %v1879, 1.442695
      %v2017 = vpow.pop %v2016
      %v2018 = vmul.f32 %v1880, 1.442695
      %v2019 = vpow.pop %v2018
      %v2020 = vmul.f32 %v1881, 1.442695
      %v2021 = vpow.pop %v2020
      %v2022 = vmul.f32 %v1882, 1.442695
      %v2023 = vpow.pop %v2022
      %v2024 = vmul.f32 %v1883, 1.442695
      %v2025 = vpow.pop %v2024
      %v2026 = vmul.f32 %v1884, 1.442695
      %v2027 = vpow.pop %v2026
      %v2028 = vmul.f32 %v1885, 1.442695
      %v2029 = vpow.pop %v2028
      %v2030 = vmul.f32 %v1886, 1.442695
      %v2031 = vpow.pop %v2030
      %v2032 = vmul.f32 %v1887, 1.442695
      %v2033 = vpow.pop %v2032
      %v2034 = vmul.f32 %v1888, 1.442695
      %v2035 = vpow.pop %v2034
      %v2036 = vmul.f32 %v1889, 1.442695
      %v2037 = vpow.pop %v2036
      %v2038 = vmul.f32 %v1890, 1.442695
      %v2039 = vpow.pop %v2038
      %v2040 = vmul.f32 %v1891, 1.442695
      %v2041 = vpow.pop %v2040
      %v2042 = vmul.f32 %v1892, 1.442695
      %v2043 = vpow.pop %v2042
      %v2044 = vmul.f32 %v1893, 1.442695
      %v2045 = vpow.pop %v2044
      %v2046 = vmul.f32 %v1894, 1.442695
      %v2047 = vpow.pop %v2046
      %v2048 = vmul.f32 %v1895, 1.442695
      %v2049 = vpow.pop %v2048
      %v2050 = vmul.f32 %v1896, 1.442695
      %v2051 = vpow.pop %v2050
      %v2052 = vmul.f32 %v1897, 1.442695
      %v2053 = vpow.pop %v2052
      %v2054 = vmul.f32 %v1898, 1.442695
      %v2055 = vpow.pop %v2054
      %v2056 = vmul.f32 %v1899, 1.442695
      %v2057 = vpow.pop %v2056
      %v2058 = vmul.f32 %v1900, 1.442695
      %v2059 = vpow.pop %v2058
      %v2060 = vmul.f32 %v1901, 1.442695
      %v2061 = vpow.pop %v2060
      %v2062 = vmul.f32 %v1902, 1.442695
      %v2063 = vpow.pop %v2062
      %v2064 = vmul.f32 %v1903, 1.442695
      %v2065 = vpow.pop %v2064
      %v2066 = vmul.f32 %v1904, 1.442695
      %v2067 = vpow.pop %v2066
      %v2068 = vmul.f32 %v1905, 1.442695
      %v2069 = vpow.pop %v2068
      %v2070 = vmul.f32 %v1906, 1.442695
      %v2071 = vpow.pop %v2070
      %v2072 = vmul.f32 %v1907, 1.442695
      %v2073 = vpow.pop %v2072
      %v2074 = vmul.f32 %v1908, 1.442695
      %v2075 = vpow.pop %v2074
      %v2076 = vmul.f32 %v1909, 1.442695
      %v2077 = vpow.pop %v2076
      %v2078 = vmul.f32 %v1910, 1.442695
      %v2079 = vpow.pop %v2078
      %v2080 = vmul.f32 %v1911, 1.442695
      %v2081 = vpow.pop %v2080
      %v2082 = vmul.f32 %v1912, 1.442695
      %v2083 = vpow.pop %v2082
      %v2084 = vmul.f32 %v1913, 1.442695
      %v2085 = vpow.pop %v2084
      %v2086 = vmul.f32 %v1914, 1.442695
      %v2087 = vpow.pop %v2086
      %v2088 = vmul.f32 %v1915, 1.442695
      %v2089 = vpow.pop %v2088
      %v2090 = vmul.f32 %v1916, 1.442695
      %v2091 = vpow.pop %v2090
      %v2092 = vmul.f32 %v1917, 1.442695
      %v2093 = vpow.pop %v2092
      %v2094 = vmul.f32 %v1918, 1.442695
      %v2095 = vpow.pop %v2094
      %v2096 = vmul.f32 %v1919, 1.442695
      %v2097 = vpow.pop %v2096
      %v2098 = vmul.f32 %v1920, 1.442695
      %v2099 = vpow.pop %v2098
      %v2100 = vmul.f32 %v1921, 1.442695
      %v2101 = vpow.pop %v2100
      %v2102 = vmul.f32 %v1922, 1.442695
      %v2103 = vpow.pop %v2102
      %v2104 = vmul.f32 %v1923, 1.442695
      %v2105 = vpow.pop %v2104
      %v2106 = vmul.f32 %v1924, 1.442695
      %v2107 = vpow.pop %v2106
      %v2108 = vmul.f32 %v1925, 1.442695
      %v2109 = vpow.pop %v2108
      %v2110 = vmul.f32 %v1926, 1.442695
      %v2111 = vpow.pop %v2110
      %v2112 = vmul.f32 %v1927, 1.442695
      %v2113 = vpow.pop %v2112
      %v2114 = vmul.f32 %v1928, 1.442695
      %v2115 = vpow.pop %v2114
      %v2116 = vmul.f32 %v1929, 1.442695
      %v2117 = vpow.pop %v2116
      %v2118 = vmul.f32 %v1930, 1.442695
      %v2119 = vpow.pop %v2118
      %v2120 = vmul.f32 %v1931, 1.442695
      %v2121 = vpow.pop %v2120
      %v2122 = vmul.f32 %v1932, 1.442695
      %v2123 = vpow.pop %v2122
      %v2124 = vmul.f32 %v1933, 1.442695
      %v2125 = vpow.pop %v2124
      %v2126 = vmul.f32 %v1934, 1.442695
      %v2127 = vpow.pop %v2126
      %v2128 = vmul.f32 %v1935, 1.442695
      %v2129 = vpow.pop %v2128
      %v2130 = vmul.f32 %v1936, 1.442695
      %v2131 = vpow.pop %v2130
      %v2132 = vmul.f32 %v1937, 1.442695
      %v2133 = vpow.pop %v2132
      %v2134 = vmul.f32 %v1938, 1.442695
      %v2135 = vpow.pop %v2134
      %v2136 = vmul.f32 %v1939, 1.442695
      %v2137 = vpow.pop %v2136
      %v2138 = vmul.f32 %v1940, 1.442695
      %v2139 = vpow.pop %v2138
      %v2140 = vmul.f32 %v1941, 1.442695
      %v2141 = vpow.pop %v2140
      %v2142 = vmul.f32 %v1942, 1.442695
      %v2143 = vpow.pop %v2142
      %v2144 = vmul.f32 %v1943, 1.442695
      %v2145 = vpow.pop %v2144
      %v2146 = vmul.f32 %v1944, 1.442695
      %v2147 = vpow.pop %v2146
      %v2148 = vmul.f32 %v1945, 1.442695
      %v2149 = vpow.pop %v2148
      %v2150 = vmul.f32 %v1946, 1.442695
      %v2151 = vpow.pop %v2150
      %v2152 = vmul.f32 %v1947, 1.442695
      %v2153 = vpow.pop %v2152
      %v2154 = vmul.f32 %v1948, 1.442695
      %v2155 = vpow.pop %v2154
      %v2156 = vmul.f32 %v1949, 1.442695
      %v2157 = vpow.pop %v2156
      %v2158 = vmul.f32 %v1950, 1.442695
      %v2159 = vpow.pop %v2158
      %v2160 = vmul.f32 %v1951, 1.442695
      %v2161 = vpow.pop %v2160
      %v2162 = vmul.f32 %v1952, 1.442695
      %v2163 = vpow.pop %v2162
      %v2164 = vmul.f32 %v1953, 1.442695
      %v2165 = vpow.pop %v2164
      %v2166 = vmul.f32 %v1954, 1.442695
      %v2167 = vpow.pop %v2166
      %v2168 = vmul.f32 %v1955, 1.442695
      %v2169 = vpow.pop %v2168
      %v2170 = vmul.f32 %v1956, 1.442695
      %v2171 = vpow.pop %v2170
      %v2172 = vmul.f32 %v1957, 1.442695
      %v2173 = vpow.pop %v2172
      %v2174 = vmul.f32 %v1958, 1.442695
      %v2175 = vpow.pop %v2174
      %v2176 = vmul.f32 %v1959, 1.442695
      %v2177 = vpow.pop %v2176
      %v2178 = vmul.f32 %v1960, 1.442695
      %v2179 = vpow.pop %v2178
      %v2180 = vmul.f32 %v1961, 1.442695
      %v2181 = vpow.pop %v2180
      %v2182 = vmul.f32 %v1962, 1.442695
      %v2183 = vpow.pop %v2182
      %v2184 = vmul.f32 %v1963, 1.442695
      %v2185 = vpow.pop %v2184
      %v2186 = vmul.f32 %v1964, 1.442695
      %v2187 = vpow.pop %v2186
      %v2188 = vmul.f32 %v1965, 1.442695
      %v2189 = vpow.pop %v2188
      %v2190 = vmul.f32 %v1966, 1.442695
      %v2191 = vpow.pop %v2190
      %v2192 = vmul.f32 %v1967, 1.442695
      %v2193 = vpow.pop %v2192
      %v2194 = vmul.f32 %v1968, 1.442695
      %v2195 = vpow.pop %v2194
      %v2196 = vmul.f32 %v1969, 1.442695
      %v2197 = vpow.pop %v2196
      %v2198 = vmul.f32 %v1970, 1.442695
      %v2199 = vpow.pop %v2198
      %v2200 = vmul.f32 %v1971, 1.442695
      %v2201 = vpow.pop %v2200
      %v2202 = vmul.f32 %v1972, 1.442695
      %v2203 = vpow.pop %v2202
      %v2204 = vmul.f32 %v1973, 1.442695
      %v2205 = vpow.pop %v2204
      %v2206 = vmul.f32 %v1974, 1.442695
      %v2207 = vpow.pop %v2206
      %v2208 = vmul.f32 %v1975, 1.442695
      %v2209 = vpow.pop %v2208
      %v2210 = vmul.f32 %v1976, 1.442695
      %v2211 = vpow.pop %v2210
      %v2212 = vmul.f32 %v1977, 1.442695
      %v2213 = vpow.pop %v2212
      %v2214 = vmul.f32 %v1978, 1.442695
      %v2215 = vpow.pop %v2214
      %v2216 = vmul.f32 %v1979, 1.442695
      %v2217 = vpow.pop %v2216
      %v2218 = vmul.f32 %v1980, 1.442695
      %v2219 = vpow.pop %v2218
      %v2220 = vmul.f32 %v1981, 1.442695
      %v2221 = vpow.pop %v2220
      %v2222 = vmul.f32 %v1982, 1.442695
      %v2223 = vpow.pop %v2222
      %v2224 = vmul.f32 %v1983, 1.442695
      %v2225 = vpow.pop %v2224
      %v2226 = vmul.f32 %v1984, 1.442695
      %v2227 = vpow.pop %v2226
      %v2228 = vmul.f32 %v1985, 1.442695
      %v2229 = vpow.pop %v2228
      %v2230 = vmul.f32 %v1986, 1.442695
      %v2231 = vpow.pop %v2230
      %v2232 = vmul.f32 %v1987, 1.442695
      %v2233 = vpow.pop %v2232
      %v2234 = vmul.f32 %v1988, 1.442695
      %v2235 = vpow.pop %v2234
      %v2236 = vmul.f32 %v1989, 1.442695
      %v2237 = vpow.pop %v2236
      %v2238 = vmul.f32 %v1990, 1.442695
      %v2239 = vpow.pop %v2238
      %v2240 = vmul.f32 %v1991, 1.442695
      %v2241 = vpow.pop %v2240
      %v2242 = vmul.f32 %v1992, 1.442695
      %v2243 = vpow.pop %v2242
      %v2244 = vmul.f32 %v1993, 1.442695
      %v2245 = vpow.pop %v2244
      %v2246 = vmul.f32 %v1994, 1.442695
      %v2247 = vpow.pop %v2246
      %v2248 = vmul.f32 %v1995, 1.442695
      %v2249 = vpow.pop %v2248
      %v2250 = vmul.f32 %v1996, 1.442695
      %v2251 = vpow.pop %v2250
      %v2252 = vmul.f32 %v1997, 1.442695
      %v2253 = vpow.pop %v2252
      %v2254 = vadd.f32 %v1999, 1.0
      %v2255 = vadd.f32 %v2001, 1.0
      %v2256 = vadd.f32 %v2003, 1.0
      %v2257 = vadd.f32 %v2005, 1.0
      %v2258 = vadd.f32 %v2007, 1.0
      %v2259 = vadd.f32 %v2009, 1.0
      %v2260 = vadd.f32 %v2011, 1.0
      %v2261 = vadd.f32 %v2013, 1.0
      %v2262 = vadd.f32 %v2015, 1.0
      %v2263 = vadd.f32 %v2017, 1.0
      %v2264 = vadd.f32 %v2019, 1.0
      %v2265 = vadd.f32 %v2021, 1.0
      %v2266 = vadd.f32 %v2023, 1.0
      %v2267 = vadd.f32 %v2025, 1.0
      %v2268 = vadd.f32 %v2027, 1.0
      %v2269 = vadd.f32 %v2029, 1.0
      %v2270 = vadd.f32 %v2031, 1.0
      %v2271 = vadd.f32 %v2033, 1.0
      %v2272 = vadd.f32 %v2035, 1.0
      %v2273 = vadd.f32 %v2037, 1.0
      %v2274 = vadd.f32 %v2039, 1.0
      %v2275 = vadd.f32 %v2041, 1.0
      %v2276 = vadd.f32 %v2043, 1.0
      %v2277 = vadd.f32 %v2045, 1.0
      %v2278 = vadd.f32 %v2047, 1.0
      %v2279 = vadd.f32 %v2049, 1.0
      %v2280 = vadd.f32 %v2051, 1.0
      %v2281 = vadd.f32 %v2053, 1.0
      %v2282 = vadd.f32 %v2055, 1.0
      %v2283 = vadd.f32 %v2057, 1.0
      %v2284 = vadd.f32 %v2059, 1.0
      %v2285 = vadd.f32 %v2061, 1.0
      %v2286 = vadd.f32 %v2063, 1.0
      %v2287 = vadd.f32 %v2065, 1.0
      %v2288 = vadd.f32 %v2067, 1.0
      %v2289 = vadd.f32 %v2069, 1.0
      %v2290 = vadd.f32 %v2071, 1.0
      %v2291 = vadd.f32 %v2073, 1.0
      %v2292 = vadd.f32 %v2075, 1.0
      %v2293 = vadd.f32 %v2077, 1.0
      %v2294 = vadd.f32 %v2079, 1.0
      %v2295 = vadd.f32 %v2081, 1.0
      %v2296 = vadd.f32 %v2083, 1.0
      %v2297 = vadd.f32 %v2085, 1.0
      %v2298 = vadd.f32 %v2087, 1.0
      %v2299 = vadd.f32 %v2089, 1.0
      %v2300 = vadd.f32 %v2091, 1.0
      %v2301 = vadd.f32 %v2093, 1.0
      %v2302 = vadd.f32 %v2095, 1.0
      %v2303 = vadd.f32 %v2097, 1.0
      %v2304 = vadd.f32 %v2099, 1.0
      %v2305 = vadd.f32 %v2101, 1.0
      %v2306 = vadd.f32 %v2103, 1.0
      %v2307 = vadd.f32 %v2105, 1.0
      %v2308 = vadd.f32 %v2107, 1.0
      %v2309 = vadd.f32 %v2109, 1.0
      %v2310 = vadd.f32 %v2111, 1.0
      %v2311 = vadd.f32 %v2113, 1.0
      %v2312 = vadd.f32 %v2115, 1.0
      %v2313 = vadd.f32 %v2117, 1.0
      %v2314 = vadd.f32 %v2119, 1.0
      %v2315 = vadd.f32 %v2121, 1.0
      %v2316 = vadd.f32 %v2123, 1.0
      %v2317 = vadd.f32 %v2125, 1.0
      %v2318 = vadd.f32 %v2127, 1.0
      %v2319 = vadd.f32 %v2129, 1.0
      %v2320 = vadd.f32 %v2131, 1.0
      %v2321 = vadd.f32 %v2133, 1.0
      %v2322 = vadd.f32 %v2135, 1.0
      %v2323 = vadd.f32 %v2137, 1.0
      %v2324 = vadd.f32 %v2139, 1.0
      %v2325 = vadd.f32 %v2141, 1.0
      %v2326 = vadd.f32 %v2143, 1.0
      %v2327 = vadd.f32 %v2145, 1.0
      %v2328 = vadd.f32 %v2147, 1.0
      %v2329 = vadd.f32 %v2149, 1.0
      %v2330 = vadd.f32 %v2151, 1.0
      %v2331 = vadd.f32 %v2153, 1.0
      %v2332 = vadd.f32 %v2155, 1.0
      %v2333 = vadd.f32 %v2157, 1.0
      %v2334 = vadd.f32 %v2159, 1.0
      %v2335 = vadd.f32 %v2161, 1.0
      %v2336 = vadd.f32 %v2163, 1.0
      %v2337 = vadd.f32 %v2165, 1.0
      %v2338 = vadd.f32 %v2167, 1.0
      %v2339 = vadd.f32 %v2169, 1.0
      %v2340 = vadd.f32 %v2171, 1.0
      %v2341 = vadd.f32 %v2173, 1.0
      %v2342 = vadd.f32 %v2175, 1.0
      %v2343 = vadd.f32 %v2177, 1.0
      %v2344 = vadd.f32 %v2179, 1.0
      %v2345 = vadd.f32 %v2181, 1.0
      %v2346 = vadd.f32 %v2183, 1.0
      %v2347 = vadd.f32 %v2185, 1.0
      %v2348 = vadd.f32 %v2187, 1.0
      %v2349 = vadd.f32 %v2189, 1.0
      %v2350 = vadd.f32 %v2191, 1.0
      %v2351 = vadd.f32 %v2193, 1.0
      %v2352 = vadd.f32 %v2195, 1.0
      %v2353 = vadd.f32 %v2197, 1.0
      %v2354 = vadd.f32 %v2199, 1.0
      %v2355 = vadd.f32 %v2201, 1.0
      %v2356 = vadd.f32 %v2203, 1.0
      %v2357 = vadd.f32 %v2205, 1.0
      %v2358 = vadd.f32 %v2207, 1.0
      %v2359 = vadd.f32 %v2209, 1.0
      %v2360 = vadd.f32 %v2211, 1.0
      %v2361 = vadd.f32 %v2213, 1.0
      %v2362 = vadd.f32 %v2215, 1.0
      %v2363 = vadd.f32 %v2217, 1.0
      %v2364 = vadd.f32 %v2219, 1.0
      %v2365 = vadd.f32 %v2221, 1.0
      %v2366 = vadd.f32 %v2223, 1.0
      %v2367 = vadd.f32 %v2225, 1.0
      %v2368 = vadd.f32 %v2227, 1.0
      %v2369 = vadd.f32 %v2229, 1.0
      %v2370 = vadd.f32 %v2231, 1.0
      %v2371 = vadd.f32 %v2233, 1.0
      %v2372 = vadd.f32 %v2235, 1.0
      %v2373 = vadd.f32 %v2237, 1.0
      %v2374 = vadd.f32 %v2239, 1.0
      %v2375 = vadd.f32 %v2241, 1.0
      %v2376 = vadd.f32 %v2243, 1.0
      %v2377 = vadd.f32 %v2245, 1.0
      %v2378 = vadd.f32 %v2247, 1.0
      %v2379 = vadd.f32 %v2249, 1.0
      %v2380 = vadd.f32 %v2251, 1.0
      %v2381 = vadd.f32 %v2253, 1.0
      %v2382 = vrcp.pop %v2254
      %v2383 = vmul.f32 %v2254, %v2382
      %v2384 = vsub.f32 1.0, %v2383
      %v2385 = vmul.f32 %v2382, %v2384
      %v2386 = vadd.f32 %v2382, %v2385
      %vm2387 = vweird.f32 %v2254
      %vm2388 = vweird.f32 %v2382
      %vm2389 = vmor %vm2387, %vm2388
      %v2390 = vsel %vm2389, %v2382, %v2386
      %v2391 = vand.u32 2147483647, %v2254
      %vm2392 = vcmp.eq.f32.partialorder %v2391, 8.507059e+37
      %v2393 = vand.u32 %v2254, 2147483648
      %v2394 = vor.u32 1.1754944e-38, %v2393
      %v2395 = vsel %vm2392, %v2394, %v2390
      %v2396 = vmul.f32 1.0, %v2395
      %v2397 = vrcp.pop %v2255
      %v2398 = vmul.f32 %v2255, %v2397
      %v2399 = vsub.f32 1.0, %v2398
      %v2400 = vmul.f32 %v2397, %v2399
      %v2401 = vadd.f32 %v2397, %v2400
      %vm2402 = vweird.f32 %v2255
      %vm2403 = vweird.f32 %v2397
      %vm2404 = vmor %vm2402, %vm2403
      %v2405 = vsel %vm2404, %v2397, %v2401
      %v2406 = vand.u32 2147483647, %v2255
      %vm2407 = vcmp.eq.f32.partialorder %v2406, 8.507059e+37
      %v2408 = vand.u32 %v2255, 2147483648
      %v2409 = vor.u32 1.1754944e-38, %v2408
      %v2410 = vsel %vm2407, %v2409, %v2405
      %v2411 = vmul.f32 1.0, %v2410
      %v2412 = vrcp.pop %v2256
      %v2413 = vmul.f32 %v2256, %v2412
      %v2414 = vsub.f32 1.0, %v2413
      %v2415 = vmul.f32 %v2412, %v2414
      %v2416 = vadd.f32 %v2412, %v2415
      %vm2417 = vweird.f32 %v2256
      %vm2418 = vweird.f32 %v2412
      %vm2419 = vmor %vm2417, %vm2418
      %v2420 = vsel %vm2419, %v2412, %v2416
      %v2421 = vand.u32 2147483647, %v2256
      %vm2422 = vcmp.eq.f32.partialorder %v2421, 8.507059e+37
      %v2423 = vand.u32 %v2256, 2147483648
      %v2424 = vor.u32 1.1754944e-38, %v2423
      %v2425 = vsel %vm2422, %v2424, %v2420
      %v2426 = vmul.f32 1.0, %v2425
      %v2427 = vrcp.pop %v2257
      %v2428 = vmul.f32 %v2257, %v2427
      %v2429 = vsub.f32 1.0, %v2428
      %v2430 = vmul.f32 %v2427, %v2429
      %v2431 = vadd.f32 %v2427, %v2430
      %vm2432 = vweird.f32 %v2257
      %vm2433 = vweird.f32 %v2427
      %vm2434 = vmor %vm2432, %vm2433
      %v2435 = vsel %vm2434, %v2427, %v2431
      %v2436 = vand.u32 2147483647, %v2257
      %vm2437 = vcmp.eq.f32.partialorder %v2436, 8.507059e+37
      %v2438 = vand.u32 %v2257, 2147483648
      %v2439 = vor.u32 1.1754944e-38, %v2438
      %v2440 = vsel %vm2437, %v2439, %v2435
      %v2441 = vmul.f32 1.0, %v2440
      %v2442 = vrcp.pop %v2258
      %v2443 = vmul.f32 %v2258, %v2442
      %v2444 = vsub.f32 1.0, %v2443
      %v2445 = vmul.f32 %v2442, %v2444
      %v2446 = vadd.f32 %v2442, %v2445
      %vm2447 = vweird.f32 %v2258
      %vm2448 = vweird.f32 %v2442
      %vm2449 = vmor %vm2447, %vm2448
      %v2450 = vsel %vm2449, %v2442, %v2446
      %v2451 = vand.u32 2147483647, %v2258
      %vm2452 = vcmp.eq.f32.partialorder %v2451, 8.507059e+37
      %v2453 = vand.u32 %v2258, 2147483648
      %v2454 = vor.u32 1.1754944e-38, %v2453
      %v2455 = vsel %vm2452, %v2454, %v2450
      %v2456 = vmul.f32 1.0, %v2455
      %v2457 = vrcp.pop %v2259
      %v2458 = vmul.f32 %v2259, %v2457
      %v2459 = vsub.f32 1.0, %v2458
      %v2460 = vmul.f32 %v2457, %v2459
      %v2461 = vadd.f32 %v2457, %v2460
      %vm2462 = vweird.f32 %v2259
      %vm2463 = vweird.f32 %v2457
      %vm2464 = vmor %vm2462, %vm2463
      %v2465 = vsel %vm2464, %v2457, %v2461
      %v2466 = vand.u32 2147483647, %v2259
      %vm2467 = vcmp.eq.f32.partialorder %v2466, 8.507059e+37
      %v2468 = vand.u32 %v2259, 2147483648
      %v2469 = vor.u32 1.1754944e-38, %v2468
      %v2470 = vsel %vm2467, %v2469, %v2465
      %v2471 = vmul.f32 1.0, %v2470
      %v2472 = vrcp.pop %v2260
      %v2473 = vmul.f32 %v2260, %v2472
      %v2474 = vsub.f32 1.0, %v2473
      %v2475 = vmul.f32 %v2472, %v2474
      %v2476 = vadd.f32 %v2472, %v2475
      %vm2477 = vweird.f32 %v2260
      %vm2478 = vweird.f32 %v2472
      %vm2479 = vmor %vm2477, %vm2478
      %v2480 = vsel %vm2479, %v2472, %v2476
      %v2481 = vand.u32 2147483647, %v2260
      %vm2482 = vcmp.eq.f32.partialorder %v2481, 8.507059e+37
      %v2483 = vand.u32 %v2260, 2147483648
      %v2484 = vor.u32 1.1754944e-38, %v2483
      %v2485 = vsel %vm2482, %v2484, %v2480
      %v2486 = vmul.f32 1.0, %v2485
      %v2487 = vrcp.pop %v2261
      %v2488 = vmul.f32 %v2261, %v2487
      %v2489 = vsub.f32 1.0, %v2488
      %v2490 = vmul.f32 %v2487, %v2489
      %v2491 = vadd.f32 %v2487, %v2490
      %vm2492 = vweird.f32 %v2261
      %vm2493 = vweird.f32 %v2487
      %vm2494 = vmor %vm2492, %vm2493
      %v2495 = vsel %vm2494, %v2487, %v2491
      %v2496 = vand.u32 2147483647, %v2261
      %vm2497 = vcmp.eq.f32.partialorder %v2496, 8.507059e+37
      %v2498 = vand.u32 %v2261, 2147483648
      %v2499 = vor.u32 1.1754944e-38, %v2498
      %v2500 = vsel %vm2497, %v2499, %v2495
      %v2501 = vmul.f32 1.0, %v2500
      %v2502 = vrcp.pop %v2262
      %v2503 = vmul.f32 %v2262, %v2502
      %v2504 = vsub.f32 1.0, %v2503
      %v2505 = vmul.f32 %v2502, %v2504
      %v2506 = vadd.f32 %v2502, %v2505
      %vm2507 = vweird.f32 %v2262
      %vm2508 = vweird.f32 %v2502
      %vm2509 = vmor %vm2507, %vm2508
      %v2510 = vsel %vm2509, %v2502, %v2506
      %v2511 = vand.u32 2147483647, %v2262
      %vm2512 = vcmp.eq.f32.partialorder %v2511, 8.507059e+37
      %v2513 = vand.u32 %v2262, 2147483648
      %v2514 = vor.u32 1.1754944e-38, %v2513
      %v2515 = vsel %vm2512, %v2514, %v2510
      %v2516 = vmul.f32 1.0, %v2515
      %v2517 = vrcp.pop %v2263
      %v2518 = vmul.f32 %v2263, %v2517
      %v2519 = vsub.f32 1.0, %v2518
      %v2520 = vmul.f32 %v2517, %v2519
      %v2521 = vadd.f32 %v2517, %v2520
      %vm2522 = vweird.f32 %v2263
      %vm2523 = vweird.f32 %v2517
      %vm2524 = vmor %vm2522, %vm2523
      %v2525 = vsel %vm2524, %v2517, %v2521
      %v2526 = vand.u32 2147483647, %v2263
      %vm2527 = vcmp.eq.f32.partialorder %v2526, 8.507059e+37
      %v2528 = vand.u32 %v2263, 2147483648
      %v2529 = vor.u32 1.1754944e-38, %v2528
      %v2530 = vsel %vm2527, %v2529, %v2525
      %v2531 = vmul.f32 1.0, %v2530
      %v2532 = vrcp.pop %v2264
      %v2533 = vmul.f32 %v2264, %v2532
      %v2534 = vsub.f32 1.0, %v2533
      %v2535 = vmul.f32 %v2532, %v2534
      %v2536 = vadd.f32 %v2532, %v2535
      %vm2537 = vweird.f32 %v2264
      %vm2538 = vweird.f32 %v2532
      %vm2539 = vmor %vm2537, %vm2538
      %v2540 = vsel %vm2539, %v2532, %v2536
      %v2541 = vand.u32 2147483647, %v2264
      %vm2542 = vcmp.eq.f32.partialorder %v2541, 8.507059e+37
      %v2543 = vand.u32 %v2264, 2147483648
      %v2544 = vor.u32 1.1754944e-38, %v2543
      %v2545 = vsel %vm2542, %v2544, %v2540
      %v2546 = vmul.f32 1.0, %v2545
      %v2547 = vrcp.pop %v2265
      %v2548 = vmul.f32 %v2265, %v2547
      %v2549 = vsub.f32 1.0, %v2548
      %v2550 = vmul.f32 %v2547, %v2549
      %v2551 = vadd.f32 %v2547, %v2550
      %vm2552 = vweird.f32 %v2265
      %vm2553 = vweird.f32 %v2547
      %vm2554 = vmor %vm2552, %vm2553
      %v2555 = vsel %vm2554, %v2547, %v2551
      %v2556 = vand.u32 2147483647, %v2265
      %vm2557 = vcmp.eq.f32.partialorder %v2556, 8.507059e+37
      %v2558 = vand.u32 %v2265, 2147483648
      %v2559 = vor.u32 1.1754944e-38, %v2558
      %v2560 = vsel %vm2557, %v2559, %v2555
      %v2561 = vmul.f32 1.0, %v2560
      %v2562 = vrcp.pop %v2266
      %v2563 = vmul.f32 %v2266, %v2562
      %v2564 = vsub.f32 1.0, %v2563
      %v2565 = vmul.f32 %v2562, %v2564
      %v2566 = vadd.f32 %v2562, %v2565
      %vm2567 = vweird.f32 %v2266
      %vm2568 = vweird.f32 %v2562
      %vm2569 = vmor %vm2567, %vm2568
      %v2570 = vsel %vm2569, %v2562, %v2566
      %v2571 = vand.u32 2147483647, %v2266
      %vm2572 = vcmp.eq.f32.partialorder %v2571, 8.507059e+37
      %v2573 = vand.u32 %v2266, 2147483648
      %v2574 = vor.u32 1.1754944e-38, %v2573
      %v2575 = vsel %vm2572, %v2574, %v2570
      %v2576 = vmul.f32 1.0, %v2575
      %v2577 = vrcp.pop %v2267
      %v2578 = vmul.f32 %v2267, %v2577
      %v2579 = vsub.f32 1.0, %v2578
      %v2580 = vmul.f32 %v2577, %v2579
      %v2581 = vadd.f32 %v2577, %v2580
      %vm2582 = vweird.f32 %v2267
      %vm2583 = vweird.f32 %v2577
      %vm2584 = vmor %vm2582, %vm2583
      %v2585 = vsel %vm2584, %v2577, %v2581
      %v2586 = vand.u32 2147483647, %v2267
      %vm2587 = vcmp.eq.f32.partialorder %v2586, 8.507059e+37
      %v2588 = vand.u32 %v2267, 2147483648
      %v2589 = vor.u32 1.1754944e-38, %v2588
      %v2590 = vsel %vm2587, %v2589, %v2585
      %v2591 = vmul.f32 1.0, %v2590
      %v2592 = vrcp.pop %v2268
      %v2593 = vmul.f32 %v2268, %v2592
      %v2594 = vsub.f32 1.0, %v2593
      %v2595 = vmul.f32 %v2592, %v2594
      %v2596 = vadd.f32 %v2592, %v2595
      %vm2597 = vweird.f32 %v2268
      %vm2598 = vweird.f32 %v2592
      %vm2599 = vmor %vm2597, %vm2598
      %v2600 = vsel %vm2599, %v2592, %v2596
      %v2601 = vand.u32 2147483647, %v2268
      %vm2602 = vcmp.eq.f32.partialorder %v2601, 8.507059e+37
      %v2603 = vand.u32 %v2268, 2147483648
      %v2604 = vor.u32 1.1754944e-38, %v2603
      %v2605 = vsel %vm2602, %v2604, %v2600
      %v2606 = vmul.f32 1.0, %v2605
      %v2607 = vrcp.pop %v2269
      %v2608 = vmul.f32 %v2269, %v2607
      %v2609 = vsub.f32 1.0, %v2608
      %v2610 = vmul.f32 %v2607, %v2609
      %v2611 = vadd.f32 %v2607, %v2610
      %vm2612 = vweird.f32 %v2269
      %vm2613 = vweird.f32 %v2607
      %vm2614 = vmor %vm2612, %vm2613
      %v2615 = vsel %vm2614, %v2607, %v2611
      %v2616 = vand.u32 2147483647, %v2269
      %vm2617 = vcmp.eq.f32.partialorder %v2616, 8.507059e+37
      %v2618 = vand.u32 %v2269, 2147483648
      %v2619 = vor.u32 1.1754944e-38, %v2618
      %v2620 = vsel %vm2617, %v2619, %v2615
      %v2621 = vmul.f32 1.0, %v2620
      %v2622 = vrcp.pop %v2270
      %v2623 = vmul.f32 %v2270, %v2622
      %v2624 = vsub.f32 1.0, %v2623
      %v2625 = vmul.f32 %v2622, %v2624
      %v2626 = vadd.f32 %v2622, %v2625
      %vm2627 = vweird.f32 %v2270
      %vm2628 = vweird.f32 %v2622
      %vm2629 = vmor %vm2627, %vm2628
      %v2630 = vsel %vm2629, %v2622, %v2626
      %v2631 = vand.u32 2147483647, %v2270
      %vm2632 = vcmp.eq.f32.partialorder %v2631, 8.507059e+37
      %v2633 = vand.u32 %v2270, 2147483648
      %v2634 = vor.u32 1.1754944e-38, %v2633
      %v2635 = vsel %vm2632, %v2634, %v2630
      %v2636 = vmul.f32 1.0, %v2635
      %v2637 = vrcp.pop %v2271
      %v2638 = vmul.f32 %v2271, %v2637
      %v2639 = vsub.f32 1.0, %v2638
      %v2640 = vmul.f32 %v2637, %v2639
      %v2641 = vadd.f32 %v2637, %v2640
      %vm2642 = vweird.f32 %v2271
      %vm2643 = vweird.f32 %v2637
      %vm2644 = vmor %vm2642, %vm2643
      %v2645 = vsel %vm2644, %v2637, %v2641
      %v2646 = vand.u32 2147483647, %v2271
      %vm2647 = vcmp.eq.f32.partialorder %v2646, 8.507059e+37
      %v2648 = vand.u32 %v2271, 2147483648
      %v2649 = vor.u32 1.1754944e-38, %v2648
      %v2650 = vsel %vm2647, %v2649, %v2645
      %v2651 = vmul.f32 1.0, %v2650
      %v2652 = vrcp.pop %v2272
      %v2653 = vmul.f32 %v2272, %v2652
      %v2654 = vsub.f32 1.0, %v2653
      %v2655 = vmul.f32 %v2652, %v2654
      %v2656 = vadd.f32 %v2652, %v2655
      %vm2657 = vweird.f32 %v2272
      %vm2658 = vweird.f32 %v2652
      %vm2659 = vmor %vm2657, %vm2658
      %v2660 = vsel %vm2659, %v2652, %v2656
      %v2661 = vand.u32 2147483647, %v2272
      %vm2662 = vcmp.eq.f32.partialorder %v2661, 8.507059e+37
      %v2663 = vand.u32 %v2272, 2147483648
      %v2664 = vor.u32 1.1754944e-38, %v2663
      %v2665 = vsel %vm2662, %v2664, %v2660
      %v2666 = vmul.f32 1.0, %v2665
      %v2667 = vrcp.pop %v2273
      %v2668 = vmul.f32 %v2273, %v2667
      %v2669 = vsub.f32 1.0, %v2668
      %v2670 = vmul.f32 %v2667, %v2669
      %v2671 = vadd.f32 %v2667, %v2670
      %vm2672 = vweird.f32 %v2273
      %vm2673 = vweird.f32 %v2667
      %vm2674 = vmor %vm2672, %vm2673
      %v2675 = vsel %vm2674, %v2667, %v2671
      %v2676 = vand.u32 2147483647, %v2273
      %vm2677 = vcmp.eq.f32.partialorder %v2676, 8.507059e+37
      %v2678 = vand.u32 %v2273, 2147483648
      %v2679 = vor.u32 1.1754944e-38, %v2678
      %v2680 = vsel %vm2677, %v2679, %v2675
      %v2681 = vmul.f32 1.0, %v2680
      %v2682 = vrcp.pop %v2274
      %v2683 = vmul.f32 %v2274, %v2682
      %v2684 = vsub.f32 1.0, %v2683
      %v2685 = vmul.f32 %v2682, %v2684
      %v2686 = vadd.f32 %v2682, %v2685
      %vm2687 = vweird.f32 %v2274
      %vm2688 = vweird.f32 %v2682
      %vm2689 = vmor %vm2687, %vm2688
      %v2690 = vsel %vm2689, %v2682, %v2686
      %v2691 = vand.u32 2147483647, %v2274
      %vm2692 = vcmp.eq.f32.partialorder %v2691, 8.507059e+37
      %v2693 = vand.u32 %v2274, 2147483648
      %v2694 = vor.u32 1.1754944e-38, %v2693
      %v2695 = vsel %vm2692, %v2694, %v2690
      %v2696 = vmul.f32 1.0, %v2695
      %v2697 = vrcp.pop %v2275
      %v2698 = vmul.f32 %v2275, %v2697
      %v2699 = vsub.f32 1.0, %v2698
      %v2700 = vmul.f32 %v2697, %v2699
      %v2701 = vadd.f32 %v2697, %v2700
      %vm2702 = vweird.f32 %v2275
      %vm2703 = vweird.f32 %v2697
      %vm2704 = vmor %vm2702, %vm2703
      %v2705 = vsel %vm2704, %v2697, %v2701
      %v2706 = vand.u32 2147483647, %v2275
      %vm2707 = vcmp.eq.f32.partialorder %v2706, 8.507059e+37
      %v2708 = vand.u32 %v2275, 2147483648
      %v2709 = vor.u32 1.1754944e-38, %v2708
      %v2710 = vsel %vm2707, %v2709, %v2705
      %v2711 = vmul.f32 1.0, %v2710
      %v2712 = vrcp.pop %v2276
      %v2713 = vmul.f32 %v2276, %v2712
      %v2714 = vsub.f32 1.0, %v2713
      %v2715 = vmul.f32 %v2712, %v2714
      %v2716 = vadd.f32 %v2712, %v2715
      %vm2717 = vweird.f32 %v2276
      %vm2718 = vweird.f32 %v2712
      %vm2719 = vmor %vm2717, %vm2718
      %v2720 = vsel %vm2719, %v2712, %v2716
      %v2721 = vand.u32 2147483647, %v2276
      %vm2722 = vcmp.eq.f32.partialorder %v2721, 8.507059e+37
      %v2723 = vand.u32 %v2276, 2147483648
      %v2724 = vor.u32 1.1754944e-38, %v2723
      %v2725 = vsel %vm2722, %v2724, %v2720
      %v2726 = vmul.f32 1.0, %v2725
      %v2727 = vrcp.pop %v2277
      %v2728 = vmul.f32 %v2277, %v2727
      %v2729 = vsub.f32 1.0, %v2728
      %v2730 = vmul.f32 %v2727, %v2729
      %v2731 = vadd.f32 %v2727, %v2730
      %vm2732 = vweird.f32 %v2277
      %vm2733 = vweird.f32 %v2727
      %vm2734 = vmor %vm2732, %vm2733
      %v2735 = vsel %vm2734, %v2727, %v2731
      %v2736 = vand.u32 2147483647, %v2277
      %vm2737 = vcmp.eq.f32.partialorder %v2736, 8.507059e+37
      %v2738 = vand.u32 %v2277, 2147483648
      %v2739 = vor.u32 1.1754944e-38, %v2738
      %v2740 = vsel %vm2737, %v2739, %v2735
      %v2741 = vmul.f32 1.0, %v2740
      %v2742 = vrcp.pop %v2278
      %v2743 = vmul.f32 %v2278, %v2742
      %v2744 = vsub.f32 1.0, %v2743
      %v2745 = vmul.f32 %v2742, %v2744
      %v2746 = vadd.f32 %v2742, %v2745
      %vm2747 = vweird.f32 %v2278
      %vm2748 = vweird.f32 %v2742
      %vm2749 = vmor %vm2747, %vm2748
      %v2750 = vsel %vm2749, %v2742, %v2746
      %v2751 = vand.u32 2147483647, %v2278
      %vm2752 = vcmp.eq.f32.partialorder %v2751, 8.507059e+37
      %v2753 = vand.u32 %v2278, 2147483648
      %v2754 = vor.u32 1.1754944e-38, %v2753
      %v2755 = vsel %vm2752, %v2754, %v2750
      %v2756 = vmul.f32 1.0, %v2755
      %v2757 = vrcp.pop %v2279
      %v2758 = vmul.f32 %v2279, %v2757
      %v2759 = vsub.f32 1.0, %v2758
      %v2760 = vmul.f32 %v2757, %v2759
      %v2761 = vadd.f32 %v2757, %v2760
      %vm2762 = vweird.f32 %v2279
      %vm2763 = vweird.f32 %v2757
      %vm2764 = vmor %vm2762, %vm2763
      %v2765 = vsel %vm2764, %v2757, %v2761
      %v2766 = vand.u32 2147483647, %v2279
      %vm2767 = vcmp.eq.f32.partialorder %v2766, 8.507059e+37
      %v2768 = vand.u32 %v2279, 2147483648
      %v2769 = vor.u32 1.1754944e-38, %v2768
      %v2770 = vsel %vm2767, %v2769, %v2765
      %v2771 = vmul.f32 1.0, %v2770
      %v2772 = vrcp.pop %v2280
      %v2773 = vmul.f32 %v2280, %v2772
      %v2774 = vsub.f32 1.0, %v2773
      %v2775 = vmul.f32 %v2772, %v2774
      %v2776 = vadd.f32 %v2772, %v2775
      %vm2777 = vweird.f32 %v2280
      %vm2778 = vweird.f32 %v2772
      %vm2779 = vmor %vm2777, %vm2778
      %v2780 = vsel %vm2779, %v2772, %v2776
      %v2781 = vand.u32 2147483647, %v2280
      %vm2782 = vcmp.eq.f32.partialorder %v2781, 8.507059e+37
      %v2783 = vand.u32 %v2280, 2147483648
      %v2784 = vor.u32 1.1754944e-38, %v2783
      %v2785 = vsel %vm2782, %v2784, %v2780
      %v2786 = vmul.f32 1.0, %v2785
      %v2787 = vrcp.pop %v2281
      %v2788 = vmul.f32 %v2281, %v2787
      %v2789 = vsub.f32 1.0, %v2788
      %v2790 = vmul.f32 %v2787, %v2789
      %v2791 = vadd.f32 %v2787, %v2790
      %vm2792 = vweird.f32 %v2281
      %vm2793 = vweird.f32 %v2787
      %vm2794 = vmor %vm2792, %vm2793
      %v2795 = vsel %vm2794, %v2787, %v2791
      %v2796 = vand.u32 2147483647, %v2281
      %vm2797 = vcmp.eq.f32.partialorder %v2796, 8.507059e+37
      %v2798 = vand.u32 %v2281, 2147483648
      %v2799 = vor.u32 1.1754944e-38, %v2798
      %v2800 = vsel %vm2797, %v2799, %v2795
      %v2801 = vmul.f32 1.0, %v2800
      %v2802 = vrcp.pop %v2282
      %v2803 = vmul.f32 %v2282, %v2802
      %v2804 = vsub.f32 1.0, %v2803
      %v2805 = vmul.f32 %v2802, %v2804
      %v2806 = vadd.f32 %v2802, %v2805
      %vm2807 = vweird.f32 %v2282
      %vm2808 = vweird.f32 %v2802
      %vm2809 = vmor %vm2807, %vm2808
      %v2810 = vsel %vm2809, %v2802, %v2806
      %v2811 = vand.u32 2147483647, %v2282
      %vm2812 = vcmp.eq.f32.partialorder %v2811, 8.507059e+37
      %v2813 = vand.u32 %v2282, 2147483648
      %v2814 = vor.u32 1.1754944e-38, %v2813
      %v2815 = vsel %vm2812, %v2814, %v2810
      %v2816 = vmul.f32 1.0, %v2815
      %v2817 = vrcp.pop %v2283
      %v2818 = vmul.f32 %v2283, %v2817
      %v2819 = vsub.f32 1.0, %v2818
      %v2820 = vmul.f32 %v2817, %v2819
      %v2821 = vadd.f32 %v2817, %v2820
      %vm2822 = vweird.f32 %v2283
      %vm2823 = vweird.f32 %v2817
      %vm2824 = vmor %vm2822, %vm2823
      %v2825 = vsel %vm2824, %v2817, %v2821
      %v2826 = vand.u32 2147483647, %v2283
      %vm2827 = vcmp.eq.f32.partialorder %v2826, 8.507059e+37
      %v2828 = vand.u32 %v2283, 2147483648
      %v2829 = vor.u32 1.1754944e-38, %v2828
      %v2830 = vsel %vm2827, %v2829, %v2825
      %v2831 = vmul.f32 1.0, %v2830
      %v2832 = vrcp.pop %v2284
      %v2833 = vmul.f32 %v2284, %v2832
      %v2834 = vsub.f32 1.0, %v2833
      %v2835 = vmul.f32 %v2832, %v2834
      %v2836 = vadd.f32 %v2832, %v2835
      %vm2837 = vweird.f32 %v2284
      %vm2838 = vweird.f32 %v2832
      %vm2839 = vmor %vm2837, %vm2838
      %v2840 = vsel %vm2839, %v2832, %v2836
      %v2841 = vand.u32 2147483647, %v2284
      %vm2842 = vcmp.eq.f32.partialorder %v2841, 8.507059e+37
      %v2843 = vand.u32 %v2284, 2147483648
      %v2844 = vor.u32 1.1754944e-38, %v2843
      %v2845 = vsel %vm2842, %v2844, %v2840
      %v2846 = vmul.f32 1.0, %v2845
      %v2847 = vrcp.pop %v2285
      %v2848 = vmul.f32 %v2285, %v2847
      %v2849 = vsub.f32 1.0, %v2848
      %v2850 = vmul.f32 %v2847, %v2849
      %v2851 = vadd.f32 %v2847, %v2850
      %vm2852 = vweird.f32 %v2285
      %vm2853 = vweird.f32 %v2847
      %vm2854 = vmor %vm2852, %vm2853
      %v2855 = vsel %vm2854, %v2847, %v2851
      %v2856 = vand.u32 2147483647, %v2285
      %vm2857 = vcmp.eq.f32.partialorder %v2856, 8.507059e+37
      %v2858 = vand.u32 %v2285, 2147483648
      %v2859 = vor.u32 1.1754944e-38, %v2858
      %v2860 = vsel %vm2857, %v2859, %v2855
      %v2861 = vmul.f32 1.0, %v2860
      %v2862 = vrcp.pop %v2286
      %v2863 = vmul.f32 %v2286, %v2862
      %v2864 = vsub.f32 1.0, %v2863
      %v2865 = vmul.f32 %v2862, %v2864
      %v2866 = vadd.f32 %v2862, %v2865
      %vm2867 = vweird.f32 %v2286
      %vm2868 = vweird.f32 %v2862
      %vm2869 = vmor %vm2867, %vm2868
      %v2870 = vsel %vm2869, %v2862, %v2866
      %v2871 = vand.u32 2147483647, %v2286
      %vm2872 = vcmp.eq.f32.partialorder %v2871, 8.507059e+37
      %v2873 = vand.u32 %v2286, 2147483648
      %v2874 = vor.u32 1.1754944e-38, %v2873
      %v2875 = vsel %vm2872, %v2874, %v2870
      %v2876 = vmul.f32 1.0, %v2875
      %v2877 = vrcp.pop %v2287
      %v2878 = vmul.f32 %v2287, %v2877
      %v2879 = vsub.f32 1.0, %v2878
      %v2880 = vmul.f32 %v2877, %v2879
      %v2881 = vadd.f32 %v2877, %v2880
      %vm2882 = vweird.f32 %v2287
      %vm2883 = vweird.f32 %v2877
      %vm2884 = vmor %vm2882, %vm2883
      %v2885 = vsel %vm2884, %v2877, %v2881
      %v2886 = vand.u32 2147483647, %v2287
      %vm2887 = vcmp.eq.f32.partialorder %v2886, 8.507059e+37
      %v2888 = vand.u32 %v2287, 2147483648
      %v2889 = vor.u32 1.1754944e-38, %v2888
      %v2890 = vsel %vm2887, %v2889, %v2885
      %v2891 = vmul.f32 1.0, %v2890
      %v2892 = vrcp.pop %v2288
      %v2893 = vmul.f32 %v2288, %v2892
      %v2894 = vsub.f32 1.0, %v2893
      %v2895 = vmul.f32 %v2892, %v2894
      %v2896 = vadd.f32 %v2892, %v2895
      %vm2897 = vweird.f32 %v2288
      %vm2898 = vweird.f32 %v2892
      %vm2899 = vmor %vm2897, %vm2898
      %v2900 = vsel %vm2899, %v2892, %v2896
      %v2901 = vand.u32 2147483647, %v2288
      %vm2902 = vcmp.eq.f32.partialorder %v2901, 8.507059e+37
      %v2903 = vand.u32 %v2288, 2147483648
      %v2904 = vor.u32 1.1754944e-38, %v2903
      %v2905 = vsel %vm2902, %v2904, %v2900
      %v2906 = vmul.f32 1.0, %v2905
      %v2907 = vrcp.pop %v2289
      %v2908 = vmul.f32 %v2289, %v2907
      %v2909 = vsub.f32 1.0, %v2908
      %v2910 = vmul.f32 %v2907, %v2909
      %v2911 = vadd.f32 %v2907, %v2910
      %vm2912 = vweird.f32 %v2289
      %vm2913 = vweird.f32 %v2907
      %vm2914 = vmor %vm2912, %vm2913
      %v2915 = vsel %vm2914, %v2907, %v2911
      %v2916 = vand.u32 2147483647, %v2289
      %vm2917 = vcmp.eq.f32.partialorder %v2916, 8.507059e+37
      %v2918 = vand.u32 %v2289, 2147483648
      %v2919 = vor.u32 1.1754944e-38, %v2918
      %v2920 = vsel %vm2917, %v2919, %v2915
      %v2921 = vmul.f32 1.0, %v2920
      %v2922 = vrcp.pop %v2290
      %v2923 = vmul.f32 %v2290, %v2922
      %v2924 = vsub.f32 1.0, %v2923
      %v2925 = vmul.f32 %v2922, %v2924
      %v2926 = vadd.f32 %v2922, %v2925
      %vm2927 = vweird.f32 %v2290
      %vm2928 = vweird.f32 %v2922
      %vm2929 = vmor %vm2927, %vm2928
      %v2930 = vsel %vm2929, %v2922, %v2926
      %v2931 = vand.u32 2147483647, %v2290
      %vm2932 = vcmp.eq.f32.partialorder %v2931, 8.507059e+37
      %v2933 = vand.u32 %v2290, 2147483648
      %v2934 = vor.u32 1.1754944e-38, %v2933
      %v2935 = vsel %vm2932, %v2934, %v2930
      %v2936 = vmul.f32 1.0, %v2935
      %v2937 = vrcp.pop %v2291
      %v2938 = vmul.f32 %v2291, %v2937
      %v2939 = vsub.f32 1.0, %v2938
      %v2940 = vmul.f32 %v2937, %v2939
      %v2941 = vadd.f32 %v2937, %v2940
      %vm2942 = vweird.f32 %v2291
      %vm2943 = vweird.f32 %v2937
      %vm2944 = vmor %vm2942, %vm2943
      %v2945 = vsel %vm2944, %v2937, %v2941
      %v2946 = vand.u32 2147483647, %v2291
      %vm2947 = vcmp.eq.f32.partialorder %v2946, 8.507059e+37
      %v2948 = vand.u32 %v2291, 2147483648
      %v2949 = vor.u32 1.1754944e-38, %v2948
      %v2950 = vsel %vm2947, %v2949, %v2945
      %v2951 = vmul.f32 1.0, %v2950
      %v2952 = vrcp.pop %v2292
      %v2953 = vmul.f32 %v2292, %v2952
      %v2954 = vsub.f32 1.0, %v2953
      %v2955 = vmul.f32 %v2952, %v2954
      %v2956 = vadd.f32 %v2952, %v2955
      %vm2957 = vweird.f32 %v2292
      %vm2958 = vweird.f32 %v2952
      %vm2959 = vmor %vm2957, %vm2958
      %v2960 = vsel %vm2959, %v2952, %v2956
      %v2961 = vand.u32 2147483647, %v2292
      %vm2962 = vcmp.eq.f32.partialorder %v2961, 8.507059e+37
      %v2963 = vand.u32 %v2292, 2147483648
      %v2964 = vor.u32 1.1754944e-38, %v2963
      %v2965 = vsel %vm2962, %v2964, %v2960
      %v2966 = vmul.f32 1.0, %v2965
      %v2967 = vrcp.pop %v2293
      %v2968 = vmul.f32 %v2293, %v2967
      %v2969 = vsub.f32 1.0, %v2968
      %v2970 = vmul.f32 %v2967, %v2969
      %v2971 = vadd.f32 %v2967, %v2970
      %vm2972 = vweird.f32 %v2293
      %vm2973 = vweird.f32 %v2967
      %vm2974 = vmor %vm2972, %vm2973
      %v2975 = vsel %vm2974, %v2967, %v2971
      %v2976 = vand.u32 2147483647, %v2293
      %vm2977 = vcmp.eq.f32.partialorder %v2976, 8.507059e+37
      %v2978 = vand.u32 %v2293, 2147483648
      %v2979 = vor.u32 1.1754944e-38, %v2978
      %v2980 = vsel %vm2977, %v2979, %v2975
      %v2981 = vmul.f32 1.0, %v2980
      %v2982 = vrcp.pop %v2294
      %v2983 = vmul.f32 %v2294, %v2982
      %v2984 = vsub.f32 1.0, %v2983
      %v2985 = vmul.f32 %v2982, %v2984
      %v2986 = vadd.f32 %v2982, %v2985
      %vm2987 = vweird.f32 %v2294
      %vm2988 = vweird.f32 %v2982
      %vm2989 = vmor %vm2987, %vm2988
      %v2990 = vsel %vm2989, %v2982, %v2986
      %v2991 = vand.u32 2147483647, %v2294
      %vm2992 = vcmp.eq.f32.partialorder %v2991, 8.507059e+37
      %v2993 = vand.u32 %v2294, 2147483648
      %v2994 = vor.u32 1.1754944e-38, %v2993
      %v2995 = vsel %vm2992, %v2994, %v2990
      %v2996 = vmul.f32 1.0, %v2995
      %v2997 = vrcp.pop %v2295
      %v2998 = vmul.f32 %v2295, %v2997
      %v2999 = vsub.f32 1.0, %v2998
      %v3000 = vmul.f32 %v2997, %v2999
      %v3001 = vadd.f32 %v2997, %v3000
      %vm3002 = vweird.f32 %v2295
      %vm3003 = vweird.f32 %v2997
      %vm3004 = vmor %vm3002, %vm3003
      %v3005 = vsel %vm3004, %v2997, %v3001
      %v3006 = vand.u32 2147483647, %v2295
      %vm3007 = vcmp.eq.f32.partialorder %v3006, 8.507059e+37
      %v3008 = vand.u32 %v2295, 2147483648
      %v3009 = vor.u32 1.1754944e-38, %v3008
      %v3010 = vsel %vm3007, %v3009, %v3005
      %v3011 = vmul.f32 1.0, %v3010
      %v3012 = vrcp.pop %v2296
      %v3013 = vmul.f32 %v2296, %v3012
      %v3014 = vsub.f32 1.0, %v3013
      %v3015 = vmul.f32 %v3012, %v3014
      %v3016 = vadd.f32 %v3012, %v3015
      %vm3017 = vweird.f32 %v2296
      %vm3018 = vweird.f32 %v3012
      %vm3019 = vmor %vm3017, %vm3018
      %v3020 = vsel %vm3019, %v3012, %v3016
      %v3021 = vand.u32 2147483647, %v2296
      %vm3022 = vcmp.eq.f32.partialorder %v3021, 8.507059e+37
      %v3023 = vand.u32 %v2296, 2147483648
      %v3024 = vor.u32 1.1754944e-38, %v3023
      %v3025 = vsel %vm3022, %v3024, %v3020
      %v3026 = vmul.f32 1.0, %v3025
      %v3027 = vrcp.pop %v2297
      %v3028 = vmul.f32 %v2297, %v3027
      %v3029 = vsub.f32 1.0, %v3028
      %v3030 = vmul.f32 %v3027, %v3029
      %v3031 = vadd.f32 %v3027, %v3030
      %vm3032 = vweird.f32 %v2297
      %vm3033 = vweird.f32 %v3027
      %vm3034 = vmor %vm3032, %vm3033
      %v3035 = vsel %vm3034, %v3027, %v3031
      %v3036 = vand.u32 2147483647, %v2297
      %vm3037 = vcmp.eq.f32.partialorder %v3036, 8.507059e+37
      %v3038 = vand.u32 %v2297, 2147483648
      %v3039 = vor.u32 1.1754944e-38, %v3038
      %v3040 = vsel %vm3037, %v3039, %v3035
      %v3041 = vmul.f32 1.0, %v3040
      %v3042 = vrcp.pop %v2298
      %v3043 = vmul.f32 %v2298, %v3042
      %v3044 = vsub.f32 1.0, %v3043
      %v3045 = vmul.f32 %v3042, %v3044
      %v3046 = vadd.f32 %v3042, %v3045
      %vm3047 = vweird.f32 %v2298
      %vm3048 = vweird.f32 %v3042
      %vm3049 = vmor %vm3047, %vm3048
      %v3050 = vsel %vm3049, %v3042, %v3046
      %v3051 = vand.u32 2147483647, %v2298
      %vm3052 = vcmp.eq.f32.partialorder %v3051, 8.507059e+37
      %v3053 = vand.u32 %v2298, 2147483648
      %v3054 = vor.u32 1.1754944e-38, %v3053
      %v3055 = vsel %vm3052, %v3054, %v3050
      %v3056 = vmul.f32 1.0, %v3055
      %v3057 = vrcp.pop %v2299
      %v3058 = vmul.f32 %v2299, %v3057
      %v3059 = vsub.f32 1.0, %v3058
      %v3060 = vmul.f32 %v3057, %v3059
      %v3061 = vadd.f32 %v3057, %v3060
      %vm3062 = vweird.f32 %v2299
      %vm3063 = vweird.f32 %v3057
      %vm3064 = vmor %vm3062, %vm3063
      %v3065 = vsel %vm3064, %v3057, %v3061
      %v3066 = vand.u32 2147483647, %v2299
      %vm3067 = vcmp.eq.f32.partialorder %v3066, 8.507059e+37
      %v3068 = vand.u32 %v2299, 2147483648
      %v3069 = vor.u32 1.1754944e-38, %v3068
      %v3070 = vsel %vm3067, %v3069, %v3065
      %v3071 = vmul.f32 1.0, %v3070
      %v3072 = vrcp.pop %v2300
      %v3073 = vmul.f32 %v2300, %v3072
      %v3074 = vsub.f32 1.0, %v3073
      %v3075 = vmul.f32 %v3072, %v3074
      %v3076 = vadd.f32 %v3072, %v3075
      %vm3077 = vweird.f32 %v2300
      %vm3078 = vweird.f32 %v3072
      %vm3079 = vmor %vm3077, %vm3078
      %v3080 = vsel %vm3079, %v3072, %v3076
      %v3081 = vand.u32 2147483647, %v2300
      %vm3082 = vcmp.eq.f32.partialorder %v3081, 8.507059e+37
      %v3083 = vand.u32 %v2300, 2147483648
      %v3084 = vor.u32 1.1754944e-38, %v3083
      %v3085 = vsel %vm3082, %v3084, %v3080
      %v3086 = vmul.f32 1.0, %v3085
      %v3087 = vrcp.pop %v2301
      %v3088 = vmul.f32 %v2301, %v3087
      %v3089 = vsub.f32 1.0, %v3088
      %v3090 = vmul.f32 %v3087, %v3089
      %v3091 = vadd.f32 %v3087, %v3090
      %vm3092 = vweird.f32 %v2301
      %vm3093 = vweird.f32 %v3087
      %vm3094 = vmor %vm3092, %vm3093
      %v3095 = vsel %vm3094, %v3087, %v3091
      %v3096 = vand.u32 2147483647, %v2301
      %vm3097 = vcmp.eq.f32.partialorder %v3096, 8.507059e+37
      %v3098 = vand.u32 %v2301, 2147483648
      %v3099 = vor.u32 1.1754944e-38, %v3098
      %v3100 = vsel %vm3097, %v3099, %v3095
      %v3101 = vmul.f32 1.0, %v3100
      %v3102 = vrcp.pop %v2302
      %v3103 = vmul.f32 %v2302, %v3102
      %v3104 = vsub.f32 1.0, %v3103
      %v3105 = vmul.f32 %v3102, %v3104
      %v3106 = vadd.f32 %v3102, %v3105
      %vm3107 = vweird.f32 %v2302
      %vm3108 = vweird.f32 %v3102
      %vm3109 = vmor %vm3107, %vm3108
      %v3110 = vsel %vm3109, %v3102, %v3106
      %v3111 = vand.u32 2147483647, %v2302
      %vm3112 = vcmp.eq.f32.partialorder %v3111, 8.507059e+37
      %v3113 = vand.u32 %v2302, 2147483648
      %v3114 = vor.u32 1.1754944e-38, %v3113
      %v3115 = vsel %vm3112, %v3114, %v3110
      %v3116 = vmul.f32 1.0, %v3115
      %v3117 = vrcp.pop %v2303
      %v3118 = vmul.f32 %v2303, %v3117
      %v3119 = vsub.f32 1.0, %v3118
      %v3120 = vmul.f32 %v3117, %v3119
      %v3121 = vadd.f32 %v3117, %v3120
      %vm3122 = vweird.f32 %v2303
      %vm3123 = vweird.f32 %v3117
      %vm3124 = vmor %vm3122, %vm3123
      %v3125 = vsel %vm3124, %v3117, %v3121
      %v3126 = vand.u32 2147483647, %v2303
      %vm3127 = vcmp.eq.f32.partialorder %v3126, 8.507059e+37
      %v3128 = vand.u32 %v2303, 2147483648
      %v3129 = vor.u32 1.1754944e-38, %v3128
      %v3130 = vsel %vm3127, %v3129, %v3125
      %v3131 = vmul.f32 1.0, %v3130
      %v3132 = vrcp.pop %v2304
      %v3133 = vmul.f32 %v2304, %v3132
      %v3134 = vsub.f32 1.0, %v3133
      %v3135 = vmul.f32 %v3132, %v3134
      %v3136 = vadd.f32 %v3132, %v3135
      %vm3137 = vweird.f32 %v2304
      %vm3138 = vweird.f32 %v3132
      %vm3139 = vmor %vm3137, %vm3138
      %v3140 = vsel %vm3139, %v3132, %v3136
      %v3141 = vand.u32 2147483647, %v2304
      %vm3142 = vcmp.eq.f32.partialorder %v3141, 8.507059e+37
      %v3143 = vand.u32 %v2304, 2147483648
      %v3144 = vor.u32 1.1754944e-38, %v3143
      %v3145 = vsel %vm3142, %v3144, %v3140
      %v3146 = vmul.f32 1.0, %v3145
      %v3147 = vrcp.pop %v2305
      %v3148 = vmul.f32 %v2305, %v3147
      %v3149 = vsub.f32 1.0, %v3148
      %v3150 = vmul.f32 %v3147, %v3149
      %v3151 = vadd.f32 %v3147, %v3150
      %vm3152 = vweird.f32 %v2305
      %vm3153 = vweird.f32 %v3147
      %vm3154 = vmor %vm3152, %vm3153
      %v3155 = vsel %vm3154, %v3147, %v3151
      %v3156 = vand.u32 2147483647, %v2305
      %vm3157 = vcmp.eq.f32.partialorder %v3156, 8.507059e+37
      %v3158 = vand.u32 %v2305, 2147483648
      %v3159 = vor.u32 1.1754944e-38, %v3158
      %v3160 = vsel %vm3157, %v3159, %v3155
      %v3161 = vmul.f32 1.0, %v3160
      %v3162 = vrcp.pop %v2306
      %v3163 = vmul.f32 %v2306, %v3162
      %v3164 = vsub.f32 1.0, %v3163
      %v3165 = vmul.f32 %v3162, %v3164
      %v3166 = vadd.f32 %v3162, %v3165
      %vm3167 = vweird.f32 %v2306
      %vm3168 = vweird.f32 %v3162
      %vm3169 = vmor %vm3167, %vm3168
      %v3170 = vsel %vm3169, %v3162, %v3166
      %v3171 = vand.u32 2147483647, %v2306
      %vm3172 = vcmp.eq.f32.partialorder %v3171, 8.507059e+37
      %v3173 = vand.u32 %v2306, 2147483648
      %v3174 = vor.u32 1.1754944e-38, %v3173
      %v3175 = vsel %vm3172, %v3174, %v3170
      %v3176 = vmul.f32 1.0, %v3175
      %v3177 = vrcp.pop %v2307
      %v3178 = vmul.f32 %v2307, %v3177
      %v3179 = vsub.f32 1.0, %v3178
      %v3180 = vmul.f32 %v3177, %v3179
      %v3181 = vadd.f32 %v3177, %v3180
      %vm3182 = vweird.f32 %v2307
      %vm3183 = vweird.f32 %v3177
      %vm3184 = vmor %vm3182, %vm3183
      %v3185 = vsel %vm3184, %v3177, %v3181
      %v3186 = vand.u32 2147483647, %v2307
      %vm3187 = vcmp.eq.f32.partialorder %v3186, 8.507059e+37
      %v3188 = vand.u32 %v2307, 2147483648
      %v3189 = vor.u32 1.1754944e-38, %v3188
      %v3190 = vsel %vm3187, %v3189, %v3185
      %v3191 = vmul.f32 1.0, %v3190
      %v3192 = vrcp.pop %v2308
      %v3193 = vmul.f32 %v2308, %v3192
      %v3194 = vsub.f32 1.0, %v3193
      %v3195 = vmul.f32 %v3192, %v3194
      %v3196 = vadd.f32 %v3192, %v3195
      %vm3197 = vweird.f32 %v2308
      %vm3198 = vweird.f32 %v3192
      %vm3199 = vmor %vm3197, %vm3198
      %v3200 = vsel %vm3199, %v3192, %v3196
      %v3201 = vand.u32 2147483647, %v2308
      %vm3202 = vcmp.eq.f32.partialorder %v3201, 8.507059e+37
      %v3203 = vand.u32 %v2308, 2147483648
      %v3204 = vor.u32 1.1754944e-38, %v3203
      %v3205 = vsel %vm3202, %v3204, %v3200
      %v3206 = vmul.f32 1.0, %v3205
      %v3207 = vrcp.pop %v2309
      %v3208 = vmul.f32 %v2309, %v3207
      %v3209 = vsub.f32 1.0, %v3208
      %v3210 = vmul.f32 %v3207, %v3209
      %v3211 = vadd.f32 %v3207, %v3210
      %vm3212 = vweird.f32 %v2309
      %vm3213 = vweird.f32 %v3207
      %vm3214 = vmor %vm3212, %vm3213
      %v3215 = vsel %vm3214, %v3207, %v3211
      %v3216 = vand.u32 2147483647, %v2309
      %vm3217 = vcmp.eq.f32.partialorder %v3216, 8.507059e+37
      %v3218 = vand.u32 %v2309, 2147483648
      %v3219 = vor.u32 1.1754944e-38, %v3218
      %v3220 = vsel %vm3217, %v3219, %v3215
      %v3221 = vmul.f32 1.0, %v3220
      %v3222 = vrcp.pop %v2310
      %v3223 = vmul.f32 %v2310, %v3222
      %v3224 = vsub.f32 1.0, %v3223
      %v3225 = vmul.f32 %v3222, %v3224
      %v3226 = vadd.f32 %v3222, %v3225
      %vm3227 = vweird.f32 %v2310
      %vm3228 = vweird.f32 %v3222
      %vm3229 = vmor %vm3227, %vm3228
      %v3230 = vsel %vm3229, %v3222, %v3226
      %v3231 = vand.u32 2147483647, %v2310
      %vm3232 = vcmp.eq.f32.partialorder %v3231, 8.507059e+37
      %v3233 = vand.u32 %v2310, 2147483648
      %v3234 = vor.u32 1.1754944e-38, %v3233
      %v3235 = vsel %vm3232, %v3234, %v3230
      %v3236 = vmul.f32 1.0, %v3235
      %v3237 = vrcp.pop %v2311
      %v3238 = vmul.f32 %v2311, %v3237
      %v3239 = vsub.f32 1.0, %v3238
      %v3240 = vmul.f32 %v3237, %v3239
      %v3241 = vadd.f32 %v3237, %v3240
      %vm3242 = vweird.f32 %v2311
      %vm3243 = vweird.f32 %v3237
      %vm3244 = vmor %vm3242, %vm3243
      %v3245 = vsel %vm3244, %v3237, %v3241
      %v3246 = vand.u32 2147483647, %v2311
      %vm3247 = vcmp.eq.f32.partialorder %v3246, 8.507059e+37
      %v3248 = vand.u32 %v2311, 2147483648
      %v3249 = vor.u32 1.1754944e-38, %v3248
      %v3250 = vsel %vm3247, %v3249, %v3245
      %v3251 = vmul.f32 1.0, %v3250
      %v3252 = vrcp.pop %v2312
      %v3253 = vmul.f32 %v2312, %v3252
      %v3254 = vsub.f32 1.0, %v3253
      %v3255 = vmul.f32 %v3252, %v3254
      %v3256 = vadd.f32 %v3252, %v3255
      %vm3257 = vweird.f32 %v2312
      %vm3258 = vweird.f32 %v3252
      %vm3259 = vmor %vm3257, %vm3258
      %v3260 = vsel %vm3259, %v3252, %v3256
      %v3261 = vand.u32 2147483647, %v2312
      %vm3262 = vcmp.eq.f32.partialorder %v3261, 8.507059e+37
      %v3263 = vand.u32 %v2312, 2147483648
      %v3264 = vor.u32 1.1754944e-38, %v3263
      %v3265 = vsel %vm3262, %v3264, %v3260
      %v3266 = vmul.f32 1.0, %v3265
      %v3267 = vrcp.pop %v2313
      %v3268 = vmul.f32 %v2313, %v3267
      %v3269 = vsub.f32 1.0, %v3268
      %v3270 = vmul.f32 %v3267, %v3269
      %v3271 = vadd.f32 %v3267, %v3270
      %vm3272 = vweird.f32 %v2313
      %vm3273 = vweird.f32 %v3267
      %vm3274 = vmor %vm3272, %vm3273
      %v3275 = vsel %vm3274, %v3267, %v3271
      %v3276 = vand.u32 2147483647, %v2313
      %vm3277 = vcmp.eq.f32.partialorder %v3276, 8.507059e+37
      %v3278 = vand.u32 %v2313, 2147483648
      %v3279 = vor.u32 1.1754944e-38, %v3278
      %v3280 = vsel %vm3277, %v3279, %v3275
      %v3281 = vmul.f32 1.0, %v3280
      %v3282 = vrcp.pop %v2314
      %v3283 = vmul.f32 %v2314, %v3282
      %v3284 = vsub.f32 1.0, %v3283
      %v3285 = vmul.f32 %v3282, %v3284
      %v3286 = vadd.f32 %v3282, %v3285
      %vm3287 = vweird.f32 %v2314
      %vm3288 = vweird.f32 %v3282
      %vm3289 = vmor %vm3287, %vm3288
      %v3290 = vsel %vm3289, %v3282, %v3286
      %v3291 = vand.u32 2147483647, %v2314
      %vm3292 = vcmp.eq.f32.partialorder %v3291, 8.507059e+37
      %v3293 = vand.u32 %v2314, 2147483648
      %v3294 = vor.u32 1.1754944e-38, %v3293
      %v3295 = vsel %vm3292, %v3294, %v3290
      %v3296 = vmul.f32 1.0, %v3295
      %v3297 = vrcp.pop %v2315
      %v3298 = vmul.f32 %v2315, %v3297
      %v3299 = vsub.f32 1.0, %v3298
      %v3300 = vmul.f32 %v3297, %v3299
      %v3301 = vadd.f32 %v3297, %v3300
      %vm3302 = vweird.f32 %v2315
      %vm3303 = vweird.f32 %v3297
      %vm3304 = vmor %vm3302, %vm3303
      %v3305 = vsel %vm3304, %v3297, %v3301
      %v3306 = vand.u32 2147483647, %v2315
      %vm3307 = vcmp.eq.f32.partialorder %v3306, 8.507059e+37
      %v3308 = vand.u32 %v2315, 2147483648
      %v3309 = vor.u32 1.1754944e-38, %v3308
      %v3310 = vsel %vm3307, %v3309, %v3305
      %v3311 = vmul.f32 1.0, %v3310
      %v3312 = vrcp.pop %v2316
      %v3313 = vmul.f32 %v2316, %v3312
      %v3314 = vsub.f32 1.0, %v3313
      %v3315 = vmul.f32 %v3312, %v3314
      %v3316 = vadd.f32 %v3312, %v3315
      %vm3317 = vweird.f32 %v2316
      %vm3318 = vweird.f32 %v3312
      %vm3319 = vmor %vm3317, %vm3318
      %v3320 = vsel %vm3319, %v3312, %v3316
      %v3321 = vand.u32 2147483647, %v2316
      %vm3322 = vcmp.eq.f32.partialorder %v3321, 8.507059e+37
      %v3323 = vand.u32 %v2316, 2147483648
      %v3324 = vor.u32 1.1754944e-38, %v3323
      %v3325 = vsel %vm3322, %v3324, %v3320
      %v3326 = vmul.f32 1.0, %v3325
      %v3327 = vrcp.pop %v2317
      %v3328 = vmul.f32 %v2317, %v3327
      %v3329 = vsub.f32 1.0, %v3328
      %v3330 = vmul.f32 %v3327, %v3329
      %v3331 = vadd.f32 %v3327, %v3330
      %vm3332 = vweird.f32 %v2317
      %vm3333 = vweird.f32 %v3327
      %vm3334 = vmor %vm3332, %vm3333
      %v3335 = vsel %vm3334, %v3327, %v3331
      %v3336 = vand.u32 2147483647, %v2317
      %vm3337 = vcmp.eq.f32.partialorder %v3336, 8.507059e+37
      %v3338 = vand.u32 %v2317, 2147483648
      %v3339 = vor.u32 1.1754944e-38, %v3338
      %v3340 = vsel %vm3337, %v3339, %v3335
      %v3341 = vmul.f32 1.0, %v3340
      %v3342 = vrcp.pop %v2318
      %v3343 = vmul.f32 %v2318, %v3342
      %v3344 = vsub.f32 1.0, %v3343
      %v3345 = vmul.f32 %v3342, %v3344
      %v3346 = vadd.f32 %v3342, %v3345
      %vm3347 = vweird.f32 %v2318
      %vm3348 = vweird.f32 %v3342
      %vm3349 = vmor %vm3347, %vm3348
      %v3350 = vsel %vm3349, %v3342, %v3346
      %v3351 = vand.u32 2147483647, %v2318
      %vm3352 = vcmp.eq.f32.partialorder %v3351, 8.507059e+37
      %v3353 = vand.u32 %v2318, 2147483648
      %v3354 = vor.u32 1.1754944e-38, %v3353
      %v3355 = vsel %vm3352, %v3354, %v3350
      %v3356 = vmul.f32 1.0, %v3355
      %v3357 = vrcp.pop %v2319
      %v3358 = vmul.f32 %v2319, %v3357
      %v3359 = vsub.f32 1.0, %v3358
      %v3360 = vmul.f32 %v3357, %v3359
      %v3361 = vadd.f32 %v3357, %v3360
      %vm3362 = vweird.f32 %v2319
      %vm3363 = vweird.f32 %v3357
      %vm3364 = vmor %vm3362, %vm3363
      %v3365 = vsel %vm3364, %v3357, %v3361
      %v3366 = vand.u32 2147483647, %v2319
      %vm3367 = vcmp.eq.f32.partialorder %v3366, 8.507059e+37
      %v3368 = vand.u32 %v2319, 2147483648
      %v3369 = vor.u32 1.1754944e-38, %v3368
      %v3370 = vsel %vm3367, %v3369, %v3365
      %v3371 = vmul.f32 1.0, %v3370
      %v3372 = vrcp.pop %v2320
      %v3373 = vmul.f32 %v2320, %v3372
      %v3374 = vsub.f32 1.0, %v3373
      %v3375 = vmul.f32 %v3372, %v3374
      %v3376 = vadd.f32 %v3372, %v3375
      %vm3377 = vweird.f32 %v2320
      %vm3378 = vweird.f32 %v3372
      %vm3379 = vmor %vm3377, %vm3378
      %v3380 = vsel %vm3379, %v3372, %v3376
      %v3381 = vand.u32 2147483647, %v2320
      %vm3382 = vcmp.eq.f32.partialorder %v3381, 8.507059e+37
      %v3383 = vand.u32 %v2320, 2147483648
      %v3384 = vor.u32 1.1754944e-38, %v3383
      %v3385 = vsel %vm3382, %v3384, %v3380
      %v3386 = vmul.f32 1.0, %v3385
      %v3387 = vrcp.pop %v2321
      %v3388 = vmul.f32 %v2321, %v3387
      %v3389 = vsub.f32 1.0, %v3388
      %v3390 = vmul.f32 %v3387, %v3389
      %v3391 = vadd.f32 %v3387, %v3390
      %vm3392 = vweird.f32 %v2321
      %vm3393 = vweird.f32 %v3387
      %vm3394 = vmor %vm3392, %vm3393
      %v3395 = vsel %vm3394, %v3387, %v3391
      %v3396 = vand.u32 2147483647, %v2321
      %vm3397 = vcmp.eq.f32.partialorder %v3396, 8.507059e+37
      %v3398 = vand.u32 %v2321, 2147483648
      %v3399 = vor.u32 1.1754944e-38, %v3398
      %v3400 = vsel %vm3397, %v3399, %v3395
      %v3401 = vmul.f32 1.0, %v3400
      %v3402 = vrcp.pop %v2322
      %v3403 = vmul.f32 %v2322, %v3402
      %v3404 = vsub.f32 1.0, %v3403
      %v3405 = vmul.f32 %v3402, %v3404
      %v3406 = vadd.f32 %v3402, %v3405
      %vm3407 = vweird.f32 %v2322
      %vm3408 = vweird.f32 %v3402
      %vm3409 = vmor %vm3407, %vm3408
      %v3410 = vsel %vm3409, %v3402, %v3406
      %v3411 = vand.u32 2147483647, %v2322
      %vm3412 = vcmp.eq.f32.partialorder %v3411, 8.507059e+37
      %v3413 = vand.u32 %v2322, 2147483648
      %v3414 = vor.u32 1.1754944e-38, %v3413
      %v3415 = vsel %vm3412, %v3414, %v3410
      %v3416 = vmul.f32 1.0, %v3415
      %v3417 = vrcp.pop %v2323
      %v3418 = vmul.f32 %v2323, %v3417
      %v3419 = vsub.f32 1.0, %v3418
      %v3420 = vmul.f32 %v3417, %v3419
      %v3421 = vadd.f32 %v3417, %v3420
      %vm3422 = vweird.f32 %v2323
      %vm3423 = vweird.f32 %v3417
      %vm3424 = vmor %vm3422, %vm3423
      %v3425 = vsel %vm3424, %v3417, %v3421
      %v3426 = vand.u32 2147483647, %v2323
      %vm3427 = vcmp.eq.f32.partialorder %v3426, 8.507059e+37
      %v3428 = vand.u32 %v2323, 2147483648
      %v3429 = vor.u32 1.1754944e-38, %v3428
      %v3430 = vsel %vm3427, %v3429, %v3425
      %v3431 = vmul.f32 1.0, %v3430
      %v3432 = vrcp.pop %v2324
      %v3433 = vmul.f32 %v2324, %v3432
      %v3434 = vsub.f32 1.0, %v3433
      %v3435 = vmul.f32 %v3432, %v3434
      %v3436 = vadd.f32 %v3432, %v3435
      %vm3437 = vweird.f32 %v2324
      %vm3438 = vweird.f32 %v3432
      %vm3439 = vmor %vm3437, %vm3438
      %v3440 = vsel %vm3439, %v3432, %v3436
      %v3441 = vand.u32 2147483647, %v2324
      %vm3442 = vcmp.eq.f32.partialorder %v3441, 8.507059e+37
      %v3443 = vand.u32 %v2324, 2147483648
      %v3444 = vor.u32 1.1754944e-38, %v3443
      %v3445 = vsel %vm3442, %v3444, %v3440
      %v3446 = vmul.f32 1.0, %v3445
      %v3447 = vrcp.pop %v2325
      %v3448 = vmul.f32 %v2325, %v3447
      %v3449 = vsub.f32 1.0, %v3448
      %v3450 = vmul.f32 %v3447, %v3449
      %v3451 = vadd.f32 %v3447, %v3450
      %vm3452 = vweird.f32 %v2325
      %vm3453 = vweird.f32 %v3447
      %vm3454 = vmor %vm3452, %vm3453
      %v3455 = vsel %vm3454, %v3447, %v3451
      %v3456 = vand.u32 2147483647, %v2325
      %vm3457 = vcmp.eq.f32.partialorder %v3456, 8.507059e+37
      %v3458 = vand.u32 %v2325, 2147483648
      %v3459 = vor.u32 1.1754944e-38, %v3458
      %v3460 = vsel %vm3457, %v3459, %v3455
      %v3461 = vmul.f32 1.0, %v3460
      %v3462 = vrcp.pop %v2326
      %v3463 = vmul.f32 %v2326, %v3462
      %v3464 = vsub.f32 1.0, %v3463
      %v3465 = vmul.f32 %v3462, %v3464
      %v3466 = vadd.f32 %v3462, %v3465
      %vm3467 = vweird.f32 %v2326
      %vm3468 = vweird.f32 %v3462
      %vm3469 = vmor %vm3467, %vm3468
      %v3470 = vsel %vm3469, %v3462, %v3466
      %v3471 = vand.u32 2147483647, %v2326
      %vm3472 = vcmp.eq.f32.partialorder %v3471, 8.507059e+37
      %v3473 = vand.u32 %v2326, 2147483648
      %v3474 = vor.u32 1.1754944e-38, %v3473
      %v3475 = vsel %vm3472, %v3474, %v3470
      %v3476 = vmul.f32 1.0, %v3475
      %v3477 = vrcp.pop %v2327
      %v3478 = vmul.f32 %v2327, %v3477
      %v3479 = vsub.f32 1.0, %v3478
      %v3480 = vmul.f32 %v3477, %v3479
      %v3481 = vadd.f32 %v3477, %v3480
      %vm3482 = vweird.f32 %v2327
      %vm3483 = vweird.f32 %v3477
      %vm3484 = vmor %vm3482, %vm3483
      %v3485 = vsel %vm3484, %v3477, %v3481
      %v3486 = vand.u32 2147483647, %v2327
      %vm3487 = vcmp.eq.f32.partialorder %v3486, 8.507059e+37
      %v3488 = vand.u32 %v2327, 2147483648
      %v3489 = vor.u32 1.1754944e-38, %v3488
      %v3490 = vsel %vm3487, %v3489, %v3485
      %v3491 = vmul.f32 1.0, %v3490
      %v3492 = vrcp.pop %v2328
      %v3493 = vmul.f32 %v2328, %v3492
      %v3494 = vsub.f32 1.0, %v3493
      %v3495 = vmul.f32 %v3492, %v3494
      %v3496 = vadd.f32 %v3492, %v3495
      %vm3497 = vweird.f32 %v2328
      %vm3498 = vweird.f32 %v3492
      %vm3499 = vmor %vm3497, %vm3498
      %v3500 = vsel %vm3499, %v3492, %v3496
      %v3501 = vand.u32 2147483647, %v2328
      %vm3502 = vcmp.eq.f32.partialorder %v3501, 8.507059e+37
      %v3503 = vand.u32 %v2328, 2147483648
      %v3504 = vor.u32 1.1754944e-38, %v3503
      %v3505 = vsel %vm3502, %v3504, %v3500
      %v3506 = vmul.f32 1.0, %v3505
      %v3507 = vrcp.pop %v2329
      %v3508 = vmul.f32 %v2329, %v3507
      %v3509 = vsub.f32 1.0, %v3508
      %v3510 = vmul.f32 %v3507, %v3509
      %v3511 = vadd.f32 %v3507, %v3510
      %vm3512 = vweird.f32 %v2329
      %vm3513 = vweird.f32 %v3507
      %vm3514 = vmor %vm3512, %vm3513
      %v3515 = vsel %vm3514, %v3507, %v3511
      %v3516 = vand.u32 2147483647, %v2329
      %vm3517 = vcmp.eq.f32.partialorder %v3516, 8.507059e+37
      %v3518 = vand.u32 %v2329, 2147483648
      %v3519 = vor.u32 1.1754944e-38, %v3518
      %v3520 = vsel %vm3517, %v3519, %v3515
      %v3521 = vmul.f32 1.0, %v3520
      %v3522 = vrcp.pop %v2330
      %v3523 = vmul.f32 %v2330, %v3522
      %v3524 = vsub.f32 1.0, %v3523
      %v3525 = vmul.f32 %v3522, %v3524
      %v3526 = vadd.f32 %v3522, %v3525
      %vm3527 = vweird.f32 %v2330
      %vm3528 = vweird.f32 %v3522
      %vm3529 = vmor %vm3527, %vm3528
      %v3530 = vsel %vm3529, %v3522, %v3526
      %v3531 = vand.u32 2147483647, %v2330
      %vm3532 = vcmp.eq.f32.partialorder %v3531, 8.507059e+37
      %v3533 = vand.u32 %v2330, 2147483648
      %v3534 = vor.u32 1.1754944e-38, %v3533
      %v3535 = vsel %vm3532, %v3534, %v3530
      %v3536 = vmul.f32 1.0, %v3535
      %v3537 = vrcp.pop %v2331
      %v3538 = vmul.f32 %v2331, %v3537
      %v3539 = vsub.f32 1.0, %v3538
      %v3540 = vmul.f32 %v3537, %v3539
      %v3541 = vadd.f32 %v3537, %v3540
      %vm3542 = vweird.f32 %v2331
      %vm3543 = vweird.f32 %v3537
      %vm3544 = vmor %vm3542, %vm3543
      %v3545 = vsel %vm3544, %v3537, %v3541
      %v3546 = vand.u32 2147483647, %v2331
      %vm3547 = vcmp.eq.f32.partialorder %v3546, 8.507059e+37
      %v3548 = vand.u32 %v2331, 2147483648
      %v3549 = vor.u32 1.1754944e-38, %v3548
      %v3550 = vsel %vm3547, %v3549, %v3545
      %v3551 = vmul.f32 1.0, %v3550
      %v3552 = vrcp.pop %v2332
      %v3553 = vmul.f32 %v2332, %v3552
      %v3554 = vsub.f32 1.0, %v3553
      %v3555 = vmul.f32 %v3552, %v3554
      %v3556 = vadd.f32 %v3552, %v3555
      %vm3557 = vweird.f32 %v2332
      %vm3558 = vweird.f32 %v3552
      %vm3559 = vmor %vm3557, %vm3558
      %v3560 = vsel %vm3559, %v3552, %v3556
      %v3561 = vand.u32 2147483647, %v2332
      %vm3562 = vcmp.eq.f32.partialorder %v3561, 8.507059e+37
      %v3563 = vand.u32 %v2332, 2147483648
      %v3564 = vor.u32 1.1754944e-38, %v3563
      %v3565 = vsel %vm3562, %v3564, %v3560
      %v3566 = vmul.f32 1.0, %v3565
      %v3567 = vrcp.pop %v2333
      %v3568 = vmul.f32 %v2333, %v3567
      %v3569 = vsub.f32 1.0, %v3568
      %v3570 = vmul.f32 %v3567, %v3569
      %v3571 = vadd.f32 %v3567, %v3570
      %vm3572 = vweird.f32 %v2333
      %vm3573 = vweird.f32 %v3567
      %vm3574 = vmor %vm3572, %vm3573
      %v3575 = vsel %vm3574, %v3567, %v3571
      %v3576 = vand.u32 2147483647, %v2333
      %vm3577 = vcmp.eq.f32.partialorder %v3576, 8.507059e+37
      %v3578 = vand.u32 %v2333, 2147483648
      %v3579 = vor.u32 1.1754944e-38, %v3578
      %v3580 = vsel %vm3577, %v3579, %v3575
      %v3581 = vmul.f32 1.0, %v3580
      %v3582 = vrcp.pop %v2334
      %v3583 = vmul.f32 %v2334, %v3582
      %v3584 = vsub.f32 1.0, %v3583
      %v3585 = vmul.f32 %v3582, %v3584
      %v3586 = vadd.f32 %v3582, %v3585
      %vm3587 = vweird.f32 %v2334
      %vm3588 = vweird.f32 %v3582
      %vm3589 = vmor %vm3587, %vm3588
      %v3590 = vsel %vm3589, %v3582, %v3586
      %v3591 = vand.u32 2147483647, %v2334
      %vm3592 = vcmp.eq.f32.partialorder %v3591, 8.507059e+37
      %v3593 = vand.u32 %v2334, 2147483648
      %v3594 = vor.u32 1.1754944e-38, %v3593
      %v3595 = vsel %vm3592, %v3594, %v3590
      %v3596 = vmul.f32 1.0, %v3595
      %v3597 = vrcp.pop %v2335
      %v3598 = vmul.f32 %v2335, %v3597
      %v3599 = vsub.f32 1.0, %v3598
      %v3600 = vmul.f32 %v3597, %v3599
      %v3601 = vadd.f32 %v3597, %v3600
      %vm3602 = vweird.f32 %v2335
      %vm3603 = vweird.f32 %v3597
      %vm3604 = vmor %vm3602, %vm3603
      %v3605 = vsel %vm3604, %v3597, %v3601
      %v3606 = vand.u32 2147483647, %v2335
      %vm3607 = vcmp.eq.f32.partialorder %v3606, 8.507059e+37
      %v3608 = vand.u32 %v2335, 2147483648
      %v3609 = vor.u32 1.1754944e-38, %v3608
      %v3610 = vsel %vm3607, %v3609, %v3605
      %v3611 = vmul.f32 1.0, %v3610
      %v3612 = vrcp.pop %v2336
      %v3613 = vmul.f32 %v2336, %v3612
      %v3614 = vsub.f32 1.0, %v3613
      %v3615 = vmul.f32 %v3612, %v3614
      %v3616 = vadd.f32 %v3612, %v3615
      %vm3617 = vweird.f32 %v2336
      %vm3618 = vweird.f32 %v3612
      %vm3619 = vmor %vm3617, %vm3618
      %v3620 = vsel %vm3619, %v3612, %v3616
      %v3621 = vand.u32 2147483647, %v2336
      %vm3622 = vcmp.eq.f32.partialorder %v3621, 8.507059e+37
      %v3623 = vand.u32 %v2336, 2147483648
      %v3624 = vor.u32 1.1754944e-38, %v3623
      %v3625 = vsel %vm3622, %v3624, %v3620
      %v3626 = vmul.f32 1.0, %v3625
      %v3627 = vrcp.pop %v2337
      %v3628 = vmul.f32 %v2337, %v3627
      %v3629 = vsub.f32 1.0, %v3628
      %v3630 = vmul.f32 %v3627, %v3629
      %v3631 = vadd.f32 %v3627, %v3630
      %vm3632 = vweird.f32 %v2337
      %vm3633 = vweird.f32 %v3627
      %vm3634 = vmor %vm3632, %vm3633
      %v3635 = vsel %vm3634, %v3627, %v3631
      %v3636 = vand.u32 2147483647, %v2337
      %vm3637 = vcmp.eq.f32.partialorder %v3636, 8.507059e+37
      %v3638 = vand.u32 %v2337, 2147483648
      %v3639 = vor.u32 1.1754944e-38, %v3638
      %v3640 = vsel %vm3637, %v3639, %v3635
      %v3641 = vmul.f32 1.0, %v3640
      %v3642 = vrcp.pop %v2338
      %v3643 = vmul.f32 %v2338, %v3642
      %v3644 = vsub.f32 1.0, %v3643
      %v3645 = vmul.f32 %v3642, %v3644
      %v3646 = vadd.f32 %v3642, %v3645
      %vm3647 = vweird.f32 %v2338
      %vm3648 = vweird.f32 %v3642
      %vm3649 = vmor %vm3647, %vm3648
      %v3650 = vsel %vm3649, %v3642, %v3646
      %v3651 = vand.u32 2147483647, %v2338
      %vm3652 = vcmp.eq.f32.partialorder %v3651, 8.507059e+37
      %v3653 = vand.u32 %v2338, 2147483648
      %v3654 = vor.u32 1.1754944e-38, %v3653
      %v3655 = vsel %vm3652, %v3654, %v3650
      %v3656 = vmul.f32 1.0, %v3655
      %v3657 = vrcp.pop %v2339
      %v3658 = vmul.f32 %v2339, %v3657
      %v3659 = vsub.f32 1.0, %v3658
      %v3660 = vmul.f32 %v3657, %v3659
      %v3661 = vadd.f32 %v3657, %v3660
      %vm3662 = vweird.f32 %v2339
      %vm3663 = vweird.f32 %v3657
      %vm3664 = vmor %vm3662, %vm3663
      %v3665 = vsel %vm3664, %v3657, %v3661
      %v3666 = vand.u32 2147483647, %v2339
      %vm3667 = vcmp.eq.f32.partialorder %v3666, 8.507059e+37
      %v3668 = vand.u32 %v2339, 2147483648
      %v3669 = vor.u32 1.1754944e-38, %v3668
      %v3670 = vsel %vm3667, %v3669, %v3665
      %v3671 = vmul.f32 1.0, %v3670
      %v3672 = vrcp.pop %v2340
      %v3673 = vmul.f32 %v2340, %v3672
      %v3674 = vsub.f32 1.0, %v3673
      %v3675 = vmul.f32 %v3672, %v3674
      %v3676 = vadd.f32 %v3672, %v3675
      %vm3677 = vweird.f32 %v2340
      %vm3678 = vweird.f32 %v3672
      %vm3679 = vmor %vm3677, %vm3678
      %v3680 = vsel %vm3679, %v3672, %v3676
      %v3681 = vand.u32 2147483647, %v2340
      %vm3682 = vcmp.eq.f32.partialorder %v3681, 8.507059e+37
      %v3683 = vand.u32 %v2340, 2147483648
      %v3684 = vor.u32 1.1754944e-38, %v3683
      %v3685 = vsel %vm3682, %v3684, %v3680
      %v3686 = vmul.f32 1.0, %v3685
      %v3687 = vrcp.pop %v2341
      %v3688 = vmul.f32 %v2341, %v3687
      %v3689 = vsub.f32 1.0, %v3688
      %v3690 = vmul.f32 %v3687, %v3689
      %v3691 = vadd.f32 %v3687, %v3690
      %vm3692 = vweird.f32 %v2341
      %vm3693 = vweird.f32 %v3687
      %vm3694 = vmor %vm3692, %vm3693
      %v3695 = vsel %vm3694, %v3687, %v3691
      %v3696 = vand.u32 2147483647, %v2341
      %vm3697 = vcmp.eq.f32.partialorder %v3696, 8.507059e+37
      %v3698 = vand.u32 %v2341, 2147483648
      %v3699 = vor.u32 1.1754944e-38, %v3698
      %v3700 = vsel %vm3697, %v3699, %v3695
      %v3701 = vmul.f32 1.0, %v3700
      %v3702 = vrcp.pop %v2342
      %v3703 = vmul.f32 %v2342, %v3702
      %v3704 = vsub.f32 1.0, %v3703
      %v3705 = vmul.f32 %v3702, %v3704
      %v3706 = vadd.f32 %v3702, %v3705
      %vm3707 = vweird.f32 %v2342
      %vm3708 = vweird.f32 %v3702
      %vm3709 = vmor %vm3707, %vm3708
      %v3710 = vsel %vm3709, %v3702, %v3706
      %v3711 = vand.u32 2147483647, %v2342
      %vm3712 = vcmp.eq.f32.partialorder %v3711, 8.507059e+37
      %v3713 = vand.u32 %v2342, 2147483648
      %v3714 = vor.u32 1.1754944e-38, %v3713
      %v3715 = vsel %vm3712, %v3714, %v3710
      %v3716 = vmul.f32 1.0, %v3715
      %v3717 = vrcp.pop %v2343
      %v3718 = vmul.f32 %v2343, %v3717
      %v3719 = vsub.f32 1.0, %v3718
      %v3720 = vmul.f32 %v3717, %v3719
      %v3721 = vadd.f32 %v3717, %v3720
      %vm3722 = vweird.f32 %v2343
      %vm3723 = vweird.f32 %v3717
      %vm3724 = vmor %vm3722, %vm3723
      %v3725 = vsel %vm3724, %v3717, %v3721
      %v3726 = vand.u32 2147483647, %v2343
      %vm3727 = vcmp.eq.f32.partialorder %v3726, 8.507059e+37
      %v3728 = vand.u32 %v2343, 2147483648
      %v3729 = vor.u32 1.1754944e-38, %v3728
      %v3730 = vsel %vm3727, %v3729, %v3725
      %v3731 = vmul.f32 1.0, %v3730
      %v3732 = vrcp.pop %v2344
      %v3733 = vmul.f32 %v2344, %v3732
      %v3734 = vsub.f32 1.0, %v3733
      %v3735 = vmul.f32 %v3732, %v3734
      %v3736 = vadd.f32 %v3732, %v3735
      %vm3737 = vweird.f32 %v2344
      %vm3738 = vweird.f32 %v3732
      %vm3739 = vmor %vm3737, %vm3738
      %v3740 = vsel %vm3739, %v3732, %v3736
      %v3741 = vand.u32 2147483647, %v2344
      %vm3742 = vcmp.eq.f32.partialorder %v3741, 8.507059e+37
      %v3743 = vand.u32 %v2344, 2147483648
      %v3744 = vor.u32 1.1754944e-38, %v3743
      %v3745 = vsel %vm3742, %v3744, %v3740
      %v3746 = vmul.f32 1.0, %v3745
      %v3747 = vrcp.pop %v2345
      %v3748 = vmul.f32 %v2345, %v3747
      %v3749 = vsub.f32 1.0, %v3748
      %v3750 = vmul.f32 %v3747, %v3749
      %v3751 = vadd.f32 %v3747, %v3750
      %vm3752 = vweird.f32 %v2345
      %vm3753 = vweird.f32 %v3747
      %vm3754 = vmor %vm3752, %vm3753
      %v3755 = vsel %vm3754, %v3747, %v3751
      %v3756 = vand.u32 2147483647, %v2345
      %vm3757 = vcmp.eq.f32.partialorder %v3756, 8.507059e+37
      %v3758 = vand.u32 %v2345, 2147483648
      %v3759 = vor.u32 1.1754944e-38, %v3758
      %v3760 = vsel %vm3757, %v3759, %v3755
      %v3761 = vmul.f32 1.0, %v3760
      %v3762 = vrcp.pop %v2346
      %v3763 = vmul.f32 %v2346, %v3762
      %v3764 = vsub.f32 1.0, %v3763
      %v3765 = vmul.f32 %v3762, %v3764
      %v3766 = vadd.f32 %v3762, %v3765
      %vm3767 = vweird.f32 %v2346
      %vm3768 = vweird.f32 %v3762
      %vm3769 = vmor %vm3767, %vm3768
      %v3770 = vsel %vm3769, %v3762, %v3766
      %v3771 = vand.u32 2147483647, %v2346
      %vm3772 = vcmp.eq.f32.partialorder %v3771, 8.507059e+37
      %v3773 = vand.u32 %v2346, 2147483648
      %v3774 = vor.u32 1.1754944e-38, %v3773
      %v3775 = vsel %vm3772, %v3774, %v3770
      %v3776 = vmul.f32 1.0, %v3775
      %v3777 = vrcp.pop %v2347
      %v3778 = vmul.f32 %v2347, %v3777
      %v3779 = vsub.f32 1.0, %v3778
      %v3780 = vmul.f32 %v3777, %v3779
      %v3781 = vadd.f32 %v3777, %v3780
      %vm3782 = vweird.f32 %v2347
      %vm3783 = vweird.f32 %v3777
      %vm3784 = vmor %vm3782, %vm3783
      %v3785 = vsel %vm3784, %v3777, %v3781
      %v3786 = vand.u32 2147483647, %v2347
      %vm3787 = vcmp.eq.f32.partialorder %v3786, 8.507059e+37
      %v3788 = vand.u32 %v2347, 2147483648
      %v3789 = vor.u32 1.1754944e-38, %v3788
      %v3790 = vsel %vm3787, %v3789, %v3785
      %v3791 = vmul.f32 1.0, %v3790
      %v3792 = vrcp.pop %v2348
      %v3793 = vmul.f32 %v2348, %v3792
      %v3794 = vsub.f32 1.0, %v3793
      %v3795 = vmul.f32 %v3792, %v3794
      %v3796 = vadd.f32 %v3792, %v3795
      %vm3797 = vweird.f32 %v2348
      %vm3798 = vweird.f32 %v3792
      %vm3799 = vmor %vm3797, %vm3798
      %v3800 = vsel %vm3799, %v3792, %v3796
      %v3801 = vand.u32 2147483647, %v2348
      %vm3802 = vcmp.eq.f32.partialorder %v3801, 8.507059e+37
      %v3803 = vand.u32 %v2348, 2147483648
      %v3804 = vor.u32 1.1754944e-38, %v3803
      %v3805 = vsel %vm3802, %v3804, %v3800
      %v3806 = vmul.f32 1.0, %v3805
      %v3807 = vrcp.pop %v2349
      %v3808 = vmul.f32 %v2349, %v3807
      %v3809 = vsub.f32 1.0, %v3808
      %v3810 = vmul.f32 %v3807, %v3809
      %v3811 = vadd.f32 %v3807, %v3810
      %vm3812 = vweird.f32 %v2349
      %vm3813 = vweird.f32 %v3807
      %vm3814 = vmor %vm3812, %vm3813
      %v3815 = vsel %vm3814, %v3807, %v3811
      %v3816 = vand.u32 2147483647, %v2349
      %vm3817 = vcmp.eq.f32.partialorder %v3816, 8.507059e+37
      %v3818 = vand.u32 %v2349, 2147483648
      %v3819 = vor.u32 1.1754944e-38, %v3818
      %v3820 = vsel %vm3817, %v3819, %v3815
      %v3821 = vmul.f32 1.0, %v3820
      %v3822 = vrcp.pop %v2350
      %v3823 = vmul.f32 %v2350, %v3822
      %v3824 = vsub.f32 1.0, %v3823
      %v3825 = vmul.f32 %v3822, %v3824
      %v3826 = vadd.f32 %v3822, %v3825
      %vm3827 = vweird.f32 %v2350
      %vm3828 = vweird.f32 %v3822
      %vm3829 = vmor %vm3827, %vm3828
      %v3830 = vsel %vm3829, %v3822, %v3826
      %v3831 = vand.u32 2147483647, %v2350
      %vm3832 = vcmp.eq.f32.partialorder %v3831, 8.507059e+37
      %v3833 = vand.u32 %v2350, 2147483648
      %v3834 = vor.u32 1.1754944e-38, %v3833
      %v3835 = vsel %vm3832, %v3834, %v3830
      %v3836 = vmul.f32 1.0, %v3835
      %v3837 = vrcp.pop %v2351
      %v3838 = vmul.f32 %v2351, %v3837
      %v3839 = vsub.f32 1.0, %v3838
      %v3840 = vmul.f32 %v3837, %v3839
      %v3841 = vadd.f32 %v3837, %v3840
      %vm3842 = vweird.f32 %v2351
      %vm3843 = vweird.f32 %v3837
      %vm3844 = vmor %vm3842, %vm3843
      %v3845 = vsel %vm3844, %v3837, %v3841
      %v3846 = vand.u32 2147483647, %v2351
      %vm3847 = vcmp.eq.f32.partialorder %v3846, 8.507059e+37
      %v3848 = vand.u32 %v2351, 2147483648
      %v3849 = vor.u32 1.1754944e-38, %v3848
      %v3850 = vsel %vm3847, %v3849, %v3845
      %v3851 = vmul.f32 1.0, %v3850
      %v3852 = vrcp.pop %v2352
      %v3853 = vmul.f32 %v2352, %v3852
      %v3854 = vsub.f32 1.0, %v3853
      %v3855 = vmul.f32 %v3852, %v3854
      %v3856 = vadd.f32 %v3852, %v3855
      %vm3857 = vweird.f32 %v2352
      %vm3858 = vweird.f32 %v3852
      %vm3859 = vmor %vm3857, %vm3858
      %v3860 = vsel %vm3859, %v3852, %v3856
      %v3861 = vand.u32 2147483647, %v2352
      %vm3862 = vcmp.eq.f32.partialorder %v3861, 8.507059e+37
      %v3863 = vand.u32 %v2352, 2147483648
      %v3864 = vor.u32 1.1754944e-38, %v3863
      %v3865 = vsel %vm3862, %v3864, %v3860
      %v3866 = vmul.f32 1.0, %v3865
      %v3867 = vrcp.pop %v2353
      %v3868 = vmul.f32 %v2353, %v3867
      %v3869 = vsub.f32 1.0, %v3868
      %v3870 = vmul.f32 %v3867, %v3869
      %v3871 = vadd.f32 %v3867, %v3870
      %vm3872 = vweird.f32 %v2353
      %vm3873 = vweird.f32 %v3867
      %vm3874 = vmor %vm3872, %vm3873
      %v3875 = vsel %vm3874, %v3867, %v3871
      %v3876 = vand.u32 2147483647, %v2353
      %vm3877 = vcmp.eq.f32.partialorder %v3876, 8.507059e+37
      %v3878 = vand.u32 %v2353, 2147483648
      %v3879 = vor.u32 1.1754944e-38, %v3878
      %v3880 = vsel %vm3877, %v3879, %v3875
      %v3881 = vmul.f32 1.0, %v3880
      %v3882 = vrcp.pop %v2354
      %v3883 = vmul.f32 %v2354, %v3882
      %v3884 = vsub.f32 1.0, %v3883
      %v3885 = vmul.f32 %v3882, %v3884
      %v3886 = vadd.f32 %v3882, %v3885
      %vm3887 = vweird.f32 %v2354
      %vm3888 = vweird.f32 %v3882
      %vm3889 = vmor %vm3887, %vm3888
      %v3890 = vsel %vm3889, %v3882, %v3886
      %v3891 = vand.u32 2147483647, %v2354
      %vm3892 = vcmp.eq.f32.partialorder %v3891, 8.507059e+37
      %v3893 = vand.u32 %v2354, 2147483648
      %v3894 = vor.u32 1.1754944e-38, %v3893
      %v3895 = vsel %vm3892, %v3894, %v3890
      %v3896 = vmul.f32 1.0, %v3895
      %v3897 = vrcp.pop %v2355
      %v3898 = vmul.f32 %v2355, %v3897
      %v3899 = vsub.f32 1.0, %v3898
      %v3900 = vmul.f32 %v3897, %v3899
      %v3901 = vadd.f32 %v3897, %v3900
      %vm3902 = vweird.f32 %v2355
      %vm3903 = vweird.f32 %v3897
      %vm3904 = vmor %vm3902, %vm3903
      %v3905 = vsel %vm3904, %v3897, %v3901
      %v3906 = vand.u32 2147483647, %v2355
      %vm3907 = vcmp.eq.f32.partialorder %v3906, 8.507059e+37
      %v3908 = vand.u32 %v2355, 2147483648
      %v3909 = vor.u32 1.1754944e-38, %v3908
      %v3910 = vsel %vm3907, %v3909, %v3905
      %v3911 = vmul.f32 1.0, %v3910
      %v3912 = vrcp.pop %v2356
      %v3913 = vmul.f32 %v2356, %v3912
      %v3914 = vsub.f32 1.0, %v3913
      %v3915 = vmul.f32 %v3912, %v3914
      %v3916 = vadd.f32 %v3912, %v3915
      %vm3917 = vweird.f32 %v2356
      %vm3918 = vweird.f32 %v3912
      %vm3919 = vmor %vm3917, %vm3918
      %v3920 = vsel %vm3919, %v3912, %v3916
      %v3921 = vand.u32 2147483647, %v2356
      %vm3922 = vcmp.eq.f32.partialorder %v3921, 8.507059e+37
      %v3923 = vand.u32 %v2356, 2147483648
      %v3924 = vor.u32 1.1754944e-38, %v3923
      %v3925 = vsel %vm3922, %v3924, %v3920
      %v3926 = vmul.f32 1.0, %v3925
      %v3927 = vrcp.pop %v2357
      %v3928 = vmul.f32 %v2357, %v3927
      %v3929 = vsub.f32 1.0, %v3928
      %v3930 = vmul.f32 %v3927, %v3929
      %v3931 = vadd.f32 %v3927, %v3930
      %vm3932 = vweird.f32 %v2357
      %vm3933 = vweird.f32 %v3927
      %vm3934 = vmor %vm3932, %vm3933
      %v3935 = vsel %vm3934, %v3927, %v3931
      %v3936 = vand.u32 2147483647, %v2357
      %vm3937 = vcmp.eq.f32.partialorder %v3936, 8.507059e+37
      %v3938 = vand.u32 %v2357, 2147483648
      %v3939 = vor.u32 1.1754944e-38, %v3938
      %v3940 = vsel %vm3937, %v3939, %v3935
      %v3941 = vmul.f32 1.0, %v3940
      %v3942 = vrcp.pop %v2358
      %v3943 = vmul.f32 %v2358, %v3942
      %v3944 = vsub.f32 1.0, %v3943
      %v3945 = vmul.f32 %v3942, %v3944
      %v3946 = vadd.f32 %v3942, %v3945
      %vm3947 = vweird.f32 %v2358
      %vm3948 = vweird.f32 %v3942
      %vm3949 = vmor %vm3947, %vm3948
      %v3950 = vsel %vm3949, %v3942, %v3946
      %v3951 = vand.u32 2147483647, %v2358
      %vm3952 = vcmp.eq.f32.partialorder %v3951, 8.507059e+37
      %v3953 = vand.u32 %v2358, 2147483648
      %v3954 = vor.u32 1.1754944e-38, %v3953
      %v3955 = vsel %vm3952, %v3954, %v3950
      %v3956 = vmul.f32 1.0, %v3955
      %v3957 = vrcp.pop %v2359
      %v3958 = vmul.f32 %v2359, %v3957
      %v3959 = vsub.f32 1.0, %v3958
      %v3960 = vmul.f32 %v3957, %v3959
      %v3961 = vadd.f32 %v3957, %v3960
      %vm3962 = vweird.f32 %v2359
      %vm3963 = vweird.f32 %v3957
      %vm3964 = vmor %vm3962, %vm3963
      %v3965 = vsel %vm3964, %v3957, %v3961
      %v3966 = vand.u32 2147483647, %v2359
      %vm3967 = vcmp.eq.f32.partialorder %v3966, 8.507059e+37
      %v3968 = vand.u32 %v2359, 2147483648
      %v3969 = vor.u32 1.1754944e-38, %v3968
      %v3970 = vsel %vm3967, %v3969, %v3965
      %v3971 = vmul.f32 1.0, %v3970
      %v3972 = vrcp.pop %v2360
      %v3973 = vmul.f32 %v2360, %v3972
      %v3974 = vsub.f32 1.0, %v3973
      %v3975 = vmul.f32 %v3972, %v3974
      %v3976 = vadd.f32 %v3972, %v3975
      %vm3977 = vweird.f32 %v2360
      %vm3978 = vweird.f32 %v3972
      %vm3979 = vmor %vm3977, %vm3978
      %v3980 = vsel %vm3979, %v3972, %v3976
      %v3981 = vand.u32 2147483647, %v2360
      %vm3982 = vcmp.eq.f32.partialorder %v3981, 8.507059e+37
      %v3983 = vand.u32 %v2360, 2147483648
      %v3984 = vor.u32 1.1754944e-38, %v3983
      %v3985 = vsel %vm3982, %v3984, %v3980
      %v3986 = vmul.f32 1.0, %v3985
      %v3987 = vrcp.pop %v2361
      %v3988 = vmul.f32 %v2361, %v3987
      %v3989 = vsub.f32 1.0, %v3988
      %v3990 = vmul.f32 %v3987, %v3989
      %v3991 = vadd.f32 %v3987, %v3990
      %vm3992 = vweird.f32 %v2361
      %vm3993 = vweird.f32 %v3987
      %vm3994 = vmor %vm3992, %vm3993
      %v3995 = vsel %vm3994, %v3987, %v3991
      %v3996 = vand.u32 2147483647, %v2361
      %vm3997 = vcmp.eq.f32.partialorder %v3996, 8.507059e+37
      %v3998 = vand.u32 %v2361, 2147483648
      %v3999 = vor.u32 1.1754944e-38, %v3998
      %v4000 = vsel %vm3997, %v3999, %v3995
      %v4001 = vmul.f32 1.0, %v4000
      %v4002 = vrcp.pop %v2362
      %v4003 = vmul.f32 %v2362, %v4002
      %v4004 = vsub.f32 1.0, %v4003
      %v4005 = vmul.f32 %v4002, %v4004
      %v4006 = vadd.f32 %v4002, %v4005
      %vm4007 = vweird.f32 %v2362
      %vm4008 = vweird.f32 %v4002
      %vm4009 = vmor %vm4007, %vm4008
      %v4010 = vsel %vm4009, %v4002, %v4006
      %v4011 = vand.u32 2147483647, %v2362
      %vm4012 = vcmp.eq.f32.partialorder %v4011, 8.507059e+37
      %v4013 = vand.u32 %v2362, 2147483648
      %v4014 = vor.u32 1.1754944e-38, %v4013
      %v4015 = vsel %vm4012, %v4014, %v4010
      %v4016 = vmul.f32 1.0, %v4015
      %v4017 = vrcp.pop %v2363
      %v4018 = vmul.f32 %v2363, %v4017
      %v4019 = vsub.f32 1.0, %v4018
      %v4020 = vmul.f32 %v4017, %v4019
      %v4021 = vadd.f32 %v4017, %v4020
      %vm4022 = vweird.f32 %v2363
      %vm4023 = vweird.f32 %v4017
      %vm4024 = vmor %vm4022, %vm4023
      %v4025 = vsel %vm4024, %v4017, %v4021
      %v4026 = vand.u32 2147483647, %v2363
      %vm4027 = vcmp.eq.f32.partialorder %v4026, 8.507059e+37
      %v4028 = vand.u32 %v2363, 2147483648
      %v4029 = vor.u32 1.1754944e-38, %v4028
      %v4030 = vsel %vm4027, %v4029, %v4025
      %v4031 = vmul.f32 1.0, %v4030
      %v4032 = vrcp.pop %v2364
      %v4033 = vmul.f32 %v2364, %v4032
      %v4034 = vsub.f32 1.0, %v4033
      %v4035 = vmul.f32 %v4032, %v4034
      %v4036 = vadd.f32 %v4032, %v4035
      %vm4037 = vweird.f32 %v2364
      %vm4038 = vweird.f32 %v4032
      %vm4039 = vmor %vm4037, %vm4038
      %v4040 = vsel %vm4039, %v4032, %v4036
      %v4041 = vand.u32 2147483647, %v2364
      %vm4042 = vcmp.eq.f32.partialorder %v4041, 8.507059e+37
      %v4043 = vand.u32 %v2364, 2147483648
      %v4044 = vor.u32 1.1754944e-38, %v4043
      %v4045 = vsel %vm4042, %v4044, %v4040
      %v4046 = vmul.f32 1.0, %v4045
      %v4047 = vrcp.pop %v2365
      %v4048 = vmul.f32 %v2365, %v4047
      %v4049 = vsub.f32 1.0, %v4048
      %v4050 = vmul.f32 %v4047, %v4049
      %v4051 = vadd.f32 %v4047, %v4050
      %vm4052 = vweird.f32 %v2365
      %vm4053 = vweird.f32 %v4047
      %vm4054 = vmor %vm4052, %vm4053
      %v4055 = vsel %vm4054, %v4047, %v4051
      %v4056 = vand.u32 2147483647, %v2365
      %vm4057 = vcmp.eq.f32.partialorder %v4056, 8.507059e+37
      %v4058 = vand.u32 %v2365, 2147483648
      %v4059 = vor.u32 1.1754944e-38, %v4058
      %v4060 = vsel %vm4057, %v4059, %v4055
      %v4061 = vmul.f32 1.0, %v4060
      %v4062 = vrcp.pop %v2366
      %v4063 = vmul.f32 %v2366, %v4062
      %v4064 = vsub.f32 1.0, %v4063
      %v4065 = vmul.f32 %v4062, %v4064
      %v4066 = vadd.f32 %v4062, %v4065
      %vm4067 = vweird.f32 %v2366
      %vm4068 = vweird.f32 %v4062
      %vm4069 = vmor %vm4067, %vm4068
      %v4070 = vsel %vm4069, %v4062, %v4066
      %v4071 = vand.u32 2147483647, %v2366
      %vm4072 = vcmp.eq.f32.partialorder %v4071, 8.507059e+37
      %v4073 = vand.u32 %v2366, 2147483648
      %v4074 = vor.u32 1.1754944e-38, %v4073
      %v4075 = vsel %vm4072, %v4074, %v4070
      %v4076 = vmul.f32 1.0, %v4075
      %v4077 = vrcp.pop %v2367
      %v4078 = vmul.f32 %v2367, %v4077
      %v4079 = vsub.f32 1.0, %v4078
      %v4080 = vmul.f32 %v4077, %v4079
      %v4081 = vadd.f32 %v4077, %v4080
      %vm4082 = vweird.f32 %v2367
      %vm4083 = vweird.f32 %v4077
      %vm4084 = vmor %vm4082, %vm4083
      %v4085 = vsel %vm4084, %v4077, %v4081
      %v4086 = vand.u32 2147483647, %v2367
      %vm4087 = vcmp.eq.f32.partialorder %v4086, 8.507059e+37
      %v4088 = vand.u32 %v2367, 2147483648
      %v4089 = vor.u32 1.1754944e-38, %v4088
      %v4090 = vsel %vm4087, %v4089, %v4085
      %v4091 = vmul.f32 1.0, %v4090
      %v4092 = vrcp.pop %v2368
      %v4093 = vmul.f32 %v2368, %v4092
      %v4094 = vsub.f32 1.0, %v4093
      %v4095 = vmul.f32 %v4092, %v4094
      %v4096 = vadd.f32 %v4092, %v4095
      %vm4097 = vweird.f32 %v2368
      %vm4098 = vweird.f32 %v4092
      %vm4099 = vmor %vm4097, %vm4098
      %v4100 = vsel %vm4099, %v4092, %v4096
      %v4101 = vand.u32 2147483647, %v2368
      %vm4102 = vcmp.eq.f32.partialorder %v4101, 8.507059e+37
      %v4103 = vand.u32 %v2368, 2147483648
      %v4104 = vor.u32 1.1754944e-38, %v4103
      %v4105 = vsel %vm4102, %v4104, %v4100
      %v4106 = vmul.f32 1.0, %v4105
      %v4107 = vrcp.pop %v2369
      %v4108 = vmul.f32 %v2369, %v4107
      %v4109 = vsub.f32 1.0, %v4108
      %v4110 = vmul.f32 %v4107, %v4109
      %v4111 = vadd.f32 %v4107, %v4110
      %vm4112 = vweird.f32 %v2369
      %vm4113 = vweird.f32 %v4107
      %vm4114 = vmor %vm4112, %vm4113
      %v4115 = vsel %vm4114, %v4107, %v4111
      %v4116 = vand.u32 2147483647, %v2369
      %vm4117 = vcmp.eq.f32.partialorder %v4116, 8.507059e+37
      %v4118 = vand.u32 %v2369, 2147483648
      %v4119 = vor.u32 1.1754944e-38, %v4118
      %v4120 = vsel %vm4117, %v4119, %v4115
      %v4121 = vmul.f32 1.0, %v4120
      %v4122 = vrcp.pop %v2370
      %v4123 = vmul.f32 %v2370, %v4122
      %v4124 = vsub.f32 1.0, %v4123
      %v4125 = vmul.f32 %v4122, %v4124
      %v4126 = vadd.f32 %v4122, %v4125
      %vm4127 = vweird.f32 %v2370
      %vm4128 = vweird.f32 %v4122
      %vm4129 = vmor %vm4127, %vm4128
      %v4130 = vsel %vm4129, %v4122, %v4126
      %v4131 = vand.u32 2147483647, %v2370
      %vm4132 = vcmp.eq.f32.partialorder %v4131, 8.507059e+37
      %v4133 = vand.u32 %v2370, 2147483648
      %v4134 = vor.u32 1.1754944e-38, %v4133
      %v4135 = vsel %vm4132, %v4134, %v4130
      %v4136 = vmul.f32 1.0, %v4135
      %v4137 = vrcp.pop %v2371
      %v4138 = vmul.f32 %v2371, %v4137
      %v4139 = vsub.f32 1.0, %v4138
      %v4140 = vmul.f32 %v4137, %v4139
      %v4141 = vadd.f32 %v4137, %v4140
      %vm4142 = vweird.f32 %v2371
      %vm4143 = vweird.f32 %v4137
      %vm4144 = vmor %vm4142, %vm4143
      %v4145 = vsel %vm4144, %v4137, %v4141
      %v4146 = vand.u32 2147483647, %v2371
      %vm4147 = vcmp.eq.f32.partialorder %v4146, 8.507059e+37
      %v4148 = vand.u32 %v2371, 2147483648
      %v4149 = vor.u32 1.1754944e-38, %v4148
      %v4150 = vsel %vm4147, %v4149, %v4145
      %v4151 = vmul.f32 1.0, %v4150
      %v4152 = vrcp.pop %v2372
      %v4153 = vmul.f32 %v2372, %v4152
      %v4154 = vsub.f32 1.0, %v4153
      %v4155 = vmul.f32 %v4152, %v4154
      %v4156 = vadd.f32 %v4152, %v4155
      %vm4157 = vweird.f32 %v2372
      %vm4158 = vweird.f32 %v4152
      %vm4159 = vmor %vm4157, %vm4158
      %v4160 = vsel %vm4159, %v4152, %v4156
      %v4161 = vand.u32 2147483647, %v2372
      %vm4162 = vcmp.eq.f32.partialorder %v4161, 8.507059e+37
      %v4163 = vand.u32 %v2372, 2147483648
      %v4164 = vor.u32 1.1754944e-38, %v4163
      %v4165 = vsel %vm4162, %v4164, %v4160
      %v4166 = vmul.f32 1.0, %v4165
      %v4167 = vrcp.pop %v2373
      %v4168 = vmul.f32 %v2373, %v4167
      %v4169 = vsub.f32 1.0, %v4168
      %v4170 = vmul.f32 %v4167, %v4169
      %v4171 = vadd.f32 %v4167, %v4170
      %vm4172 = vweird.f32 %v2373
      %vm4173 = vweird.f32 %v4167
      %vm4174 = vmor %vm4172, %vm4173
      %v4175 = vsel %vm4174, %v4167, %v4171
      %v4176 = vand.u32 2147483647, %v2373
      %vm4177 = vcmp.eq.f32.partialorder %v4176, 8.507059e+37
      %v4178 = vand.u32 %v2373, 2147483648
      %v4179 = vor.u32 1.1754944e-38, %v4178
      %v4180 = vsel %vm4177, %v4179, %v4175
      %v4181 = vmul.f32 1.0, %v4180
      %v4182 = vrcp.pop %v2374
      %v4183 = vmul.f32 %v2374, %v4182
      %v4184 = vsub.f32 1.0, %v4183
      %v4185 = vmul.f32 %v4182, %v4184
      %v4186 = vadd.f32 %v4182, %v4185
      %vm4187 = vweird.f32 %v2374
      %vm4188 = vweird.f32 %v4182
      %vm4189 = vmor %vm4187, %vm4188
      %v4190 = vsel %vm4189, %v4182, %v4186
      %v4191 = vand.u32 2147483647, %v2374
      %vm4192 = vcmp.eq.f32.partialorder %v4191, 8.507059e+37
      %v4193 = vand.u32 %v2374, 2147483648
      %v4194 = vor.u32 1.1754944e-38, %v4193
      %v4195 = vsel %vm4192, %v4194, %v4190
      %v4196 = vmul.f32 1.0, %v4195
      %v4197 = vrcp.pop %v2375
      %v4198 = vmul.f32 %v2375, %v4197
      %v4199 = vsub.f32 1.0, %v4198
      %v4200 = vmul.f32 %v4197, %v4199
      %v4201 = vadd.f32 %v4197, %v4200
      %vm4202 = vweird.f32 %v2375
      %vm4203 = vweird.f32 %v4197
      %vm4204 = vmor %vm4202, %vm4203
      %v4205 = vsel %vm4204, %v4197, %v4201
      %v4206 = vand.u32 2147483647, %v2375
      %vm4207 = vcmp.eq.f32.partialorder %v4206, 8.507059e+37
      %v4208 = vand.u32 %v2375, 2147483648
      %v4209 = vor.u32 1.1754944e-38, %v4208
      %v4210 = vsel %vm4207, %v4209, %v4205
      %v4211 = vmul.f32 1.0, %v4210
      %v4212 = vrcp.pop %v2376
      %v4213 = vmul.f32 %v2376, %v4212
      %v4214 = vsub.f32 1.0, %v4213
      %v4215 = vmul.f32 %v4212, %v4214
      %v4216 = vadd.f32 %v4212, %v4215
      %vm4217 = vweird.f32 %v2376
      %vm4218 = vweird.f32 %v4212
      %vm4219 = vmor %vm4217, %vm4218
      %v4220 = vsel %vm4219, %v4212, %v4216
      %v4221 = vand.u32 2147483647, %v2376
      %vm4222 = vcmp.eq.f32.partialorder %v4221, 8.507059e+37
      %v4223 = vand.u32 %v2376, 2147483648
      %v4224 = vor.u32 1.1754944e-38, %v4223
      %v4225 = vsel %vm4222, %v4224, %v4220
      %v4226 = vmul.f32 1.0, %v4225
      %v4227 = vrcp.pop %v2377
      %v4228 = vmul.f32 %v2377, %v4227
      %v4229 = vsub.f32 1.0, %v4228
      %v4230 = vmul.f32 %v4227, %v4229
      %v4231 = vadd.f32 %v4227, %v4230
      %vm4232 = vweird.f32 %v2377
      %vm4233 = vweird.f32 %v4227
      %vm4234 = vmor %vm4232, %vm4233
      %v4235 = vsel %vm4234, %v4227, %v4231
      %v4236 = vand.u32 2147483647, %v2377
      %vm4237 = vcmp.eq.f32.partialorder %v4236, 8.507059e+37
      %v4238 = vand.u32 %v2377, 2147483648
      %v4239 = vor.u32 1.1754944e-38, %v4238
      %v4240 = vsel %vm4237, %v4239, %v4235
      %v4241 = vmul.f32 1.0, %v4240
      %v4242 = vrcp.pop %v2378
      %v4243 = vmul.f32 %v2378, %v4242
      %v4244 = vsub.f32 1.0, %v4243
      %v4245 = vmul.f32 %v4242, %v4244
      %v4246 = vadd.f32 %v4242, %v4245
      %vm4247 = vweird.f32 %v2378
      %vm4248 = vweird.f32 %v4242
      %vm4249 = vmor %vm4247, %vm4248
      %v4250 = vsel %vm4249, %v4242, %v4246
      %v4251 = vand.u32 2147483647, %v2378
      %vm4252 = vcmp.eq.f32.partialorder %v4251, 8.507059e+37
      %v4253 = vand.u32 %v2378, 2147483648
      %v4254 = vor.u32 1.1754944e-38, %v4253
      %v4255 = vsel %vm4252, %v4254, %v4250
      %v4256 = vmul.f32 1.0, %v4255
      %v4257 = vrcp.pop %v2379
      %v4258 = vmul.f32 %v2379, %v4257
      %v4259 = vsub.f32 1.0, %v4258
      %v4260 = vmul.f32 %v4257, %v4259
      %v4261 = vadd.f32 %v4257, %v4260
      %vm4262 = vweird.f32 %v2379
      %vm4263 = vweird.f32 %v4257
      %vm4264 = vmor %vm4262, %vm4263
      %v4265 = vsel %vm4264, %v4257, %v4261
      %v4266 = vand.u32 2147483647, %v2379
      %vm4267 = vcmp.eq.f32.partialorder %v4266, 8.507059e+37
      %v4268 = vand.u32 %v2379, 2147483648
      %v4269 = vor.u32 1.1754944e-38, %v4268
      %v4270 = vsel %vm4267, %v4269, %v4265
      %v4271 = vmul.f32 1.0, %v4270
      %v4272 = vrcp.pop %v2380
      %v4273 = vmul.f32 %v2380, %v4272
      %v4274 = vsub.f32 1.0, %v4273
      %v4275 = vmul.f32 %v4272, %v4274
      %v4276 = vadd.f32 %v4272, %v4275
      %vm4277 = vweird.f32 %v2380
      %vm4278 = vweird.f32 %v4272
      %vm4279 = vmor %vm4277, %vm4278
      %v4280 = vsel %vm4279, %v4272, %v4276
      %v4281 = vand.u32 2147483647, %v2380
      %vm4282 = vcmp.eq.f32.partialorder %v4281, 8.507059e+37
      %v4283 = vand.u32 %v2380, 2147483648
      %v4284 = vor.u32 1.1754944e-38, %v4283
      %v4285 = vsel %vm4282, %v4284, %v4280
      %v4286 = vmul.f32 1.0, %v4285
      %v4287 = vrcp.pop %v2381
      %v4288 = vmul.f32 %v2381, %v4287
      %v4289 = vsub.f32 1.0, %v4288
      %v4290 = vmul.f32 %v4287, %v4289
      %v4291 = vadd.f32 %v4287, %v4290
      %vm4292 = vweird.f32 %v2381
      %vm4293 = vweird.f32 %v4287
      %vm4294 = vmor %vm4292, %vm4293
      %v4295 = vsel %vm4294, %v4287, %v4291
      %v4296 = vand.u32 2147483647, %v2381
      %vm4297 = vcmp.eq.f32.partialorder %v4296, 8.507059e+37
      %v4298 = vand.u32 %v2381, 2147483648
      %v4299 = vor.u32 1.1754944e-38, %v4298
      %v4300 = vsel %vm4297, %v4299, %v4295
      %v4301 = vmul.f32 1.0, %v4300
      %v4302 = vmul.f32 %v1524, %v2396
      %v4303 = vmul.f32 %v1613, %v2411
      %v4304 = vmul.f32 %v1702, %v2426
      %v4305 = vmul.f32 %v1791, %v2441
      %v4306 = vmul.f32 %v1526, %v2456
      %v4307 = vmul.f32 %v1615, %v2471
      %v4308 = vmul.f32 %v1704, %v2486
      %v4309 = vmul.f32 %v1793, %v2501
      %v4310 = vmul.f32 %v1529, %v2516
      %v4311 = vmul.f32 %v1618, %v2531
      %v4312 = vmul.f32 %v1707, %v2546
      %v4313 = vmul.f32 %v1796, %v2561
      %v4314 = vmul.f32 %v1531, %v2576
      %v4315 = vmul.f32 %v1620, %v2591
      %v4316 = vmul.f32 %v1709, %v2606
      %v4317 = vmul.f32 %v1798, %v2621
      %v4318 = vmul.f32 %v1534, %v2636
      %v4319 = vmul.f32 %v1623, %v2651
      %v4320 = vmul.f32 %v1712, %v2666
      %v4321 = vmul.f32 %v1801, %v2681
      %v4322 = vmul.f32 %v1536, %v2696
      %v4323 = vmul.f32 %v1625, %v2711
      %v4324 = vmul.f32 %v1714, %v2726
      %v4325 = vmul.f32 %v1803, %v2741
      %v4326 = vmul.f32 %v1539, %v2756
      %v4327 = vmul.f32 %v1628, %v2771
      %v4328 = vmul.f32 %v1717, %v2786
      %v4329 = vmul.f32 %v1806, %v2801
      %v4330 = vmul.f32 %v1541, %v2816
      %v4331 = vmul.f32 %v1630, %v2831
      %v4332 = vmul.f32 %v1719, %v2846
      %v4333 = vmul.f32 %v1808, %v2861
      %v4334 = vmul.f32 %v1544, %v2876
      %v4335 = vmul.f32 %v1633, %v2891
      %v4336 = vmul.f32 %v1722, %v2906
      %v4337 = vmul.f32 %v1811, %v2921
      %v4338 = vmul.f32 %v1546, %v2936
      %v4339 = vmul.f32 %v1635, %v2951
      %v4340 = vmul.f32 %v1724, %v2966
      %v4341 = vmul.f32 %v1813, %v2981
      %v4342 = vmul.f32 %v1549, %v2996
      %v4343 = vmul.f32 %v1638, %v3011
      %v4344 = vmul.f32 %v1727, %v3026
      %v4345 = vmul.f32 %v1816, %v3041
      %v4346 = vmul.f32 %v1551, %v3056
      %v4347 = vmul.f32 %v1640, %v3071
      %v4348 = vmul.f32 %v1729, %v3086
      %v4349 = vmul.f32 %v1818, %v3101
      %v4350 = vmul.f32 %v1554, %v3116
      %v4351 = vmul.f32 %v1643, %v3131
      %v4352 = vmul.f32 %v1732, %v3146
      %v4353 = vmul.f32 %v1821, %v3161
      %v4354 = vmul.f32 %v1556, %v3176
      %v4355 = vmul.f32 %v1645, %v3191
      %v4356 = vmul.f32 %v1734, %v3206
      %v4357 = vmul.f32 %v1823, %v3221
      %v4358 = vmul.f32 %v1559, %v3236
      %v4359 = vmul.f32 %v1648, %v3251
      %v4360 = vmul.f32 %v1737, %v3266
      %v4361 = vmul.f32 %v1826, %v3281
      %v4362 = vmul.f32 %v1561, %v3296
      %v4363 = vmul.f32 %v1650, %v3311
      %v4364 = vmul.f32 %v1739, %v3326
      %v4365 = vmul.f32 %v1828, %v3341
      %v4366 = vmul.f32 %v1564, %v3356
      %v4367 = vmul.f32 %v1653, %v3371
      %v4368 = vmul.f32 %v1742, %v3386
      %v4369 = vmul.f32 %v1831, %v3401
      %v4370 = vmul.f32 %v1566, %v3416
      %v4371 = vmul.f32 %v1655, %v3431
      %v4372 = vmul.f32 %v1744, %v3446
      %v4373 = vmul.f32 %v1833, %v3461
      %v4374 = vmul.f32 %v1569, %v3476
      %v4375 = vmul.f32 %v1658, %v3491
      %v4376 = vmul.f32 %v1747, %v3506
      %v4377 = vmul.f32 %v1836, %v3521
      %v4378 = vmul.f32 %v1571, %v3536
      %v4379 = vmul.f32 %v1660, %v3551
      %v4380 = vmul.f32 %v1749, %v3566
      %v4381 = vmul.f32 %v1838, %v3581
      %v4382 = vmul.f32 %v1574, %v3596
      %v4383 = vmul.f32 %v1663, %v3611
      %v4384 = vmul.f32 %v1752, %v3626
      %v4385 = vmul.f32 %v1841, %v3641
      %v4386 = vmul.f32 %v1576, %v3656
      %v4387 = vmul.f32 %v1665, %v3671
      %v4388 = vmul.f32 %v1754, %v3686
      %v4389 = vmul.f32 %v1843, %v3701
      %v4390 = vmul.f32 %v1579, %v3716
      %v4391 = vmul.f32 %v1668, %v3731
      %v4392 = vmul.f32 %v1757, %v3746
      %v4393 = vmul.f32 %v1846, %v3761
      %v4394 = vmul.f32 %v1581, %v3776
      %v4395 = vmul.f32 %v1670, %v3791
      %v4396 = vmul.f32 %v1759, %v3806
      %v4397 = vmul.f32 %v1848, %v3821
      %v4398 = vmul.f32 %v1584, %v3836
      %v4399 = vmul.f32 %v1673, %v3851
      %v4400 = vmul.f32 %v1762, %v3866
      %v4401 = vmul.f32 %v1851, %v3881
      %v4402 = vmul.f32 %v1586, %v3896
      %v4403 = vmul.f32 %v1675, %v3911
      %v4404 = vmul.f32 %v1764, %v3926
      %v4405 = vmul.f32 %v1853, %v3941
      %v4406 = vmul.f32 %v1589, %v3956
      %v4407 = vmul.f32 %v1678, %v3971
      %v4408 = vmul.f32 %v1767, %v3986
      %v4409 = vmul.f32 %v1856, %v4001
      %v4410 = vmul.f32 %v1591, %v4016
      %v4411 = vmul.f32 %v1680, %v4031
      %v4412 = vmul.f32 %v1769, %v4046
      %v4413 = vmul.f32 %v1858, %v4061
      %v4414 = vmul.f32 %v1594, %v4076
      %v4415 = vmul.f32 %v1683, %v4091
      %v4416 = vmul.f32 %v1772, %v4106
      %v4417 = vmul.f32 %v1861, %v4121
      %v4418 = vmul.f32 %v1596, %v4136
      %v4419 = vmul.f32 %v1685, %v4151
      %v4420 = vmul.f32 %v1774, %v4166
      %v4421 = vmul.f32 %v1863, %v4181
      %v4422 = vmul.f32 %v1599, %v4196
      %v4423 = vmul.f32 %v1688, %v4211
      %v4424 = vmul.f32 %v1777, %v4226
      %v4425 = vmul.f32 %v1866, %v4241
      %v4426 = vmul.f32 %v1601, %v4256
      %v4427 = vmul.f32 %v1690, %v4271
      %v4428 = vmul.f32 %v1779, %v4286
      %v4429 = vmul.f32 %v1868, %v4301
      %v4430 = vpack.c.bf16 %v4306, %v4302
      %v4431 = vpack.c.bf16 %v4307, %v4303
      %v4432 = vpack.c.bf16 %v4308, %v4304
      %v4433 = vpack.c.bf16 %v4309, %v4305
      %v4434 = vpack.c.bf16 %v4314, %v4310
      %v4435 = vpack.c.bf16 %v4315, %v4311
      %v4436 = vpack.c.bf16 %v4316, %v4312
      %v4437 = vpack.c.bf16 %v4317, %v4313
      %v4438 = vpack.c.bf16 %v4322, %v4318
      %v4439 = vpack.c.bf16 %v4323, %v4319
      %v4440 = vpack.c.bf16 %v4324, %v4320
      %v4441 = vpack.c.bf16 %v4325, %v4321
      %v4442 = vpack.c.bf16 %v4330, %v4326
      %v4443 = vpack.c.bf16 %v4331, %v4327
      %v4444 = vpack.c.bf16 %v4332, %v4328
      %v4445 = vpack.c.bf16 %v4333, %v4329
      %v4446 = vpack.c.bf16 %v4338, %v4334
      %v4447 = vpack.c.bf16 %v4339, %v4335
      %v4448 = vpack.c.bf16 %v4340, %v4336
      %v4449 = vpack.c.bf16 %v4341, %v4337
      %v4450 = vpack.c.bf16 %v4346, %v4342
      %v4451 = vpack.c.bf16 %v4347, %v4343
      %v4452 = vpack.c.bf16 %v4348, %v4344
      %v4453 = vpack.c.bf16 %v4349, %v4345
      %v4454 = vpack.c.bf16 %v4354, %v4350
      %v4455 = vpack.c.bf16 %v4355, %v4351
      %v4456 = vpack.c.bf16 %v4356, %v4352
      %v4457 = vpack.c.bf16 %v4357, %v4353
      %v4458 = vpack.c.bf16 %v4362, %v4358
      %v4459 = vpack.c.bf16 %v4363, %v4359
      %v4460 = vpack.c.bf16 %v4364, %v4360
      %v4461 = vpack.c.bf16 %v4365, %v4361
      %v4462 = vpack.c.bf16 %v4370, %v4366
      %v4463 = vpack.c.bf16 %v4371, %v4367
      %v4464 = vpack.c.bf16 %v4372, %v4368
      %v4465 = vpack.c.bf16 %v4373, %v4369
      %v4466 = vpack.c.bf16 %v4378, %v4374
      %v4467 = vpack.c.bf16 %v4379, %v4375
      %v4468 = vpack.c.bf16 %v4380, %v4376
      %v4469 = vpack.c.bf16 %v4381, %v4377
      %v4470 = vpack.c.bf16 %v4386, %v4382
      %v4471 = vpack.c.bf16 %v4387, %v4383
      %v4472 = vpack.c.bf16 %v4388, %v4384
      %v4473 = vpack.c.bf16 %v4389, %v4385
      %v4474 = vpack.c.bf16 %v4394, %v4390
      %v4475 = vpack.c.bf16 %v4395, %v4391
      %v4476 = vpack.c.bf16 %v4396, %v4392
      %v4477 = vpack.c.bf16 %v4397, %v4393
      %v4478 = vpack.c.bf16 %v4402, %v4398
      %v4479 = vpack.c.bf16 %v4403, %v4399
      %v4480 = vpack.c.bf16 %v4404, %v4400
      %v4481 = vpack.c.bf16 %v4405, %v4401
      %v4482 = vpack.c.bf16 %v4410, %v4406
      %v4483 = vpack.c.bf16 %v4411, %v4407
      %v4484 = vpack.c.bf16 %v4412, %v4408
      %v4485 = vpack.c.bf16 %v4413, %v4409
      %v4486 = vpack.c.bf16 %v4418, %v4414
      %v4487 = vpack.c.bf16 %v4419, %v4415
      %v4488 = vpack.c.bf16 %v4420, %v4416
      %v4489 = vpack.c.bf16 %v4421, %v4417
      %v4490 = vpack.c.bf16 %v4426, %v4422
      %v4491 = vpack.c.bf16 %v4427, %v4423
      %v4492 = vpack.c.bf16 %v4428, %v4424
      %v4493 = vpack.c.bf16 %v4429, %v4425
      %v4494 = vld [vmem:[%s4] sm:$0xff]
      %v4495 = vld [vmem:[%s4 + $0x8] sm:$0xff]
      %v4496 = vld [vmem:[%s4 + $0x10] sm:$0xff]
      %v4497 = vld [vmem:[%s4 + $0x18] sm:$0xff]
      %v4498 = vld [vmem:[%s4 + $0x20] sm:$0xff]
      %v4499 = vld [vmem:[%s4 + $0x28] sm:$0xff]
      %v4500 = vld [vmem:[%s4 + $0x30] sm:$0xff]
      %v4501 = vld [vmem:[%s4 + $0x38] sm:$0xff]
      %v4502 = vld [vmem:[%s4 + $0x40] sm:$0xff]
      %v4503 = vld [vmem:[%s4 + $0x48] sm:$0xff]
      %v4504 = vld [vmem:[%s4 + $0x50] sm:$0xff]
      %v4505 = vld [vmem:[%s4 + $0x58] sm:$0xff]
      %v4506 = vld [vmem:[%s4 + $0x60] sm:$0xff]
      %v4507 = vld [vmem:[%s4 + $0x68] sm:$0xff]
      %v4508 = vld [vmem:[%s4 + $0x70] sm:$0xff]
      %v4509 = vld [vmem:[%s4 + $0x78] sm:$0xff]
      %v4510 = vld [vmem:[%s4 + $0x80] sm:$0xff]
      %v4511 = vld [vmem:[%s4 + $0x88] sm:$0xff]
      %v4512 = vld [vmem:[%s4 + $0x90] sm:$0xff]
      %v4513 = vld [vmem:[%s4 + $0x98] sm:$0xff]
      %v4514 = vld [vmem:[%s4 + $0xa0] sm:$0xff]
      %v4515 = vld [vmem:[%s4 + $0xa8] sm:$0xff]
      %v4516 = vld [vmem:[%s4 + $0xb0] sm:$0xff]
      %v4517 = vld [vmem:[%s4 + $0xb8] sm:$0xff]
      %v4518 = vld [vmem:[%s4 + $0xc0] sm:$0xff]
      %v4519 = vld [vmem:[%s4 + $0xc8] sm:$0xff]
      %v4520 = vld [vmem:[%s4 + $0xd0] sm:$0xff]
      %v4521 = vld [vmem:[%s4 + $0xd8] sm:$0xff]
      %v4522 = vld [vmem:[%s4 + $0xe0] sm:$0xff]
      %v4523 = vld [vmem:[%s4 + $0xe8] sm:$0xff]
      %v4524 = vld [vmem:[%s4 + $0xf0] sm:$0xff]
      %v4525 = vld [vmem:[%s4 + $0xf8] sm:$0xff]
      %v4526 = vld [vmem:[%s4 + $0x100] sm:$0xff]
      %v4527 = vld [vmem:[%s4 + $0x108] sm:$0xff]
      %v4528 = vld [vmem:[%s4 + $0x110] sm:$0xff]
      %v4529 = vld [vmem:[%s4 + $0x118] sm:$0xff]
      %v4530 = vld [vmem:[%s4 + $0x120] sm:$0xff]
      %v4531 = vld [vmem:[%s4 + $0x128] sm:$0xff]
      %v4532 = vld [vmem:[%s4 + $0x130] sm:$0xff]
      %v4533 = vld [vmem:[%s4 + $0x138] sm:$0xff]
      %v4534 = vld [vmem:[%s4 + $0x140] sm:$0xff]
      %v4535 = vld [vmem:[%s4 + $0x148] sm:$0xff]
      %v4536 = vld [vmem:[%s4 + $0x150] sm:$0xff]
      %v4537 = vld [vmem:[%s4 + $0x158] sm:$0xff]
      %v4538 = vld [vmem:[%s4 + $0x160] sm:$0xff]
      %v4539 = vld [vmem:[%s4 + $0x168] sm:$0xff]
      %v4540 = vld [vmem:[%s4 + $0x170] sm:$0xff]
      %v4541 = vld [vmem:[%s4 + $0x178] sm:$0xff]
      %v4542 = vld [vmem:[%s4 + $0x180] sm:$0xff]
      %v4543 = vld [vmem:[%s4 + $0x188] sm:$0xff]
      %v4544 = vld [vmem:[%s4 + $0x190] sm:$0xff]
      %v4545 = vld [vmem:[%s4 + $0x198] sm:$0xff]
      %v4546 = vld [vmem:[%s4 + $0x1a0] sm:$0xff]
      %v4547 = vld [vmem:[%s4 + $0x1a8] sm:$0xff]
      %v4548 = vld [vmem:[%s4 + $0x1b0] sm:$0xff]
      %v4549 = vld [vmem:[%s4 + $0x1b8] sm:$0xff]
      %v4550 = vld [vmem:[%s4 + $0x1c0] sm:$0xff]
      %v4551 = vld [vmem:[%s4 + $0x1c8] sm:$0xff]
      %v4552 = vld [vmem:[%s4 + $0x1d0] sm:$0xff]
      %v4553 = vld [vmem:[%s4 + $0x1d8] sm:$0xff]
      %v4554 = vld [vmem:[%s4 + $0x1e0] sm:$0xff]
      %v4555 = vld [vmem:[%s4 + $0x1e8] sm:$0xff]
      %v4556 = vld [vmem:[%s4 + $0x1f0] sm:$0xff]
      %v4557 = vld [vmem:[%s4 + $0x1f8] sm:$0xff]
      %v4559 = vperm.slane %v1374, 0
      %v4560 = vperm.slane %v1374, 1
      %v4627 = vunpack.c.l.b16 %v4494
      %v4628 = vunpack.c.h.b16 %v4494
      %v4629 = vunpack.c.l.b16 %v4495
      %v4630 = vunpack.c.h.b16 %v4495
      %v4631 = vunpack.c.l.b16 %v4496
      %v4632 = vunpack.c.h.b16 %v4496
      %v4633 = vunpack.c.l.b16 %v4497
      %v4634 = vunpack.c.h.b16 %v4497
      %v4635 = vunpack.c.l.b16 %v4498
      %v4636 = vunpack.c.h.b16 %v4498
      %v4637 = vunpack.c.l.b16 %v4499
      %v4638 = vunpack.c.h.b16 %v4499
      %v4639 = vunpack.c.l.b16 %v4500
      %v4640 = vunpack.c.h.b16 %v4500
      %v4641 = vunpack.c.l.b16 %v4501
      %v4642 = vunpack.c.h.b16 %v4501
      %v4643 = vunpack.c.l.b16 %v4502
      %v4644 = vunpack.c.h.b16 %v4502
      %v4645 = vunpack.c.l.b16 %v4503
      %v4646 = vunpack.c.h.b16 %v4503
      %v4647 = vunpack.c.l.b16 %v4504
      %v4648 = vunpack.c.h.b16 %v4504
      %v4649 = vunpack.c.l.b16 %v4505
      %v4650 = vunpack.c.h.b16 %v4505
      %v4651 = vunpack.c.l.b16 %v4506
      %v4652 = vunpack.c.h.b16 %v4506
      %v4653 = vunpack.c.l.b16 %v4507
      %v4654 = vunpack.c.h.b16 %v4507
      %v4655 = vunpack.c.l.b16 %v4508
      %v4656 = vunpack.c.h.b16 %v4508
      %v4657 = vunpack.c.l.b16 %v4509
      %v4658 = vunpack.c.h.b16 %v4509
      %v4659 = vunpack.c.l.b16 %v4510
      %v4660 = vunpack.c.h.b16 %v4510
      %v4661 = vunpack.c.l.b16 %v4511
      %v4662 = vunpack.c.h.b16 %v4511
      %v4663 = vunpack.c.l.b16 %v4512
      %v4664 = vunpack.c.h.b16 %v4512
      %v4665 = vunpack.c.l.b16 %v4513
      %v4666 = vunpack.c.h.b16 %v4513
      %v4667 = vunpack.c.l.b16 %v4514
      %v4668 = vunpack.c.h.b16 %v4514
      %v4669 = vunpack.c.l.b16 %v4515
      %v4670 = vunpack.c.h.b16 %v4515
      %v4671 = vunpack.c.l.b16 %v4516
      %v4672 = vunpack.c.h.b16 %v4516
      %v4673 = vunpack.c.l.b16 %v4517
      %v4674 = vunpack.c.h.b16 %v4517
      %v4675 = vunpack.c.l.b16 %v4518
      %v4676 = vunpack.c.h.b16 %v4518
      %v4677 = vunpack.c.l.b16 %v4519
      %v4678 = vunpack.c.h.b16 %v4519
      %v4679 = vunpack.c.l.b16 %v4520
      %v4680 = vunpack.c.h.b16 %v4520
      %v4681 = vunpack.c.l.b16 %v4521
      %v4682 = vunpack.c.h.b16 %v4521
      %v4683 = vunpack.c.l.b16 %v4522
      %v4684 = vunpack.c.h.b16 %v4522
      %v4685 = vunpack.c.l.b16 %v4523
      %v4686 = vunpack.c.h.b16 %v4523
      %v4687 = vunpack.c.l.b16 %v4524
      %v4688 = vunpack.c.h.b16 %v4524
      %v4689 = vunpack.c.l.b16 %v4525
      %v4690 = vunpack.c.h.b16 %v4525
      %v4691 = vunpack.c.l.b16 %v4526
      %v4692 = vunpack.c.h.b16 %v4526
      %v4693 = vunpack.c.l.b16 %v4527
      %v4694 = vunpack.c.h.b16 %v4527
      %v4695 = vunpack.c.l.b16 %v4528
      %v4696 = vunpack.c.h.b16 %v4528
      %v4697 = vunpack.c.l.b16 %v4529
      %v4698 = vunpack.c.h.b16 %v4529
      %v4699 = vunpack.c.l.b16 %v4530
      %v4700 = vunpack.c.h.b16 %v4530
      %v4701 = vunpack.c.l.b16 %v4531
      %v4702 = vunpack.c.h.b16 %v4531
      %v4703 = vunpack.c.l.b16 %v4532
      %v4704 = vunpack.c.h.b16 %v4532
      %v4705 = vunpack.c.l.b16 %v4533
      %v4706 = vunpack.c.h.b16 %v4533
      %v4707 = vunpack.c.l.b16 %v4534
      %v4708 = vunpack.c.h.b16 %v4534
      %v4709 = vunpack.c.l.b16 %v4535
      %v4710 = vunpack.c.h.b16 %v4535
      %v4711 = vunpack.c.l.b16 %v4536
      %v4712 = vunpack.c.h.b16 %v4536
      %v4713 = vunpack.c.l.b16 %v4537
      %v4714 = vunpack.c.h.b16 %v4537
      %v4715 = vunpack.c.l.b16 %v4538
      %v4716 = vunpack.c.h.b16 %v4538
      %v4717 = vunpack.c.l.b16 %v4539
      %v4718 = vunpack.c.h.b16 %v4539
      %v4719 = vunpack.c.l.b16 %v4540
      %v4720 = vunpack.c.h.b16 %v4540
      %v4721 = vunpack.c.l.b16 %v4541
      %v4722 = vunpack.c.h.b16 %v4541
      %v4723 = vunpack.c.l.b16 %v4542
      %v4724 = vunpack.c.h.b16 %v4542
      %v4725 = vunpack.c.l.b16 %v4543
      %v4726 = vunpack.c.h.b16 %v4543
      %v4727 = vunpack.c.l.b16 %v4544
      %v4728 = vunpack.c.h.b16 %v4544
      %v4729 = vunpack.c.l.b16 %v4545
      %v4730 = vunpack.c.h.b16 %v4545
      %v4731 = vunpack.c.l.b16 %v4546
      %v4732 = vunpack.c.h.b16 %v4546
      %v4733 = vunpack.c.l.b16 %v4547
      %v4734 = vunpack.c.h.b16 %v4547
      %v4735 = vunpack.c.l.b16 %v4548
      %v4736 = vunpack.c.h.b16 %v4548
      %v4737 = vunpack.c.l.b16 %v4549
      %v4738 = vunpack.c.h.b16 %v4549
      %v4739 = vunpack.c.l.b16 %v4550
      %v4740 = vunpack.c.h.b16 %v4550
      %v4741 = vunpack.c.l.b16 %v4551
      %v4742 = vunpack.c.h.b16 %v4551
      %v4743 = vunpack.c.l.b16 %v4552
      %v4744 = vunpack.c.h.b16 %v4552
      %v4745 = vunpack.c.l.b16 %v4553
      %v4746 = vunpack.c.h.b16 %v4553
      %v4747 = vunpack.c.l.b16 %v4554
      %v4748 = vunpack.c.h.b16 %v4554
      %v4749 = vunpack.c.l.b16 %v4555
      %v4750 = vunpack.c.h.b16 %v4555
      %v4751 = vunpack.c.l.b16 %v4556
      %v4752 = vunpack.c.h.b16 %v4556
      %v4753 = vunpack.c.l.b16 %v4557
      %v4754 = vunpack.c.h.b16 %v4557
      %v4755 = vpack.c.b16 %v4629, %v4627
      %v4756 = vpack.c.b16 %v4630, %v4628
      %v4757 = vpack.c.b16 %v4633, %v4631
      %v4758 = vpack.c.b16 %v4634, %v4632
      %v4759 = vpack.c.b16 %v4637, %v4635
      %v4760 = vpack.c.b16 %v4638, %v4636
      %v4761 = vpack.c.b16 %v4641, %v4639
      %v4762 = vpack.c.b16 %v4642, %v4640
      %v4763 = vpack.c.b16 %v4645, %v4643
      %v4764 = vpack.c.b16 %v4646, %v4644
      %v4765 = vpack.c.b16 %v4649, %v4647
      %v4766 = vpack.c.b16 %v4650, %v4648
      %v4767 = vpack.c.b16 %v4653, %v4651
      %v4768 = vpack.c.b16 %v4654, %v4652
      %v4769 = vpack.c.b16 %v4657, %v4655
      %v4770 = vpack.c.b16 %v4658, %v4656
      %v4771 = vpack.c.b16 %v4661, %v4659
      %v4772 = vpack.c.b16 %v4662, %v4660
      %v4773 = vpack.c.b16 %v4665, %v4663
      %v4774 = vpack.c.b16 %v4666, %v4664
      %v4775 = vpack.c.b16 %v4669, %v4667
      %v4776 = vpack.c.b16 %v4670, %v4668
      %v4777 = vpack.c.b16 %v4673, %v4671
      %v4778 = vpack.c.b16 %v4674, %v4672
      %v4779 = vpack.c.b16 %v4677, %v4675
      %v4780 = vpack.c.b16 %v4678, %v4676
      %v4781 = vpack.c.b16 %v4681, %v4679
      %v4782 = vpack.c.b16 %v4682, %v4680
      %v4783 = vpack.c.b16 %v4685, %v4683
      %v4784 = vpack.c.b16 %v4686, %v4684
      %v4785 = vpack.c.b16 %v4689, %v4687
      %v4786 = vpack.c.b16 %v4690, %v4688
      %v4787 = vpack.c.b16 %v4693, %v4691
      %v4788 = vpack.c.b16 %v4694, %v4692
      %v4789 = vpack.c.b16 %v4697, %v4695
      %v4790 = vpack.c.b16 %v4698, %v4696
      %v4791 = vpack.c.b16 %v4701, %v4699
      %v4792 = vpack.c.b16 %v4702, %v4700
      %v4793 = vpack.c.b16 %v4705, %v4703
      %v4794 = vpack.c.b16 %v4706, %v4704
      %v4795 = vpack.c.b16 %v4709, %v4707
      %v4796 = vpack.c.b16 %v4710, %v4708
      %v4797 = vpack.c.b16 %v4713, %v4711
      %v4798 = vpack.c.b16 %v4714, %v4712
      %v4799 = vpack.c.b16 %v4717, %v4715
      %v4800 = vpack.c.b16 %v4718, %v4716
      %v4801 = vpack.c.b16 %v4721, %v4719
      %v4802 = vpack.c.b16 %v4722, %v4720
      %v4803 = vpack.c.b16 %v4725, %v4723
      %v4804 = vpack.c.b16 %v4726, %v4724
      %v4805 = vpack.c.b16 %v4729, %v4727
      %v4806 = vpack.c.b16 %v4730, %v4728
      %v4807 = vpack.c.b16 %v4733, %v4731
      %v4808 = vpack.c.b16 %v4734, %v4732
      %v4809 = vpack.c.b16 %v4737, %v4735
      %v4810 = vpack.c.b16 %v4738, %v4736
      %v4811 = vpack.c.b16 %v4741, %v4739
      %v4812 = vpack.c.b16 %v4742, %v4740
      %v4813 = vpack.c.b16 %v4745, %v4743
      %v4814 = vpack.c.b16 %v4746, %v4744
      %v4815 = vpack.c.b16 %v4749, %v4747
      %v4816 = vpack.c.b16 %v4750, %v4748
      %v4817 = vpack.c.b16 %v4753, %v4751
      %v4818 = vpack.c.b16 %v4754, %v4752
      %4883 = vmatpush.bf16.msra.mxu0 %v4769
      %4884 = vmatpush.bf16.msra.mxu0 %v4767
      %4885 = vmatpush.bf16.msra.mxu0 %v4765
      %4886 = vmatpush.bf16.msra.mxu0 %v4763
      %4887 = vmatpush.bf16.msra.mxu0 %v4761
      %4888 = vmatpush.bf16.msra.mxu0 %v4759
      %4889 = vmatpush.bf16.msra.mxu0 %v4757
      %4890 = vmatpush.bf16.msra.mxu0 %v4755
      %4891 = vmatmul.bf16.gmra.mxu0 %v4430
      %v4892 = vpop.f32.mrf.mxu0
      %v4893 = vadd.f32 %v4559, %v4892
      %v4894 = vpop.f32.mrf.mxu0
      %v4895 = vadd.f32 %v4559, %v4894
      %4896 = vmatmul.bf16.gmra.mxu0 %v4434
      %v4897 = vpop.f32.mrf.mxu0
      %v4898 = vadd.f32 %v4559, %v4897
      %v4899 = vpop.f32.mrf.mxu0
      %v4900 = vadd.f32 %v4559, %v4899
      %4901 = vmatmul.bf16.gmra.mxu0 %v4438
      %v4902 = vpop.f32.mrf.mxu0
      %v4903 = vadd.f32 %v4559, %v4902
      %v4904 = vpop.f32.mrf.mxu0
      %v4905 = vadd.f32 %v4559, %v4904
      %4906 = vmatmul.bf16.gmra.mxu0 %v4442
      %v4907 = vpop.f32.mrf.mxu0
      %v4908 = vadd.f32 %v4559, %v4907
      %v4909 = vpop.f32.mrf.mxu0
      %v4910 = vadd.f32 %v4559, %v4909
      %4911 = vmatmul.bf16.gmra.mxu0 %v4446
      %v4912 = vpop.f32.mrf.mxu0
      %v4913 = vadd.f32 %v4559, %v4912
      %v4914 = vpop.f32.mrf.mxu0
      %v4915 = vadd.f32 %v4559, %v4914
      %4916 = vmatmul.bf16.gmra.mxu0 %v4450
      %v4917 = vpop.f32.mrf.mxu0
      %v4918 = vadd.f32 %v4559, %v4917
      %v4919 = vpop.f32.mrf.mxu0
      %v4920 = vadd.f32 %v4559, %v4919
      %4921 = vmatmul.bf16.gmra.mxu0 %v4454
      %v4922 = vpop.f32.mrf.mxu0
      %v4923 = vadd.f32 %v4559, %v4922
      %v4924 = vpop.f32.mrf.mxu0
      %v4925 = vadd.f32 %v4559, %v4924
      %4926 = vmatmul.bf16.gmra.mxu0 %v4458
      %v4927 = vpop.f32.mrf.mxu0
      %v4928 = vadd.f32 %v4559, %v4927
      %v4929 = vpop.f32.mrf.mxu0
      %v4930 = vadd.f32 %v4559, %v4929
      %4931 = vmatmul.bf16.gmra.mxu0 %v4462
      %v4932 = vpop.f32.mrf.mxu0
      %v4933 = vadd.f32 %v4559, %v4932
      %v4934 = vpop.f32.mrf.mxu0
      %v4935 = vadd.f32 %v4559, %v4934
      %4936 = vmatmul.bf16.gmra.mxu0 %v4466
      %v4937 = vpop.f32.mrf.mxu0
      %v4938 = vadd.f32 %v4559, %v4937
      %v4939 = vpop.f32.mrf.mxu0
      %v4940 = vadd.f32 %v4559, %v4939
      %4941 = vmatmul.bf16.gmra.mxu0 %v4470
      %v4942 = vpop.f32.mrf.mxu0
      %v4943 = vadd.f32 %v4559, %v4942
      %v4944 = vpop.f32.mrf.mxu0
      %v4945 = vadd.f32 %v4559, %v4944
      %4946 = vmatmul.bf16.gmra.mxu0 %v4474
      %v4947 = vpop.f32.mrf.mxu0
      %v4948 = vadd.f32 %v4559, %v4947
      %v4949 = vpop.f32.mrf.mxu0
      %v4950 = vadd.f32 %v4559, %v4949
      %4951 = vmatmul.bf16.gmra.mxu0 %v4478
      %v4952 = vpop.f32.mrf.mxu0
      %v4953 = vadd.f32 %v4559, %v4952
      %v4954 = vpop.f32.mrf.mxu0
      %v4955 = vadd.f32 %v4559, %v4954
      %4956 = vmatmul.bf16.gmra.mxu0 %v4482
      %v4957 = vpop.f32.mrf.mxu0
      %v4958 = vadd.f32 %v4559, %v4957
      %v4959 = vpop.f32.mrf.mxu0
      %v4960 = vadd.f32 %v4559, %v4959
      %4961 = vmatmul.bf16.gmra.mxu0 %v4486
      %v4962 = vpop.f32.mrf.mxu0
      %v4963 = vadd.f32 %v4559, %v4962
      %v4964 = vpop.f32.mrf.mxu0
      %v4965 = vadd.f32 %v4559, %v4964
      %4966 = vmatmul.bf16.gmra.mxu0 %v4490
      %v4967 = vpop.f32.mrf.mxu0
      %v4968 = vadd.f32 %v4559, %v4967
      %v4969 = vpop.f32.mrf.mxu0
      %v4970 = vadd.f32 %v4559, %v4969
      %4971 = vdwg.mxu0
      %4972 = vmatpush.bf16.msra.mxu0 %v4785
      %4973 = vmatpush.bf16.msra.mxu0 %v4783
      %4974 = vmatpush.bf16.msra.mxu0 %v4781
      %4975 = vmatpush.bf16.msra.mxu0 %v4779
      %4976 = vmatpush.bf16.msra.mxu0 %v4777
      %4977 = vmatpush.bf16.msra.mxu0 %v4775
      %4978 = vmatpush.bf16.msra.mxu0 %v4773
      %4979 = vmatpush.bf16.msra.mxu0 %v4771
      %4980 = vmatmul.bf16.gmra.mxu0 %v4431
      %v4981 = vpop.f32.mrf.mxu0
      %v4982 = vadd.f32 %v4893, %v4981
      %v4983 = vpop.f32.mrf.mxu0
      %v4984 = vadd.f32 %v4895, %v4983
      %4985 = vmatmul.bf16.gmra.mxu0 %v4435
      %v4986 = vpop.f32.mrf.mxu0
      %v4987 = vadd.f32 %v4898, %v4986
      %v4988 = vpop.f32.mrf.mxu0
      %v4989 = vadd.f32 %v4900, %v4988
      %4990 = vmatmul.bf16.gmra.mxu0 %v4439
      %v4991 = vpop.f32.mrf.mxu0
      %v4992 = vadd.f32 %v4903, %v4991
      %v4993 = vpop.f32.mrf.mxu0
      %v4994 = vadd.f32 %v4905, %v4993
      %4995 = vmatmul.bf16.gmra.mxu0 %v4443
      %v4996 = vpop.f32.mrf.mxu0
      %v4997 = vadd.f32 %v4908, %v4996
      %v4998 = vpop.f32.mrf.mxu0
      %v4999 = vadd.f32 %v4910, %v4998
      %5000 = vmatmul.bf16.gmra.mxu0 %v4447
      %v5001 = vpop.f32.mrf.mxu0
      %v5002 = vadd.f32 %v4913, %v5001
      %v5003 = vpop.f32.mrf.mxu0
      %v5004 = vadd.f32 %v4915, %v5003
      %5005 = vmatmul.bf16.gmra.mxu0 %v4451
      %v5006 = vpop.f32.mrf.mxu0
      %v5007 = vadd.f32 %v4918, %v5006
      %v5008 = vpop.f32.mrf.mxu0
      %v5009 = vadd.f32 %v4920, %v5008
      %5010 = vmatmul.bf16.gmra.mxu0 %v4455
      %v5011 = vpop.f32.mrf.mxu0
      %v5012 = vadd.f32 %v4923, %v5011
      %v5013 = vpop.f32.mrf.mxu0
      %v5014 = vadd.f32 %v4925, %v5013
      %5015 = vmatmul.bf16.gmra.mxu0 %v4459
      %v5016 = vpop.f32.mrf.mxu0
      %v5017 = vadd.f32 %v4928, %v5016
      %v5018 = vpop.f32.mrf.mxu0
      %v5019 = vadd.f32 %v4930, %v5018
      %5020 = vmatmul.bf16.gmra.mxu0 %v4463
      %v5021 = vpop.f32.mrf.mxu0
      %v5022 = vadd.f32 %v4933, %v5021
      %v5023 = vpop.f32.mrf.mxu0
      %v5024 = vadd.f32 %v4935, %v5023
      %5025 = vmatmul.bf16.gmra.mxu0 %v4467
      %v5026 = vpop.f32.mrf.mxu0
      %v5027 = vadd.f32 %v4938, %v5026
      %v5028 = vpop.f32.mrf.mxu0
      %v5029 = vadd.f32 %v4940, %v5028
      %5030 = vmatmul.bf16.gmra.mxu0 %v4471
      %v5031 = vpop.f32.mrf.mxu0
      %v5032 = vadd.f32 %v4943, %v5031
      %v5033 = vpop.f32.mrf.mxu0
      %v5034 = vadd.f32 %v4945, %v5033
      %5035 = vmatmul.bf16.gmra.mxu0 %v4475
      %v5036 = vpop.f32.mrf.mxu0
      %v5037 = vadd.f32 %v4948, %v5036
      %v5038 = vpop.f32.mrf.mxu0
      %v5039 = vadd.f32 %v4950, %v5038
      %5040 = vmatmul.bf16.gmra.mxu0 %v4479
      %v5041 = vpop.f32.mrf.mxu0
      %v5042 = vadd.f32 %v4953, %v5041
      %v5043 = vpop.f32.mrf.mxu0
      %v5044 = vadd.f32 %v4955, %v5043
      %5045 = vmatmul.bf16.gmra.mxu0 %v4483
      %v5046 = vpop.f32.mrf.mxu0
      %v5047 = vadd.f32 %v4958, %v5046
      %v5048 = vpop.f32.mrf.mxu0
      %v5049 = vadd.f32 %v4960, %v5048
      %5050 = vmatmul.bf16.gmra.mxu0 %v4487
      %v5051 = vpop.f32.mrf.mxu0
      %v5052 = vadd.f32 %v4963, %v5051
      %v5053 = vpop.f32.mrf.mxu0
      %v5054 = vadd.f32 %v4965, %v5053
      %5055 = vmatmul.bf16.gmra.mxu0 %v4491
      %v5056 = vpop.f32.mrf.mxu0
      %v5057 = vadd.f32 %v4968, %v5056
      %v5058 = vpop.f32.mrf.mxu0
      %v5059 = vadd.f32 %v4970, %v5058
      %5060 = vdwg.mxu0
      %5061 = vmatpush.bf16.msra.mxu0 %v4801
      %5062 = vmatpush.bf16.msra.mxu0 %v4799
      %5063 = vmatpush.bf16.msra.mxu0 %v4797
      %5064 = vmatpush.bf16.msra.mxu0 %v4795
      %5065 = vmatpush.bf16.msra.mxu0 %v4793
      %5066 = vmatpush.bf16.msra.mxu0 %v4791
      %5067 = vmatpush.bf16.msra.mxu0 %v4789
      %5068 = vmatpush.bf16.msra.mxu0 %v4787
      %5069 = vmatmul.bf16.gmra.mxu0 %v4432
      %v5070 = vpop.f32.mrf.mxu0
      %v5071 = vadd.f32 %v4982, %v5070
      %v5072 = vpop.f32.mrf.mxu0
      %v5073 = vadd.f32 %v4984, %v5072
      %5074 = vmatmul.bf16.gmra.mxu0 %v4436
      %v5075 = vpop.f32.mrf.mxu0
      %v5076 = vadd.f32 %v4987, %v5075
      %v5077 = vpop.f32.mrf.mxu0
      %v5078 = vadd.f32 %v4989, %v5077
      %5079 = vmatmul.bf16.gmra.mxu0 %v4440
      %v5080 = vpop.f32.mrf.mxu0
      %v5081 = vadd.f32 %v4992, %v5080
      %v5082 = vpop.f32.mrf.mxu0
      %v5083 = vadd.f32 %v4994, %v5082
      %5084 = vmatmul.bf16.gmra.mxu0 %v4444
      %v5085 = vpop.f32.mrf.mxu0
      %v5086 = vadd.f32 %v4997, %v5085
      %v5087 = vpop.f32.mrf.mxu0
      %v5088 = vadd.f32 %v4999, %v5087
      %5089 = vmatmul.bf16.gmra.mxu0 %v4448
      %v5090 = vpop.f32.mrf.mxu0
      %v5091 = vadd.f32 %v5002, %v5090
      %v5092 = vpop.f32.mrf.mxu0
      %v5093 = vadd.f32 %v5004, %v5092
      %5094 = vmatmul.bf16.gmra.mxu0 %v4452
      %v5095 = vpop.f32.mrf.mxu0
      %v5096 = vadd.f32 %v5007, %v5095
      %v5097 = vpop.f32.mrf.mxu0
      %v5098 = vadd.f32 %v5009, %v5097
      %5099 = vmatmul.bf16.gmra.mxu0 %v4456
      %v5100 = vpop.f32.mrf.mxu0
      %v5101 = vadd.f32 %v5012, %v5100
      %v5102 = vpop.f32.mrf.mxu0
      %v5103 = vadd.f32 %v5014, %v5102
      %5104 = vmatmul.bf16.gmra.mxu0 %v4460
      %v5105 = vpop.f32.mrf.mxu0
      %v5106 = vadd.f32 %v5017, %v5105
      %v5107 = vpop.f32.mrf.mxu0
      %v5108 = vadd.f32 %v5019, %v5107
      %5109 = vmatmul.bf16.gmra.mxu0 %v4464
      %v5110 = vpop.f32.mrf.mxu0
      %v5111 = vadd.f32 %v5022, %v5110
      %v5112 = vpop.f32.mrf.mxu0
      %v5113 = vadd.f32 %v5024, %v5112
      %5114 = vmatmul.bf16.gmra.mxu0 %v4468
      %v5115 = vpop.f32.mrf.mxu0
      %v5116 = vadd.f32 %v5027, %v5115
      %v5117 = vpop.f32.mrf.mxu0
      %v5118 = vadd.f32 %v5029, %v5117
      %5119 = vmatmul.bf16.gmra.mxu0 %v4472
      %v5120 = vpop.f32.mrf.mxu0
      %v5121 = vadd.f32 %v5032, %v5120
      %v5122 = vpop.f32.mrf.mxu0
      %v5123 = vadd.f32 %v5034, %v5122
      %5124 = vmatmul.bf16.gmra.mxu0 %v4476
      %v5125 = vpop.f32.mrf.mxu0
      %v5126 = vadd.f32 %v5037, %v5125
      %v5127 = vpop.f32.mrf.mxu0
      %v5128 = vadd.f32 %v5039, %v5127
      %5129 = vmatmul.bf16.gmra.mxu0 %v4480
      %v5130 = vpop.f32.mrf.mxu0
      %v5131 = vadd.f32 %v5042, %v5130
      %v5132 = vpop.f32.mrf.mxu0
      %v5133 = vadd.f32 %v5044, %v5132
      %5134 = vmatmul.bf16.gmra.mxu0 %v4484
      %v5135 = vpop.f32.mrf.mxu0
      %v5136 = vadd.f32 %v5047, %v5135
      %v5137 = vpop.f32.mrf.mxu0
      %v5138 = vadd.f32 %v5049, %v5137
      %5139 = vmatmul.bf16.gmra.mxu0 %v4488
      %v5140 = vpop.f32.mrf.mxu0
      %v5141 = vadd.f32 %v5052, %v5140
      %v5142 = vpop.f32.mrf.mxu0
      %v5143 = vadd.f32 %v5054, %v5142
      %5144 = vmatmul.bf16.gmra.mxu0 %v4492
      %v5145 = vpop.f32.mrf.mxu0
      %v5146 = vadd.f32 %v5057, %v5145
      %v5147 = vpop.f32.mrf.mxu0
      %v5148 = vadd.f32 %v5059, %v5147
      %5149 = vdwg.mxu0
      %5150 = vmatpush.bf16.msra.mxu0 %v4817
      %5151 = vmatpush.bf16.msra.mxu0 %v4815
      %5152 = vmatpush.bf16.msra.mxu0 %v4813
      %5153 = vmatpush.bf16.msra.mxu0 %v4811
      %5154 = vmatpush.bf16.msra.mxu0 %v4809
      %5155 = vmatpush.bf16.msra.mxu0 %v4807
      %5156 = vmatpush.bf16.msra.mxu0 %v4805
      %5157 = vmatpush.bf16.msra.mxu0 %v4803
      %5158 = vmatmul.bf16.gmra.mxu0 %v4433
      %v5159 = vpop.f32.mrf.mxu0
      %v5160 = vadd.f32 %v5071, %v5159
      %v5161 = vpop.f32.mrf.mxu0
      %v5162 = vadd.f32 %v5073, %v5161
      %5163 = vmatmul.bf16.gmra.mxu0 %v4437
      %v5164 = vpop.f32.mrf.mxu0
      %v5165 = vadd.f32 %v5076, %v5164
      %v5166 = vpop.f32.mrf.mxu0
      %v5167 = vadd.f32 %v5078, %v5166
      %5168 = vmatmul.bf16.gmra.mxu0 %v4441
      %v5169 = vpop.f32.mrf.mxu0
      %v5170 = vadd.f32 %v5081, %v5169
      %v5171 = vpop.f32.mrf.mxu0
      %v5172 = vadd.f32 %v5083, %v5171
      %5173 = vmatmul.bf16.gmra.mxu0 %v4445
      %v5174 = vpop.f32.mrf.mxu0
      %v5175 = vadd.f32 %v5086, %v5174
      %v5176 = vpop.f32.mrf.mxu0
      %v5177 = vadd.f32 %v5088, %v5176
      %5178 = vmatmul.bf16.gmra.mxu0 %v4449
      %v5179 = vpop.f32.mrf.mxu0
      %v5180 = vadd.f32 %v5091, %v5179
      %v5181 = vpop.f32.mrf.mxu0
      %v5182 = vadd.f32 %v5093, %v5181
      %5183 = vmatmul.bf16.gmra.mxu0 %v4453
      %v5184 = vpop.f32.mrf.mxu0
      %v5185 = vadd.f32 %v5096, %v5184
      %v5186 = vpop.f32.mrf.mxu0
      %v5187 = vadd.f32 %v5098, %v5186
      %5188 = vmatmul.bf16.gmra.mxu0 %v4457
      %v5189 = vpop.f32.mrf.mxu0
      %v5190 = vadd.f32 %v5101, %v5189
      %v5191 = vpop.f32.mrf.mxu0
      %v5192 = vadd.f32 %v5103, %v5191
      %5193 = vmatmul.bf16.gmra.mxu0 %v4461
      %v5194 = vpop.f32.mrf.mxu0
      %v5195 = vadd.f32 %v5106, %v5194
      %v5196 = vpop.f32.mrf.mxu0
      %v5197 = vadd.f32 %v5108, %v5196
      %5198 = vmatmul.bf16.gmra.mxu0 %v4465
      %v5199 = vpop.f32.mrf.mxu0
      %v5200 = vadd.f32 %v5111, %v5199
      %v5201 = vpop.f32.mrf.mxu0
      %v5202 = vadd.f32 %v5113, %v5201
      %5203 = vmatmul.bf16.gmra.mxu0 %v4469
      %v5204 = vpop.f32.mrf.mxu0
      %v5205 = vadd.f32 %v5116, %v5204
      %v5206 = vpop.f32.mrf.mxu0
      %v5207 = vadd.f32 %v5118, %v5206
      %5208 = vmatmul.bf16.gmra.mxu0 %v4473
      %v5209 = vpop.f32.mrf.mxu0
      %v5210 = vadd.f32 %v5121, %v5209
      %v5211 = vpop.f32.mrf.mxu0
      %v5212 = vadd.f32 %v5123, %v5211
      %5213 = vmatmul.bf16.gmra.mxu0 %v4477
      %v5214 = vpop.f32.mrf.mxu0
      %v5215 = vadd.f32 %v5126, %v5214
      %v5216 = vpop.f32.mrf.mxu0
      %v5217 = vadd.f32 %v5128, %v5216
      %5218 = vmatmul.bf16.gmra.mxu0 %v4481
      %v5219 = vpop.f32.mrf.mxu0
      %v5220 = vadd.f32 %v5131, %v5219
      %v5221 = vpop.f32.mrf.mxu0
      %v5222 = vadd.f32 %v5133, %v5221
      %5223 = vmatmul.bf16.gmra.mxu0 %v4485
      %v5224 = vpop.f32.mrf.mxu0
      %v5225 = vadd.f32 %v5136, %v5224
      %v5226 = vpop.f32.mrf.mxu0
      %v5227 = vadd.f32 %v5138, %v5226
      %5228 = vmatmul.bf16.gmra.mxu0 %v4489
      %v5229 = vpop.f32.mrf.mxu0
      %v5230 = vadd.f32 %v5141, %v5229
      %v5231 = vpop.f32.mrf.mxu0
      %v5232 = vadd.f32 %v5143, %v5231
      %5233 = vmatmul.bf16.gmra.mxu0 %v4493
      %v5234 = vpop.f32.mrf.mxu0
      %v5235 = vadd.f32 %v5146, %v5234
      %v5236 = vpop.f32.mrf.mxu0
      %v5237 = vadd.f32 %v5148, %v5236
      %5238 = vdwg.mxu0
      %5239 = vmatpush.bf16.msra.mxu0 %v4770
      %5240 = vmatpush.bf16.msra.mxu0 %v4768
      %5241 = vmatpush.bf16.msra.mxu0 %v4766
      %5242 = vmatpush.bf16.msra.mxu0 %v4764
      %5243 = vmatpush.bf16.msra.mxu0 %v4762
      %5244 = vmatpush.bf16.msra.mxu0 %v4760
      %5245 = vmatpush.bf16.msra.mxu0 %v4758
      %5246 = vmatpush.bf16.msra.mxu0 %v4756
      %5247 = vmatmul.bf16.gmra.mxu0 %v4430
      %v5248 = vpop.f32.mrf.mxu0
      %v5249 = vadd.f32 %v4560, %v5248
      %v5250 = vpop.f32.mrf.mxu0
      %v5251 = vadd.f32 %v4560, %v5250
      %5252 = vmatmul.bf16.gmra.mxu0 %v4434
      %v5253 = vpop.f32.mrf.mxu0
      %v5254 = vadd.f32 %v4560, %v5253
      %v5255 = vpop.f32.mrf.mxu0
      %v5256 = vadd.f32 %v4560, %v5255
      %5257 = vmatmul.bf16.gmra.mxu0 %v4438
      %v5258 = vpop.f32.mrf.mxu0
      %v5259 = vadd.f32 %v4560, %v5258
      %v5260 = vpop.f32.mrf.mxu0
      %v5261 = vadd.f32 %v4560, %v5260
      %5262 = vmatmul.bf16.gmra.mxu0 %v4442
      %v5263 = vpop.f32.mrf.mxu0
      %v5264 = vadd.f32 %v4560, %v5263
      %v5265 = vpop.f32.mrf.mxu0
      %v5266 = vadd.f32 %v4560, %v5265
      %5267 = vmatmul.bf16.gmra.mxu0 %v4446
      %v5268 = vpop.f32.mrf.mxu0
      %v5269 = vadd.f32 %v4560, %v5268
      %v5270 = vpop.f32.mrf.mxu0
      %v5271 = vadd.f32 %v4560, %v5270
      %5272 = vmatmul.bf16.gmra.mxu0 %v4450
      %v5273 = vpop.f32.mrf.mxu0
      %v5274 = vadd.f32 %v4560, %v5273
      %v5275 = vpop.f32.mrf.mxu0
      %v5276 = vadd.f32 %v4560, %v5275
      %5277 = vmatmul.bf16.gmra.mxu0 %v4454
      %v5278 = vpop.f32.mrf.mxu0
      %v5279 = vadd.f32 %v4560, %v5278
      %v5280 = vpop.f32.mrf.mxu0
      %v5281 = vadd.f32 %v4560, %v5280
      %5282 = vmatmul.bf16.gmra.mxu0 %v4458
      %v5283 = vpop.f32.mrf.mxu0
      %v5284 = vadd.f32 %v4560, %v5283
      %v5285 = vpop.f32.mrf.mxu0
      %v5286 = vadd.f32 %v4560, %v5285
      %5287 = vmatmul.bf16.gmra.mxu0 %v4462
      %v5288 = vpop.f32.mrf.mxu0
      %v5289 = vadd.f32 %v4560, %v5288
      %v5290 = vpop.f32.mrf.mxu0
      %v5291 = vadd.f32 %v4560, %v5290
      %5292 = vmatmul.bf16.gmra.mxu0 %v4466
      %v5293 = vpop.f32.mrf.mxu0
      %v5294 = vadd.f32 %v4560, %v5293
      %v5295 = vpop.f32.mrf.mxu0
      %v5296 = vadd.f32 %v4560, %v5295
      %5297 = vmatmul.bf16.gmra.mxu0 %v4470
      %v5298 = vpop.f32.mrf.mxu0
      %v5299 = vadd.f32 %v4560, %v5298
      %v5300 = vpop.f32.mrf.mxu0
      %v5301 = vadd.f32 %v4560, %v5300
      %5302 = vmatmul.bf16.gmra.mxu0 %v4474
      %v5303 = vpop.f32.mrf.mxu0
      %v5304 = vadd.f32 %v4560, %v5303
      %v5305 = vpop.f32.mrf.mxu0
      %v5306 = vadd.f32 %v4560, %v5305
      %5307 = vmatmul.bf16.gmra.mxu0 %v4478
      %v5308 = vpop.f32.mrf.mxu0
      %v5309 = vadd.f32 %v4560, %v5308
      %v5310 = vpop.f32.mrf.mxu0
      %v5311 = vadd.f32 %v4560, %v5310
      %5312 = vmatmul.bf16.gmra.mxu0 %v4482
      %v5313 = vpop.f32.mrf.mxu0
      %v5314 = vadd.f32 %v4560, %v5313
      %v5315 = vpop.f32.mrf.mxu0
      %v5316 = vadd.f32 %v4560, %v5315
      %5317 = vmatmul.bf16.gmra.mxu0 %v4486
      %v5318 = vpop.f32.mrf.mxu0
      %v5319 = vadd.f32 %v4560, %v5318
      %v5320 = vpop.f32.mrf.mxu0
      %v5321 = vadd.f32 %v4560, %v5320
      %5322 = vmatmul.bf16.gmra.mxu0 %v4490
      %v5323 = vpop.f32.mrf.mxu0
      %v5324 = vadd.f32 %v4560, %v5323
      %v5325 = vpop.f32.mrf.mxu0
      %v5326 = vadd.f32 %v4560, %v5325
      %5327 = vdwg.mxu0
      %5328 = vmatpush.bf16.msra.mxu0 %v4786
      %5329 = vmatpush.bf16.msra.mxu0 %v4784
      %5330 = vmatpush.bf16.msra.mxu0 %v4782
      %5331 = vmatpush.bf16.msra.mxu0 %v4780
      %5332 = vmatpush.bf16.msra.mxu0 %v4778
      %5333 = vmatpush.bf16.msra.mxu0 %v4776
      %5334 = vmatpush.bf16.msra.mxu0 %v4774
      %5335 = vmatpush.bf16.msra.mxu0 %v4772
      %5336 = vmatmul.bf16.gmra.mxu0 %v4431
      %v5337 = vpop.f32.mrf.mxu0
      %v5338 = vadd.f32 %v5249, %v5337
      %v5339 = vpop.f32.mrf.mxu0
      %v5340 = vadd.f32 %v5251, %v5339
      %5341 = vmatmul.bf16.gmra.mxu0 %v4435
      %v5342 = vpop.f32.mrf.mxu0
      %v5343 = vadd.f32 %v5254, %v5342
      %v5344 = vpop.f32.mrf.mxu0
      %v5345 = vadd.f32 %v5256, %v5344
      %5346 = vmatmul.bf16.gmra.mxu0 %v4439
      %v5347 = vpop.f32.mrf.mxu0
      %v5348 = vadd.f32 %v5259, %v5347
      %v5349 = vpop.f32.mrf.mxu0
      %v5350 = vadd.f32 %v5261, %v5349
      %5351 = vmatmul.bf16.gmra.mxu0 %v4443
      %v5352 = vpop.f32.mrf.mxu0
      %v5353 = vadd.f32 %v5264, %v5352
      %v5354 = vpop.f32.mrf.mxu0
      %v5355 = vadd.f32 %v5266, %v5354
      %5356 = vmatmul.bf16.gmra.mxu0 %v4447
      %v5357 = vpop.f32.mrf.mxu0
      %v5358 = vadd.f32 %v5269, %v5357
      %v5359 = vpop.f32.mrf.mxu0
      %v5360 = vadd.f32 %v5271, %v5359
      %5361 = vmatmul.bf16.gmra.mxu0 %v4451
      %v5362 = vpop.f32.mrf.mxu0
      %v5363 = vadd.f32 %v5274, %v5362
      %v5364 = vpop.f32.mrf.mxu0
      %v5365 = vadd.f32 %v5276, %v5364
      %5366 = vmatmul.bf16.gmra.mxu0 %v4455
      %v5367 = vpop.f32.mrf.mxu0
      %v5368 = vadd.f32 %v5279, %v5367
      %v5369 = vpop.f32.mrf.mxu0
      %v5370 = vadd.f32 %v5281, %v5369
      %5371 = vmatmul.bf16.gmra.mxu0 %v4459
      %v5372 = vpop.f32.mrf.mxu0
      %v5373 = vadd.f32 %v5284, %v5372
      %v5374 = vpop.f32.mrf.mxu0
      %v5375 = vadd.f32 %v5286, %v5374
      %5376 = vmatmul.bf16.gmra.mxu0 %v4463
      %v5377 = vpop.f32.mrf.mxu0
      %v5378 = vadd.f32 %v5289, %v5377
      %v5379 = vpop.f32.mrf.mxu0
      %v5380 = vadd.f32 %v5291, %v5379
      %5381 = vmatmul.bf16.gmra.mxu0 %v4467
      %v5382 = vpop.f32.mrf.mxu0
      %v5383 = vadd.f32 %v5294, %v5382
      %v5384 = vpop.f32.mrf.mxu0
      %v5385 = vadd.f32 %v5296, %v5384
      %5386 = vmatmul.bf16.gmra.mxu0 %v4471
      %v5387 = vpop.f32.mrf.mxu0
      %v5388 = vadd.f32 %v5299, %v5387
      %v5389 = vpop.f32.mrf.mxu0
      %v5390 = vadd.f32 %v5301, %v5389
      %5391 = vmatmul.bf16.gmra.mxu0 %v4475
      %v5392 = vpop.f32.mrf.mxu0
      %v5393 = vadd.f32 %v5304, %v5392
      %v5394 = vpop.f32.mrf.mxu0
      %v5395 = vadd.f32 %v5306, %v5394
      %5396 = vmatmul.bf16.gmra.mxu0 %v4479
      %v5397 = vpop.f32.mrf.mxu0
      %v5398 = vadd.f32 %v5309, %v5397
      %v5399 = vpop.f32.mrf.mxu0
      %v5400 = vadd.f32 %v5311, %v5399
      %5401 = vmatmul.bf16.gmra.mxu0 %v4483
      %v5402 = vpop.f32.mrf.mxu0
      %v5403 = vadd.f32 %v5314, %v5402
      %v5404 = vpop.f32.mrf.mxu0
      %v5405 = vadd.f32 %v5316, %v5404
      %5406 = vmatmul.bf16.gmra.mxu0 %v4487
      %v5407 = vpop.f32.mrf.mxu0
      %v5408 = vadd.f32 %v5319, %v5407
      %v5409 = vpop.f32.mrf.mxu0
      %v5410 = vadd.f32 %v5321, %v5409
      %5411 = vmatmul.bf16.gmra.mxu0 %v4491
      %v5412 = vpop.f32.mrf.mxu0
      %v5413 = vadd.f32 %v5324, %v5412
      %v5414 = vpop.f32.mrf.mxu0
      %v5415 = vadd.f32 %v5326, %v5414
      %5416 = vdwg.mxu0
      %5417 = vmatpush.bf16.msra.mxu0 %v4802
      %5418 = vmatpush.bf16.msra.mxu0 %v4800
      %5419 = vmatpush.bf16.msra.mxu0 %v4798
      %5420 = vmatpush.bf16.msra.mxu0 %v4796
      %5421 = vmatpush.bf16.msra.mxu0 %v4794
      %5422 = vmatpush.bf16.msra.mxu0 %v4792
      %5423 = vmatpush.bf16.msra.mxu0 %v4790
      %5424 = vmatpush.bf16.msra.mxu0 %v4788
      %5425 = vmatmul.bf16.gmra.mxu0 %v4432
      %v5426 = vpop.f32.mrf.mxu0
      %v5427 = vadd.f32 %v5338, %v5426
      %v5428 = vpop.f32.mrf.mxu0
      %v5429 = vadd.f32 %v5340, %v5428
      %5430 = vmatmul.bf16.gmra.mxu0 %v4436
      %v5431 = vpop.f32.mrf.mxu0
      %v5432 = vadd.f32 %v5343, %v5431
      %v5433 = vpop.f32.mrf.mxu0
      %v5434 = vadd.f32 %v5345, %v5433
      %5435 = vmatmul.bf16.gmra.mxu0 %v4440
      %v5436 = vpop.f32.mrf.mxu0
      %v5437 = vadd.f32 %v5348, %v5436
      %v5438 = vpop.f32.mrf.mxu0
      %v5439 = vadd.f32 %v5350, %v5438
      %5440 = vmatmul.bf16.gmra.mxu0 %v4444
      %v5441 = vpop.f32.mrf.mxu0
      %v5442 = vadd.f32 %v5353, %v5441
      %v5443 = vpop.f32.mrf.mxu0
      %v5444 = vadd.f32 %v5355, %v5443
      %5445 = vmatmul.bf16.gmra.mxu0 %v4448
      %v5446 = vpop.f32.mrf.mxu0
      %v5447 = vadd.f32 %v5358, %v5446
      %v5448 = vpop.f32.mrf.mxu0
      %v5449 = vadd.f32 %v5360, %v5448
      %5450 = vmatmul.bf16.gmra.mxu0 %v4452
      %v5451 = vpop.f32.mrf.mxu0
      %v5452 = vadd.f32 %v5363, %v5451
      %v5453 = vpop.f32.mrf.mxu0
      %v5454 = vadd.f32 %v5365, %v5453
      %5455 = vmatmul.bf16.gmra.mxu0 %v4456
      %v5456 = vpop.f32.mrf.mxu0
      %v5457 = vadd.f32 %v5368, %v5456
      %v5458 = vpop.f32.mrf.mxu0
      %v5459 = vadd.f32 %v5370, %v5458
      %5460 = vmatmul.bf16.gmra.mxu0 %v4460
      %v5461 = vpop.f32.mrf.mxu0
      %v5462 = vadd.f32 %v5373, %v5461
      %v5463 = vpop.f32.mrf.mxu0
      %v5464 = vadd.f32 %v5375, %v5463
      %5465 = vmatmul.bf16.gmra.mxu0 %v4464
      %v5466 = vpop.f32.mrf.mxu0
      %v5467 = vadd.f32 %v5378, %v5466
      %v5468 = vpop.f32.mrf.mxu0
      %v5469 = vadd.f32 %v5380, %v5468
      %5470 = vmatmul.bf16.gmra.mxu0 %v4468
      %v5471 = vpop.f32.mrf.mxu0
      %v5472 = vadd.f32 %v5383, %v5471
      %v5473 = vpop.f32.mrf.mxu0
      %v5474 = vadd.f32 %v5385, %v5473
      %5475 = vmatmul.bf16.gmra.mxu0 %v4472
      %v5476 = vpop.f32.mrf.mxu0
      %v5477 = vadd.f32 %v5388, %v5476
      %v5478 = vpop.f32.mrf.mxu0
      %v5479 = vadd.f32 %v5390, %v5478
      %5480 = vmatmul.bf16.gmra.mxu0 %v4476
      %v5481 = vpop.f32.mrf.mxu0
      %v5482 = vadd.f32 %v5393, %v5481
      %v5483 = vpop.f32.mrf.mxu0
      %v5484 = vadd.f32 %v5395, %v5483
      %5485 = vmatmul.bf16.gmra.mxu0 %v4480
      %v5486 = vpop.f32.mrf.mxu0
      %v5487 = vadd.f32 %v5398, %v5486
      %v5488 = vpop.f32.mrf.mxu0
      %v5489 = vadd.f32 %v5400, %v5488
      %5490 = vmatmul.bf16.gmra.mxu0 %v4484
      %v5491 = vpop.f32.mrf.mxu0
      %v5492 = vadd.f32 %v5403, %v5491
      %v5493 = vpop.f32.mrf.mxu0
      %v5494 = vadd.f32 %v5405, %v5493
      %5495 = vmatmul.bf16.gmra.mxu0 %v4488
      %v5496 = vpop.f32.mrf.mxu0
      %v5497 = vadd.f32 %v5408, %v5496
      %v5498 = vpop.f32.mrf.mxu0
      %v5499 = vadd.f32 %v5410, %v5498
      %5500 = vmatmul.bf16.gmra.mxu0 %v4492
      %v5501 = vpop.f32.mrf.mxu0
      %v5502 = vadd.f32 %v5413, %v5501
      %v5503 = vpop.f32.mrf.mxu0
      %v5504 = vadd.f32 %v5415, %v5503
      %5505 = vdwg.mxu0
      %5506 = vmatpush.bf16.msra.mxu0 %v4818
      %5507 = vmatpush.bf16.msra.mxu0 %v4816
      %5508 = vmatpush.bf16.msra.mxu0 %v4814
      %5509 = vmatpush.bf16.msra.mxu0 %v4812
      %5510 = vmatpush.bf16.msra.mxu0 %v4810
      %5511 = vmatpush.bf16.msra.mxu0 %v4808
      %5512 = vmatpush.bf16.msra.mxu0 %v4806
      %5513 = vmatpush.bf16.msra.mxu0 %v4804
      %5514 = vmatmul.bf16.gmra.mxu0 %v4433
      %v5515 = vpop.f32.mrf.mxu0
      %v5516 = vadd.f32 %v5427, %v5515
      %v5517 = vpop.f32.mrf.mxu0
      %v5518 = vadd.f32 %v5429, %v5517
      %5519 = vmatmul.bf16.gmra.mxu0 %v4437
      %v5520 = vpop.f32.mrf.mxu0
      %v5521 = vadd.f32 %v5432, %v5520
      %v5522 = vpop.f32.mrf.mxu0
      %v5523 = vadd.f32 %v5434, %v5522
      %5524 = vmatmul.bf16.gmra.mxu0 %v4441
      %v5525 = vpop.f32.mrf.mxu0
      %v5526 = vadd.f32 %v5437, %v5525
      %v5527 = vpop.f32.mrf.mxu0
      %v5528 = vadd.f32 %v5439, %v5527
      %5529 = vmatmul.bf16.gmra.mxu0 %v4445
      %v5530 = vpop.f32.mrf.mxu0
      %v5531 = vadd.f32 %v5442, %v5530
      %v5532 = vpop.f32.mrf.mxu0
      %v5533 = vadd.f32 %v5444, %v5532
      %5534 = vmatmul.bf16.gmra.mxu0 %v4449
      %v5535 = vpop.f32.mrf.mxu0
      %v5536 = vadd.f32 %v5447, %v5535
      %v5537 = vpop.f32.mrf.mxu0
      %v5538 = vadd.f32 %v5449, %v5537
      %5539 = vmatmul.bf16.gmra.mxu0 %v4453
      %v5540 = vpop.f32.mrf.mxu0
      %v5541 = vadd.f32 %v5452, %v5540
      %v5542 = vpop.f32.mrf.mxu0
      %v5543 = vadd.f32 %v5454, %v5542
      %5544 = vmatmul.bf16.gmra.mxu0 %v4457
      %v5545 = vpop.f32.mrf.mxu0
      %v5546 = vadd.f32 %v5457, %v5545
      %v5547 = vpop.f32.mrf.mxu0
      %v5548 = vadd.f32 %v5459, %v5547
      %5549 = vmatmul.bf16.gmra.mxu0 %v4461
      %v5550 = vpop.f32.mrf.mxu0
      %v5551 = vadd.f32 %v5462, %v5550
      %v5552 = vpop.f32.mrf.mxu0
      %v5553 = vadd.f32 %v5464, %v5552
      %5554 = vmatmul.bf16.gmra.mxu0 %v4465
      %v5555 = vpop.f32.mrf.mxu0
      %v5556 = vadd.f32 %v5467, %v5555
      %v5557 = vpop.f32.mrf.mxu0
      %v5558 = vadd.f32 %v5469, %v5557
      %5559 = vmatmul.bf16.gmra.mxu0 %v4469
      %v5560 = vpop.f32.mrf.mxu0
      %v5561 = vadd.f32 %v5472, %v5560
      %v5562 = vpop.f32.mrf.mxu0
      %v5563 = vadd.f32 %v5474, %v5562
      %5564 = vmatmul.bf16.gmra.mxu0 %v4473
      %v5565 = vpop.f32.mrf.mxu0
      %v5566 = vadd.f32 %v5477, %v5565
      %v5567 = vpop.f32.mrf.mxu0
      %v5568 = vadd.f32 %v5479, %v5567
      %5569 = vmatmul.bf16.gmra.mxu0 %v4477
      %v5570 = vpop.f32.mrf.mxu0
      %v5571 = vadd.f32 %v5482, %v5570
      %v5572 = vpop.f32.mrf.mxu0
      %v5573 = vadd.f32 %v5484, %v5572
      %5574 = vmatmul.bf16.gmra.mxu0 %v4481
      %v5575 = vpop.f32.mrf.mxu0
      %v5576 = vadd.f32 %v5487, %v5575
      %v5577 = vpop.f32.mrf.mxu0
      %v5578 = vadd.f32 %v5489, %v5577
      %5579 = vmatmul.bf16.gmra.mxu0 %v4485
      %v5580 = vpop.f32.mrf.mxu0
      %v5581 = vadd.f32 %v5492, %v5580
      %v5582 = vpop.f32.mrf.mxu0
      %v5583 = vadd.f32 %v5494, %v5582
      %5584 = vmatmul.bf16.gmra.mxu0 %v4489
      %v5585 = vpop.f32.mrf.mxu0
      %v5586 = vadd.f32 %v5497, %v5585
      %v5587 = vpop.f32.mrf.mxu0
      %v5588 = vadd.f32 %v5499, %v5587
      %5589 = vmatmul.bf16.gmra.mxu0 %v4493
      %v5590 = vpop.f32.mrf.mxu0
      %v5591 = vadd.f32 %v5502, %v5590
      %v5592 = vpop.f32.mrf.mxu0
      %v5593 = vadd.f32 %v5504, %v5592
      %5594 = vdwg.mxu0
      %v5595 = vxor.u32 %v5160, 2147483648
      %v5596 = vxor.u32 %v5516, 2147483648
      %v5597 = vxor.u32 %v5162, 2147483648
      %v5598 = vxor.u32 %v5518, 2147483648
      %v5599 = vxor.u32 %v5165, 2147483648
      %v5600 = vxor.u32 %v5521, 2147483648
      %v5601 = vxor.u32 %v5167, 2147483648
      %v5602 = vxor.u32 %v5523, 2147483648
      %v5603 = vxor.u32 %v5170, 2147483648
      %v5604 = vxor.u32 %v5526, 2147483648
      %v5605 = vxor.u32 %v5172, 2147483648
      %v5606 = vxor.u32 %v5528, 2147483648
      %v5607 = vxor.u32 %v5175, 2147483648
      %v5608 = vxor.u32 %v5531, 2147483648
      %v5609 = vxor.u32 %v5177, 2147483648
      %v5610 = vxor.u32 %v5533, 2147483648
      %v5611 = vxor.u32 %v5180, 2147483648
      %v5612 = vxor.u32 %v5536, 2147483648
      %v5613 = vxor.u32 %v5182, 2147483648
      %v5614 = vxor.u32 %v5538, 2147483648
      %v5615 = vxor.u32 %v5185, 2147483648
      %v5616 = vxor.u32 %v5541, 2147483648
      %v5617 = vxor.u32 %v5187, 2147483648
      %v5618 = vxor.u32 %v5543, 2147483648
      %v5619 = vxor.u32 %v5190, 2147483648
      %v5620 = vxor.u32 %v5546, 2147483648
      %v5621 = vxor.u32 %v5192, 2147483648
      %v5622 = vxor.u32 %v5548, 2147483648
      %v5623 = vxor.u32 %v5195, 2147483648
      %v5624 = vxor.u32 %v5551, 2147483648
      %v5625 = vxor.u32 %v5197, 2147483648
      %v5626 = vxor.u32 %v5553, 2147483648
      %v5627 = vxor.u32 %v5200, 2147483648
      %v5628 = vxor.u32 %v5556, 2147483648
      %v5629 = vxor.u32 %v5202, 2147483648
      %v5630 = vxor.u32 %v5558, 2147483648
      %v5631 = vxor.u32 %v5205, 2147483648
      %v5632 = vxor.u32 %v5561, 2147483648
      %v5633 = vxor.u32 %v5207, 2147483648
      %v5634 = vxor.u32 %v5563, 2147483648
      %v5635 = vxor.u32 %v5210, 2147483648
      %v5636 = vxor.u32 %v5566, 2147483648
      %v5637 = vxor.u32 %v5212, 2147483648
      %v5638 = vxor.u32 %v5568, 2147483648
      %v5639 = vxor.u32 %v5215, 2147483648
      %v5640 = vxor.u32 %v5571, 2147483648
      %v5641 = vxor.u32 %v5217, 2147483648
      %v5642 = vxor.u32 %v5573, 2147483648
      %v5643 = vxor.u32 %v5220, 2147483648
      %v5644 = vxor.u32 %v5576, 2147483648
      %v5645 = vxor.u32 %v5222, 2147483648
      %v5646 = vxor.u32 %v5578, 2147483648
      %v5647 = vxor.u32 %v5225, 2147483648
      %v5648 = vxor.u32 %v5581, 2147483648
      %v5649 = vxor.u32 %v5227, 2147483648
      %v5650 = vxor.u32 %v5583, 2147483648
      %v5651 = vxor.u32 %v5230, 2147483648
      %v5652 = vxor.u32 %v5586, 2147483648
      %v5653 = vxor.u32 %v5232, 2147483648
      %v5654 = vxor.u32 %v5588, 2147483648
      %v5655 = vxor.u32 %v5235, 2147483648
      %v5656 = vxor.u32 %v5591, 2147483648
      %v5657 = vxor.u32 %v5237, 2147483648
      %v5658 = vxor.u32 %v5593, 2147483648
      %v5659 = vmul.f32 %v5595, 1.442695
      %v5660 = vpow.pop %v5659
      %v5661 = vmul.f32 %v5596, 1.442695
      %v5662 = vpow.pop %v5661
      %v5663 = vmul.f32 %v5597, 1.442695
      %v5664 = vpow.pop %v5663
      %v5665 = vmul.f32 %v5598, 1.442695
      %v5666 = vpow.pop %v5665
      %v5667 = vmul.f32 %v5599, 1.442695
      %v5668 = vpow.pop %v5667
      %v5669 = vmul.f32 %v5600, 1.442695
      %v5670 = vpow.pop %v5669
      %v5671 = vmul.f32 %v5601, 1.442695
      %v5672 = vpow.pop %v5671
      %v5673 = vmul.f32 %v5602, 1.442695
      %v5674 = vpow.pop %v5673
      %v5675 = vmul.f32 %v5603, 1.442695
      %v5676 = vpow.pop %v5675
      %v5677 = vmul.f32 %v5604, 1.442695
      %v5678 = vpow.pop %v5677
      %v5679 = vmul.f32 %v5605, 1.442695
      %v5680 = vpow.pop %v5679
      %v5681 = vmul.f32 %v5606, 1.442695
      %v5682 = vpow.pop %v5681
      %v5683 = vmul.f32 %v5607, 1.442695
      %v5684 = vpow.pop %v5683
      %v5685 = vmul.f32 %v5608, 1.442695
      %v5686 = vpow.pop %v5685
      %v5687 = vmul.f32 %v5609, 1.442695
      %v5688 = vpow.pop %v5687
      %v5689 = vmul.f32 %v5610, 1.442695
      %v5690 = vpow.pop %v5689
      %v5691 = vmul.f32 %v5611, 1.442695
      %v5692 = vpow.pop %v5691
      %v5693 = vmul.f32 %v5612, 1.442695
      %v5694 = vpow.pop %v5693
      %v5695 = vmul.f32 %v5613, 1.442695
      %v5696 = vpow.pop %v5695
      %v5697 = vmul.f32 %v5614, 1.442695
      %v5698 = vpow.pop %v5697
      %v5699 = vmul.f32 %v5615, 1.442695
      %v5700 = vpow.pop %v5699
      %v5701 = vmul.f32 %v5616, 1.442695
      %v5702 = vpow.pop %v5701
      %v5703 = vmul.f32 %v5617, 1.442695
      %v5704 = vpow.pop %v5703
      %v5705 = vmul.f32 %v5618, 1.442695
      %v5706 = vpow.pop %v5705
      %v5707 = vmul.f32 %v5619, 1.442695
      %v5708 = vpow.pop %v5707
      %v5709 = vmul.f32 %v5620, 1.442695
      %v5710 = vpow.pop %v5709
      %v5711 = vmul.f32 %v5621, 1.442695
      %v5712 = vpow.pop %v5711
      %v5713 = vmul.f32 %v5622, 1.442695
      %v5714 = vpow.pop %v5713
      %v5715 = vmul.f32 %v5623, 1.442695
      %v5716 = vpow.pop %v5715
      %v5717 = vmul.f32 %v5624, 1.442695
      %v5718 = vpow.pop %v5717
      %v5719 = vmul.f32 %v5625, 1.442695
      %v5720 = vpow.pop %v5719
      %v5721 = vmul.f32 %v5626, 1.442695
      %v5722 = vpow.pop %v5721
      %v5723 = vmul.f32 %v5627, 1.442695
      %v5724 = vpow.pop %v5723
      %v5725 = vmul.f32 %v5628, 1.442695
      %v5726 = vpow.pop %v5725
      %v5727 = vmul.f32 %v5629, 1.442695
      %v5728 = vpow.pop %v5727
      %v5729 = vmul.f32 %v5630, 1.442695
      %v5730 = vpow.pop %v5729
      %v5731 = vmul.f32 %v5631, 1.442695
      %v5732 = vpow.pop %v5731
      %v5733 = vmul.f32 %v5632, 1.442695
      %v5734 = vpow.pop %v5733
      %v5735 = vmul.f32 %v5633, 1.442695
      %v5736 = vpow.pop %v5735
      %v5737 = vmul.f32 %v5634, 1.442695
      %v5738 = vpow.pop %v5737
      %v5739 = vmul.f32 %v5635, 1.442695
      %v5740 = vpow.pop %v5739
      %v5741 = vmul.f32 %v5636, 1.442695
      %v5742 = vpow.pop %v5741
      %v5743 = vmul.f32 %v5637, 1.442695
      %v5744 = vpow.pop %v5743
      %v5745 = vmul.f32 %v5638, 1.442695
      %v5746 = vpow.pop %v5745
      %v5747 = vmul.f32 %v5639, 1.442695
      %v5748 = vpow.pop %v5747
      %v5749 = vmul.f32 %v5640, 1.442695
      %v5750 = vpow.pop %v5749
      %v5751 = vmul.f32 %v5641, 1.442695
      %v5752 = vpow.pop %v5751
      %v5753 = vmul.f32 %v5642, 1.442695
      %v5754 = vpow.pop %v5753
      %v5755 = vmul.f32 %v5643, 1.442695
      %v5756 = vpow.pop %v5755
      %v5757 = vmul.f32 %v5644, 1.442695
      %v5758 = vpow.pop %v5757
      %v5759 = vmul.f32 %v5645, 1.442695
      %v5760 = vpow.pop %v5759
      %v5761 = vmul.f32 %v5646, 1.442695
      %v5762 = vpow.pop %v5761
      %v5763 = vmul.f32 %v5647, 1.442695
      %v5764 = vpow.pop %v5763
      %v5765 = vmul.f32 %v5648, 1.442695
      %v5766 = vpow.pop %v5765
      %v5767 = vmul.f32 %v5649, 1.442695
      %v5768 = vpow.pop %v5767
      %v5769 = vmul.f32 %v5650, 1.442695
      %v5770 = vpow.pop %v5769
      %v5771 = vmul.f32 %v5651, 1.442695
      %v5772 = vpow.pop %v5771
      %v5773 = vmul.f32 %v5652, 1.442695
      %v5774 = vpow.pop %v5773
      %v5775 = vmul.f32 %v5653, 1.442695
      %v5776 = vpow.pop %v5775
      %v5777 = vmul.f32 %v5654, 1.442695
      %v5778 = vpow.pop %v5777
      %v5779 = vmul.f32 %v5655, 1.442695
      %v5780 = vpow.pop %v5779
      %v5781 = vmul.f32 %v5656, 1.442695
      %v5782 = vpow.pop %v5781
      %v5783 = vmul.f32 %v5657, 1.442695
      %v5784 = vpow.pop %v5783
      %v5785 = vmul.f32 %v5658, 1.442695
      %v5786 = vpow.pop %v5785
      %v5787 = vadd.f32 %v5660, 1.0
      %v5788 = vadd.f32 %v5662, 1.0
      %v5789 = vadd.f32 %v5664, 1.0
      %v5790 = vadd.f32 %v5666, 1.0
      %v5791 = vadd.f32 %v5668, 1.0
      %v5792 = vadd.f32 %v5670, 1.0
      %v5793 = vadd.f32 %v5672, 1.0
      %v5794 = vadd.f32 %v5674, 1.0
      %v5795 = vadd.f32 %v5676, 1.0
      %v5796 = vadd.f32 %v5678, 1.0
      %v5797 = vadd.f32 %v5680, 1.0
      %v5798 = vadd.f32 %v5682, 1.0
      %v5799 = vadd.f32 %v5684, 1.0
      %v5800 = vadd.f32 %v5686, 1.0
      %v5801 = vadd.f32 %v5688, 1.0
      %v5802 = vadd.f32 %v5690, 1.0
      %v5803 = vadd.f32 %v5692, 1.0
      %v5804 = vadd.f32 %v5694, 1.0
      %v5805 = vadd.f32 %v5696, 1.0
      %v5806 = vadd.f32 %v5698, 1.0
      %v5807 = vadd.f32 %v5700, 1.0
      %v5808 = vadd.f32 %v5702, 1.0
      %v5809 = vadd.f32 %v5704, 1.0
      %v5810 = vadd.f32 %v5706, 1.0
      %v5811 = vadd.f32 %v5708, 1.0
      %v5812 = vadd.f32 %v5710, 1.0
      %v5813 = vadd.f32 %v5712, 1.0
      %v5814 = vadd.f32 %v5714, 1.0
      %v5815 = vadd.f32 %v5716, 1.0
      %v5816 = vadd.f32 %v5718, 1.0
      %v5817 = vadd.f32 %v5720, 1.0
      %v5818 = vadd.f32 %v5722, 1.0
      %v5819 = vadd.f32 %v5724, 1.0
      %v5820 = vadd.f32 %v5726, 1.0
      %v5821 = vadd.f32 %v5728, 1.0
      %v5822 = vadd.f32 %v5730, 1.0
      %v5823 = vadd.f32 %v5732, 1.0
      %v5824 = vadd.f32 %v5734, 1.0
      %v5825 = vadd.f32 %v5736, 1.0
      %v5826 = vadd.f32 %v5738, 1.0
      %v5827 = vadd.f32 %v5740, 1.0
      %v5828 = vadd.f32 %v5742, 1.0
      %v5829 = vadd.f32 %v5744, 1.0
      %v5830 = vadd.f32 %v5746, 1.0
      %v5831 = vadd.f32 %v5748, 1.0
      %v5832 = vadd.f32 %v5750, 1.0
      %v5833 = vadd.f32 %v5752, 1.0
      %v5834 = vadd.f32 %v5754, 1.0
      %v5835 = vadd.f32 %v5756, 1.0
      %v5836 = vadd.f32 %v5758, 1.0
      %v5837 = vadd.f32 %v5760, 1.0
      %v5838 = vadd.f32 %v5762, 1.0
      %v5839 = vadd.f32 %v5764, 1.0
      %v5840 = vadd.f32 %v5766, 1.0
      %v5841 = vadd.f32 %v5768, 1.0
      %v5842 = vadd.f32 %v5770, 1.0
      %v5843 = vadd.f32 %v5772, 1.0
      %v5844 = vadd.f32 %v5774, 1.0
      %v5845 = vadd.f32 %v5776, 1.0
      %v5846 = vadd.f32 %v5778, 1.0
      %v5847 = vadd.f32 %v5780, 1.0
      %v5848 = vadd.f32 %v5782, 1.0
      %v5849 = vadd.f32 %v5784, 1.0
      %v5850 = vadd.f32 %v5786, 1.0
      %v5851 = vrcp.pop %v5787
      %v5852 = vmul.f32 %v5787, %v5851
      %v5853 = vsub.f32 1.0, %v5852
      %v5854 = vmul.f32 %v5851, %v5853
      %v5855 = vadd.f32 %v5851, %v5854
      %vm5856 = vweird.f32 %v5787
      %vm5857 = vweird.f32 %v5851
      %vm5858 = vmor %vm5856, %vm5857
      %v5859 = vsel %vm5858, %v5851, %v5855
      %v5860 = vand.u32 2147483647, %v5787
      %vm5861 = vcmp.eq.f32.partialorder %v5860, 8.507059e+37
      %v5862 = vand.u32 %v5787, 2147483648
      %v5863 = vor.u32 1.1754944e-38, %v5862
      %v5864 = vsel %vm5861, %v5863, %v5859
      %v5865 = vmul.f32 1.0, %v5864
      %v5866 = vrcp.pop %v5788
      %v5867 = vmul.f32 %v5788, %v5866
      %v5868 = vsub.f32 1.0, %v5867
      %v5869 = vmul.f32 %v5866, %v5868
      %v5870 = vadd.f32 %v5866, %v5869
      %vm5871 = vweird.f32 %v5788
      %vm5872 = vweird.f32 %v5866
      %vm5873 = vmor %vm5871, %vm5872
      %v5874 = vsel %vm5873, %v5866, %v5870
      %v5875 = vand.u32 2147483647, %v5788
      %vm5876 = vcmp.eq.f32.partialorder %v5875, 8.507059e+37
      %v5877 = vand.u32 %v5788, 2147483648
      %v5878 = vor.u32 1.1754944e-38, %v5877
      %v5879 = vsel %vm5876, %v5878, %v5874
      %v5880 = vmul.f32 1.0, %v5879
      %v5881 = vrcp.pop %v5789
      %v5882 = vmul.f32 %v5789, %v5881
      %v5883 = vsub.f32 1.0, %v5882
      %v5884 = vmul.f32 %v5881, %v5883
      %v5885 = vadd.f32 %v5881, %v5884
      %vm5886 = vweird.f32 %v5789
      %vm5887 = vweird.f32 %v5881
      %vm5888 = vmor %vm5886, %vm5887
      %v5889 = vsel %vm5888, %v5881, %v5885
      %v5890 = vand.u32 2147483647, %v5789
      %vm5891 = vcmp.eq.f32.partialorder %v5890, 8.507059e+37
      %v5892 = vand.u32 %v5789, 2147483648
      %v5893 = vor.u32 1.1754944e-38, %v5892
      %v5894 = vsel %vm5891, %v5893, %v5889
      %v5895 = vmul.f32 1.0, %v5894
      %v5896 = vrcp.pop %v5790
      %v5897 = vmul.f32 %v5790, %v5896
      %v5898 = vsub.f32 1.0, %v5897
      %v5899 = vmul.f32 %v5896, %v5898
      %v5900 = vadd.f32 %v5896, %v5899
      %vm5901 = vweird.f32 %v5790
      %vm5902 = vweird.f32 %v5896
      %vm5903 = vmor %vm5901, %vm5902
      %v5904 = vsel %vm5903, %v5896, %v5900
      %v5905 = vand.u32 2147483647, %v5790
      %vm5906 = vcmp.eq.f32.partialorder %v5905, 8.507059e+37
      %v5907 = vand.u32 %v5790, 2147483648
      %v5908 = vor.u32 1.1754944e-38, %v5907
      %v5909 = vsel %vm5906, %v5908, %v5904
      %v5910 = vmul.f32 1.0, %v5909
      %v5911 = vrcp.pop %v5791
      %v5912 = vmul.f32 %v5791, %v5911
      %v5913 = vsub.f32 1.0, %v5912
      %v5914 = vmul.f32 %v5911, %v5913
      %v5915 = vadd.f32 %v5911, %v5914
      %vm5916 = vweird.f32 %v5791
      %vm5917 = vweird.f32 %v5911
      %vm5918 = vmor %vm5916, %vm5917
      %v5919 = vsel %vm5918, %v5911, %v5915
      %v5920 = vand.u32 2147483647, %v5791
      %vm5921 = vcmp.eq.f32.partialorder %v5920, 8.507059e+37
      %v5922 = vand.u32 %v5791, 2147483648
      %v5923 = vor.u32 1.1754944e-38, %v5922
      %v5924 = vsel %vm5921, %v5923, %v5919
      %v5925 = vmul.f32 1.0, %v5924
      %v5926 = vrcp.pop %v5792
      %v5927 = vmul.f32 %v5792, %v5926
      %v5928 = vsub.f32 1.0, %v5927
      %v5929 = vmul.f32 %v5926, %v5928
      %v5930 = vadd.f32 %v5926, %v5929
      %vm5931 = vweird.f32 %v5792
      %vm5932 = vweird.f32 %v5926
      %vm5933 = vmor %vm5931, %vm5932
      %v5934 = vsel %vm5933, %v5926, %v5930
      %v5935 = vand.u32 2147483647, %v5792
      %vm5936 = vcmp.eq.f32.partialorder %v5935, 8.507059e+37
      %v5937 = vand.u32 %v5792, 2147483648
      %v5938 = vor.u32 1.1754944e-38, %v5937
      %v5939 = vsel %vm5936, %v5938, %v5934
      %v5940 = vmul.f32 1.0, %v5939
      %v5941 = vrcp.pop %v5793
      %v5942 = vmul.f32 %v5793, %v5941
      %v5943 = vsub.f32 1.0, %v5942
      %v5944 = vmul.f32 %v5941, %v5943
      %v5945 = vadd.f32 %v5941, %v5944
      %vm5946 = vweird.f32 %v5793
      %vm5947 = vweird.f32 %v5941
      %vm5948 = vmor %vm5946, %vm5947
      %v5949 = vsel %vm5948, %v5941, %v5945
      %v5950 = vand.u32 2147483647, %v5793
      %vm5951 = vcmp.eq.f32.partialorder %v5950, 8.507059e+37
      %v5952 = vand.u32 %v5793, 2147483648
      %v5953 = vor.u32 1.1754944e-38, %v5952
      %v5954 = vsel %vm5951, %v5953, %v5949
      %v5955 = vmul.f32 1.0, %v5954
      %v5956 = vrcp.pop %v5794
      %v5957 = vmul.f32 %v5794, %v5956
      %v5958 = vsub.f32 1.0, %v5957
      %v5959 = vmul.f32 %v5956, %v5958
      %v5960 = vadd.f32 %v5956, %v5959
      %vm5961 = vweird.f32 %v5794
      %vm5962 = vweird.f32 %v5956
      %vm5963 = vmor %vm5961, %vm5962
      %v5964 = vsel %vm5963, %v5956, %v5960
      %v5965 = vand.u32 2147483647, %v5794
      %vm5966 = vcmp.eq.f32.partialorder %v5965, 8.507059e+37
      %v5967 = vand.u32 %v5794, 2147483648
      %v5968 = vor.u32 1.1754944e-38, %v5967
      %v5969 = vsel %vm5966, %v5968, %v5964
      %v5970 = vmul.f32 1.0, %v5969
      %v5971 = vrcp.pop %v5795
      %v5972 = vmul.f32 %v5795, %v5971
      %v5973 = vsub.f32 1.0, %v5972
      %v5974 = vmul.f32 %v5971, %v5973
      %v5975 = vadd.f32 %v5971, %v5974
      %vm5976 = vweird.f32 %v5795
      %vm5977 = vweird.f32 %v5971
      %vm5978 = vmor %vm5976, %vm5977
      %v5979 = vsel %vm5978, %v5971, %v5975
      %v5980 = vand.u32 2147483647, %v5795
      %vm5981 = vcmp.eq.f32.partialorder %v5980, 8.507059e+37
      %v5982 = vand.u32 %v5795, 2147483648
      %v5983 = vor.u32 1.1754944e-38, %v5982
      %v5984 = vsel %vm5981, %v5983, %v5979
      %v5985 = vmul.f32 1.0, %v5984
      %v5986 = vrcp.pop %v5796
      %v5987 = vmul.f32 %v5796, %v5986
      %v5988 = vsub.f32 1.0, %v5987
      %v5989 = vmul.f32 %v5986, %v5988
      %v5990 = vadd.f32 %v5986, %v5989
      %vm5991 = vweird.f32 %v5796
      %vm5992 = vweird.f32 %v5986
      %vm5993 = vmor %vm5991, %vm5992
      %v5994 = vsel %vm5993, %v5986, %v5990
      %v5995 = vand.u32 2147483647, %v5796
      %vm5996 = vcmp.eq.f32.partialorder %v5995, 8.507059e+37
      %v5997 = vand.u32 %v5796, 2147483648
      %v5998 = vor.u32 1.1754944e-38, %v5997
      %v5999 = vsel %vm5996, %v5998, %v5994
      %v6000 = vmul.f32 1.0, %v5999
      %v6001 = vrcp.pop %v5797
      %v6002 = vmul.f32 %v5797, %v6001
      %v6003 = vsub.f32 1.0, %v6002
      %v6004 = vmul.f32 %v6001, %v6003
      %v6005 = vadd.f32 %v6001, %v6004
      %vm6006 = vweird.f32 %v5797
      %vm6007 = vweird.f32 %v6001
      %vm6008 = vmor %vm6006, %vm6007
      %v6009 = vsel %vm6008, %v6001, %v6005
      %v6010 = vand.u32 2147483647, %v5797
      %vm6011 = vcmp.eq.f32.partialorder %v6010, 8.507059e+37
      %v6012 = vand.u32 %v5797, 2147483648
      %v6013 = vor.u32 1.1754944e-38, %v6012
      %v6014 = vsel %vm6011, %v6013, %v6009
      %v6015 = vmul.f32 1.0, %v6014
      %v6016 = vrcp.pop %v5798
      %v6017 = vmul.f32 %v5798, %v6016
      %v6018 = vsub.f32 1.0, %v6017
      %v6019 = vmul.f32 %v6016, %v6018
      %v6020 = vadd.f32 %v6016, %v6019
      %vm6021 = vweird.f32 %v5798
      %vm6022 = vweird.f32 %v6016
      %vm6023 = vmor %vm6021, %vm6022
      %v6024 = vsel %vm6023, %v6016, %v6020
      %v6025 = vand.u32 2147483647, %v5798
      %vm6026 = vcmp.eq.f32.partialorder %v6025, 8.507059e+37
      %v6027 = vand.u32 %v5798, 2147483648
      %v6028 = vor.u32 1.1754944e-38, %v6027
      %v6029 = vsel %vm6026, %v6028, %v6024
      %v6030 = vmul.f32 1.0, %v6029
      %v6031 = vrcp.pop %v5799
      %v6032 = vmul.f32 %v5799, %v6031
      %v6033 = vsub.f32 1.0, %v6032
      %v6034 = vmul.f32 %v6031, %v6033
      %v6035 = vadd.f32 %v6031, %v6034
      %vm6036 = vweird.f32 %v5799
      %vm6037 = vweird.f32 %v6031
      %vm6038 = vmor %vm6036, %vm6037
      %v6039 = vsel %vm6038, %v6031, %v6035
      %v6040 = vand.u32 2147483647, %v5799
      %vm6041 = vcmp.eq.f32.partialorder %v6040, 8.507059e+37
      %v6042 = vand.u32 %v5799, 2147483648
      %v6043 = vor.u32 1.1754944e-38, %v6042
      %v6044 = vsel %vm6041, %v6043, %v6039
      %v6045 = vmul.f32 1.0, %v6044
      %v6046 = vrcp.pop %v5800
      %v6047 = vmul.f32 %v5800, %v6046
      %v6048 = vsub.f32 1.0, %v6047
      %v6049 = vmul.f32 %v6046, %v6048
      %v6050 = vadd.f32 %v6046, %v6049
      %vm6051 = vweird.f32 %v5800
      %vm6052 = vweird.f32 %v6046
      %vm6053 = vmor %vm6051, %vm6052
      %v6054 = vsel %vm6053, %v6046, %v6050
      %v6055 = vand.u32 2147483647, %v5800
      %vm6056 = vcmp.eq.f32.partialorder %v6055, 8.507059e+37
      %v6057 = vand.u32 %v5800, 2147483648
      %v6058 = vor.u32 1.1754944e-38, %v6057
      %v6059 = vsel %vm6056, %v6058, %v6054
      %v6060 = vmul.f32 1.0, %v6059
      %v6061 = vrcp.pop %v5801
      %v6062 = vmul.f32 %v5801, %v6061
      %v6063 = vsub.f32 1.0, %v6062
      %v6064 = vmul.f32 %v6061, %v6063
      %v6065 = vadd.f32 %v6061, %v6064
      %vm6066 = vweird.f32 %v5801
      %vm6067 = vweird.f32 %v6061
      %vm6068 = vmor %vm6066, %vm6067
      %v6069 = vsel %vm6068, %v6061, %v6065
      %v6070 = vand.u32 2147483647, %v5801
      %vm6071 = vcmp.eq.f32.partialorder %v6070, 8.507059e+37
      %v6072 = vand.u32 %v5801, 2147483648
      %v6073 = vor.u32 1.1754944e-38, %v6072
      %v6074 = vsel %vm6071, %v6073, %v6069
      %v6075 = vmul.f32 1.0, %v6074
      %v6076 = vrcp.pop %v5802
      %v6077 = vmul.f32 %v5802, %v6076
      %v6078 = vsub.f32 1.0, %v6077
      %v6079 = vmul.f32 %v6076, %v6078
      %v6080 = vadd.f32 %v6076, %v6079
      %vm6081 = vweird.f32 %v5802
      %vm6082 = vweird.f32 %v6076
      %vm6083 = vmor %vm6081, %vm6082
      %v6084 = vsel %vm6083, %v6076, %v6080
      %v6085 = vand.u32 2147483647, %v5802
      %vm6086 = vcmp.eq.f32.partialorder %v6085, 8.507059e+37
      %v6087 = vand.u32 %v5802, 2147483648
      %v6088 = vor.u32 1.1754944e-38, %v6087
      %v6089 = vsel %vm6086, %v6088, %v6084
      %v6090 = vmul.f32 1.0, %v6089
      %v6091 = vrcp.pop %v5803
      %v6092 = vmul.f32 %v5803, %v6091
      %v6093 = vsub.f32 1.0, %v6092
      %v6094 = vmul.f32 %v6091, %v6093
      %v6095 = vadd.f32 %v6091, %v6094
      %vm6096 = vweird.f32 %v5803
      %vm6097 = vweird.f32 %v6091
      %vm6098 = vmor %vm6096, %vm6097
      %v6099 = vsel %vm6098, %v6091, %v6095
      %v6100 = vand.u32 2147483647, %v5803
      %vm6101 = vcmp.eq.f32.partialorder %v6100, 8.507059e+37
      %v6102 = vand.u32 %v5803, 2147483648
      %v6103 = vor.u32 1.1754944e-38, %v6102
      %v6104 = vsel %vm6101, %v6103, %v6099
      %v6105 = vmul.f32 1.0, %v6104
      %v6106 = vrcp.pop %v5804
      %v6107 = vmul.f32 %v5804, %v6106
      %v6108 = vsub.f32 1.0, %v6107
      %v6109 = vmul.f32 %v6106, %v6108
      %v6110 = vadd.f32 %v6106, %v6109
      %vm6111 = vweird.f32 %v5804
      %vm6112 = vweird.f32 %v6106
      %vm6113 = vmor %vm6111, %vm6112
      %v6114 = vsel %vm6113, %v6106, %v6110
      %v6115 = vand.u32 2147483647, %v5804
      %vm6116 = vcmp.eq.f32.partialorder %v6115, 8.507059e+37
      %v6117 = vand.u32 %v5804, 2147483648
      %v6118 = vor.u32 1.1754944e-38, %v6117
      %v6119 = vsel %vm6116, %v6118, %v6114
      %v6120 = vmul.f32 1.0, %v6119
      %v6121 = vrcp.pop %v5805
      %v6122 = vmul.f32 %v5805, %v6121
      %v6123 = vsub.f32 1.0, %v6122
      %v6124 = vmul.f32 %v6121, %v6123
      %v6125 = vadd.f32 %v6121, %v6124
      %vm6126 = vweird.f32 %v5805
      %vm6127 = vweird.f32 %v6121
      %vm6128 = vmor %vm6126, %vm6127
      %v6129 = vsel %vm6128, %v6121, %v6125
      %v6130 = vand.u32 2147483647, %v5805
      %vm6131 = vcmp.eq.f32.partialorder %v6130, 8.507059e+37
      %v6132 = vand.u32 %v5805, 2147483648
      %v6133 = vor.u32 1.1754944e-38, %v6132
      %v6134 = vsel %vm6131, %v6133, %v6129
      %v6135 = vmul.f32 1.0, %v6134
      %v6136 = vrcp.pop %v5806
      %v6137 = vmul.f32 %v5806, %v6136
      %v6138 = vsub.f32 1.0, %v6137
      %v6139 = vmul.f32 %v6136, %v6138
      %v6140 = vadd.f32 %v6136, %v6139
      %vm6141 = vweird.f32 %v5806
      %vm6142 = vweird.f32 %v6136
      %vm6143 = vmor %vm6141, %vm6142
      %v6144 = vsel %vm6143, %v6136, %v6140
      %v6145 = vand.u32 2147483647, %v5806
      %vm6146 = vcmp.eq.f32.partialorder %v6145, 8.507059e+37
      %v6147 = vand.u32 %v5806, 2147483648
      %v6148 = vor.u32 1.1754944e-38, %v6147
      %v6149 = vsel %vm6146, %v6148, %v6144
      %v6150 = vmul.f32 1.0, %v6149
      %v6151 = vrcp.pop %v5807
      %v6152 = vmul.f32 %v5807, %v6151
      %v6153 = vsub.f32 1.0, %v6152
      %v6154 = vmul.f32 %v6151, %v6153
      %v6155 = vadd.f32 %v6151, %v6154
      %vm6156 = vweird.f32 %v5807
      %vm6157 = vweird.f32 %v6151
      %vm6158 = vmor %vm6156, %vm6157
      %v6159 = vsel %vm6158, %v6151, %v6155
      %v6160 = vand.u32 2147483647, %v5807
      %vm6161 = vcmp.eq.f32.partialorder %v6160, 8.507059e+37
      %v6162 = vand.u32 %v5807, 2147483648
      %v6163 = vor.u32 1.1754944e-38, %v6162
      %v6164 = vsel %vm6161, %v6163, %v6159
      %v6165 = vmul.f32 1.0, %v6164
      %v6166 = vrcp.pop %v5808
      %v6167 = vmul.f32 %v5808, %v6166
      %v6168 = vsub.f32 1.0, %v6167
      %v6169 = vmul.f32 %v6166, %v6168
      %v6170 = vadd.f32 %v6166, %v6169
      %vm6171 = vweird.f32 %v5808
      %vm6172 = vweird.f32 %v6166
      %vm6173 = vmor %vm6171, %vm6172
      %v6174 = vsel %vm6173, %v6166, %v6170
      %v6175 = vand.u32 2147483647, %v5808
      %vm6176 = vcmp.eq.f32.partialorder %v6175, 8.507059e+37
      %v6177 = vand.u32 %v5808, 2147483648
      %v6178 = vor.u32 1.1754944e-38, %v6177
      %v6179 = vsel %vm6176, %v6178, %v6174
      %v6180 = vmul.f32 1.0, %v6179
      %v6181 = vrcp.pop %v5809
      %v6182 = vmul.f32 %v5809, %v6181
      %v6183 = vsub.f32 1.0, %v6182
      %v6184 = vmul.f32 %v6181, %v6183
      %v6185 = vadd.f32 %v6181, %v6184
      %vm6186 = vweird.f32 %v5809
      %vm6187 = vweird.f32 %v6181
      %vm6188 = vmor %vm6186, %vm6187
      %v6189 = vsel %vm6188, %v6181, %v6185
      %v6190 = vand.u32 2147483647, %v5809
      %vm6191 = vcmp.eq.f32.partialorder %v6190, 8.507059e+37
      %v6192 = vand.u32 %v5809, 2147483648
      %v6193 = vor.u32 1.1754944e-38, %v6192
      %v6194 = vsel %vm6191, %v6193, %v6189
      %v6195 = vmul.f32 1.0, %v6194
      %v6196 = vrcp.pop %v5810
      %v6197 = vmul.f32 %v5810, %v6196
      %v6198 = vsub.f32 1.0, %v6197
      %v6199 = vmul.f32 %v6196, %v6198
      %v6200 = vadd.f32 %v6196, %v6199
      %vm6201 = vweird.f32 %v5810
      %vm6202 = vweird.f32 %v6196
      %vm6203 = vmor %vm6201, %vm6202
      %v6204 = vsel %vm6203, %v6196, %v6200
      %v6205 = vand.u32 2147483647, %v5810
      %vm6206 = vcmp.eq.f32.partialorder %v6205, 8.507059e+37
      %v6207 = vand.u32 %v5810, 2147483648
      %v6208 = vor.u32 1.1754944e-38, %v6207
      %v6209 = vsel %vm6206, %v6208, %v6204
      %v6210 = vmul.f32 1.0, %v6209
      %v6211 = vrcp.pop %v5811
      %v6212 = vmul.f32 %v5811, %v6211
      %v6213 = vsub.f32 1.0, %v6212
      %v6214 = vmul.f32 %v6211, %v6213
      %v6215 = vadd.f32 %v6211, %v6214
      %vm6216 = vweird.f32 %v5811
      %vm6217 = vweird.f32 %v6211
      %vm6218 = vmor %vm6216, %vm6217
      %v6219 = vsel %vm6218, %v6211, %v6215
      %v6220 = vand.u32 2147483647, %v5811
      %vm6221 = vcmp.eq.f32.partialorder %v6220, 8.507059e+37
      %v6222 = vand.u32 %v5811, 2147483648
      %v6223 = vor.u32 1.1754944e-38, %v6222
      %v6224 = vsel %vm6221, %v6223, %v6219
      %v6225 = vmul.f32 1.0, %v6224
      %v6226 = vrcp.pop %v5812
      %v6227 = vmul.f32 %v5812, %v6226
      %v6228 = vsub.f32 1.0, %v6227
      %v6229 = vmul.f32 %v6226, %v6228
      %v6230 = vadd.f32 %v6226, %v6229
      %vm6231 = vweird.f32 %v5812
      %vm6232 = vweird.f32 %v6226
      %vm6233 = vmor %vm6231, %vm6232
      %v6234 = vsel %vm6233, %v6226, %v6230
      %v6235 = vand.u32 2147483647, %v5812
      %vm6236 = vcmp.eq.f32.partialorder %v6235, 8.507059e+37
      %v6237 = vand.u32 %v5812, 2147483648
      %v6238 = vor.u32 1.1754944e-38, %v6237
      %v6239 = vsel %vm6236, %v6238, %v6234
      %v6240 = vmul.f32 1.0, %v6239
      %v6241 = vrcp.pop %v5813
      %v6242 = vmul.f32 %v5813, %v6241
      %v6243 = vsub.f32 1.0, %v6242
      %v6244 = vmul.f32 %v6241, %v6243
      %v6245 = vadd.f32 %v6241, %v6244
      %vm6246 = vweird.f32 %v5813
      %vm6247 = vweird.f32 %v6241
      %vm6248 = vmor %vm6246, %vm6247
      %v6249 = vsel %vm6248, %v6241, %v6245
      %v6250 = vand.u32 2147483647, %v5813
      %vm6251 = vcmp.eq.f32.partialorder %v6250, 8.507059e+37
      %v6252 = vand.u32 %v5813, 2147483648
      %v6253 = vor.u32 1.1754944e-38, %v6252
      %v6254 = vsel %vm6251, %v6253, %v6249
      %v6255 = vmul.f32 1.0, %v6254
      %v6256 = vrcp.pop %v5814
      %v6257 = vmul.f32 %v5814, %v6256
      %v6258 = vsub.f32 1.0, %v6257
      %v6259 = vmul.f32 %v6256, %v6258
      %v6260 = vadd.f32 %v6256, %v6259
      %vm6261 = vweird.f32 %v5814
      %vm6262 = vweird.f32 %v6256
      %vm6263 = vmor %vm6261, %vm6262
      %v6264 = vsel %vm6263, %v6256, %v6260
      %v6265 = vand.u32 2147483647, %v5814
      %vm6266 = vcmp.eq.f32.partialorder %v6265, 8.507059e+37
      %v6267 = vand.u32 %v5814, 2147483648
      %v6268 = vor.u32 1.1754944e-38, %v6267
      %v6269 = vsel %vm6266, %v6268, %v6264
      %v6270 = vmul.f32 1.0, %v6269
      %v6271 = vrcp.pop %v5815
      %v6272 = vmul.f32 %v5815, %v6271
      %v6273 = vsub.f32 1.0, %v6272
      %v6274 = vmul.f32 %v6271, %v6273
      %v6275 = vadd.f32 %v6271, %v6274
      %vm6276 = vweird.f32 %v5815
      %vm6277 = vweird.f32 %v6271
      %vm6278 = vmor %vm6276, %vm6277
      %v6279 = vsel %vm6278, %v6271, %v6275
      %v6280 = vand.u32 2147483647, %v5815
      %vm6281 = vcmp.eq.f32.partialorder %v6280, 8.507059e+37
      %v6282 = vand.u32 %v5815, 2147483648
      %v6283 = vor.u32 1.1754944e-38, %v6282
      %v6284 = vsel %vm6281, %v6283, %v6279
      %v6285 = vmul.f32 1.0, %v6284
      %v6286 = vrcp.pop %v5816
      %v6287 = vmul.f32 %v5816, %v6286
      %v6288 = vsub.f32 1.0, %v6287
      %v6289 = vmul.f32 %v6286, %v6288
      %v6290 = vadd.f32 %v6286, %v6289
      %vm6291 = vweird.f32 %v5816
      %vm6292 = vweird.f32 %v6286
      %vm6293 = vmor %vm6291, %vm6292
      %v6294 = vsel %vm6293, %v6286, %v6290
      %v6295 = vand.u32 2147483647, %v5816
      %vm6296 = vcmp.eq.f32.partialorder %v6295, 8.507059e+37
      %v6297 = vand.u32 %v5816, 2147483648
      %v6298 = vor.u32 1.1754944e-38, %v6297
      %v6299 = vsel %vm6296, %v6298, %v6294
      %v6300 = vmul.f32 1.0, %v6299
      %v6301 = vrcp.pop %v5817
      %v6302 = vmul.f32 %v5817, %v6301
      %v6303 = vsub.f32 1.0, %v6302
      %v6304 = vmul.f32 %v6301, %v6303
      %v6305 = vadd.f32 %v6301, %v6304
      %vm6306 = vweird.f32 %v5817
      %vm6307 = vweird.f32 %v6301
      %vm6308 = vmor %vm6306, %vm6307
      %v6309 = vsel %vm6308, %v6301, %v6305
      %v6310 = vand.u32 2147483647, %v5817
      %vm6311 = vcmp.eq.f32.partialorder %v6310, 8.507059e+37
      %v6312 = vand.u32 %v5817, 2147483648
      %v6313 = vor.u32 1.1754944e-38, %v6312
      %v6314 = vsel %vm6311, %v6313, %v6309
      %v6315 = vmul.f32 1.0, %v6314
      %v6316 = vrcp.pop %v5818
      %v6317 = vmul.f32 %v5818, %v6316
      %v6318 = vsub.f32 1.0, %v6317
      %v6319 = vmul.f32 %v6316, %v6318
      %v6320 = vadd.f32 %v6316, %v6319
      %vm6321 = vweird.f32 %v5818
      %vm6322 = vweird.f32 %v6316
      %vm6323 = vmor %vm6321, %vm6322
      %v6324 = vsel %vm6323, %v6316, %v6320
      %v6325 = vand.u32 2147483647, %v5818
      %vm6326 = vcmp.eq.f32.partialorder %v6325, 8.507059e+37
      %v6327 = vand.u32 %v5818, 2147483648
      %v6328 = vor.u32 1.1754944e-38, %v6327
      %v6329 = vsel %vm6326, %v6328, %v6324
      %v6330 = vmul.f32 1.0, %v6329
      %v6331 = vrcp.pop %v5819
      %v6332 = vmul.f32 %v5819, %v6331
      %v6333 = vsub.f32 1.0, %v6332
      %v6334 = vmul.f32 %v6331, %v6333
      %v6335 = vadd.f32 %v6331, %v6334
      %vm6336 = vweird.f32 %v5819
      %vm6337 = vweird.f32 %v6331
      %vm6338 = vmor %vm6336, %vm6337
      %v6339 = vsel %vm6338, %v6331, %v6335
      %v6340 = vand.u32 2147483647, %v5819
      %vm6341 = vcmp.eq.f32.partialorder %v6340, 8.507059e+37
      %v6342 = vand.u32 %v5819, 2147483648
      %v6343 = vor.u32 1.1754944e-38, %v6342
      %v6344 = vsel %vm6341, %v6343, %v6339
      %v6345 = vmul.f32 1.0, %v6344
      %v6346 = vrcp.pop %v5820
      %v6347 = vmul.f32 %v5820, %v6346
      %v6348 = vsub.f32 1.0, %v6347
      %v6349 = vmul.f32 %v6346, %v6348
      %v6350 = vadd.f32 %v6346, %v6349
      %vm6351 = vweird.f32 %v5820
      %vm6352 = vweird.f32 %v6346
      %vm6353 = vmor %vm6351, %vm6352
      %v6354 = vsel %vm6353, %v6346, %v6350
      %v6355 = vand.u32 2147483647, %v5820
      %vm6356 = vcmp.eq.f32.partialorder %v6355, 8.507059e+37
      %v6357 = vand.u32 %v5820, 2147483648
      %v6358 = vor.u32 1.1754944e-38, %v6357
      %v6359 = vsel %vm6356, %v6358, %v6354
      %v6360 = vmul.f32 1.0, %v6359
      %v6361 = vrcp.pop %v5821
      %v6362 = vmul.f32 %v5821, %v6361
      %v6363 = vsub.f32 1.0, %v6362
      %v6364 = vmul.f32 %v6361, %v6363
      %v6365 = vadd.f32 %v6361, %v6364
      %vm6366 = vweird.f32 %v5821
      %vm6367 = vweird.f32 %v6361
      %vm6368 = vmor %vm6366, %vm6367
      %v6369 = vsel %vm6368, %v6361, %v6365
      %v6370 = vand.u32 2147483647, %v5821
      %vm6371 = vcmp.eq.f32.partialorder %v6370, 8.507059e+37
      %v6372 = vand.u32 %v5821, 2147483648
      %v6373 = vor.u32 1.1754944e-38, %v6372
      %v6374 = vsel %vm6371, %v6373, %v6369
      %v6375 = vmul.f32 1.0, %v6374
      %v6376 = vrcp.pop %v5822
      %v6377 = vmul.f32 %v5822, %v6376
      %v6378 = vsub.f32 1.0, %v6377
      %v6379 = vmul.f32 %v6376, %v6378
      %v6380 = vadd.f32 %v6376, %v6379
      %vm6381 = vweird.f32 %v5822
      %vm6382 = vweird.f32 %v6376
      %vm6383 = vmor %vm6381, %vm6382
      %v6384 = vsel %vm6383, %v6376, %v6380
      %v6385 = vand.u32 2147483647, %v5822
      %vm6386 = vcmp.eq.f32.partialorder %v6385, 8.507059e+37
      %v6387 = vand.u32 %v5822, 2147483648
      %v6388 = vor.u32 1.1754944e-38, %v6387
      %v6389 = vsel %vm6386, %v6388, %v6384
      %v6390 = vmul.f32 1.0, %v6389
      %v6391 = vrcp.pop %v5823
      %v6392 = vmul.f32 %v5823, %v6391
      %v6393 = vsub.f32 1.0, %v6392
      %v6394 = vmul.f32 %v6391, %v6393
      %v6395 = vadd.f32 %v6391, %v6394
      %vm6396 = vweird.f32 %v5823
      %vm6397 = vweird.f32 %v6391
      %vm6398 = vmor %vm6396, %vm6397
      %v6399 = vsel %vm6398, %v6391, %v6395
      %v6400 = vand.u32 2147483647, %v5823
      %vm6401 = vcmp.eq.f32.partialorder %v6400, 8.507059e+37
      %v6402 = vand.u32 %v5823, 2147483648
      %v6403 = vor.u32 1.1754944e-38, %v6402
      %v6404 = vsel %vm6401, %v6403, %v6399
      %v6405 = vmul.f32 1.0, %v6404
      %v6406 = vrcp.pop %v5824
      %v6407 = vmul.f32 %v5824, %v6406
      %v6408 = vsub.f32 1.0, %v6407
      %v6409 = vmul.f32 %v6406, %v6408
      %v6410 = vadd.f32 %v6406, %v6409
      %vm6411 = vweird.f32 %v5824
      %vm6412 = vweird.f32 %v6406
      %vm6413 = vmor %vm6411, %vm6412
      %v6414 = vsel %vm6413, %v6406, %v6410
      %v6415 = vand.u32 2147483647, %v5824
      %vm6416 = vcmp.eq.f32.partialorder %v6415, 8.507059e+37
      %v6417 = vand.u32 %v5824, 2147483648
      %v6418 = vor.u32 1.1754944e-38, %v6417
      %v6419 = vsel %vm6416, %v6418, %v6414
      %v6420 = vmul.f32 1.0, %v6419
      %v6421 = vrcp.pop %v5825
      %v6422 = vmul.f32 %v5825, %v6421
      %v6423 = vsub.f32 1.0, %v6422
      %v6424 = vmul.f32 %v6421, %v6423
      %v6425 = vadd.f32 %v6421, %v6424
      %vm6426 = vweird.f32 %v5825
      %vm6427 = vweird.f32 %v6421
      %vm6428 = vmor %vm6426, %vm6427
      %v6429 = vsel %vm6428, %v6421, %v6425
      %v6430 = vand.u32 2147483647, %v5825
      %vm6431 = vcmp.eq.f32.partialorder %v6430, 8.507059e+37
      %v6432 = vand.u32 %v5825, 2147483648
      %v6433 = vor.u32 1.1754944e-38, %v6432
      %v6434 = vsel %vm6431, %v6433, %v6429
      %v6435 = vmul.f32 1.0, %v6434
      %v6436 = vrcp.pop %v5826
      %v6437 = vmul.f32 %v5826, %v6436
      %v6438 = vsub.f32 1.0, %v6437
      %v6439 = vmul.f32 %v6436, %v6438
      %v6440 = vadd.f32 %v6436, %v6439
      %vm6441 = vweird.f32 %v5826
      %vm6442 = vweird.f32 %v6436
      %vm6443 = vmor %vm6441, %vm6442
      %v6444 = vsel %vm6443, %v6436, %v6440
      %v6445 = vand.u32 2147483647, %v5826
      %vm6446 = vcmp.eq.f32.partialorder %v6445, 8.507059e+37
      %v6447 = vand.u32 %v5826, 2147483648
      %v6448 = vor.u32 1.1754944e-38, %v6447
      %v6449 = vsel %vm6446, %v6448, %v6444
      %v6450 = vmul.f32 1.0, %v6449
      %v6451 = vrcp.pop %v5827
      %v6452 = vmul.f32 %v5827, %v6451
      %v6453 = vsub.f32 1.0, %v6452
      %v6454 = vmul.f32 %v6451, %v6453
      %v6455 = vadd.f32 %v6451, %v6454
      %vm6456 = vweird.f32 %v5827
      %vm6457 = vweird.f32 %v6451
      %vm6458 = vmor %vm6456, %vm6457
      %v6459 = vsel %vm6458, %v6451, %v6455
      %v6460 = vand.u32 2147483647, %v5827
      %vm6461 = vcmp.eq.f32.partialorder %v6460, 8.507059e+37
      %v6462 = vand.u32 %v5827, 2147483648
      %v6463 = vor.u32 1.1754944e-38, %v6462
      %v6464 = vsel %vm6461, %v6463, %v6459
      %v6465 = vmul.f32 1.0, %v6464
      %v6466 = vrcp.pop %v5828
      %v6467 = vmul.f32 %v5828, %v6466
      %v6468 = vsub.f32 1.0, %v6467
      %v6469 = vmul.f32 %v6466, %v6468
      %v6470 = vadd.f32 %v6466, %v6469
      %vm6471 = vweird.f32 %v5828
      %vm6472 = vweird.f32 %v6466
      %vm6473 = vmor %vm6471, %vm6472
      %v6474 = vsel %vm6473, %v6466, %v6470
      %v6475 = vand.u32 2147483647, %v5828
      %vm6476 = vcmp.eq.f32.partialorder %v6475, 8.507059e+37
      %v6477 = vand.u32 %v5828, 2147483648
      %v6478 = vor.u32 1.1754944e-38, %v6477
      %v6479 = vsel %vm6476, %v6478, %v6474
      %v6480 = vmul.f32 1.0, %v6479
      %v6481 = vrcp.pop %v5829
      %v6482 = vmul.f32 %v5829, %v6481
      %v6483 = vsub.f32 1.0, %v6482
      %v6484 = vmul.f32 %v6481, %v6483
      %v6485 = vadd.f32 %v6481, %v6484
      %vm6486 = vweird.f32 %v5829
      %vm6487 = vweird.f32 %v6481
      %vm6488 = vmor %vm6486, %vm6487
      %v6489 = vsel %vm6488, %v6481, %v6485
      %v6490 = vand.u32 2147483647, %v5829
      %vm6491 = vcmp.eq.f32.partialorder %v6490, 8.507059e+37
      %v6492 = vand.u32 %v5829, 2147483648
      %v6493 = vor.u32 1.1754944e-38, %v6492
      %v6494 = vsel %vm6491, %v6493, %v6489
      %v6495 = vmul.f32 1.0, %v6494
      %v6496 = vrcp.pop %v5830
      %v6497 = vmul.f32 %v5830, %v6496
      %v6498 = vsub.f32 1.0, %v6497
      %v6499 = vmul.f32 %v6496, %v6498
      %v6500 = vadd.f32 %v6496, %v6499
      %vm6501 = vweird.f32 %v5830
      %vm6502 = vweird.f32 %v6496
      %vm6503 = vmor %vm6501, %vm6502
      %v6504 = vsel %vm6503, %v6496, %v6500
      %v6505 = vand.u32 2147483647, %v5830
      %vm6506 = vcmp.eq.f32.partialorder %v6505, 8.507059e+37
      %v6507 = vand.u32 %v5830, 2147483648
      %v6508 = vor.u32 1.1754944e-38, %v6507
      %v6509 = vsel %vm6506, %v6508, %v6504
      %v6510 = vmul.f32 1.0, %v6509
      %v6511 = vrcp.pop %v5831
      %v6512 = vmul.f32 %v5831, %v6511
      %v6513 = vsub.f32 1.0, %v6512
      %v6514 = vmul.f32 %v6511, %v6513
      %v6515 = vadd.f32 %v6511, %v6514
      %vm6516 = vweird.f32 %v5831
      %vm6517 = vweird.f32 %v6511
      %vm6518 = vmor %vm6516, %vm6517
      %v6519 = vsel %vm6518, %v6511, %v6515
      %v6520 = vand.u32 2147483647, %v5831
      %vm6521 = vcmp.eq.f32.partialorder %v6520, 8.507059e+37
      %v6522 = vand.u32 %v5831, 2147483648
      %v6523 = vor.u32 1.1754944e-38, %v6522
      %v6524 = vsel %vm6521, %v6523, %v6519
      %v6525 = vmul.f32 1.0, %v6524
      %v6526 = vrcp.pop %v5832
      %v6527 = vmul.f32 %v5832, %v6526
      %v6528 = vsub.f32 1.0, %v6527
      %v6529 = vmul.f32 %v6526, %v6528
      %v6530 = vadd.f32 %v6526, %v6529
      %vm6531 = vweird.f32 %v5832
      %vm6532 = vweird.f32 %v6526
      %vm6533 = vmor %vm6531, %vm6532
      %v6534 = vsel %vm6533, %v6526, %v6530
      %v6535 = vand.u32 2147483647, %v5832
      %vm6536 = vcmp.eq.f32.partialorder %v6535, 8.507059e+37
      %v6537 = vand.u32 %v5832, 2147483648
      %v6538 = vor.u32 1.1754944e-38, %v6537
      %v6539 = vsel %vm6536, %v6538, %v6534
      %v6540 = vmul.f32 1.0, %v6539
      %v6541 = vrcp.pop %v5833
      %v6542 = vmul.f32 %v5833, %v6541
      %v6543 = vsub.f32 1.0, %v6542
      %v6544 = vmul.f32 %v6541, %v6543
      %v6545 = vadd.f32 %v6541, %v6544
      %vm6546 = vweird.f32 %v5833
      %vm6547 = vweird.f32 %v6541
      %vm6548 = vmor %vm6546, %vm6547
      %v6549 = vsel %vm6548, %v6541, %v6545
      %v6550 = vand.u32 2147483647, %v5833
      %vm6551 = vcmp.eq.f32.partialorder %v6550, 8.507059e+37
      %v6552 = vand.u32 %v5833, 2147483648
      %v6553 = vor.u32 1.1754944e-38, %v6552
      %v6554 = vsel %vm6551, %v6553, %v6549
      %v6555 = vmul.f32 1.0, %v6554
      %v6556 = vrcp.pop %v5834
      %v6557 = vmul.f32 %v5834, %v6556
      %v6558 = vsub.f32 1.0, %v6557
      %v6559 = vmul.f32 %v6556, %v6558
      %v6560 = vadd.f32 %v6556, %v6559
      %vm6561 = vweird.f32 %v5834
      %vm6562 = vweird.f32 %v6556
      %vm6563 = vmor %vm6561, %vm6562
      %v6564 = vsel %vm6563, %v6556, %v6560
      %v6565 = vand.u32 2147483647, %v5834
      %vm6566 = vcmp.eq.f32.partialorder %v6565, 8.507059e+37
      %v6567 = vand.u32 %v5834, 2147483648
      %v6568 = vor.u32 1.1754944e-38, %v6567
      %v6569 = vsel %vm6566, %v6568, %v6564
      %v6570 = vmul.f32 1.0, %v6569
      %v6571 = vrcp.pop %v5835
      %v6572 = vmul.f32 %v5835, %v6571
      %v6573 = vsub.f32 1.0, %v6572
      %v6574 = vmul.f32 %v6571, %v6573
      %v6575 = vadd.f32 %v6571, %v6574
      %vm6576 = vweird.f32 %v5835
      %vm6577 = vweird.f32 %v6571
      %vm6578 = vmor %vm6576, %vm6577
      %v6579 = vsel %vm6578, %v6571, %v6575
      %v6580 = vand.u32 2147483647, %v5835
      %vm6581 = vcmp.eq.f32.partialorder %v6580, 8.507059e+37
      %v6582 = vand.u32 %v5835, 2147483648
      %v6583 = vor.u32 1.1754944e-38, %v6582
      %v6584 = vsel %vm6581, %v6583, %v6579
      %v6585 = vmul.f32 1.0, %v6584
      %v6586 = vrcp.pop %v5836
      %v6587 = vmul.f32 %v5836, %v6586
      %v6588 = vsub.f32 1.0, %v6587
      %v6589 = vmul.f32 %v6586, %v6588
      %v6590 = vadd.f32 %v6586, %v6589
      %vm6591 = vweird.f32 %v5836
      %vm6592 = vweird.f32 %v6586
      %vm6593 = vmor %vm6591, %vm6592
      %v6594 = vsel %vm6593, %v6586, %v6590
      %v6595 = vand.u32 2147483647, %v5836
      %vm6596 = vcmp.eq.f32.partialorder %v6595, 8.507059e+37
      %v6597 = vand.u32 %v5836, 2147483648
      %v6598 = vor.u32 1.1754944e-38, %v6597
      %v6599 = vsel %vm6596, %v6598, %v6594
      %v6600 = vmul.f32 1.0, %v6599
      %v6601 = vrcp.pop %v5837
      %v6602 = vmul.f32 %v5837, %v6601
      %v6603 = vsub.f32 1.0, %v6602
      %v6604 = vmul.f32 %v6601, %v6603
      %v6605 = vadd.f32 %v6601, %v6604
      %vm6606 = vweird.f32 %v5837
      %vm6607 = vweird.f32 %v6601
      %vm6608 = vmor %vm6606, %vm6607
      %v6609 = vsel %vm6608, %v6601, %v6605
      %v6610 = vand.u32 2147483647, %v5837
      %vm6611 = vcmp.eq.f32.partialorder %v6610, 8.507059e+37
      %v6612 = vand.u32 %v5837, 2147483648
      %v6613 = vor.u32 1.1754944e-38, %v6612
      %v6614 = vsel %vm6611, %v6613, %v6609
      %v6615 = vmul.f32 1.0, %v6614
      %v6616 = vrcp.pop %v5838
      %v6617 = vmul.f32 %v5838, %v6616
      %v6618 = vsub.f32 1.0, %v6617
      %v6619 = vmul.f32 %v6616, %v6618
      %v6620 = vadd.f32 %v6616, %v6619
      %vm6621 = vweird.f32 %v5838
      %vm6622 = vweird.f32 %v6616
      %vm6623 = vmor %vm6621, %vm6622
      %v6624 = vsel %vm6623, %v6616, %v6620
      %v6625 = vand.u32 2147483647, %v5838
      %vm6626 = vcmp.eq.f32.partialorder %v6625, 8.507059e+37
      %v6627 = vand.u32 %v5838, 2147483648
      %v6628 = vor.u32 1.1754944e-38, %v6627
      %v6629 = vsel %vm6626, %v6628, %v6624
      %v6630 = vmul.f32 1.0, %v6629
      %v6631 = vrcp.pop %v5839
      %v6632 = vmul.f32 %v5839, %v6631
      %v6633 = vsub.f32 1.0, %v6632
      %v6634 = vmul.f32 %v6631, %v6633
      %v6635 = vadd.f32 %v6631, %v6634
      %vm6636 = vweird.f32 %v5839
      %vm6637 = vweird.f32 %v6631
      %vm6638 = vmor %vm6636, %vm6637
      %v6639 = vsel %vm6638, %v6631, %v6635
      %v6640 = vand.u32 2147483647, %v5839
      %vm6641 = vcmp.eq.f32.partialorder %v6640, 8.507059e+37
      %v6642 = vand.u32 %v5839, 2147483648
      %v6643 = vor.u32 1.1754944e-38, %v6642
      %v6644 = vsel %vm6641, %v6643, %v6639
      %v6645 = vmul.f32 1.0, %v6644
      %v6646 = vrcp.pop %v5840
      %v6647 = vmul.f32 %v5840, %v6646
      %v6648 = vsub.f32 1.0, %v6647
      %v6649 = vmul.f32 %v6646, %v6648
      %v6650 = vadd.f32 %v6646, %v6649
      %vm6651 = vweird.f32 %v5840
      %vm6652 = vweird.f32 %v6646
      %vm6653 = vmor %vm6651, %vm6652
      %v6654 = vsel %vm6653, %v6646, %v6650
      %v6655 = vand.u32 2147483647, %v5840
      %vm6656 = vcmp.eq.f32.partialorder %v6655, 8.507059e+37
      %v6657 = vand.u32 %v5840, 2147483648
      %v6658 = vor.u32 1.1754944e-38, %v6657
      %v6659 = vsel %vm6656, %v6658, %v6654
      %v6660 = vmul.f32 1.0, %v6659
      %v6661 = vrcp.pop %v5841
      %v6662 = vmul.f32 %v5841, %v6661
      %v6663 = vsub.f32 1.0, %v6662
      %v6664 = vmul.f32 %v6661, %v6663
      %v6665 = vadd.f32 %v6661, %v6664
      %vm6666 = vweird.f32 %v5841
      %vm6667 = vweird.f32 %v6661
      %vm6668 = vmor %vm6666, %vm6667
      %v6669 = vsel %vm6668, %v6661, %v6665
      %v6670 = vand.u32 2147483647, %v5841
      %vm6671 = vcmp.eq.f32.partialorder %v6670, 8.507059e+37
      %v6672 = vand.u32 %v5841, 2147483648
      %v6673 = vor.u32 1.1754944e-38, %v6672
      %v6674 = vsel %vm6671, %v6673, %v6669
      %v6675 = vmul.f32 1.0, %v6674
      %v6676 = vrcp.pop %v5842
      %v6677 = vmul.f32 %v5842, %v6676
      %v6678 = vsub.f32 1.0, %v6677
      %v6679 = vmul.f32 %v6676, %v6678
      %v6680 = vadd.f32 %v6676, %v6679
      %vm6681 = vweird.f32 %v5842
      %vm6682 = vweird.f32 %v6676
      %vm6683 = vmor %vm6681, %vm6682
      %v6684 = vsel %vm6683, %v6676, %v6680
      %v6685 = vand.u32 2147483647, %v5842
      %vm6686 = vcmp.eq.f32.partialorder %v6685, 8.507059e+37
      %v6687 = vand.u32 %v5842, 2147483648
      %v6688 = vor.u32 1.1754944e-38, %v6687
      %v6689 = vsel %vm6686, %v6688, %v6684
      %v6690 = vmul.f32 1.0, %v6689
      %v6691 = vrcp.pop %v5843
      %v6692 = vmul.f32 %v5843, %v6691
      %v6693 = vsub.f32 1.0, %v6692
      %v6694 = vmul.f32 %v6691, %v6693
      %v6695 = vadd.f32 %v6691, %v6694
      %vm6696 = vweird.f32 %v5843
      %vm6697 = vweird.f32 %v6691
      %vm6698 = vmor %vm6696, %vm6697
      %v6699 = vsel %vm6698, %v6691, %v6695
      %v6700 = vand.u32 2147483647, %v5843
      %vm6701 = vcmp.eq.f32.partialorder %v6700, 8.507059e+37
      %v6702 = vand.u32 %v5843, 2147483648
      %v6703 = vor.u32 1.1754944e-38, %v6702
      %v6704 = vsel %vm6701, %v6703, %v6699
      %v6705 = vmul.f32 1.0, %v6704
      %v6706 = vrcp.pop %v5844
      %v6707 = vmul.f32 %v5844, %v6706
      %v6708 = vsub.f32 1.0, %v6707
      %v6709 = vmul.f32 %v6706, %v6708
      %v6710 = vadd.f32 %v6706, %v6709
      %vm6711 = vweird.f32 %v5844
      %vm6712 = vweird.f32 %v6706
      %vm6713 = vmor %vm6711, %vm6712
      %v6714 = vsel %vm6713, %v6706, %v6710
      %v6715 = vand.u32 2147483647, %v5844
      %vm6716 = vcmp.eq.f32.partialorder %v6715, 8.507059e+37
      %v6717 = vand.u32 %v5844, 2147483648
      %v6718 = vor.u32 1.1754944e-38, %v6717
      %v6719 = vsel %vm6716, %v6718, %v6714
      %v6720 = vmul.f32 1.0, %v6719
      %v6721 = vrcp.pop %v5845
      %v6722 = vmul.f32 %v5845, %v6721
      %v6723 = vsub.f32 1.0, %v6722
      %v6724 = vmul.f32 %v6721, %v6723
      %v6725 = vadd.f32 %v6721, %v6724
      %vm6726 = vweird.f32 %v5845
      %vm6727 = vweird.f32 %v6721
      %vm6728 = vmor %vm6726, %vm6727
      %v6729 = vsel %vm6728, %v6721, %v6725
      %v6730 = vand.u32 2147483647, %v5845
      %vm6731 = vcmp.eq.f32.partialorder %v6730, 8.507059e+37
      %v6732 = vand.u32 %v5845, 2147483648
      %v6733 = vor.u32 1.1754944e-38, %v6732
      %v6734 = vsel %vm6731, %v6733, %v6729
      %v6735 = vmul.f32 1.0, %v6734
      %v6736 = vrcp.pop %v5846
      %v6737 = vmul.f32 %v5846, %v6736
      %v6738 = vsub.f32 1.0, %v6737
      %v6739 = vmul.f32 %v6736, %v6738
      %v6740 = vadd.f32 %v6736, %v6739
      %vm6741 = vweird.f32 %v5846
      %vm6742 = vweird.f32 %v6736
      %vm6743 = vmor %vm6741, %vm6742
      %v6744 = vsel %vm6743, %v6736, %v6740
      %v6745 = vand.u32 2147483647, %v5846
      %vm6746 = vcmp.eq.f32.partialorder %v6745, 8.507059e+37
      %v6747 = vand.u32 %v5846, 2147483648
      %v6748 = vor.u32 1.1754944e-38, %v6747
      %v6749 = vsel %vm6746, %v6748, %v6744
      %v6750 = vmul.f32 1.0, %v6749
      %v6751 = vrcp.pop %v5847
      %v6752 = vmul.f32 %v5847, %v6751
      %v6753 = vsub.f32 1.0, %v6752
      %v6754 = vmul.f32 %v6751, %v6753
      %v6755 = vadd.f32 %v6751, %v6754
      %vm6756 = vweird.f32 %v5847
      %vm6757 = vweird.f32 %v6751
      %vm6758 = vmor %vm6756, %vm6757
      %v6759 = vsel %vm6758, %v6751, %v6755
      %v6760 = vand.u32 2147483647, %v5847
      %vm6761 = vcmp.eq.f32.partialorder %v6760, 8.507059e+37
      %v6762 = vand.u32 %v5847, 2147483648
      %v6763 = vor.u32 1.1754944e-38, %v6762
      %v6764 = vsel %vm6761, %v6763, %v6759
      %v6765 = vmul.f32 1.0, %v6764
      %v6766 = vrcp.pop %v5848
      %v6767 = vmul.f32 %v5848, %v6766
      %v6768 = vsub.f32 1.0, %v6767
      %v6769 = vmul.f32 %v6766, %v6768
      %v6770 = vadd.f32 %v6766, %v6769
      %vm6771 = vweird.f32 %v5848
      %vm6772 = vweird.f32 %v6766
      %vm6773 = vmor %vm6771, %vm6772
      %v6774 = vsel %vm6773, %v6766, %v6770
      %v6775 = vand.u32 2147483647, %v5848
      %vm6776 = vcmp.eq.f32.partialorder %v6775, 8.507059e+37
      %v6777 = vand.u32 %v5848, 2147483648
      %v6778 = vor.u32 1.1754944e-38, %v6777
      %v6779 = vsel %vm6776, %v6778, %v6774
      %v6780 = vmul.f32 1.0, %v6779
      %v6781 = vrcp.pop %v5849
      %v6782 = vmul.f32 %v5849, %v6781
      %v6783 = vsub.f32 1.0, %v6782
      %v6784 = vmul.f32 %v6781, %v6783
      %v6785 = vadd.f32 %v6781, %v6784
      %vm6786 = vweird.f32 %v5849
      %vm6787 = vweird.f32 %v6781
      %vm6788 = vmor %vm6786, %vm6787
      %v6789 = vsel %vm6788, %v6781, %v6785
      %v6790 = vand.u32 2147483647, %v5849
      %vm6791 = vcmp.eq.f32.partialorder %v6790, 8.507059e+37
      %v6792 = vand.u32 %v5849, 2147483648
      %v6793 = vor.u32 1.1754944e-38, %v6792
      %v6794 = vsel %vm6791, %v6793, %v6789
      %v6795 = vmul.f32 1.0, %v6794
      %v6796 = vrcp.pop %v5850
      %v6797 = vmul.f32 %v5850, %v6796
      %v6798 = vsub.f32 1.0, %v6797
      %v6799 = vmul.f32 %v6796, %v6798
      %v6800 = vadd.f32 %v6796, %v6799
      %vm6801 = vweird.f32 %v5850
      %vm6802 = vweird.f32 %v6796
      %vm6803 = vmor %vm6801, %vm6802
      %v6804 = vsel %vm6803, %v6796, %v6800
      %v6805 = vand.u32 2147483647, %v5850
      %vm6806 = vcmp.eq.f32.partialorder %v6805, 8.507059e+37
      %v6807 = vand.u32 %v5850, 2147483648
      %v6808 = vor.u32 1.1754944e-38, %v6807
      %v6809 = vsel %vm6806, %v6808, %v6804
      %v6810 = vmul.f32 1.0, %v6809
      %v6811 = vmul.f32 %v5160, %v5865
      %v6812 = vmul.f32 %v5516, %v5880
      %v6813 = vmul.f32 %v5162, %v5895
      %v6814 = vmul.f32 %v5518, %v5910
      %v6815 = vmul.f32 %v5165, %v5925
      %v6816 = vmul.f32 %v5521, %v5940
      %v6817 = vmul.f32 %v5167, %v5955
      %v6818 = vmul.f32 %v5523, %v5970
      %v6819 = vmul.f32 %v5170, %v5985
      %v6820 = vmul.f32 %v5526, %v6000
      %v6821 = vmul.f32 %v5172, %v6015
      %v6822 = vmul.f32 %v5528, %v6030
      %v6823 = vmul.f32 %v5175, %v6045
      %v6824 = vmul.f32 %v5531, %v6060
      %v6825 = vmul.f32 %v5177, %v6075
      %v6826 = vmul.f32 %v5533, %v6090
      %v6827 = vmul.f32 %v5180, %v6105
      %v6828 = vmul.f32 %v5536, %v6120
      %v6829 = vmul.f32 %v5182, %v6135
      %v6830 = vmul.f32 %v5538, %v6150
      %v6831 = vmul.f32 %v5185, %v6165
      %v6832 = vmul.f32 %v5541, %v6180
      %v6833 = vmul.f32 %v5187, %v6195
      %v6834 = vmul.f32 %v5543, %v6210
      %v6835 = vmul.f32 %v5190, %v6225
      %v6836 = vmul.f32 %v5546, %v6240
      %v6837 = vmul.f32 %v5192, %v6255
      %v6838 = vmul.f32 %v5548, %v6270
      %v6839 = vmul.f32 %v5195, %v6285
      %v6840 = vmul.f32 %v5551, %v6300
      %v6841 = vmul.f32 %v5197, %v6315
      %v6842 = vmul.f32 %v5553, %v6330
      %v6843 = vmul.f32 %v5200, %v6345
      %v6844 = vmul.f32 %v5556, %v6360
      %v6845 = vmul.f32 %v5202, %v6375
      %v6846 = vmul.f32 %v5558, %v6390
      %v6847 = vmul.f32 %v5205, %v6405
      %v6848 = vmul.f32 %v5561, %v6420
      %v6849 = vmul.f32 %v5207, %v6435
      %v6850 = vmul.f32 %v5563, %v6450
      %v6851 = vmul.f32 %v5210, %v6465
      %v6852 = vmul.f32 %v5566, %v6480
      %v6853 = vmul.f32 %v5212, %v6495
      %v6854 = vmul.f32 %v5568, %v6510
      %v6855 = vmul.f32 %v5215, %v6525
      %v6856 = vmul.f32 %v5571, %v6540
      %v6857 = vmul.f32 %v5217, %v6555
      %v6858 = vmul.f32 %v5573, %v6570
      %v6859 = vmul.f32 %v5220, %v6585
      %v6860 = vmul.f32 %v5576, %v6600
      %v6861 = vmul.f32 %v5222, %v6615
      %v6862 = vmul.f32 %v5578, %v6630
      %v6863 = vmul.f32 %v5225, %v6645
      %v6864 = vmul.f32 %v5581, %v6660
      %v6865 = vmul.f32 %v5227, %v6675
      %v6866 = vmul.f32 %v5583, %v6690
      %v6867 = vmul.f32 %v5230, %v6705
      %v6868 = vmul.f32 %v5586, %v6720
      %v6869 = vmul.f32 %v5232, %v6735
      %v6870 = vmul.f32 %v5588, %v6750
      %v6871 = vmul.f32 %v5235, %v6765
      %v6872 = vmul.f32 %v5591, %v6780
      %v6873 = vmul.f32 %v5237, %v6795
      %v6874 = vmul.f32 %v5593, %v6810
      %v6875 = vpack.c.bf16 %v6813, %v6811
      %v6876 = vpack.c.bf16 %v6814, %v6812
      %v6877 = vpack.c.bf16 %v6817, %v6815
      %v6878 = vpack.c.bf16 %v6818, %v6816
      %v6879 = vpack.c.bf16 %v6821, %v6819
      %v6880 = vpack.c.bf16 %v6822, %v6820
      %v6881 = vpack.c.bf16 %v6825, %v6823
      %v6882 = vpack.c.bf16 %v6826, %v6824
      %v6883 = vpack.c.bf16 %v6829, %v6827
      %v6884 = vpack.c.bf16 %v6830, %v6828
      %v6885 = vpack.c.bf16 %v6833, %v6831
      %v6886 = vpack.c.bf16 %v6834, %v6832
      %v6887 = vpack.c.bf16 %v6837, %v6835
      %v6888 = vpack.c.bf16 %v6838, %v6836
      %v6889 = vpack.c.bf16 %v6841, %v6839
      %v6890 = vpack.c.bf16 %v6842, %v6840
      %v6891 = vpack.c.bf16 %v6845, %v6843
      %v6892 = vpack.c.bf16 %v6846, %v6844
      %v6893 = vpack.c.bf16 %v6849, %v6847
      %v6894 = vpack.c.bf16 %v6850, %v6848
      %v6895 = vpack.c.bf16 %v6853, %v6851
      %v6896 = vpack.c.bf16 %v6854, %v6852
      %v6897 = vpack.c.bf16 %v6857, %v6855
      %v6898 = vpack.c.bf16 %v6858, %v6856
      %v6899 = vpack.c.bf16 %v6861, %v6859
      %v6900 = vpack.c.bf16 %v6862, %v6860
      %v6901 = vpack.c.bf16 %v6865, %v6863
      %v6902 = vpack.c.bf16 %v6866, %v6864
      %v6903 = vpack.c.bf16 %v6869, %v6867
      %v6904 = vpack.c.bf16 %v6870, %v6868
      %v6905 = vpack.c.bf16 %v6873, %v6871
      %v6906 = vpack.c.bf16 %v6874, %v6872
      %v6907 = vld [vmem:[%s5] sm:$0xf]
      %v6908 = vld [vmem:[%s5 + $0x4] sm:$0xf]
      %v6909 = vld [vmem:[%s5 + $0x8] sm:$0xf]
      %v6910 = vld [vmem:[%s5 + $0xc] sm:$0xf]
      %v6911 = vld [vmem:[%s5 + $0x10] sm:$0xf]
      %v6912 = vld [vmem:[%s5 + $0x14] sm:$0xf]
      %v6913 = vld [vmem:[%s5 + $0x18] sm:$0xf]
      %v6914 = vld [vmem:[%s5 + $0x1c] sm:$0xf]
      %v6915 = vld [vmem:[%s5 + $0x20] sm:$0xf]
      %v6916 = vld [vmem:[%s5 + $0x24] sm:$0xf]
      %v6917 = vld [vmem:[%s5 + $0x28] sm:$0xf]
      %v6918 = vld [vmem:[%s5 + $0x2c] sm:$0xf]
      %v6919 = vld [vmem:[%s5 + $0x30] sm:$0xf]
      %v6920 = vld [vmem:[%s5 + $0x34] sm:$0xf]
      %v6921 = vld [vmem:[%s5 + $0x38] sm:$0xf]
      %v6922 = vld [vmem:[%s5 + $0x3c] sm:$0xf]
      %v6923 = vld [vmem:[%s5 + $0x40] sm:$0xf]
      %v6924 = vld [vmem:[%s5 + $0x44] sm:$0xf]
      %v6925 = vld [vmem:[%s5 + $0x48] sm:$0xf]
      %v6926 = vld [vmem:[%s5 + $0x4c] sm:$0xf]
      %v6927 = vld [vmem:[%s5 + $0x50] sm:$0xf]
      %v6928 = vld [vmem:[%s5 + $0x54] sm:$0xf]
      %v6929 = vld [vmem:[%s5 + $0x58] sm:$0xf]
      %v6930 = vld [vmem:[%s5 + $0x5c] sm:$0xf]
      %v6931 = vld [vmem:[%s5 + $0x60] sm:$0xf]
      %v6932 = vld [vmem:[%s5 + $0x64] sm:$0xf]
      %v6933 = vld [vmem:[%s5 + $0x68] sm:$0xf]
      %v6934 = vld [vmem:[%s5 + $0x6c] sm:$0xf]
      %v6935 = vld [vmem:[%s5 + $0x70] sm:$0xf]
      %v6936 = vld [vmem:[%s5 + $0x74] sm:$0xf]
      %v6937 = vld [vmem:[%s5 + $0x78] sm:$0xf]
      %v6938 = vld [vmem:[%s5 + $0x7c] sm:$0xf]
      %v6940 = vperm.slane %v1375, 0
      %v6974 = vunpack.c.l.b16 %v6907
      %v6975 = vunpack.c.l.b16 %v6908
      %v6976 = vunpack.c.l.b16 %v6909
      %v6977 = vunpack.c.l.b16 %v6910
      %v6978 = vunpack.c.l.b16 %v6911
      %v6979 = vunpack.c.l.b16 %v6912
      %v6980 = vunpack.c.l.b16 %v6913
      %v6981 = vunpack.c.l.b16 %v6914
      %v6982 = vunpack.c.l.b16 %v6915
      %v6983 = vunpack.c.l.b16 %v6916
      %v6984 = vunpack.c.l.b16 %v6917
      %v6985 = vunpack.c.l.b16 %v6918
      %v6986 = vunpack.c.l.b16 %v6919
      %v6987 = vunpack.c.l.b16 %v6920
      %v6988 = vunpack.c.l.b16 %v6921
      %v6989 = vunpack.c.l.b16 %v6922
      %v6990 = vunpack.c.l.b16 %v6923
      %v6991 = vunpack.c.l.b16 %v6924
      %v6992 = vunpack.c.l.b16 %v6925
      %v6993 = vunpack.c.l.b16 %v6926
      %v6994 = vunpack.c.l.b16 %v6927
      %v6995 = vunpack.c.l.b16 %v6928
      %v6996 = vunpack.c.l.b16 %v6929
      %v6997 = vunpack.c.l.b16 %v6930
      %v6998 = vunpack.c.l.b16 %v6931
      %v6999 = vunpack.c.l.b16 %v6932
      %v7000 = vunpack.c.l.b16 %v6933
      %v7001 = vunpack.c.l.b16 %v6934
      %v7002 = vunpack.c.l.b16 %v6935
      %v7003 = vunpack.c.l.b16 %v6936
      %v7004 = vunpack.c.l.b16 %v6937
      %v7005 = vunpack.c.l.b16 %v6938
      %v7006 = vpack.c.b16 %v6975, %v6974
      %v7007 = vpack.c.b16 %v6977, %v6976
      %v7008 = vpack.c.b16 %v6979, %v6978
      %v7009 = vpack.c.b16 %v6981, %v6980
      %v7010 = vpack.c.b16 %v6983, %v6982
      %v7011 = vpack.c.b16 %v6985, %v6984
      %v7012 = vpack.c.b16 %v6987, %v6986
      %v7013 = vpack.c.b16 %v6989, %v6988
      %v7014 = vpack.c.b16 %v6991, %v6990
      %v7015 = vpack.c.b16 %v6993, %v6992
      %v7016 = vpack.c.b16 %v6995, %v6994
      %v7017 = vpack.c.b16 %v6997, %v6996
      %v7018 = vpack.c.b16 %v6999, %v6998
      %v7019 = vpack.c.b16 %v7001, %v7000
      %v7020 = vpack.c.b16 %v7003, %v7002
      %v7021 = vpack.c.b16 %v7005, %v7004
      %7038 = vmatpush.bf16.msra.mxu0 %v7013
      %7039 = vmatpush.bf16.msra.mxu0 %v7012
      %7040 = vmatpush.bf16.msra.mxu0 %v7011
      %7041 = vmatpush.bf16.msra.mxu0 %v7010
      %7042 = vmatpush.bf16.msra.mxu0 %v7009
      %7043 = vmatpush.bf16.msra.mxu0 %v7008
      %7044 = vmatpush.bf16.msra.mxu0 %v7007
      %7045 = vmatpush.bf16.msra.mxu0 %v7006
      %7046 = vmatmul.bf16.gmra.mxu0 %v6875
      %v7047 = vpop.f32.mrf.mxu0
      %v7048 = vadd.f32 %v6940, %v7047
      %v7049 = vpop.f32.mrf.mxu0
      %v7050 = vadd.f32 %v6940, %v7049
      %7051 = vmatmul.bf16.gmra.mxu0 %v6877
      %v7052 = vpop.f32.mrf.mxu0
      %v7053 = vadd.f32 %v6940, %v7052
      %v7054 = vpop.f32.mrf.mxu0
      %v7055 = vadd.f32 %v6940, %v7054
      %7056 = vmatmul.bf16.gmra.mxu0 %v6879
      %v7057 = vpop.f32.mrf.mxu0
      %v7058 = vadd.f32 %v6940, %v7057
      %v7059 = vpop.f32.mrf.mxu0
      %v7060 = vadd.f32 %v6940, %v7059
      %7061 = vmatmul.bf16.gmra.mxu0 %v6881
      %v7062 = vpop.f32.mrf.mxu0
      %v7063 = vadd.f32 %v6940, %v7062
      %v7064 = vpop.f32.mrf.mxu0
      %v7065 = vadd.f32 %v6940, %v7064
      %7066 = vmatmul.bf16.gmra.mxu0 %v6883
      %v7067 = vpop.f32.mrf.mxu0
      %v7068 = vadd.f32 %v6940, %v7067
      %v7069 = vpop.f32.mrf.mxu0
      %v7070 = vadd.f32 %v6940, %v7069
      %7071 = vmatmul.bf16.gmra.mxu0 %v6885
      %v7072 = vpop.f32.mrf.mxu0
      %v7073 = vadd.f32 %v6940, %v7072
      %v7074 = vpop.f32.mrf.mxu0
      %v7075 = vadd.f32 %v6940, %v7074
      %7076 = vmatmul.bf16.gmra.mxu0 %v6887
      %v7077 = vpop.f32.mrf.mxu0
      %v7078 = vadd.f32 %v6940, %v7077
      %v7079 = vpop.f32.mrf.mxu0
      %v7080 = vadd.f32 %v6940, %v7079
      %7081 = vmatmul.bf16.gmra.mxu0 %v6889
      %v7082 = vpop.f32.mrf.mxu0
      %v7083 = vadd.f32 %v6940, %v7082
      %v7084 = vpop.f32.mrf.mxu0
      %v7085 = vadd.f32 %v6940, %v7084
      %7086 = vmatmul.bf16.gmra.mxu0 %v6891
      %v7087 = vpop.f32.mrf.mxu0
      %v7088 = vadd.f32 %v6940, %v7087
      %v7089 = vpop.f32.mrf.mxu0
      %v7090 = vadd.f32 %v6940, %v7089
      %7091 = vmatmul.bf16.gmra.mxu0 %v6893
      %v7092 = vpop.f32.mrf.mxu0
      %v7093 = vadd.f32 %v6940, %v7092
      %v7094 = vpop.f32.mrf.mxu0
      %v7095 = vadd.f32 %v6940, %v7094
      %7096 = vmatmul.bf16.gmra.mxu0 %v6895
      %v7097 = vpop.f32.mrf.mxu0
      %v7098 = vadd.f32 %v6940, %v7097
      %v7099 = vpop.f32.mrf.mxu0
      %v7100 = vadd.f32 %v6940, %v7099
      %7101 = vmatmul.bf16.gmra.mxu0 %v6897
      %v7102 = vpop.f32.mrf.mxu0
      %v7103 = vadd.f32 %v6940, %v7102
      %v7104 = vpop.f32.mrf.mxu0
      %v7105 = vadd.f32 %v6940, %v7104
      %7106 = vmatmul.bf16.gmra.mxu0 %v6899
      %v7107 = vpop.f32.mrf.mxu0
      %v7108 = vadd.f32 %v6940, %v7107
      %v7109 = vpop.f32.mrf.mxu0
      %v7110 = vadd.f32 %v6940, %v7109
      %7111 = vmatmul.bf16.gmra.mxu0 %v6901
      %v7112 = vpop.f32.mrf.mxu0
      %v7113 = vadd.f32 %v6940, %v7112
      %v7114 = vpop.f32.mrf.mxu0
      %v7115 = vadd.f32 %v6940, %v7114
      %7116 = vmatmul.bf16.gmra.mxu0 %v6903
      %v7117 = vpop.f32.mrf.mxu0
      %v7118 = vadd.f32 %v6940, %v7117
      %v7119 = vpop.f32.mrf.mxu0
      %v7120 = vadd.f32 %v6940, %v7119
      %7121 = vmatmul.bf16.gmra.mxu0 %v6905
      %v7122 = vpop.f32.mrf.mxu0
      %v7123 = vadd.f32 %v6940, %v7122
      %v7124 = vpop.f32.mrf.mxu0
      %v7125 = vadd.f32 %v6940, %v7124
      %7126 = vdwg.mxu0
      %7127 = vmatpush.bf16.msra.mxu0 %v7021
      %7128 = vmatpush.bf16.msra.mxu0 %v7020
      %7129 = vmatpush.bf16.msra.mxu0 %v7019
      %7130 = vmatpush.bf16.msra.mxu0 %v7018
      %7131 = vmatpush.bf16.msra.mxu0 %v7017
      %7132 = vmatpush.bf16.msra.mxu0 %v7016
      %7133 = vmatpush.bf16.msra.mxu0 %v7015
      %7134 = vmatpush.bf16.msra.mxu0 %v7014
      %7135 = vmatmul.bf16.gmra.mxu0 %v6876
      %v7136 = vpop.f32.mrf.mxu0
      %v7137 = vadd.f32 %v7048, %v7136
      %v7138 = vpop.f32.mrf.mxu0
      %v7139 = vadd.f32 %v7050, %v7138
      %7140 = vmatmul.bf16.gmra.mxu0 %v6878
      %v7141 = vpop.f32.mrf.mxu0
      %v7142 = vadd.f32 %v7053, %v7141
      %v7143 = vpop.f32.mrf.mxu0
      %v7144 = vadd.f32 %v7055, %v7143
      %7145 = vmatmul.bf16.gmra.mxu0 %v6880
      %v7146 = vpop.f32.mrf.mxu0
      %v7147 = vadd.f32 %v7058, %v7146
      %v7148 = vpop.f32.mrf.mxu0
      %v7149 = vadd.f32 %v7060, %v7148
      %7150 = vmatmul.bf16.gmra.mxu0 %v6882
      %v7151 = vpop.f32.mrf.mxu0
      %v7152 = vadd.f32 %v7063, %v7151
      %v7153 = vpop.f32.mrf.mxu0
      %v7154 = vadd.f32 %v7065, %v7153
      %7155 = vmatmul.bf16.gmra.mxu0 %v6884
      %v7156 = vpop.f32.mrf.mxu0
      %v7157 = vadd.f32 %v7068, %v7156
      %v7158 = vpop.f32.mrf.mxu0
      %v7159 = vadd.f32 %v7070, %v7158
      %7160 = vmatmul.bf16.gmra.mxu0 %v6886
      %v7161 = vpop.f32.mrf.mxu0
      %v7162 = vadd.f32 %v7073, %v7161
      %v7163 = vpop.f32.mrf.mxu0
      %v7164 = vadd.f32 %v7075, %v7163
      %7165 = vmatmul.bf16.gmra.mxu0 %v6888
      %v7166 = vpop.f32.mrf.mxu0
      %v7167 = vadd.f32 %v7078, %v7166
      %v7168 = vpop.f32.mrf.mxu0
      %v7169 = vadd.f32 %v7080, %v7168
      %7170 = vmatmul.bf16.gmra.mxu0 %v6890
      %v7171 = vpop.f32.mrf.mxu0
      %v7172 = vadd.f32 %v7083, %v7171
      %v7173 = vpop.f32.mrf.mxu0
      %v7174 = vadd.f32 %v7085, %v7173
      %7175 = vmatmul.bf16.gmra.mxu0 %v6892
      %v7176 = vpop.f32.mrf.mxu0
      %v7177 = vadd.f32 %v7088, %v7176
      %v7178 = vpop.f32.mrf.mxu0
      %v7179 = vadd.f32 %v7090, %v7178
      %7180 = vmatmul.bf16.gmra.mxu0 %v6894
      %v7181 = vpop.f32.mrf.mxu0
      %v7182 = vadd.f32 %v7093, %v7181
      %v7183 = vpop.f32.mrf.mxu0
      %v7184 = vadd.f32 %v7095, %v7183
      %7185 = vmatmul.bf16.gmra.mxu0 %v6896
      %v7186 = vpop.f32.mrf.mxu0
      %v7187 = vadd.f32 %v7098, %v7186
      %v7188 = vpop.f32.mrf.mxu0
      %v7189 = vadd.f32 %v7100, %v7188
      %7190 = vmatmul.bf16.gmra.mxu0 %v6898
      %v7191 = vpop.f32.mrf.mxu0
      %v7192 = vadd.f32 %v7103, %v7191
      %v7193 = vpop.f32.mrf.mxu0
      %v7194 = vadd.f32 %v7105, %v7193
      %7195 = vmatmul.bf16.gmra.mxu0 %v6900
      %v7196 = vpop.f32.mrf.mxu0
      %v7197 = vadd.f32 %v7108, %v7196
      %v7198 = vpop.f32.mrf.mxu0
      %v7199 = vadd.f32 %v7110, %v7198
      %7200 = vmatmul.bf16.gmra.mxu0 %v6902
      %v7201 = vpop.f32.mrf.mxu0
      %v7202 = vadd.f32 %v7113, %v7201
      %v7203 = vpop.f32.mrf.mxu0
      %v7204 = vadd.f32 %v7115, %v7203
      %7205 = vmatmul.bf16.gmra.mxu0 %v6904
      %v7206 = vpop.f32.mrf.mxu0
      %v7207 = vadd.f32 %v7118, %v7206
      %v7208 = vpop.f32.mrf.mxu0
      %v7209 = vadd.f32 %v7120, %v7208
      %7210 = vmatmul.bf16.gmra.mxu0 %v6906
      %v7211 = vpop.f32.mrf.mxu0
      %v7212 = vadd.f32 %v7123, %v7211
      %v7213 = vpop.f32.mrf.mxu0
      %v7214 = vadd.f32 %v7125, %v7213
      %7215 = vdwg.mxu0
      %v7216 = vsel %vm1324, %v7137, 0.0
      %7217 = vadd.xlane.f32.xlu0 %v7216
      %v7218 = vpop.xlane.xlu0 %7217
      %v7219 = vsel %vm1324, %v7139, 0.0
      %7220 = vadd.xlane.f32.xlu0 %v7219
      %v7221 = vpop.xlane.xlu0 %7220
      %v7222 = vsel %vm1324, %v7142, 0.0
      %7223 = vadd.xlane.f32.xlu0 %v7222
      %v7224 = vpop.xlane.xlu0 %7223
      %v7225 = vsel %vm1324, %v7144, 0.0
      %7226 = vadd.xlane.f32.xlu0 %v7225
      %v7227 = vpop.xlane.xlu0 %7226
      %v7228 = vsel %vm1324, %v7147, 0.0
      %7229 = vadd.xlane.f32.xlu0 %v7228
      %v7230 = vpop.xlane.xlu0 %7229
      %v7231 = vsel %vm1324, %v7149, 0.0
      %7232 = vadd.xlane.f32.xlu0 %v7231
      %v7233 = vpop.xlane.xlu0 %7232
      %v7234 = vsel %vm1324, %v7152, 0.0
      %7235 = vadd.xlane.f32.xlu0 %v7234
      %v7236 = vpop.xlane.xlu0 %7235
      %v7237 = vsel %vm1324, %v7154, 0.0
      %7238 = vadd.xlane.f32.xlu0 %v7237
      %v7239 = vpop.xlane.xlu0 %7238
      %v7240 = vsel %vm1324, %v7157, 0.0
      %7241 = vadd.xlane.f32.xlu0 %v7240
      %v7242 = vpop.xlane.xlu0 %7241
      %v7243 = vsel %vm1324, %v7159, 0.0
      %7244 = vadd.xlane.f32.xlu0 %v7243
      %v7245 = vpop.xlane.xlu0 %7244
      %v7246 = vsel %vm1324, %v7162, 0.0
      %7247 = vadd.xlane.f32.xlu0 %v7246
      %v7248 = vpop.xlane.xlu0 %7247
      %v7249 = vsel %vm1324, %v7164, 0.0
      %7250 = vadd.xlane.f32.xlu0 %v7249
      %v7251 = vpop.xlane.xlu0 %7250
      %v7252 = vsel %vm1324, %v7167, 0.0
      %7253 = vadd.xlane.f32.xlu0 %v7252
      %v7254 = vpop.xlane.xlu0 %7253
      %v7255 = vsel %vm1324, %v7169, 0.0
      %7256 = vadd.xlane.f32.xlu0 %v7255
      %v7257 = vpop.xlane.xlu0 %7256
      %v7258 = vsel %vm1324, %v7172, 0.0
      %7259 = vadd.xlane.f32.xlu0 %v7258
      %v7260 = vpop.xlane.xlu0 %7259
      %v7261 = vsel %vm1324, %v7174, 0.0
      %7262 = vadd.xlane.f32.xlu0 %v7261
      %v7263 = vpop.xlane.xlu0 %7262
      %v7264 = vsel %vm1324, %v7177, 0.0
      %7265 = vadd.xlane.f32.xlu0 %v7264
      %v7266 = vpop.xlane.xlu0 %7265
      %v7267 = vsel %vm1324, %v7179, 0.0
      %7268 = vadd.xlane.f32.xlu0 %v7267
      %v7269 = vpop.xlane.xlu0 %7268
      %v7270 = vsel %vm1324, %v7182, 0.0
      %7271 = vadd.xlane.f32.xlu0 %v7270
      %v7272 = vpop.xlane.xlu0 %7271
      %v7273 = vsel %vm1324, %v7184, 0.0
      %7274 = vadd.xlane.f32.xlu0 %v7273
      %v7275 = vpop.xlane.xlu0 %7274
      %v7276 = vsel %vm1324, %v7187, 0.0
      %7277 = vadd.xlane.f32.xlu0 %v7276
      %v7278 = vpop.xlane.xlu0 %7277
      %v7279 = vsel %vm1324, %v7189, 0.0
      %7280 = vadd.xlane.f32.xlu0 %v7279
      %v7281 = vpop.xlane.xlu0 %7280
      %v7282 = vsel %vm1324, %v7192, 0.0
      %7283 = vadd.xlane.f32.xlu0 %v7282
      %v7284 = vpop.xlane.xlu0 %7283
      %v7285 = vsel %vm1324, %v7194, 0.0
      %7286 = vadd.xlane.f32.xlu0 %v7285
      %v7287 = vpop.xlane.xlu0 %7286
      %v7288 = vsel %vm1324, %v7197, 0.0
      %7289 = vadd.xlane.f32.xlu0 %v7288
      %v7290 = vpop.xlane.xlu0 %7289
      %v7291 = vsel %vm1324, %v7199, 0.0
      %7292 = vadd.xlane.f32.xlu0 %v7291
      %v7293 = vpop.xlane.xlu0 %7292
      %v7294 = vsel %vm1324, %v7202, 0.0
      %7295 = vadd.xlane.f32.xlu0 %v7294
      %v7296 = vpop.xlane.xlu0 %7295
      %v7297 = vsel %vm1324, %v7204, 0.0
      %7298 = vadd.xlane.f32.xlu0 %v7297
      %v7299 = vpop.xlane.xlu0 %7298
      %v7300 = vsel %vm1324, %v7207, 0.0
      %7301 = vadd.xlane.f32.xlu0 %v7300
      %v7302 = vpop.xlane.xlu0 %7301
      %v7303 = vsel %vm1324, %v7209, 0.0
      %7304 = vadd.xlane.f32.xlu0 %v7303
      %v7305 = vpop.xlane.xlu0 %7304
      %v7306 = vsel %vm1324, %v7212, 0.0
      %7307 = vadd.xlane.f32.xlu0 %v7306
      %v7308 = vpop.xlane.xlu0 %7307
      %v7309 = vsel %vm1324, %v7214, 0.0
      %7310 = vadd.xlane.f32.xlu0 %v7309
      %v7311 = vpop.xlane.xlu0 %7310
      %v7312 = vadd.f32 %v7218, %v7221
      %v7313 = vadd.f32 %v7312, %v7224
      %v7314 = vadd.f32 %v7313, %v7227
      %v7315 = vadd.f32 %v7314, %v7230
      %v7316 = vadd.f32 %v7315, %v7233
      %v7317 = vadd.f32 %v7316, %v7236
      %v7318 = vadd.f32 %v7317, %v7239
      %v7319 = vrot.slane %v7318, 4
      %v7320 = vadd.f32 %v7318, %v7319
      %v7321 = vrot.slane %v7320, 2
      %v7322 = vadd.f32 %v7320, %v7321
      %v7323 = vrot.slane %v7322, 1
      %v7324 = vadd.f32 %v7322, %v7323
      %v7325 = vadd.f32 %v7242, %v7245
      %v7326 = vadd.f32 %v7325, %v7248
      %v7327 = vadd.f32 %v7326, %v7251
      %v7328 = vadd.f32 %v7327, %v7254
      %v7329 = vadd.f32 %v7328, %v7257
      %v7330 = vadd.f32 %v7329, %v7260
      %v7331 = vadd.f32 %v7330, %v7263
      %v7332 = vrot.slane %v7331, 4
      %v7333 = vadd.f32 %v7331, %v7332
      %v7334 = vrot.slane %v7333, 2
      %v7335 = vadd.f32 %v7333, %v7334
      %v7336 = vrot.slane %v7335, 1
      %v7337 = vadd.f32 %v7335, %v7336
      %v7338 = vadd.f32 %v7266, %v7269
      %v7339 = vadd.f32 %v7338, %v7272
      %v7340 = vadd.f32 %v7339, %v7275
      %v7341 = vadd.f32 %v7340, %v7278
      %v7342 = vadd.f32 %v7341, %v7281
      %v7343 = vadd.f32 %v7342, %v7284
      %v7344 = vadd.f32 %v7343, %v7287
      %v7345 = vrot.slane %v7344, 4
      %v7346 = vadd.f32 %v7344, %v7345
      %v7347 = vrot.slane %v7346, 2
      %v7348 = vadd.f32 %v7346, %v7347
      %v7349 = vrot.slane %v7348, 1
      %v7350 = vadd.f32 %v7348, %v7349
      %v7351 = vadd.f32 %v7290, %v7293
      %v7352 = vadd.f32 %v7351, %v7296
      %v7353 = vadd.f32 %v7352, %v7299
      %v7354 = vadd.f32 %v7353, %v7302
      %v7355 = vadd.f32 %v7354, %v7305
      %v7356 = vadd.f32 %v7355, %v7308
      %v7357 = vadd.f32 %v7356, %v7311
      %v7358 = vrot.slane %v7357, 4
      %v7359 = vadd.f32 %v7357, %v7358
      %v7360 = vrot.slane %v7359, 2
      %v7361 = vadd.f32 %v7359, %v7360
      %v7362 = vrot.slane %v7361, 1
      %v7363 = vadd.f32 %v7361, %v7362
      %v7364 = vmul.f32 %v7324, 0.00048828125
      %v7365 = vmul.f32 %v7337, 0.00048828125
      %v7366 = vmul.f32 %v7350, 0.00048828125
      %v7367 = vmul.f32 %v7363, 0.00048828125
      %v7368 = vsub.f32 %v7137, %v7364
      %v7369 = vsub.f32 %v7139, %v7364
      %v7370 = vsub.f32 %v7142, %v7364
      %v7371 = vsub.f32 %v7144, %v7364
      %v7372 = vsub.f32 %v7147, %v7364
      %v7373 = vsub.f32 %v7149, %v7364
      %v7374 = vsub.f32 %v7152, %v7364
      %v7375 = vsub.f32 %v7154, %v7364
      %v7376 = vsub.f32 %v7157, %v7365
      %v7377 = vsub.f32 %v7159, %v7365
      %v7378 = vsub.f32 %v7162, %v7365
      %v7379 = vsub.f32 %v7164, %v7365
      %v7380 = vsub.f32 %v7167, %v7365
      %v7381 = vsub.f32 %v7169, %v7365
      %v7382 = vsub.f32 %v7172, %v7365
      %v7383 = vsub.f32 %v7174, %v7365
      %v7384 = vsub.f32 %v7177, %v7366
      %v7385 = vsub.f32 %v7179, %v7366
      %v7386 = vsub.f32 %v7182, %v7366
      %v7387 = vsub.f32 %v7184, %v7366
      %v7388 = vsub.f32 %v7187, %v7366
      %v7389 = vsub.f32 %v7189, %v7366
      %v7390 = vsub.f32 %v7192, %v7366
      %v7391 = vsub.f32 %v7194, %v7366
      %v7392 = vsub.f32 %v7197, %v7367
      %v7393 = vsub.f32 %v7199, %v7367
      %v7394 = vsub.f32 %v7202, %v7367
      %v7395 = vsub.f32 %v7204, %v7367
      %v7396 = vsub.f32 %v7207, %v7367
      %v7397 = vsub.f32 %v7209, %v7367
      %v7398 = vsub.f32 %v7212, %v7367
      %v7399 = vsub.f32 %v7214, %v7367
      %v7400 = vmul.f32 %v7368, %v7368
      %v7401 = vmul.f32 %v7369, %v7369
      %v7402 = vmul.f32 %v7370, %v7370
      %v7403 = vmul.f32 %v7371, %v7371
      %v7404 = vmul.f32 %v7372, %v7372
      %v7405 = vmul.f32 %v7373, %v7373
      %v7406 = vmul.f32 %v7374, %v7374
      %v7407 = vmul.f32 %v7375, %v7375
      %v7408 = vmul.f32 %v7376, %v7376
      %v7409 = vmul.f32 %v7377, %v7377
      %v7410 = vmul.f32 %v7378, %v7378
      %v7411 = vmul.f32 %v7379, %v7379
      %v7412 = vmul.f32 %v7380, %v7380
      %v7413 = vmul.f32 %v7381, %v7381
      %v7414 = vmul.f32 %v7382, %v7382
      %v7415 = vmul.f32 %v7383, %v7383
      %v7416 = vmul.f32 %v7384, %v7384
      %v7417 = vmul.f32 %v7385, %v7385
      %v7418 = vmul.f32 %v7386, %v7386
      %v7419 = vmul.f32 %v7387, %v7387
      %v7420 = vmul.f32 %v7388, %v7388
      %v7421 = vmul.f32 %v7389, %v7389
      %v7422 = vmul.f32 %v7390, %v7390
      %v7423 = vmul.f32 %v7391, %v7391
      %v7424 = vmul.f32 %v7392, %v7392
      %v7425 = vmul.f32 %v7393, %v7393
      %v7426 = vmul.f32 %v7394, %v7394
      %v7427 = vmul.f32 %v7395, %v7395
      %v7428 = vmul.f32 %v7396, %v7396
      %v7429 = vmul.f32 %v7397, %v7397
      %v7430 = vmul.f32 %v7398, %v7398
      %v7431 = vmul.f32 %v7399, %v7399
      %v7432 = vsel %vm1324, %v7400, 0.0
      %7433 = vadd.xlane.f32.xlu0 %v7432
      %v7434 = vpop.xlane.xlu0 %7433
      %v7435 = vsel %vm1324, %v7401, 0.0
      %7436 = vadd.xlane.f32.xlu0 %v7435
      %v7437 = vpop.xlane.xlu0 %7436
      %v7438 = vsel %vm1324, %v7402, 0.0
      %7439 = vadd.xlane.f32.xlu0 %v7438
      %v7440 = vpop.xlane.xlu0 %7439
      %v7441 = vsel %vm1324, %v7403, 0.0
      %7442 = vadd.xlane.f32.xlu0 %v7441
      %v7443 = vpop.xlane.xlu0 %7442
      %v7444 = vsel %vm1324, %v7404, 0.0
      %7445 = vadd.xlane.f32.xlu0 %v7444
      %v7446 = vpop.xlane.xlu0 %7445
      %v7447 = vsel %vm1324, %v7405, 0.0
      %7448 = vadd.xlane.f32.xlu0 %v7447
      %v7449 = vpop.xlane.xlu0 %7448
      %v7450 = vsel %vm1324, %v7406, 0.0
      %7451 = vadd.xlane.f32.xlu0 %v7450
      %v7452 = vpop.xlane.xlu0 %7451
      %v7453 = vsel %vm1324, %v7407, 0.0
      %7454 = vadd.xlane.f32.xlu0 %v7453
      %v7455 = vpop.xlane.xlu0 %7454
      %v7456 = vsel %vm1324, %v7408, 0.0
      %7457 = vadd.xlane.f32.xlu0 %v7456
      %v7458 = vpop.xlane.xlu0 %7457
      %v7459 = vsel %vm1324, %v7409, 0.0
      %7460 = vadd.xlane.f32.xlu0 %v7459
      %v7461 = vpop.xlane.xlu0 %7460
      %v7462 = vsel %vm1324, %v7410, 0.0
      %7463 = vadd.xlane.f32.xlu0 %v7462
      %v7464 = vpop.xlane.xlu0 %7463
      %v7465 = vsel %vm1324, %v7411, 0.0
      %7466 = vadd.xlane.f32.xlu0 %v7465
      %v7467 = vpop.xlane.xlu0 %7466
      %v7468 = vsel %vm1324, %v7412, 0.0
      %7469 = vadd.xlane.f32.xlu0 %v7468
      %v7470 = vpop.xlane.xlu0 %7469
      %v7471 = vsel %vm1324, %v7413, 0.0
      %7472 = vadd.xlane.f32.xlu0 %v7471
      %v7473 = vpop.xlane.xlu0 %7472
      %v7474 = vsel %vm1324, %v7414, 0.0
      %7475 = vadd.xlane.f32.xlu0 %v7474
      %v7476 = vpop.xlane.xlu0 %7475
      %v7477 = vsel %vm1324, %v7415, 0.0
      %7478 = vadd.xlane.f32.xlu0 %v7477
      %v7479 = vpop.xlane.xlu0 %7478
      %v7480 = vsel %vm1324, %v7416, 0.0
      %7481 = vadd.xlane.f32.xlu0 %v7480
      %v7482 = vpop.xlane.xlu0 %7481
      %v7483 = vsel %vm1324, %v7417, 0.0
      %7484 = vadd.xlane.f32.xlu0 %v7483
      %v7485 = vpop.xlane.xlu0 %7484
      %v7486 = vsel %vm1324, %v7418, 0.0
      %7487 = vadd.xlane.f32.xlu0 %v7486
      %v7488 = vpop.xlane.xlu0 %7487
      %v7489 = vsel %vm1324, %v7419, 0.0
      %7490 = vadd.xlane.f32.xlu0 %v7489
      %v7491 = vpop.xlane.xlu0 %7490
      %v7492 = vsel %vm1324, %v7420, 0.0
      %7493 = vadd.xlane.f32.xlu0 %v7492
      %v7494 = vpop.xlane.xlu0 %7493
      %v7495 = vsel %vm1324, %v7421, 0.0
      %7496 = vadd.xlane.f32.xlu0 %v7495
      %v7497 = vpop.xlane.xlu0 %7496
      %v7498 = vsel %vm1324, %v7422, 0.0
      %7499 = vadd.xlane.f32.xlu0 %v7498
      %v7500 = vpop.xlane.xlu0 %7499
      %v7501 = vsel %vm1324, %v7423, 0.0
      %7502 = vadd.xlane.f32.xlu0 %v7501
      %v7503 = vpop.xlane.xlu0 %7502
      %v7504 = vsel %vm1324, %v7424, 0.0
      %7505 = vadd.xlane.f32.xlu0 %v7504
      %v7506 = vpop.xlane.xlu0 %7505
      %v7507 = vsel %vm1324, %v7425, 0.0
      %7508 = vadd.xlane.f32.xlu0 %v7507
      %v7509 = vpop.xlane.xlu0 %7508
      %v7510 = vsel %vm1324, %v7426, 0.0
      %7511 = vadd.xlane.f32.xlu0 %v7510
      %v7512 = vpop.xlane.xlu0 %7511
      %v7513 = vsel %vm1324, %v7427, 0.0
      %7514 = vadd.xlane.f32.xlu0 %v7513
      %v7515 = vpop.xlane.xlu0 %7514
      %v7516 = vsel %vm1324, %v7428, 0.0
      %7517 = vadd.xlane.f32.xlu0 %v7516
      %v7518 = vpop.xlane.xlu0 %7517
      %v7519 = vsel %vm1324, %v7429, 0.0
      %7520 = vadd.xlane.f32.xlu0 %v7519
      %v7521 = vpop.xlane.xlu0 %7520
      %v7522 = vsel %vm1324, %v7430, 0.0
      %7523 = vadd.xlane.f32.xlu0 %v7522
      %v7524 = vpop.xlane.xlu0 %7523
      %v7525 = vsel %vm1324, %v7431, 0.0
      %7526 = vadd.xlane.f32.xlu0 %v7525
      %v7527 = vpop.xlane.xlu0 %7526
      %v7528 = vadd.f32 %v7434, %v7437
      %v7529 = vadd.f32 %v7528, %v7440
      %v7530 = vadd.f32 %v7529, %v7443
      %v7531 = vadd.f32 %v7530, %v7446
      %v7532 = vadd.f32 %v7531, %v7449
      %v7533 = vadd.f32 %v7532, %v7452
      %v7534 = vadd.f32 %v7533, %v7455
      %v7535 = vrot.slane %v7534, 4
      %v7536 = vadd.f32 %v7534, %v7535
      %v7537 = vrot.slane %v7536, 2
      %v7538 = vadd.f32 %v7536, %v7537
      %v7539 = vrot.slane %v7538, 1
      %v7540 = vadd.f32 %v7538, %v7539
      %v7541 = vadd.f32 %v7458, %v7461
      %v7542 = vadd.f32 %v7541, %v7464
      %v7543 = vadd.f32 %v7542, %v7467
      %v7544 = vadd.f32 %v7543, %v7470
      %v7545 = vadd.f32 %v7544, %v7473
      %v7546 = vadd.f32 %v7545, %v7476
      %v7547 = vadd.f32 %v7546, %v7479
      %v7548 = vrot.slane %v7547, 4
      %v7549 = vadd.f32 %v7547, %v7548
      %v7550 = vrot.slane %v7549, 2
      %v7551 = vadd.f32 %v7549, %v7550
      %v7552 = vrot.slane %v7551, 1
      %v7553 = vadd.f32 %v7551, %v7552
      %v7554 = vadd.f32 %v7482, %v7485
      %v7555 = vadd.f32 %v7554, %v7488
      %v7556 = vadd.f32 %v7555, %v7491
      %v7557 = vadd.f32 %v7556, %v7494
      %v7558 = vadd.f32 %v7557, %v7497
      %v7559 = vadd.f32 %v7558, %v7500
      %v7560 = vadd.f32 %v7559, %v7503
      %v7561 = vrot.slane %v7560, 4
      %v7562 = vadd.f32 %v7560, %v7561
      %v7563 = vrot.slane %v7562, 2
      %v7564 = vadd.f32 %v7562, %v7563
      %v7565 = vrot.slane %v7564, 1
      %v7566 = vadd.f32 %v7564, %v7565
      %v7567 = vadd.f32 %v7506, %v7509
      %v7568 = vadd.f32 %v7567, %v7512
      %v7569 = vadd.f32 %v7568, %v7515
      %v7570 = vadd.f32 %v7569, %v7518
      %v7571 = vadd.f32 %v7570, %v7521
      %v7572 = vadd.f32 %v7571, %v7524
      %v7573 = vadd.f32 %v7572, %v7527
      %v7574 = vrot.slane %v7573, 4
      %v7575 = vadd.f32 %v7573, %v7574
      %v7576 = vrot.slane %v7575, 2
      %v7577 = vadd.f32 %v7575, %v7576
      %v7578 = vrot.slane %v7577, 1
      %v7579 = vadd.f32 %v7577, %v7578
      %v7580 = vmul.f32 %v7540, 0.00048828125
      %v7581 = vmul.f32 %v7553, 0.00048828125
      %v7582 = vmul.f32 %v7566, 0.00048828125
      %v7583 = vmul.f32 %v7579, 0.00048828125
      %v7584 = vadd.f32 %v7580, 1e-05
      %v7585 = vadd.f32 %v7581, 1e-05
      %v7586 = vadd.f32 %v7582, 1e-05
      %v7587 = vadd.f32 %v7583, 1e-05
      %v7588 = vrsqrt.pop %v7584
      %v7589 = vmul.f32 %v7588, %v7584
      %v7590 = vmul.f32 %v7589, %v7588
      %v7591 = vmul.f32 0.5, %v7590
      %v7592 = vsub.f32 1.5, %v7591
      %v7593 = vmul.f32 %v7588, %v7592
      %vm7594 = vweird.f32 %v7584
      %vm7595 = vweird.f32 %v7588
      %vm7596 = vmor %vm7594, %vm7595
      %v7597 = vsel %vm7596, %v7588, %v7593
      %v7598 = vrsqrt.pop %v7585
      %v7599 = vmul.f32 %v7598, %v7585
      %v7600 = vmul.f32 %v7599, %v7598
      %v7601 = vmul.f32 0.5, %v7600
      %v7602 = vsub.f32 1.5, %v7601
      %v7603 = vmul.f32 %v7598, %v7602
      %vm7604 = vweird.f32 %v7585
      %vm7605 = vweird.f32 %v7598
      %vm7606 = vmor %vm7604, %vm7605
      %v7607 = vsel %vm7606, %v7598, %v7603
      %v7608 = vrsqrt.pop %v7586
      %v7609 = vmul.f32 %v7608, %v7586
      %v7610 = vmul.f32 %v7609, %v7608
      %v7611 = vmul.f32 0.5, %v7610
      %v7612 = vsub.f32 1.5, %v7611
      %v7613 = vmul.f32 %v7608, %v7612
      %vm7614 = vweird.f32 %v7586
      %vm7615 = vweird.f32 %v7608
      %vm7616 = vmor %vm7614, %vm7615
      %v7617 = vsel %vm7616, %v7608, %v7613
      %v7618 = vrsqrt.pop %v7587
      %v7619 = vmul.f32 %v7618, %v7587
      %v7620 = vmul.f32 %v7619, %v7618
      %v7621 = vmul.f32 0.5, %v7620
      %v7622 = vsub.f32 1.5, %v7621
      %v7623 = vmul.f32 %v7618, %v7622
      %vm7624 = vweird.f32 %v7587
      %vm7625 = vweird.f32 %v7618
      %vm7626 = vmor %vm7624, %vm7625
      %v7627 = vsel %vm7626, %v7618, %v7623
      %v7628 = vmul.f32 %v7368, %v7597
      %v7629 = vmul.f32 %v7369, %v7597
      %v7630 = vmul.f32 %v7370, %v7597
      %v7631 = vmul.f32 %v7371, %v7597
      %v7632 = vmul.f32 %v7372, %v7597
      %v7633 = vmul.f32 %v7373, %v7597
      %v7634 = vmul.f32 %v7374, %v7597
      %v7635 = vmul.f32 %v7375, %v7597
      %v7636 = vmul.f32 %v7376, %v7607
      %v7637 = vmul.f32 %v7377, %v7607
      %v7638 = vmul.f32 %v7378, %v7607
      %v7639 = vmul.f32 %v7379, %v7607
      %v7640 = vmul.f32 %v7380, %v7607
      %v7641 = vmul.f32 %v7381, %v7607
      %v7642 = vmul.f32 %v7382, %v7607
      %v7643 = vmul.f32 %v7383, %v7607
      %v7644 = vmul.f32 %v7384, %v7617
      %v7645 = vmul.f32 %v7385, %v7617
      %v7646 = vmul.f32 %v7386, %v7617
      %v7647 = vmul.f32 %v7387, %v7617
      %v7648 = vmul.f32 %v7388, %v7617
      %v7649 = vmul.f32 %v7389, %v7617
      %v7650 = vmul.f32 %v7390, %v7617
      %v7651 = vmul.f32 %v7391, %v7617
      %v7652 = vmul.f32 %v7392, %v7627
      %v7653 = vmul.f32 %v7393, %v7627
      %v7654 = vmul.f32 %v7394, %v7627
      %v7655 = vmul.f32 %v7395, %v7627
      %v7656 = vmul.f32 %v7396, %v7627
      %v7657 = vmul.f32 %v7397, %v7627
      %v7658 = vmul.f32 %v7398, %v7627
      %v7659 = vmul.f32 %v7399, %v7627
      %v7660 = vld [vmem:[%s7] sm:$0xff]
      %v7661 = vld [vmem:[%s7 + $0x8] sm:$0xff]
      %v7662 = vld [vmem:[%s7 + $0x10] sm:$0xff]
      %v7663 = vld [vmem:[%s7 + $0x18] sm:$0xff]
      %v7664 = vld [vmem:[%s7 + $0x20] sm:$0xff]
      %v7665 = vld [vmem:[%s7 + $0x28] sm:$0xff]
      %v7666 = vld [vmem:[%s7 + $0x30] sm:$0xff]
      %v7667 = vld [vmem:[%s7 + $0x38] sm:$0xff]
      %v7668 = vmul.f32 %v7628, %v7660
      %v7669 = vmul.f32 %v7629, %v7661
      %v7670 = vmul.f32 %v7630, %v7662
      %v7671 = vmul.f32 %v7631, %v7663
      %v7672 = vmul.f32 %v7632, %v7664
      %v7673 = vmul.f32 %v7633, %v7665
      %v7674 = vmul.f32 %v7634, %v7666
      %v7675 = vmul.f32 %v7635, %v7667
      %v7676 = vmul.f32 %v7636, %v7660
      %v7677 = vmul.f32 %v7637, %v7661
      %v7678 = vmul.f32 %v7638, %v7662
      %v7679 = vmul.f32 %v7639, %v7663
      %v7680 = vmul.f32 %v7640, %v7664
      %v7681 = vmul.f32 %v7641, %v7665
      %v7682 = vmul.f32 %v7642, %v7666
      %v7683 = vmul.f32 %v7643, %v7667
      %v7684 = vmul.f32 %v7644, %v7660
      %v7685 = vmul.f32 %v7645, %v7661
      %v7686 = vmul.f32 %v7646, %v7662
      %v7687 = vmul.f32 %v7647, %v7663
      %v7688 = vmul.f32 %v7648, %v7664
      %v7689 = vmul.f32 %v7649, %v7665
      %v7690 = vmul.f32 %v7650, %v7666
      %v7691 = vmul.f32 %v7651, %v7667
      %v7692 = vmul.f32 %v7652, %v7660
      %v7693 = vmul.f32 %v7653, %v7661
      %v7694 = vmul.f32 %v7654, %v7662
      %v7695 = vmul.f32 %v7655, %v7663
      %v7696 = vmul.f32 %v7656, %v7664
      %v7697 = vmul.f32 %v7657, %v7665
      %v7698 = vmul.f32 %v7658, %v7666
      %v7699 = vmul.f32 %v7659, %v7667
      %s7700 = scalar_lea.vmem %s7, 64
      %v7701 = vld [vmem:[%s7700] sm:$0xff]
      %v7702 = vld [vmem:[%s7700 + $0x8] sm:$0xff]
      %v7703 = vld [vmem:[%s7700 + $0x10] sm:$0xff]
      %v7704 = vld [vmem:[%s7700 + $0x18] sm:$0xff]
      %v7705 = vld [vmem:[%s7700 + $0x20] sm:$0xff]
      %v7706 = vld [vmem:[%s7700 + $0x28] sm:$0xff]
      %v7707 = vld [vmem:[%s7700 + $0x30] sm:$0xff]
      %v7708 = vld [vmem:[%s7700 + $0x38] sm:$0xff]
      %v7709 = vadd.f32 %v7668, %v7701
      %v7710 = vadd.f32 %v7669, %v7702
      %v7711 = vadd.f32 %v7670, %v7703
      %v7712 = vadd.f32 %v7671, %v7704
      %v7713 = vadd.f32 %v7672, %v7705
      %v7714 = vadd.f32 %v7673, %v7706
      %v7715 = vadd.f32 %v7674, %v7707
      %v7716 = vadd.f32 %v7675, %v7708
      %v7717 = vadd.f32 %v7676, %v7701
      %v7718 = vadd.f32 %v7677, %v7702
      %v7719 = vadd.f32 %v7678, %v7703
      %v7720 = vadd.f32 %v7679, %v7704
      %v7721 = vadd.f32 %v7680, %v7705
      %v7722 = vadd.f32 %v7681, %v7706
      %v7723 = vadd.f32 %v7682, %v7707
      %v7724 = vadd.f32 %v7683, %v7708
      %v7725 = vadd.f32 %v7684, %v7701
      %v7726 = vadd.f32 %v7685, %v7702
      %v7727 = vadd.f32 %v7686, %v7703
      %v7728 = vadd.f32 %v7687, %v7704
      %v7729 = vadd.f32 %v7688, %v7705
      %v7730 = vadd.f32 %v7689, %v7706
      %v7731 = vadd.f32 %v7690, %v7707
      %v7732 = vadd.f32 %v7691, %v7708
      %v7733 = vadd.f32 %v7692, %v7701
      %v7734 = vadd.f32 %v7693, %v7702
      %v7735 = vadd.f32 %v7694, %v7703
      %v7736 = vadd.f32 %v7695, %v7704
      %v7737 = vadd.f32 %v7696, %v7705
      %v7738 = vadd.f32 %v7697, %v7706
      %v7739 = vadd.f32 %v7698, %v7707
      %v7740 = vadd.f32 %v7699, %v7708
      %v7741 = vadd.f32 %v359, %v7709
      %v7742 = vadd.f32 %v360, %v7710
      %v7743 = vadd.f32 %v361, %v7711
      %v7744 = vadd.f32 %v362, %v7712
      %v7745 = vadd.f32 %v363, %v7713
      %v7746 = vadd.f32 %v364, %v7714
      %v7747 = vadd.f32 %v365, %v7715
      %v7748 = vadd.f32 %v366, %v7716
      %v7749 = vadd.f32 %v367, %v7717
      %v7750 = vadd.f32 %v368, %v7718
      %v7751 = vadd.f32 %v369, %v7719
      %v7752 = vadd.f32 %v370, %v7720
      %v7753 = vadd.f32 %v371, %v7721
      %v7754 = vadd.f32 %v372, %v7722
      %v7755 = vadd.f32 %v373, %v7723
      %v7756 = vadd.f32 %v374, %v7724
      %v7757 = vadd.f32 %v375, %v7725
      %v7758 = vadd.f32 %v376, %v7726
      %v7759 = vadd.f32 %v377, %v7727
      %v7760 = vadd.f32 %v378, %v7728
      %v7761 = vadd.f32 %v379, %v7729
      %v7762 = vadd.f32 %v380, %v7730
      %v7763 = vadd.f32 %v381, %v7731
      %v7764 = vadd.f32 %v382, %v7732
      %v7765 = vadd.f32 %v383, %v7733
      %v7766 = vadd.f32 %v384, %v7734
      %v7767 = vadd.f32 %v385, %v7735
      %v7768 = vadd.f32 %v386, %v7736
      %v7769 = vadd.f32 %v387, %v7737
      %v7770 = vadd.f32 %v388, %v7738
      %v7771 = vadd.f32 %v389, %v7739
      %v7772 = vadd.f32 %v390, %v7740
      %7773 = vst.msk [vmem:[%s356] sm:$0xff] %vm1324, %v7741
      %7774 = vst.msk [vmem:[%s356 + $0x8] sm:$0xff] %vm1324, %v7742
      %7775 = vst.msk [vmem:[%s356 + $0x10] sm:$0xff] %vm1324, %v7743
      %7776 = vst.msk [vmem:[%s356 + $0x18] sm:$0xff] %vm1324, %v7744
      %7777 = vst.msk [vmem:[%s356 + $0x20] sm:$0xff] %vm1324, %v7745
      %7778 = vst.msk [vmem:[%s356 + $0x28] sm:$0xff] %vm1324, %v7746
      %7779 = vst.msk [vmem:[%s356 + $0x30] sm:$0xff] %vm1324, %v7747
      %7780 = vst.msk [vmem:[%s356 + $0x38] sm:$0xff] %vm1324, %v7748
      %7781 = vst.msk [vmem:[%s356 + $0x40] sm:$0xff] %vm1324, %v7749
      %7782 = vst.msk [vmem:[%s356 + $0x48] sm:$0xff] %vm1324, %v7750
      %7783 = vst.msk [vmem:[%s356 + $0x50] sm:$0xff] %vm1324, %v7751
      %7784 = vst.msk [vmem:[%s356 + $0x58] sm:$0xff] %vm1324, %v7752
      %7785 = vst.msk [vmem:[%s356 + $0x60] sm:$0xff] %vm1324, %v7753
      %7786 = vst.msk [vmem:[%s356 + $0x68] sm:$0xff] %vm1324, %v7754
      %7787 = vst.msk [vmem:[%s356 + $0x70] sm:$0xff] %vm1324, %v7755
      %7788 = vst.msk [vmem:[%s356 + $0x78] sm:$0xff] %vm1324, %v7756
      %7789 = vst.msk [vmem:[%s356 + $0x80] sm:$0xff] %vm1324, %v7757
      %7790 = vst.msk [vmem:[%s356 + $0x88] sm:$0xff] %vm1324, %v7758
      %7791 = vst.msk [vmem:[%s356 + $0x90] sm:$0xff] %vm1324, %v7759
      %7792 = vst.msk [vmem:[%s356 + $0x98] sm:$0xff] %vm1324, %v7760
      %7793 = vst.msk [vmem:[%s356 + $0xa0] sm:$0xff] %vm1324, %v7761
      %7794 = vst.msk [vmem:[%s356 + $0xa8] sm:$0xff] %vm1324, %v7762
      %7795 = vst.msk [vmem:[%s356 + $0xb0] sm:$0xff] %vm1324, %v7763
      %7796 = vst.msk [vmem:[%s356 + $0xb8] sm:$0xff] %vm1324, %v7764
      %7797 = vst.msk [vmem:[%s356 + $0xc0] sm:$0xff] %vm1324, %v7765
      %7798 = vst.msk [vmem:[%s356 + $0xc8] sm:$0xff] %vm1324, %v7766
      %7799 = vst.msk [vmem:[%s356 + $0xd0] sm:$0xff] %vm1324, %v7767
      %7800 = vst.msk [vmem:[%s356 + $0xd8] sm:$0xff] %vm1324, %v7768
      %7801 = vst.msk [vmem:[%s356 + $0xe0] sm:$0xff] %vm1324, %v7769
      %7802 = vst.msk [vmem:[%s356 + $0xe8] sm:$0xff] %vm1324, %v7770
      %7803 = vst.msk [vmem:[%s356 + $0xf0] sm:$0xff] %vm1324, %v7771
      %7804 = vst.msk [vmem:[%s356 + $0xf8] sm:$0xff] %vm1324, %v7772
      %s7805 = smul.u32 4, %s19
      %p7806 = scmp.lt.s32.totalorder %s7805, 7
      %s7807 = scalar_select %p7806, %s7805, 7
      %s7808 = smul.addr %s7807, 8
      %s7809 = smul.addr %s7808, 8
      %s7810 = scalar_lea.vmem %s8, %s7809
      // Predicated region
      $region53: #{tpu_custom_call.1} parent=51 // pred_check
        %p7811 = pneg %p220
      $region54: #{tpu_custom_call.1} parent=51 // pred_check_branch
        %7813 = sbr.rel (%p7811) target = $region56
      $region55: #{tpu_custom_call.1} parent=51 // pred_region
        %s7814 = smul.u32 4, %s19
      $region56: #{tpu_custom_call.1} parent=51 // pred_fallthru
        _
    $region52: #{tpu_custom_call.1} parent=5 // pred_fallthru
      _
    %p7815 = scmp.le.s32.totalorder 2, %s14
    // Predicated region
    $region57: #{tpu_custom_call.1} parent=5 // pred_check
      %p7816 = pneg %p7815
    $region58: #{tpu_custom_call.1} parent=5 // pred_check_branch
      %7818 = sbr.rel (%p7816) target = $region60
    $region59: #{tpu_custom_call.1} parent=5 // pred_region
      %s7819 = ssub.s32 %s14, 2
      // Predicated region
      $region61: #{tpu_custom_call.1} parent=59 // pred_check
        %p7820 = pneg %p226
      $region62: #{tpu_custom_call.1} parent=59 // pred_check_branch
        %7822 = sbr.rel (%p7820) target = $region64
      $region63: #{tpu_custom_call.1} parent=59 // pred_region
        %s7823 = smul.u32 4, %s20
        %p7824 = scmp.lt.s32.totalorder %s7823, 7
        %s7825 = scalar_select %p7824, %s7823, 7
        %s7826 = smul.addr %s7825, 8
        %s7827 = smul.addr %s7826, 8
        %s7828 = scalar_lea.vmem %s8, %s7827
      $region64: #{tpu_custom_call.1} parent=59 // pred_fallthru
        _
    $region60: #{tpu_custom_call.1} parent=5 // pred_fallthru
      _
  $region6: #{tpu_custom_call.1} parent=0 // loop_footer
    %s18 = sadd.s32 1, %s14
  $region7: #{tpu_custom_call.1} parent=0 // loop_footer_branch
    %13 = sbr.rel target = $region3
  $region8: #{tpu_custom_call.1} parent=0 // loop_exit
    _

</llo_original>
